<compile_context>
chip_gen: v7x
topology: tpu7x:2x2x1
jax: 0.10.0
libtpu: 0.0.40
codegen_flags: <defaults>
</compile_context>

<pallas_src>
import functools

import jax
import jax.numpy as jnp
from jax.experimental import pallas as pl
from jax.experimental.pallas import tpu as pltpu

G = 128   # lane-aligned width of one gate block (and of the padded hidden state)
H1 = 50   # hidden size of LSTM layer 1 (fixed by the PyTorch module)


# ----------------------------------------------------------------------------- kernel
def _encoder_kernel(
    x_ref,                                   # (T, B, 1)   input sequence
    w_ih1f_ref, w_hh1f_ref, b1f_ref,         # layer-1 forward : (1,4G), (G,4G), (1,4G)
    w_ih1b_ref, w_hh1b_ref, b1b_ref,         # layer-1 backward
    w_ih2f_ref, w_hh2f_ref, b2f_ref,         # layer-2 forward : (2G,4G), (G,4G), (1,4G)
    w_ih2b_ref, w_hh2b_ref, b2b_ref,         # layer-2 backward
    out_ref,                                 # (B, 2G) = [h2_fwd_final | h2_bwd_final] (padded)
):
    T, B, _ = x_ref.shape
    f32 = jnp.float32

    def cell(gates, c):
        # fused gates (B, 4G), gate order (i, f, g, o), each a 128-lane-aligned slice
        i_g = jax.nn.sigmoid(gates[:, 0 * G:1 * G])
        f_g = jax.nn.sigmoid(gates[:, 1 * G:2 * G])
        g_g = jnp.tanh(gates[:, 2 * G:3 * G])
        o_g = jax.nn.sigmoid(gates[:, 3 * G:4 * G])
        c_new = f_g * c + i_g * g_g
        h_new = o_g * jnp.tanh(c_new)
        return h_new, c_new

    zero = jnp.zeros((B, G), f32)

    # ---- layer 1: forward & backward recurrences interleaved (independent chains)
    w_ih1f = w_ih1f_ref[...]                 # (1, 4G) — hoisted (input dim is 1)
    w_ih1b = w_ih1b_ref[...]
    b1f = b1f_ref[...]                       # (1, 4G) — bias hoisted out of the loop
    b1b = b1b_ref[...]

    h1f = [None] * T                         # layer-1 forward hidden per time step (B, G)
    h1b = [None] * T                         # layer-1 backward hidden per time step (B, G)
    hf = cf = hb = cb = zero
    for s in range(T):                       # fully unrolled; T static and tiny
        tb = T - 1 - s
        g_f = (x_ref[s] * w_ih1f             # (B,1)*(1,4G): D=1 -> broadcast, no MXU
               + jnp.dot(hf, w_hh1f_ref[...], preferred_element_type=f32)
               + b1f)
        g_b = (x_ref[tb] * w_ih1b
               + jnp.dot(hb, w_hh1b_ref[...], preferred_element_type=f32)
               + b1b)
        hf, cf = cell(g_f, cf)
        hb, cb = cell(g_b, cb)
        h1f[s] = hf
        h1b[tb] = hb

    # ---- layer 2 over the in-VMEM layer-1 outputs; only the final hiddens are needed
    b2f = b2f_ref[...]
    b2b = b2b_ref[...]
    h2f = c2f = h2b = c2b = zero
    for s in range(T):
        tb = T - 1 - s
        in_f = jnp.concatenate([h1f[s], h1b[s]], axis=-1)      # (B, 2G)
        in_b = jnp.concatenate([h1f[tb], h1b[tb]], axis=-1)
        g_f = (jnp.dot(in_f, w_ih2f_ref[...], preferred_element_type=f32)
               + jnp.dot(h2f, w_hh2f_ref[...], preferred_element_type=f32)
               + b2f)
        g_b = (jnp.dot(in_b, w_ih2b_ref[...], preferred_element_type=f32)
               + jnp.dot(h2b, w_hh2b_ref[...], preferred_element_type=f32)
               + b2b)
        h2f, c2f = cell(g_f, c2f)
        h2b, c2b = cell(g_b, c2b)

    # single lane-dense (B, 2G) store
    out_ref[...] = jnp.concatenate([h2f, h2b], axis=-1)


# ----------------------------------------------------------------------------- wrapper
def lstm_encoder(x_nct, packed, h2):
    """x_nct: (B, 1, T) PyTorch NCL layout -> (B, 2*h2) embedding."""
    B, C, T = x_nct.shape
    assert C == 1
    x_tb1 = jnp.transpose(x_nct, (2, 0, 1)).astype(jnp.float32)   # (T, B, 1)

    vmem = pl.BlockSpec(memory_space=pltpu.MemorySpace.VMEM)
    out_pad = pl.pallas_call(
        _encoder_kernel,
        out_shape=jax.ShapeDtypeStruct((B, 2 * G), jnp.float32),
        in_specs=[vmem] * (1 + len(packed)),
        out_specs=vmem,
    )(x_tb1, *packed)

    # un-pad the two final hidden states and concat (matches h_n.permute(1,0,2).flatten(1))
    return jnp.concatenate([out_pad[:, :h2], out_pad[:, G:G + h2]], axis=-1)


# ----------------------------------------------------------------------------- params
def init_lstm_params(key, d_in, hidden):
    """Synthetic LSTM weights, gate order (i, f, g, o); b is the combined b_ih + b_hh."""
    k1, k2, k3 = jax.random.split(key, 3)
    s = 1.0 / jnp.sqrt(jnp.float32(hidden))
    w_ih = jax.random.uniform(k1, (4, d_in, hidden), jnp.float32, -s, s)
    w_hh = jax.random.uniform(k2, (4, hidden, hidden), jnp.float32, -s, s)
    b = jax.random.uniform(k3, (4, hidden), jnp.float32, -2 * s, 2 * s)
    return (w_ih, w_hh, b)


def pack_lstm_dir(w_ih, w_hh, b, in_segments, in_pad):
    """Pack raw per-gate weights into the fused, 128-lane-padded kernel layout.

    w_ih: (4, d_in, H), w_hh: (4, H, H), b: (4, H)
    in_segments: list of (dst_row_start, src_row_start, n_rows) mapping raw input
                 rows into the padded input dimension of size `in_pad`.
    Returns (w_ih_p (in_pad, 4G), w_hh_p (G, 4G), b_p (1, 4G)); padded rows/cols are 0,
    which keeps padded hidden/cell lanes exactly 0 through the recurrence.
    """
    H = w_hh.shape[-1]
    w_ih_p = jnp.zeros((in_pad, 4 * G), jnp.float32)
    w_hh_p = jnp.zeros((G, 4 * G), jnp.float32)
    b_p = jnp.zeros((1, 4 * G), jnp.float32)
    for g in range(4):
        c0 = g * G
        for dst, src, n in in_segments:
            w_ih_p = w_ih_p.at[dst:dst + n, c0:c0 + H].set(w_ih[g, src:src + n, :])
        w_hh_p = w_hh_p.at[:H, c0:c0 + H].set(w_hh[g])
        b_p = b_p.at[0, c0:c0 + H].set(b[g])
    return (w_ih_p, w_hh_p, b_p)


def make_params(key, embedding_dim):
    assert embedding_dim % 2 == 0, "'embedding_dim' must be even."
    h2 = embedding_dim // 2
    assert H1 <= G and h2 <= G
    k = jax.random.split(key, 4)
    raw = {
        "l1_f": init_lstm_params(k[0], 1, H1),
        "l1_b": init_lstm_params(k[1], 1, H1),
        "l2_f": init_lstm_params(k[2], 2 * H1, h2),
        "l2_b": init_lstm_params(k[3], 2 * H1, h2),
    }
    seg1 = [(0, 0, 1)]                       # layer-1 input dim 1 -> padded row 0
    seg2 = [(0, 0, H1), (G, H1, H1)]         # [fwd h | bwd h] -> padded rows [0:50], [128:178]
    packed = (pack_lstm_dir(*raw["l1_f"], seg1, 1)
              + pack_lstm_dir(*raw["l1_b"], seg1, 1)
              + pack_lstm_dir(*raw["l2_f"], seg2, 2 * G)
              + pack_lstm_dir(*raw["l2_b"], seg2, 2 * G))
    return raw, packed


# ----------------------------------------------------------------------------- pure-JAX reference
def _ref_lstm_dir(x_btd, w_ih, w_hh, b, reverse):
    B, T, _ = x_btd.shape
    H = w_hh.shape[-1]
    h = jnp.zeros((B, H), jnp.float32)
    c = jnp.zeros((B, H), jnp.float32)
    outs = [None] * T
    order = range(T - 1, -1, -1) if reverse else range(T)
    hp = jax.lax.Precision.HIGHEST
    for t in order:
        xt = x_btd[:, t, :]
        gs = [jnp.dot(xt, w_ih[g], precision=hp) + jnp.dot(h, w_hh[g], precision=hp) + b[g]
              for g in range(4)]
        i = jax.nn.sigmoid(gs[0])
        f = jax.nn.sigmoid(gs[1])
        gg = jnp.tanh(gs[2])
        o = jax.nn.sigmoid(gs[3])
        c = f * c + i * gg
        h = o * jnp.tanh(c)
        outs[t] = h
    return jnp.stack(outs, axis=1), h


def lstm_encoder_ref(x_nct, raw):
    x = jnp.transpose(x_nct, (0, 2, 1)).astype(jnp.float32)
    of, _ = _ref_lstm_dir(x, *raw["l1_f"], reverse=False)
    ob, _ = _ref_lstm_dir(x, *raw["l1_b"], reverse=True)
    o1 = jnp.concatenate([of, ob], axis=-1)
    _, hf = _ref_lstm_dir(o1, *raw["l2_f"], reverse=False)
    _, hb = _ref_lstm_dir(o1, *raw["l2_b"], reverse=True)
    return jnp.concatenate([hf, hb], axis=-1)


# ----------------------------------------------------------------------------- main
if __name__ == "__main__":
    key = jax.random.PRNGKey(0)
    k_x, k_p = jax.random.split(key)

    B, C, T = 2, 1, 8
    embedding_dim = 32

    x = jax.random.normal(k_x, (B, C, T), dtype=jnp.float32)
    raw, packed = make_params(k_p, embedding_dim)

    encoder = jax.jit(functools.partial(lstm_encoder, packed=packed, h2=embedding_dim // 2))
    out = jax.block_until_ready(encoder(x))

    assert out.shape == (B, embedding_dim), out.shape
    assert out.dtype == jnp.float32
    assert bool(jnp.all(jnp.isfinite(out)))

    ref = lstm_encoder_ref(x, raw)
    max_err = float(jnp.max(jnp.abs(out - ref)))
    assert max_err < 2e-3, f"kernel/ref mismatch, max abs err = {max_err}"

    print("KERNEL_OK")
</pallas_src>

<mosaic_0001>
module attributes {stable_mosaic.version = 11 : i64} {
  func.func @_encoder_kernel(%arg0: memref<8x2x1xf32, #tpu.memory_space<vmem>>, %arg1: memref<1x512xf32, #tpu.memory_space<vmem>>, %arg2: memref<128x512xf32, #tpu.memory_space<vmem>>, %arg3: memref<1x512xf32, #tpu.memory_space<vmem>>, %arg4: memref<1x512xf32, #tpu.memory_space<vmem>>, %arg5: memref<128x512xf32, #tpu.memory_space<vmem>>, %arg6: memref<1x512xf32, #tpu.memory_space<vmem>>, %arg7: memref<256x512xf32, #tpu.memory_space<vmem>>, %arg8: memref<128x512xf32, #tpu.memory_space<vmem>>, %arg9: memref<1x512xf32, #tpu.memory_space<vmem>>, %arg10: memref<256x512xf32, #tpu.memory_space<vmem>>, %arg11: memref<128x512xf32, #tpu.memory_space<vmem>>, %arg12: memref<1x512xf32, #tpu.memory_space<vmem>>, %arg13: memref<2x256xf32, #tpu.memory_space<vmem>>) attributes {dimension_semantics = [], scalar_prefetch = 0 : i64, scratch_operands = 0 : i64, tpu.core_type = #tpu.core_type<tc>} {
    %cst = arith.constant 0.000000e+00 : f32
    %0 = vector.broadcast %cst : f32 to vector<2x128xf32>
    %c0 = arith.constant 0 : index
    %c0_0 = arith.constant 0 : index
    %1 = vector.load %arg1[%c0, %c0_0] : memref<1x512xf32, #tpu.memory_space<vmem>>, vector<1x512xf32>
    %c0_1 = arith.constant 0 : index
    %c0_2 = arith.constant 0 : index
    %2 = vector.load %arg4[%c0_1, %c0_2] : memref<1x512xf32, #tpu.memory_space<vmem>>, vector<1x512xf32>
    %c0_3 = arith.constant 0 : index
    %c0_4 = arith.constant 0 : index
    %3 = vector.load %arg3[%c0_3, %c0_4] : memref<1x512xf32, #tpu.memory_space<vmem>>, vector<1x512xf32>
    %c0_5 = arith.constant 0 : index
    %c0_6 = arith.constant 0 : index
    %4 = vector.load %arg6[%c0_5, %c0_6] : memref<1x512xf32, #tpu.memory_space<vmem>>, vector<1x512xf32>
    %c0_7 = arith.constant 0 : index
    %c0_8 = arith.constant 0 : index
    %c0_9 = arith.constant 0 : index
    %5 = vector.load %arg0[%c0_7, %c0_8, %c0_9] : memref<8x2x1xf32, #tpu.memory_space<vmem>>, vector<1x2x1xf32>
    %6 = vector.shape_cast %5 : vector<1x2x1xf32> to vector<2x1xf32>
    %7 = vector.broadcast %6 : vector<2x1xf32> to vector<2x512xf32>
    %8 = vector.broadcast %1 : vector<1x512xf32> to vector<2x512xf32>
    %9 = arith.mulf %7, %8 : vector<2x512xf32>
    %c0_10 = arith.constant 0 : index
    %c0_11 = arith.constant 0 : index
    %10 = vector.load %arg2[%c0_10, %c0_11] : memref<128x512xf32, #tpu.memory_space<vmem>>, vector<128x512xf32>
    %cst_12 = arith.constant dense<0.000000e+00> : vector<2x512xf32>
    %11 = tpu.matmul %0, %10, %cst_12 {dimension_numbers = #tpu.dot_dimension_numbers<[1], [0], [0], [1], [0, 0, 1, 1], [], []>} : vector<2x128xf32>, vector<128x512xf32>, vector<2x512xf32> -> vector<2x512xf32>
    %12 = arith.addf %9, %11 : vector<2x512xf32>
    %13 = vector.broadcast %3 : vector<1x512xf32> to vector<2x512xf32>
    %14 = arith.addf %12, %13 : vector<2x512xf32>
    %c7 = arith.constant 7 : index
    %c0_13 = arith.constant 0 : index
    %c0_14 = arith.constant 0 : index
    %15 = vector.load %arg0[%c7, %c0_13, %c0_14] : memref<8x2x1xf32, #tpu.memory_space<vmem>>, vector<1x2x1xf32>
    %16 = vector.shape_cast %15 : vector<1x2x1xf32> to vector<2x1xf32>
    %17 = vector.broadcast %16 : vector<2x1xf32> to vector<2x512xf32>
    %18 = vector.broadcast %2 : vector<1x512xf32> to vector<2x512xf32>
    %19 = arith.mulf %17, %18 : vector<2x512xf32>
    %c0_15 = arith.constant 0 : index
    %c0_16 = arith.constant 0 : index
    %20 = vector.load %arg5[%c0_15, %c0_16] : memref<128x512xf32, #tpu.memory_space<vmem>>, vector<128x512xf32>
    %cst_17 = arith.constant dense<0.000000e+00> : vector<2x512xf32>
    %21 = tpu.matmul %0, %20, %cst_17 {dimension_numbers = #tpu.dot_dimension_numbers<[1], [0], [0], [1], [0, 0, 1, 1], [], []>} : vector<2x128xf32>, vector<128x512xf32>, vector<2x512xf32> -> vector<2x512xf32>
    %22 = arith.addf %19, %21 : vector<2x512xf32>
    %23 = vector.broadcast %4 : vector<1x512xf32> to vector<2x512xf32>
    %24 = arith.addf %22, %23 : vector<2x512xf32>
    %25 = vector.extract_strided_slice %14 {offsets = [0, 0], sizes = [2, 128], strides = [1, 1]} : vector<2x512xf32> to vector<2x128xf32>
    %26 = arith.negf %25 : vector<2x128xf32>
    %27 = math.exp %26 : vector<2x128xf32>
    %cst_18 = arith.constant 1.000000e+00 : f32
    %28 = vector.broadcast %cst_18 : f32 to vector<2x128xf32>
    %29 = arith.addf %28, %27 : vector<2x128xf32>
    %30 = arith.divf %28, %29 : vector<2x128xf32>
    %31 = vector.extract_strided_slice %14 {offsets = [0, 128], sizes = [2, 128], strides = [1, 1]} : vector<2x512xf32> to vector<2x128xf32>
    %32 = arith.negf %31 : vector<2x128xf32>
    %33 = math.exp %32 : vector<2x128xf32>
    %cst_19 = arith.constant 1.000000e+00 : f32
    %34 = vector.broadcast %cst_19 : f32 to vector<2x128xf32>
    %35 = arith.addf %34, %33 : vector<2x128xf32>
    %36 = arith.divf %34, %35 : vector<2x128xf32>
    %37 = vector.extract_strided_slice %14 {offsets = [0, 256], sizes = [2, 128], strides = [1, 1]} : vector<2x512xf32> to vector<2x128xf32>
    %38 = math.tanh %37 : vector<2x128xf32>
    %39 = vector.extract_strided_slice %14 {offsets = [0, 384], sizes = [2, 128], strides = [1, 1]} : vector<2x512xf32> to vector<2x128xf32>
    %40 = arith.negf %39 : vector<2x128xf32>
    %41 = math.exp %40 : vector<2x128xf32>
    %cst_20 = arith.constant 1.000000e+00 : f32
    %42 = vector.broadcast %cst_20 : f32 to vector<2x128xf32>
    %43 = arith.addf %42, %41 : vector<2x128xf32>
    %44 = arith.divf %42, %43 : vector<2x128xf32>
    %45 = arith.mulf %36, %0 : vector<2x128xf32>
    %46 = arith.mulf %30, %38 : vector<2x128xf32>
    %47 = arith.addf %45, %46 : vector<2x128xf32>
    %48 = math.tanh %47 : vector<2x128xf32>
    %49 = arith.mulf %44, %48 : vector<2x128xf32>
    %50 = vector.extract_strided_slice %24 {offsets = [0, 0], sizes = [2, 128], strides = [1, 1]} : vector<2x512xf32> to vector<2x128xf32>
    %51 = arith.negf %50 : vector<2x128xf32>
    %52 = math.exp %51 : vector<2x128xf32>
    %cst_21 = arith.constant 1.000000e+00 : f32
    %53 = vector.broadcast %cst_21 : f32 to vector<2x128xf32>
    %54 = arith.addf %53, %52 : vector<2x128xf32>
    %55 = arith.divf %53, %54 : vector<2x128xf32>
    %56 = vector.extract_strided_slice %24 {offsets = [0, 128], sizes = [2, 128], strides = [1, 1]} : vector<2x512xf32> to vector<2x128xf32>
    %57 = arith.negf %56 : vector<2x128xf32>
    %58 = math.exp %57 : vector<2x128xf32>
    %cst_22 = arith.constant 1.000000e+00 : f32
    %59 = vector.broadcast %cst_22 : f32 to vector<2x128xf32>
    %60 = arith.addf %59, %58 : vector<2x128xf32>
    %61 = arith.divf %59, %60 : vector<2x128xf32>
    %62 = vector.extract_strided_slice %24 {offsets = [0, 256], sizes = [2, 128], strides = [1, 1]} : vector<2x512xf32> to vector<2x128xf32>
    %63 = math.tanh %62 : vector<2x128xf32>
    %64 = vector.extract_strided_slice %24 {offsets = [0, 384], sizes = [2, 128], strides = [1, 1]} : vector<2x512xf32> to vector<2x128xf32>
    %65 = arith.negf %64 : vector<2x128xf32>
    %66 = math.exp %65 : vector<2x128xf32>
    %cst_23 = arith.constant 1.000000e+00 : f32
    %67 = vector.broadcast %cst_23 : f32 to vector<2x128xf32>
    %68 = arith.addf %67, %66 : vector<2x128xf32>
    %69 = arith.divf %67, %68 : vector<2x128xf32>
    %70 = arith.mulf %61, %0 : vector<2x128xf32>
    %71 = arith.mulf %55, %63 : vector<2x128xf32>
    %72 = arith.addf %70, %71 : vector<2x128xf32>
    %73 = math.tanh %72 : vector<2x128xf32>
    %74 = arith.mulf %69, %73 : vector<2x128xf32>
    %c1 = arith.constant 1 : index
    %c0_24 = arith.constant 0 : index
    %c0_25 = arith.constant 0 : index
    %75 = vector.load %arg0[%c1, %c0_24, %c0_25] : memref<8x2x1xf32, #tpu.memory_space<vmem>>, vector<1x2x1xf32>
    %76 = vector.shape_cast %75 : vector<1x2x1xf32> to vector<2x1xf32>
    %77 = vector.broadcast %76 : vector<2x1xf32> to vector<2x512xf32>
    %78 = vector.broadcast %1 : vector<1x512xf32> to vector<2x512xf32>
    %79 = arith.mulf %77, %78 : vector<2x512xf32>
    %c0_26 = arith.constant 0 : index
    %c0_27 = arith.constant 0 : index
    %80 = vector.load %arg2[%c0_26, %c0_27] : memref<128x512xf32, #tpu.memory_space<vmem>>, vector<128x512xf32>
    %cst_28 = arith.constant dense<0.000000e+00> : vector<2x512xf32>
    %81 = tpu.matmul %49, %80, %cst_28 {dimension_numbers = #tpu.dot_dimension_numbers<[1], [0], [0], [1], [0, 0, 1, 1], [], []>} : vector<2x128xf32>, vector<128x512xf32>, vector<2x512xf32> -> vector<2x512xf32>
    %82 = arith.addf %79, %81 : vector<2x512xf32>
    %83 = vector.broadcast %3 : vector<1x512xf32> to vector<2x512xf32>
    %84 = arith.addf %82, %83 : vector<2x512xf32>
    %c6 = arith.constant 6 : index
    %c0_29 = arith.constant 0 : index
    %c0_30 = arith.constant 0 : index
    %85 = vector.load %arg0[%c6, %c0_29, %c0_30] : memref<8x2x1xf32, #tpu.memory_space<vmem>>, vector<1x2x1xf32>
    %86 = vector.shape_cast %85 : vector<1x2x1xf32> to vector<2x1xf32>
    %87 = vector.broadcast %86 : vector<2x1xf32> to vector<2x512xf32>
    %88 = vector.broadcast %2 : vector<1x512xf32> to vector<2x512xf32>
    %89 = arith.mulf %87, %88 : vector<2x512xf32>
    %c0_31 = arith.constant 0 : index
    %c0_32 = arith.constant 0 : index
    %90 = vector.load %arg5[%c0_31, %c0_32] : memref<128x512xf32, #tpu.memory_space<vmem>>, vector<128x512xf32>
    %cst_33 = arith.constant dense<0.000000e+00> : vector<2x512xf32>
    %91 = tpu.matmul %74, %90, %cst_33 {dimension_numbers = #tpu.dot_dimension_numbers<[1], [0], [0], [1], [0, 0, 1, 1], [], []>} : vector<2x128xf32>, vector<128x512xf32>, vector<2x512xf32> -> vector<2x512xf32>
    %92 = arith.addf %89, %91 : vector<2x512xf32>
    %93 = vector.broadcast %4 : vector<1x512xf32> to vector<2x512xf32>
    %94 = arith.addf %92, %93 : vector<2x512xf32>
    %95 = vector.extract_strided_slice %84 {offsets = [0, 0], sizes = [2, 128], strides = [1, 1]} : vector<2x512xf32> to vector<2x128xf32>
    %96 = arith.negf %95 : vector<2x128xf32>
    %97 = math.exp %96 : vector<2x128xf32>
    %cst_34 = arith.constant 1.000000e+00 : f32
    %98 = vector.broadcast %cst_34 : f32 to vector<2x128xf32>
    %99 = arith.addf %98, %97 : vector<2x128xf32>
    %100 = arith.divf %98, %99 : vector<2x128xf32>
    %101 = vector.extract_strided_slice %84 {offsets = [0, 128], sizes = [2, 128], strides = [1, 1]} : vector<2x512xf32> to vector<2x128xf32>
    %102 = arith.negf %101 : vector<2x128xf32>
    %103 = math.exp %102 : vector<2x128xf32>
    %cst_35 = arith.constant 1.000000e+00 : f32
    %104 = vector.broadcast %cst_35 : f32 to vector<2x128xf32>
    %105 = arith.addf %104, %103 : vector<2x128xf32>
    %106 = arith.divf %104, %105 : vector<2x128xf32>
    %107 = vector.extract_strided_slice %84 {offsets = [0, 256], sizes = [2, 128], strides = [1, 1]} : vector<2x512xf32> to vector<2x128xf32>
    %108 = math.tanh %107 : vector<2x128xf32>
    %109 = vector.extract_strided_slice %84 {offsets = [0, 384], sizes = [2, 128], strides = [1, 1]} : vector<2x512xf32> to vector<2x128xf32>
    %110 = arith.negf %109 : vector<2x128xf32>
    %111 = math.exp %110 : vector<2x128xf32>
    %cst_36 = arith.constant 1.000000e+00 : f32
    %112 = vector.broadcast %cst_36 : f32 to vector<2x128xf32>
    %113 = arith.addf %112, %111 : vector<2x128xf32>
    %114 = arith.divf %112, %113 : vector<2x128xf32>
    %115 = arith.mulf %106, %47 : vector<2x128xf32>
    %116 = arith.mulf %100, %108 : vector<2x128xf32>
    %117 = arith.addf %115, %116 : vector<2x128xf32>
    %118 = math.tanh %117 : vector<2x128xf32>
    %119 = arith.mulf %114, %118 : vector<2x128xf32>
    %120 = vector.extract_strided_slice %94 {offsets = [0, 0], sizes = [2, 128], strides = [1, 1]} : vector<2x512xf32> to vector<2x128xf32>
    %121 = arith.negf %120 : vector<2x128xf32>
    %122 = math.exp %121 : vector<2x128xf32>
    %cst_37 = arith.constant 1.000000e+00 : f32
    %123 = vector.broadcast %cst_37 : f32 to vector<2x128xf32>
    %124 = arith.addf %123, %122 : vector<2x128xf32>
    %125 = arith.divf %123, %124 : vector<2x128xf32>
    %126 = vector.extract_strided_slice %94 {offsets = [0, 128], sizes = [2, 128], strides = [1, 1]} : vector<2x512xf32> to vector<2x128xf32>
    %127 = arith.negf %126 : vector<2x128xf32>
    %128 = math.exp %127 : vector<2x128xf32>
    %cst_38 = arith.constant 1.000000e+00 : f32
    %129 = vector.broadcast %cst_38 : f32 to vector<2x128xf32>
    %130 = arith.addf %129, %128 : vector<2x128xf32>
    %131 = arith.divf %129, %130 : vector<2x128xf32>
    %132 = vector.extract_strided_slice %94 {offsets = [0, 256], sizes = [2, 128], strides = [1, 1]} : vector<2x512xf32> to vector<2x128xf32>
    %133 = math.tanh %132 : vector<2x128xf32>
    %134 = vector.extract_strided_slice %94 {offsets = [0, 384], sizes = [2, 128], strides = [1, 1]} : vector<2x512xf32> to vector<2x128xf32>
    %135 = arith.negf %134 : vector<2x128xf32>
    %136 = math.exp %135 : vector<2x128xf32>
    %cst_39 = arith.constant 1.000000e+00 : f32
    %137 = vector.broadcast %cst_39 : f32 to vector<2x128xf32>
    %138 = arith.addf %137, %136 : vector<2x128xf32>
    %139 = arith.divf %137, %138 : vector<2x128xf32>
    %140 = arith.mulf %131, %72 : vector<2x128xf32>
    %141 = arith.mulf %125, %133 : vector<2x128xf32>
    %142 = arith.addf %140, %141 : vector<2x128xf32>
    %143 = math.tanh %142 : vector<2x128xf32>
    %144 = arith.mulf %139, %143 : vector<2x128xf32>
    %c2 = arith.constant 2 : index
    %c0_40 = arith.constant 0 : index
    %c0_41 = arith.constant 0 : index
    %145 = vector.load %arg0[%c2, %c0_40, %c0_41] : memref<8x2x1xf32, #tpu.memory_space<vmem>>, vector<1x2x1xf32>
    %146 = vector.shape_cast %145 : vector<1x2x1xf32> to vector<2x1xf32>
    %147 = vector.broadcast %146 : vector<2x1xf32> to vector<2x512xf32>
    %148 = vector.broadcast %1 : vector<1x512xf32> to vector<2x512xf32>
    %149 = arith.mulf %147, %148 : vector<2x512xf32>
    %c0_42 = arith.constant 0 : index
    %c0_43 = arith.constant 0 : index
    %150 = vector.load %arg2[%c0_42, %c0_43] : memref<128x512xf32, #tpu.memory_space<vmem>>, vector<128x512xf32>
    %cst_44 = arith.constant dense<0.000000e+00> : vector<2x512xf32>
    %151 = tpu.matmul %119, %150, %cst_44 {dimension_numbers = #tpu.dot_dimension_numbers<[1], [0], [0], [1], [0, 0, 1, 1], [], []>} : vector<2x128xf32>, vector<128x512xf32>, vector<2x512xf32> -> vector<2x512xf32>
    %152 = arith.addf %149, %151 : vector<2x512xf32>
    %153 = vector.broadcast %3 : vector<1x512xf32> to vector<2x512xf32>
    %154 = arith.addf %152, %153 : vector<2x512xf32>
    %c5 = arith.constant 5 : index
    %c0_45 = arith.constant 0 : index
    %c0_46 = arith.constant 0 : index
    %155 = vector.load %arg0[%c5, %c0_45, %c0_46] : memref<8x2x1xf32, #tpu.memory_space<vmem>>, vector<1x2x1xf32>
    %156 = vector.shape_cast %155 : vector<1x2x1xf32> to vector<2x1xf32>
    %157 = vector.broadcast %156 : vector<2x1xf32> to vector<2x512xf32>
    %158 = vector.broadcast %2 : vector<1x512xf32> to vector<2x512xf32>
    %159 = arith.mulf %157, %158 : vector<2x512xf32>
    %c0_47 = arith.constant 0 : index
    %c0_48 = arith.constant 0 : index
    %160 = vector.load %arg5[%c0_47, %c0_48] : memref<128x512xf32, #tpu.memory_space<vmem>>, vector<128x512xf32>
    %cst_49 = arith.constant dense<0.000000e+00> : vector<2x512xf32>
    %161 = tpu.matmul %144, %160, %cst_49 {dimension_numbers = #tpu.dot_dimension_numbers<[1], [0], [0], [1], [0, 0, 1, 1], [], []>} : vector<2x128xf32>, vector<128x512xf32>, vector<2x512xf32> -> vector<2x512xf32>
    %162 = arith.addf %159, %161 : vector<2x512xf32>
    %163 = vector.broadcast %4 : vector<1x512xf32> to vector<2x512xf32>
    %164 = arith.addf %162, %163 : vector<2x512xf32>
    %165 = vector.extract_strided_slice %154 {offsets = [0, 0], sizes = [2, 128], strides = [1, 1]} : vector<2x512xf32> to vector<2x128xf32>
    %166 = arith.negf %165 : vector<2x128xf32>
    %167 = math.exp %166 : vector<2x128xf32>
    %cst_50 = arith.constant 1.000000e+00 : f32
    %168 = vector.broadcast %cst_50 : f32 to vector<2x128xf32>
    %169 = arith.addf %168, %167 : vector<2x128xf32>
    %170 = arith.divf %168, %169 : vector<2x128xf32>
    %171 = vector.extract_strided_slice %154 {offsets = [0, 128], sizes = [2, 128], strides = [1, 1]} : vector<2x512xf32> to vector<2x128xf32>
    %172 = arith.negf %171 : vector<2x128xf32>
    %173 = math.exp %172 : vector<2x128xf32>
    %cst_51 = arith.constant 1.000000e+00 : f32
    %174 = vector.broadcast %cst_51 : f32 to vector<2x128xf32>
    %175 = arith.addf %174, %173 : vector<2x128xf32>
    %176 = arith.divf %174, %175 : vector<2x128xf32>
    %177 = vector.extract_strided_slice %154 {offsets = [0, 256], sizes = [2, 128], strides = [1, 1]} : vector<2x512xf32> to vector<2x128xf32>
    %178 = math.tanh %177 : vector<2x128xf32>
    %179 = vector.extract_strided_slice %154 {offsets = [0, 384], sizes = [2, 128], strides = [1, 1]} : vector<2x512xf32> to vector<2x128xf32>
    %180 = arith.negf %179 : vector<2x128xf32>
    %181 = math.exp %180 : vector<2x128xf32>
    %cst_52 = arith.constant 1.000000e+00 : f32
    %182 = vector.broadcast %cst_52 : f32 to vector<2x128xf32>
    %183 = arith.addf %182, %181 : vector<2x128xf32>
    %184 = arith.divf %182, %183 : vector<2x128xf32>
    %185 = arith.mulf %176, %117 : vector<2x128xf32>
    %186 = arith.mulf %170, %178 : vector<2x128xf32>
    %187 = arith.addf %185, %186 : vector<2x128xf32>
    %188 = math.tanh %187 : vector<2x128xf32>
    %189 = arith.mulf %184, %188 : vector<2x128xf32>
    %190 = vector.extract_strided_slice %164 {offsets = [0, 0], sizes = [2, 128], strides = [1, 1]} : vector<2x512xf32> to vector<2x128xf32>
    %191 = arith.negf %190 : vector<2x128xf32>
    %192 = math.exp %191 : vector<2x128xf32>
    %cst_53 = arith.constant 1.000000e+00 : f32
    %193 = vector.broadcast %cst_53 : f32 to vector<2x128xf32>
    %194 = arith.addf %193, %192 : vector<2x128xf32>
    %195 = arith.divf %193, %194 : vector<2x128xf32>
    %196 = vector.extract_strided_slice %164 {offsets = [0, 128], sizes = [2, 128], strides = [1, 1]} : vector<2x512xf32> to vector<2x128xf32>
    %197 = arith.negf %196 : vector<2x128xf32>
    %198 = math.exp %197 : vector<2x128xf32>
    %cst_54 = arith.constant 1.000000e+00 : f32
    %199 = vector.broadcast %cst_54 : f32 to vector<2x128xf32>
    %200 = arith.addf %199, %198 : vector<2x128xf32>
    %201 = arith.divf %199, %200 : vector<2x128xf32>
    %202 = vector.extract_strided_slice %164 {offsets = [0, 256], sizes = [2, 128], strides = [1, 1]} : vector<2x512xf32> to vector<2x128xf32>
    %203 = math.tanh %202 : vector<2x128xf32>
    %204 = vector.extract_strided_slice %164 {offsets = [0, 384], sizes = [2, 128], strides = [1, 1]} : vector<2x512xf32> to vector<2x128xf32>
    %205 = arith.negf %204 : vector<2x128xf32>
    %206 = math.exp %205 : vector<2x128xf32>
    %cst_55 = arith.constant 1.000000e+00 : f32
    %207 = vector.broadcast %cst_55 : f32 to vector<2x128xf32>
    %208 = arith.addf %207, %206 : vector<2x128xf32>
    %209 = arith.divf %207, %208 : vector<2x128xf32>
    %210 = arith.mulf %201, %142 : vector<2x128xf32>
    %211 = arith.mulf %195, %203 : vector<2x128xf32>
    %212 = arith.addf %210, %211 : vector<2x128xf32>
    %213 = math.tanh %212 : vector<2x128xf32>
    %214 = arith.mulf %209, %213 : vector<2x128xf32>
    %c3 = arith.constant 3 : index
    %c0_56 = arith.constant 0 : index
    %c0_57 = arith.constant 0 : index
    %215 = vector.load %arg0[%c3, %c0_56, %c0_57] : memref<8x2x1xf32, #tpu.memory_space<vmem>>, vector<1x2x1xf32>
    %216 = vector.shape_cast %215 : vector<1x2x1xf32> to vector<2x1xf32>
    %217 = vector.broadcast %216 : vector<2x1xf32> to vector<2x512xf32>
    %218 = vector.broadcast %1 : vector<1x512xf32> to vector<2x512xf32>
    %219 = arith.mulf %217, %218 : vector<2x512xf32>
    %c0_58 = arith.constant 0 : index
    %c0_59 = arith.constant 0 : index
    %220 = vector.load %arg2[%c0_58, %c0_59] : memref<128x512xf32, #tpu.memory_space<vmem>>, vector<128x512xf32>
    %cst_60 = arith.constant dense<0.000000e+00> : vector<2x512xf32>
    %221 = tpu.matmul %189, %220, %cst_60 {dimension_numbers = #tpu.dot_dimension_numbers<[1], [0], [0], [1], [0, 0, 1, 1], [], []>} : vector<2x128xf32>, vector<128x512xf32>, vector<2x512xf32> -> vector<2x512xf32>
    %222 = arith.addf %219, %221 : vector<2x512xf32>
    %223 = vector.broadcast %3 : vector<1x512xf32> to vector<2x512xf32>
    %224 = arith.addf %222, %223 : vector<2x512xf32>
    %c4 = arith.constant 4 : index
    %c0_61 = arith.constant 0 : index
    %c0_62 = arith.constant 0 : index
    %225 = vector.load %arg0[%c4, %c0_61, %c0_62] : memref<8x2x1xf32, #tpu.memory_space<vmem>>, vector<1x2x1xf32>
    %226 = vector.shape_cast %225 : vector<1x2x1xf32> to vector<2x1xf32>
    %227 = vector.broadcast %226 : vector<2x1xf32> to vector<2x512xf32>
    %228 = vector.broadcast %2 : vector<1x512xf32> to vector<2x512xf32>
    %229 = arith.mulf %227, %228 : vector<2x512xf32>
    %c0_63 = arith.constant 0 : index
    %c0_64 = arith.constant 0 : index
    %230 = vector.load %arg5[%c0_63, %c0_64] : memref<128x512xf32, #tpu.memory_space<vmem>>, vector<128x512xf32>
    %cst_65 = arith.constant dense<0.000000e+00> : vector<2x512xf32>
    %231 = tpu.matmul %214, %230, %cst_65 {dimension_numbers = #tpu.dot_dimension_numbers<[1], [0], [0], [1], [0, 0, 1, 1], [], []>} : vector<2x128xf32>, vector<128x512xf32>, vector<2x512xf32> -> vector<2x512xf32>
    %232 = arith.addf %229, %231 : vector<2x512xf32>
    %233 = vector.broadcast %4 : vector<1x512xf32> to vector<2x512xf32>
    %234 = arith.addf %232, %233 : vector<2x512xf32>
    %235 = vector.extract_strided_slice %224 {offsets = [0, 0], sizes = [2, 128], strides = [1, 1]} : vector<2x512xf32> to vector<2x128xf32>
    %236 = arith.negf %235 : vector<2x128xf32>
    %237 = math.exp %236 : vector<2x128xf32>
    %cst_66 = arith.constant 1.000000e+00 : f32
    %238 = vector.broadcast %cst_66 : f32 to vector<2x128xf32>
    %239 = arith.addf %238, %237 : vector<2x128xf32>
    %240 = arith.divf %238, %239 : vector<2x128xf32>
    %241 = vector.extract_strided_slice %224 {offsets = [0, 128], sizes = [2, 128], strides = [1, 1]} : vector<2x512xf32> to vector<2x128xf32>
    %242 = arith.negf %241 : vector<2x128xf32>
    %243 = math.exp %242 : vector<2x128xf32>
    %cst_67 = arith.constant 1.000000e+00 : f32
    %244 = vector.broadcast %cst_67 : f32 to vector<2x128xf32>
    %245 = arith.addf %244, %243 : vector<2x128xf32>
    %246 = arith.divf %244, %245 : vector<2x128xf32>
    %247 = vector.extract_strided_slice %224 {offsets = [0, 256], sizes = [2, 128], strides = [1, 1]} : vector<2x512xf32> to vector<2x128xf32>
    %248 = math.tanh %247 : vector<2x128xf32>
    %249 = vector.extract_strided_slice %224 {offsets = [0, 384], sizes = [2, 128], strides = [1, 1]} : vector<2x512xf32> to vector<2x128xf32>
    %250 = arith.negf %249 : vector<2x128xf32>
    %251 = math.exp %250 : vector<2x128xf32>
    %cst_68 = arith.constant 1.000000e+00 : f32
    %252 = vector.broadcast %cst_68 : f32 to vector<2x128xf32>
    %253 = arith.addf %252, %251 : vector<2x128xf32>
    %254 = arith.divf %252, %253 : vector<2x128xf32>
    %255 = arith.mulf %246, %187 : vector<2x128xf32>
    %256 = arith.mulf %240, %248 : vector<2x128xf32>
    %257 = arith.addf %255, %256 : vector<2x128xf32>
    %258 = math.tanh %257 : vector<2x128xf32>
    %259 = arith.mulf %254, %258 : vector<2x128xf32>
    %260 = vector.extract_strided_slice %234 {offsets = [0, 0], sizes = [2, 128], strides = [1, 1]} : vector<2x512xf32> to vector<2x128xf32>
    %261 = arith.negf %260 : vector<2x128xf32>
    %262 = math.exp %261 : vector<2x128xf32>
    %cst_69 = arith.constant 1.000000e+00 : f32
    %263 = vector.broadcast %cst_69 : f32 to vector<2x128xf32>
    %264 = arith.addf %263, %262 : vector<2x128xf32>
    %265 = arith.divf %263, %264 : vector<2x128xf32>
    %266 = vector.extract_strided_slice %234 {offsets = [0, 128], sizes = [2, 128], strides = [1, 1]} : vector<2x512xf32> to vector<2x128xf32>
    %267 = arith.negf %266 : vector<2x128xf32>
    %268 = math.exp %267 : vector<2x128xf32>
    %cst_70 = arith.constant 1.000000e+00 : f32
    %269 = vector.broadcast %cst_70 : f32 to vector<2x128xf32>
    %270 = arith.addf %269, %268 : vector<2x128xf32>
    %271 = arith.divf %269, %270 : vector<2x128xf32>
    %272 = vector.extract_strided_slice %234 {offsets = [0, 256], sizes = [2, 128], strides = [1, 1]} : vector<2x512xf32> to vector<2x128xf32>
    %273 = math.tanh %272 : vector<2x128xf32>
    %274 = vector.extract_strided_slice %234 {offsets = [0, 384], sizes = [2, 128], strides = [1, 1]} : vector<2x512xf32> to vector<2x128xf32>
    %275 = arith.negf %274 : vector<2x128xf32>
    %276 = math.exp %275 : vector<2x128xf32>
    %cst_71 = arith.constant 1.000000e+00 : f32
    %277 = vector.broadcast %cst_71 : f32 to vector<2x128xf32>
    %278 = arith.addf %277, %276 : vector<2x128xf32>
    %279 = arith.divf %277, %278 : vector<2x128xf32>
    %280 = arith.mulf %271, %212 : vector<2x128xf32>
    %281 = arith.mulf %265, %273 : vector<2x128xf32>
    %282 = arith.addf %280, %281 : vector<2x128xf32>
    %283 = math.tanh %282 : vector<2x128xf32>
    %284 = arith.mulf %279, %283 : vector<2x128xf32>
    %c4_72 = arith.constant 4 : index
    %c0_73 = arith.constant 0 : index
    %c0_74 = arith.constant 0 : index
    %285 = vector.load %arg0[%c4_72, %c0_73, %c0_74] : memref<8x2x1xf32, #tpu.memory_space<vmem>>, vector<1x2x1xf32>
    %286 = vector.shape_cast %285 : vector<1x2x1xf32> to vector<2x1xf32>
    %287 = vector.broadcast %286 : vector<2x1xf32> to vector<2x512xf32>
    %288 = vector.broadcast %1 : vector<1x512xf32> to vector<2x512xf32>
    %289 = arith.mulf %287, %288 : vector<2x512xf32>
    %c0_75 = arith.constant 0 : index
    %c0_76 = arith.constant 0 : index
    %290 = vector.load %arg2[%c0_75, %c0_76] : memref<128x512xf32, #tpu.memory_space<vmem>>, vector<128x512xf32>
    %cst_77 = arith.constant dense<0.000000e+00> : vector<2x512xf32>
    %291 = tpu.matmul %259, %290, %cst_77 {dimension_numbers = #tpu.dot_dimension_numbers<[1], [0], [0], [1], [0, 0, 1, 1], [], []>} : vector<2x128xf32>, vector<128x512xf32>, vector<2x512xf32> -> vector<2x512xf32>
    %292 = arith.addf %289, %291 : vector<2x512xf32>
    %293 = vector.broadcast %3 : vector<1x512xf32> to vector<2x512xf32>
    %294 = arith.addf %292, %293 : vector<2x512xf32>
    %c3_78 = arith.constant 3 : index
    %c0_79 = arith.constant 0 : index
    %c0_80 = arith.constant 0 : index
    %295 = vector.load %arg0[%c3_78, %c0_79, %c0_80] : memref<8x2x1xf32, #tpu.memory_space<vmem>>, vector<1x2x1xf32>
    %296 = vector.shape_cast %295 : vector<1x2x1xf32> to vector<2x1xf32>
    %297 = vector.broadcast %296 : vector<2x1xf32> to vector<2x512xf32>
    %298 = vector.broadcast %2 : vector<1x512xf32> to vector<2x512xf32>
    %299 = arith.mulf %297, %298 : vector<2x512xf32>
    %c0_81 = arith.constant 0 : index
    %c0_82 = arith.constant 0 : index
    %300 = vector.load %arg5[%c0_81, %c0_82] : memref<128x512xf32, #tpu.memory_space<vmem>>, vector<128x512xf32>
    %cst_83 = arith.constant dense<0.000000e+00> : vector<2x512xf32>
    %301 = tpu.matmul %284, %300, %cst_83 {dimension_numbers = #tpu.dot_dimension_numbers<[1], [0], [0], [1], [0, 0, 1, 1], [], []>} : vector<2x128xf32>, vector<128x512xf32>, vector<2x512xf32> -> vector<2x512xf32>
    %302 = arith.addf %299, %301 : vector<2x512xf32>
    %303 = vector.broadcast %4 : vector<1x512xf32> to vector<2x512xf32>
    %304 = arith.addf %302, %303 : vector<2x512xf32>
    %305 = vector.extract_strided_slice %294 {offsets = [0, 0], sizes = [2, 128], strides = [1, 1]} : vector<2x512xf32> to vector<2x128xf32>
    %306 = arith.negf %305 : vector<2x128xf32>
    %307 = math.exp %306 : vector<2x128xf32>
    %cst_84 = arith.constant 1.000000e+00 : f32
    %308 = vector.broadcast %cst_84 : f32 to vector<2x128xf32>
    %309 = arith.addf %308, %307 : vector<2x128xf32>
    %310 = arith.divf %308, %309 : vector<2x128xf32>
    %311 = vector.extract_strided_slice %294 {offsets = [0, 128], sizes = [2, 128], strides = [1, 1]} : vector<2x512xf32> to vector<2x128xf32>
    %312 = arith.negf %311 : vector<2x128xf32>
    %313 = math.exp %312 : vector<2x128xf32>
    %cst_85 = arith.constant 1.000000e+00 : f32
    %314 = vector.broadcast %cst_85 : f32 to vector<2x128xf32>
    %315 = arith.addf %314, %313 : vector<2x128xf32>
    %316 = arith.divf %314, %315 : vector<2x128xf32>
    %317 = vector.extract_strided_slice %294 {offsets = [0, 256], sizes = [2, 128], strides = [1, 1]} : vector<2x512xf32> to vector<2x128xf32>
    %318 = math.tanh %317 : vector<2x128xf32>
    %319 = vector.extract_strided_slice %294 {offsets = [0, 384], sizes = [2, 128], strides = [1, 1]} : vector<2x512xf32> to vector<2x128xf32>
    %320 = arith.negf %319 : vector<2x128xf32>
    %321 = math.exp %320 : vector<2x128xf32>
    %cst_86 = arith.constant 1.000000e+00 : f32
    %322 = vector.broadcast %cst_86 : f32 to vector<2x128xf32>
    %323 = arith.addf %322, %321 : vector<2x128xf32>
    %324 = arith.divf %322, %323 : vector<2x128xf32>
    %325 = arith.mulf %316, %257 : vector<2x128xf32>
    %326 = arith.mulf %310, %318 : vector<2x128xf32>
    %327 = arith.addf %325, %326 : vector<2x128xf32>
    %328 = math.tanh %327 : vector<2x128xf32>
    %329 = arith.mulf %324, %328 : vector<2x128xf32>
    %330 = vector.extract_strided_slice %304 {offsets = [0, 0], sizes = [2, 128], strides = [1, 1]} : vector<2x512xf32> to vector<2x128xf32>
    %331 = arith.negf %330 : vector<2x128xf32>
    %332 = math.exp %331 : vector<2x128xf32>
    %cst_87 = arith.constant 1.000000e+00 : f32
    %333 = vector.broadcast %cst_87 : f32 to vector<2x128xf32>
    %334 = arith.addf %333, %332 : vector<2x128xf32>
    %335 = arith.divf %333, %334 : vector<2x128xf32>
    %336 = vector.extract_strided_slice %304 {offsets = [0, 128], sizes = [2, 128], strides = [1, 1]} : vector<2x512xf32> to vector<2x128xf32>
    %337 = arith.negf %336 : vector<2x128xf32>
    %338 = math.exp %337 : vector<2x128xf32>
    %cst_88 = arith.constant 1.000000e+00 : f32
    %339 = vector.broadcast %cst_88 : f32 to vector<2x128xf32>
    %340 = arith.addf %339, %338 : vector<2x128xf32>
    %341 = arith.divf %339, %340 : vector<2x128xf32>
    %342 = vector.extract_strided_slice %304 {offsets = [0, 256], sizes = [2, 128], strides = [1, 1]} : vector<2x512xf32> to vector<2x128xf32>
    %343 = math.tanh %342 : vector<2x128xf32>
    %344 = vector.extract_strided_slice %304 {offsets = [0, 384], sizes = [2, 128], strides = [1, 1]} : vector<2x512xf32> to vector<2x128xf32>
    %345 = arith.negf %344 : vector<2x128xf32>
    %346 = math.exp %345 : vector<2x128xf32>
    %cst_89 = arith.constant 1.000000e+00 : f32
    %347 = vector.broadcast %cst_89 : f32 to vector<2x128xf32>
    %348 = arith.addf %347, %346 : vector<2x128xf32>
    %349 = arith.divf %347, %348 : vector<2x128xf32>
    %350 = arith.mulf %341, %282 : vector<2x128xf32>
    %351 = arith.mulf %335, %343 : vector<2x128xf32>
    %352 = arith.addf %350, %351 : vector<2x128xf32>
    %353 = math.tanh %352 : vector<2x128xf32>
    %354 = arith.mulf %349, %353 : vector<2x128xf32>
    %c5_90 = arith.constant 5 : index
    %c0_91 = arith.constant 0 : index
    %c0_92 = arith.constant 0 : index
    %355 = vector.load %arg0[%c5_90, %c0_91, %c0_92] : memref<8x2x1xf32, #tpu.memory_space<vmem>>, vector<1x2x1xf32>
    %356 = vector.shape_cast %355 : vector<1x2x1xf32> to vector<2x1xf32>
    %357 = vector.broadcast %356 : vector<2x1xf32> to vector<2x512xf32>
    %358 = vector.broadcast %1 : vector<1x512xf32> to vector<2x512xf32>
    %359 = arith.mulf %357, %358 : vector<2x512xf32>
    %c0_93 = arith.constant 0 : index
    %c0_94 = arith.constant 0 : index
    %360 = vector.load %arg2[%c0_93, %c0_94] : memref<128x512xf32, #tpu.memory_space<vmem>>, vector<128x512xf32>
    %cst_95 = arith.constant dense<0.000000e+00> : vector<2x512xf32>
    %361 = tpu.matmul %329, %360, %cst_95 {dimension_numbers = #tpu.dot_dimension_numbers<[1], [0], [0], [1], [0, 0, 1, 1], [], []>} : vector<2x128xf32>, vector<128x512xf32>, vector<2x512xf32> -> vector<2x512xf32>
    %362 = arith.addf %359, %361 : vector<2x512xf32>
    %363 = vector.broadcast %3 : vector<1x512xf32> to vector<2x512xf32>
    %364 = arith.addf %362, %363 : vector<2x512xf32>
    %c2_96 = arith.constant 2 : index
    %c0_97 = arith.constant 0 : index
    %c0_98 = arith.constant 0 : index
    %365 = vector.load %arg0[%c2_96, %c0_97, %c0_98] : memref<8x2x1xf32, #tpu.memory_space<vmem>>, vector<1x2x1xf32>
    %366 = vector.shape_cast %365 : vector<1x2x1xf32> to vector<2x1xf32>
    %367 = vector.broadcast %366 : vector<2x1xf32> to vector<2x512xf32>
    %368 = vector.broadcast %2 : vector<1x512xf32> to vector<2x512xf32>
    %369 = arith.mulf %367, %368 : vector<2x512xf32>
    %c0_99 = arith.constant 0 : index
    %c0_100 = arith.constant 0 : index
    %370 = vector.load %arg5[%c0_99, %c0_100] : memref<128x512xf32, #tpu.memory_space<vmem>>, vector<128x512xf32>
    %cst_101 = arith.constant dense<0.000000e+00> : vector<2x512xf32>
    %371 = tpu.matmul %354, %370, %cst_101 {dimension_numbers = #tpu.dot_dimension_numbers<[1], [0], [0], [1], [0, 0, 1, 1], [], []>} : vector<2x128xf32>, vector<128x512xf32>, vector<2x512xf32> -> vector<2x512xf32>
    %372 = arith.addf %369, %371 : vector<2x512xf32>
    %373 = vector.broadcast %4 : vector<1x512xf32> to vector<2x512xf32>
    %374 = arith.addf %372, %373 : vector<2x512xf32>
    %375 = vector.extract_strided_slice %364 {offsets = [0, 0], sizes = [2, 128], strides = [1, 1]} : vector<2x512xf32> to vector<2x128xf32>
    %376 = arith.negf %375 : vector<2x128xf32>
    %377 = math.exp %376 : vector<2x128xf32>
    %cst_102 = arith.constant 1.000000e+00 : f32
    %378 = vector.broadcast %cst_102 : f32 to vector<2x128xf32>
    %379 = arith.addf %378, %377 : vector<2x128xf32>
    %380 = arith.divf %378, %379 : vector<2x128xf32>
    %381 = vector.extract_strided_slice %364 {offsets = [0, 128], sizes = [2, 128], strides = [1, 1]} : vector<2x512xf32> to vector<2x128xf32>
    %382 = arith.negf %381 : vector<2x128xf32>
    %383 = math.exp %382 : vector<2x128xf32>
    %cst_103 = arith.constant 1.000000e+00 : f32
    %384 = vector.broadcast %cst_103 : f32 to vector<2x128xf32>
    %385 = arith.addf %384, %383 : vector<2x128xf32>
    %386 = arith.divf %384, %385 : vector<2x128xf32>
    %387 = vector.extract_strided_slice %364 {offsets = [0, 256], sizes = [2, 128], strides = [1, 1]} : vector<2x512xf32> to vector<2x128xf32>
    %388 = math.tanh %387 : vector<2x128xf32>
    %389 = vector.extract_strided_slice %364 {offsets = [0, 384], sizes = [2, 128], strides = [1, 1]} : vector<2x512xf32> to vector<2x128xf32>
    %390 = arith.negf %389 : vector<2x128xf32>
    %391 = math.exp %390 : vector<2x128xf32>
    %cst_104 = arith.constant 1.000000e+00 : f32
    %392 = vector.broadcast %cst_104 : f32 to vector<2x128xf32>
    %393 = arith.addf %392, %391 : vector<2x128xf32>
    %394 = arith.divf %392, %393 : vector<2x128xf32>
    %395 = arith.mulf %386, %327 : vector<2x128xf32>
    %396 = arith.mulf %380, %388 : vector<2x128xf32>
    %397 = arith.addf %395, %396 : vector<2x128xf32>
    %398 = math.tanh %397 : vector<2x128xf32>
    %399 = arith.mulf %394, %398 : vector<2x128xf32>
    %400 = vector.extract_strided_slice %374 {offsets = [0, 0], sizes = [2, 128], strides = [1, 1]} : vector<2x512xf32> to vector<2x128xf32>
    %401 = arith.negf %400 : vector<2x128xf32>
    %402 = math.exp %401 : vector<2x128xf32>
    %cst_105 = arith.constant 1.000000e+00 : f32
    %403 = vector.broadcast %cst_105 : f32 to vector<2x128xf32>
    %404 = arith.addf %403, %402 : vector<2x128xf32>
    %405 = arith.divf %403, %404 : vector<2x128xf32>
    %406 = vector.extract_strided_slice %374 {offsets = [0, 128], sizes = [2, 128], strides = [1, 1]} : vector<2x512xf32> to vector<2x128xf32>
    %407 = arith.negf %406 : vector<2x128xf32>
    %408 = math.exp %407 : vector<2x128xf32>
    %cst_106 = arith.constant 1.000000e+00 : f32
    %409 = vector.broadcast %cst_106 : f32 to vector<2x128xf32>
    %410 = arith.addf %409, %408 : vector<2x128xf32>
    %411 = arith.divf %409, %410 : vector<2x128xf32>
    %412 = vector.extract_strided_slice %374 {offsets = [0, 256], sizes = [2, 128], strides = [1, 1]} : vector<2x512xf32> to vector<2x128xf32>
    %413 = math.tanh %412 : vector<2x128xf32>
    %414 = vector.extract_strided_slice %374 {offsets = [0, 384], sizes = [2, 128], strides = [1, 1]} : vector<2x512xf32> to vector<2x128xf32>
    %415 = arith.negf %414 : vector<2x128xf32>
    %416 = math.exp %415 : vector<2x128xf32>
    %cst_107 = arith.constant 1.000000e+00 : f32
    %417 = vector.broadcast %cst_107 : f32 to vector<2x128xf32>
    %418 = arith.addf %417, %416 : vector<2x128xf32>
    %419 = arith.divf %417, %418 : vector<2x128xf32>
    %420 = arith.mulf %411, %352 : vector<2x128xf32>
    %421 = arith.mulf %405, %413 : vector<2x128xf32>
    %422 = arith.addf %420, %421 : vector<2x128xf32>
    %423 = math.tanh %422 : vector<2x128xf32>
    %424 = arith.mulf %419, %423 : vector<2x128xf32>
    %c6_108 = arith.constant 6 : index
    %c0_109 = arith.constant 0 : index
    %c0_110 = arith.constant 0 : index
    %425 = vector.load %arg0[%c6_108, %c0_109, %c0_110] : memref<8x2x1xf32, #tpu.memory_space<vmem>>, vector<1x2x1xf32>
    %426 = vector.shape_cast %425 : vector<1x2x1xf32> to vector<2x1xf32>
    %427 = vector.broadcast %426 : vector<2x1xf32> to vector<2x512xf32>
    %428 = vector.broadcast %1 : vector<1x512xf32> to vector<2x512xf32>
    %429 = arith.mulf %427, %428 : vector<2x512xf32>
    %c0_111 = arith.constant 0 : index
    %c0_112 = arith.constant 0 : index
    %430 = vector.load %arg2[%c0_111, %c0_112] : memref<128x512xf32, #tpu.memory_space<vmem>>, vector<128x512xf32>
    %cst_113 = arith.constant dense<0.000000e+00> : vector<2x512xf32>
    %431 = tpu.matmul %399, %430, %cst_113 {dimension_numbers = #tpu.dot_dimension_numbers<[1], [0], [0], [1], [0, 0, 1, 1], [], []>} : vector<2x128xf32>, vector<128x512xf32>, vector<2x512xf32> -> vector<2x512xf32>
    %432 = arith.addf %429, %431 : vector<2x512xf32>
    %433 = vector.broadcast %3 : vector<1x512xf32> to vector<2x512xf32>
    %434 = arith.addf %432, %433 : vector<2x512xf32>
    %c1_114 = arith.constant 1 : index
    %c0_115 = arith.constant 0 : index
    %c0_116 = arith.constant 0 : index
    %435 = vector.load %arg0[%c1_114, %c0_115, %c0_116] : memref<8x2x1xf32, #tpu.memory_space<vmem>>, vector<1x2x1xf32>
    %436 = vector.shape_cast %435 : vector<1x2x1xf32> to vector<2x1xf32>
    %437 = vector.broadcast %436 : vector<2x1xf32> to vector<2x512xf32>
    %438 = vector.broadcast %2 : vector<1x512xf32> to vector<2x512xf32>
    %439 = arith.mulf %437, %438 : vector<2x512xf32>
    %c0_117 = arith.constant 0 : index
    %c0_118 = arith.constant 0 : index
    %440 = vector.load %arg5[%c0_117, %c0_118] : memref<128x512xf32, #tpu.memory_space<vmem>>, vector<128x512xf32>
    %cst_119 = arith.constant dense<0.000000e+00> : vector<2x512xf32>
    %441 = tpu.matmul %424, %440, %cst_119 {dimension_numbers = #tpu.dot_dimension_numbers<[1], [0], [0], [1], [0, 0, 1, 1], [], []>} : vector<2x128xf32>, vector<128x512xf32>, vector<2x512xf32> -> vector<2x512xf32>
    %442 = arith.addf %439, %441 : vector<2x512xf32>
    %443 = vector.broadcast %4 : vector<1x512xf32> to vector<2x512xf32>
    %444 = arith.addf %442, %443 : vector<2x512xf32>
    %445 = vector.extract_strided_slice %434 {offsets = [0, 0], sizes = [2, 128], strides = [1, 1]} : vector<2x512xf32> to vector<2x128xf32>
    %446 = arith.negf %445 : vector<2x128xf32>
    %447 = math.exp %446 : vector<2x128xf32>
    %cst_120 = arith.constant 1.000000e+00 : f32
    %448 = vector.broadcast %cst_120 : f32 to vector<2x128xf32>
    %449 = arith.addf %448, %447 : vector<2x128xf32>
    %450 = arith.divf %448, %449 : vector<2x128xf32>
    %451 = vector.extract_strided_slice %434 {offsets = [0, 128], sizes = [2, 128], strides = [1, 1]} : vector<2x512xf32> to vector<2x128xf32>
    %452 = arith.negf %451 : vector<2x128xf32>
    %453 = math.exp %452 : vector<2x128xf32>
    %cst_121 = arith.constant 1.000000e+00 : f32
    %454 = vector.broadcast %cst_121 : f32 to vector<2x128xf32>
    %455 = arith.addf %454, %453 : vector<2x128xf32>
    %456 = arith.divf %454, %455 : vector<2x128xf32>
    %457 = vector.extract_strided_slice %434 {offsets = [0, 256], sizes = [2, 128], strides = [1, 1]} : vector<2x512xf32> to vector<2x128xf32>
    %458 = math.tanh %457 : vector<2x128xf32>
    %459 = vector.extract_strided_slice %434 {offsets = [0, 384], sizes = [2, 128], strides = [1, 1]} : vector<2x512xf32> to vector<2x128xf32>
    %460 = arith.negf %459 : vector<2x128xf32>
    %461 = math.exp %460 : vector<2x128xf32>
    %cst_122 = arith.constant 1.000000e+00 : f32
    %462 = vector.broadcast %cst_122 : f32 to vector<2x128xf32>
    %463 = arith.addf %462, %461 : vector<2x128xf32>
    %464 = arith.divf %462, %463 : vector<2x128xf32>
    %465 = arith.mulf %456, %397 : vector<2x128xf32>
    %466 = arith.mulf %450, %458 : vector<2x128xf32>
    %467 = arith.addf %465, %466 : vector<2x128xf32>
    %468 = math.tanh %467 : vector<2x128xf32>
    %469 = arith.mulf %464, %468 : vector<2x128xf32>
    %470 = vector.extract_strided_slice %444 {offsets = [0, 0], sizes = [2, 128], strides = [1, 1]} : vector<2x512xf32> to vector<2x128xf32>
    %471 = arith.negf %470 : vector<2x128xf32>
    %472 = math.exp %471 : vector<2x128xf32>
    %cst_123 = arith.constant 1.000000e+00 : f32
    %473 = vector.broadcast %cst_123 : f32 to vector<2x128xf32>
    %474 = arith.addf %473, %472 : vector<2x128xf32>
    %475 = arith.divf %473, %474 : vector<2x128xf32>
    %476 = vector.extract_strided_slice %444 {offsets = [0, 128], sizes = [2, 128], strides = [1, 1]} : vector<2x512xf32> to vector<2x128xf32>
    %477 = arith.negf %476 : vector<2x128xf32>
    %478 = math.exp %477 : vector<2x128xf32>
    %cst_124 = arith.constant 1.000000e+00 : f32
    %479 = vector.broadcast %cst_124 : f32 to vector<2x128xf32>
    %480 = arith.addf %479, %478 : vector<2x128xf32>
    %481 = arith.divf %479, %480 : vector<2x128xf32>
    %482 = vector.extract_strided_slice %444 {offsets = [0, 256], sizes = [2, 128], strides = [1, 1]} : vector<2x512xf32> to vector<2x128xf32>
    %483 = math.tanh %482 : vector<2x128xf32>
    %484 = vector.extract_strided_slice %444 {offsets = [0, 384], sizes = [2, 128], strides = [1, 1]} : vector<2x512xf32> to vector<2x128xf32>
    %485 = arith.negf %484 : vector<2x128xf32>
    %486 = math.exp %485 : vector<2x128xf32>
    %cst_125 = arith.constant 1.000000e+00 : f32
    %487 = vector.broadcast %cst_125 : f32 to vector<2x128xf32>
    %488 = arith.addf %487, %486 : vector<2x128xf32>
    %489 = arith.divf %487, %488 : vector<2x128xf32>
    %490 = arith.mulf %481, %422 : vector<2x128xf32>
    %491 = arith.mulf %475, %483 : vector<2x128xf32>
    %492 = arith.addf %490, %491 : vector<2x128xf32>
    %493 = math.tanh %492 : vector<2x128xf32>
    %494 = arith.mulf %489, %493 : vector<2x128xf32>
    %c7_126 = arith.constant 7 : index
    %c0_127 = arith.constant 0 : index
    %c0_128 = arith.constant 0 : index
    %495 = vector.load %arg0[%c7_126, %c0_127, %c0_128] : memref<8x2x1xf32, #tpu.memory_space<vmem>>, vector<1x2x1xf32>
    %496 = vector.shape_cast %495 : vector<1x2x1xf32> to vector<2x1xf32>
    %497 = vector.broadcast %496 : vector<2x1xf32> to vector<2x512xf32>
    %498 = vector.broadcast %1 : vector<1x512xf32> to vector<2x512xf32>
    %499 = arith.mulf %497, %498 : vector<2x512xf32>
    %c0_129 = arith.constant 0 : index
    %c0_130 = arith.constant 0 : index
    %500 = vector.load %arg2[%c0_129, %c0_130] : memref<128x512xf32, #tpu.memory_space<vmem>>, vector<128x512xf32>
    %cst_131 = arith.constant dense<0.000000e+00> : vector<2x512xf32>
    %501 = tpu.matmul %469, %500, %cst_131 {dimension_numbers = #tpu.dot_dimension_numbers<[1], [0], [0], [1], [0, 0, 1, 1], [], []>} : vector<2x128xf32>, vector<128x512xf32>, vector<2x512xf32> -> vector<2x512xf32>
    %502 = arith.addf %499, %501 : vector<2x512xf32>
    %503 = vector.broadcast %3 : vector<1x512xf32> to vector<2x512xf32>
    %504 = arith.addf %502, %503 : vector<2x512xf32>
    %c0_132 = arith.constant 0 : index
    %c0_133 = arith.constant 0 : index
    %c0_134 = arith.constant 0 : index
    %505 = vector.load %arg0[%c0_132, %c0_133, %c0_134] : memref<8x2x1xf32, #tpu.memory_space<vmem>>, vector<1x2x1xf32>
    %506 = vector.shape_cast %505 : vector<1x2x1xf32> to vector<2x1xf32>
    %507 = vector.broadcast %506 : vector<2x1xf32> to vector<2x512xf32>
    %508 = vector.broadcast %2 : vector<1x512xf32> to vector<2x512xf32>
    %509 = arith.mulf %507, %508 : vector<2x512xf32>
    %c0_135 = arith.constant 0 : index
    %c0_136 = arith.constant 0 : index
    %510 = vector.load %arg5[%c0_135, %c0_136] : memref<128x512xf32, #tpu.memory_space<vmem>>, vector<128x512xf32>
    %cst_137 = arith.constant dense<0.000000e+00> : vector<2x512xf32>
    %511 = tpu.matmul %494, %510, %cst_137 {dimension_numbers = #tpu.dot_dimension_numbers<[1], [0], [0], [1], [0, 0, 1, 1], [], []>} : vector<2x128xf32>, vector<128x512xf32>, vector<2x512xf32> -> vector<2x512xf32>
    %512 = arith.addf %509, %511 : vector<2x512xf32>
    %513 = vector.broadcast %4 : vector<1x512xf32> to vector<2x512xf32>
    %514 = arith.addf %512, %513 : vector<2x512xf32>
    %515 = vector.extract_strided_slice %504 {offsets = [0, 0], sizes = [2, 128], strides = [1, 1]} : vector<2x512xf32> to vector<2x128xf32>
    %516 = arith.negf %515 : vector<2x128xf32>
    %517 = math.exp %516 : vector<2x128xf32>
    %cst_138 = arith.constant 1.000000e+00 : f32
    %518 = vector.broadcast %cst_138 : f32 to vector<2x128xf32>
    %519 = arith.addf %518, %517 : vector<2x128xf32>
    %520 = arith.divf %518, %519 : vector<2x128xf32>
    %521 = vector.extract_strided_slice %504 {offsets = [0, 128], sizes = [2, 128], strides = [1, 1]} : vector<2x512xf32> to vector<2x128xf32>
    %522 = arith.negf %521 : vector<2x128xf32>
    %523 = math.exp %522 : vector<2x128xf32>
    %cst_139 = arith.constant 1.000000e+00 : f32
    %524 = vector.broadcast %cst_139 : f32 to vector<2x128xf32>
    %525 = arith.addf %524, %523 : vector<2x128xf32>
    %526 = arith.divf %524, %525 : vector<2x128xf32>
    %527 = vector.extract_strided_slice %504 {offsets = [0, 256], sizes = [2, 128], strides = [1, 1]} : vector<2x512xf32> to vector<2x128xf32>
    %528 = math.tanh %527 : vector<2x128xf32>
    %529 = vector.extract_strided_slice %504 {offsets = [0, 384], sizes = [2, 128], strides = [1, 1]} : vector<2x512xf32> to vector<2x128xf32>
    %530 = arith.negf %529 : vector<2x128xf32>
    %531 = math.exp %530 : vector<2x128xf32>
    %cst_140 = arith.constant 1.000000e+00 : f32
    %532 = vector.broadcast %cst_140 : f32 to vector<2x128xf32>
    %533 = arith.addf %532, %531 : vector<2x128xf32>
    %534 = arith.divf %532, %533 : vector<2x128xf32>
    %535 = arith.mulf %526, %467 : vector<2x128xf32>
    %536 = arith.mulf %520, %528 : vector<2x128xf32>
    %537 = arith.addf %535, %536 : vector<2x128xf32>
    %538 = math.tanh %537 : vector<2x128xf32>
    %539 = arith.mulf %534, %538 : vector<2x128xf32>
    %540 = vector.extract_strided_slice %514 {offsets = [0, 0], sizes = [2, 128], strides = [1, 1]} : vector<2x512xf32> to vector<2x128xf32>
    %541 = arith.negf %540 : vector<2x128xf32>
    %542 = math.exp %541 : vector<2x128xf32>
    %cst_141 = arith.constant 1.000000e+00 : f32
    %543 = vector.broadcast %cst_141 : f32 to vector<2x128xf32>
    %544 = arith.addf %543, %542 : vector<2x128xf32>
    %545 = arith.divf %543, %544 : vector<2x128xf32>
    %546 = vector.extract_strided_slice %514 {offsets = [0, 128], sizes = [2, 128], strides = [1, 1]} : vector<2x512xf32> to vector<2x128xf32>
    %547 = arith.negf %546 : vector<2x128xf32>
    %548 = math.exp %547 : vector<2x128xf32>
    %cst_142 = arith.constant 1.000000e+00 : f32
    %549 = vector.broadcast %cst_142 : f32 to vector<2x128xf32>
    %550 = arith.addf %549, %548 : vector<2x128xf32>
    %551 = arith.divf %549, %550 : vector<2x128xf32>
    %552 = vector.extract_strided_slice %514 {offsets = [0, 256], sizes = [2, 128], strides = [1, 1]} : vector<2x512xf32> to vector<2x128xf32>
    %553 = math.tanh %552 : vector<2x128xf32>
    %554 = vector.extract_strided_slice %514 {offsets = [0, 384], sizes = [2, 128], strides = [1, 1]} : vector<2x512xf32> to vector<2x128xf32>
    %555 = arith.negf %554 : vector<2x128xf32>
    %556 = math.exp %555 : vector<2x128xf32>
    %cst_143 = arith.constant 1.000000e+00 : f32
    %557 = vector.broadcast %cst_143 : f32 to vector<2x128xf32>
    %558 = arith.addf %557, %556 : vector<2x128xf32>
    %559 = arith.divf %557, %558 : vector<2x128xf32>
    %560 = arith.mulf %551, %492 : vector<2x128xf32>
    %561 = arith.mulf %545, %553 : vector<2x128xf32>
    %562 = arith.addf %560, %561 : vector<2x128xf32>
    %563 = math.tanh %562 : vector<2x128xf32>
    %564 = arith.mulf %559, %563 : vector<2x128xf32>
    %c0_144 = arith.constant 0 : index
    %c0_145 = arith.constant 0 : index
    %565 = vector.load %arg9[%c0_144, %c0_145] : memref<1x512xf32, #tpu.memory_space<vmem>>, vector<1x512xf32>
    %c0_146 = arith.constant 0 : index
    %c0_147 = arith.constant 0 : index
    %566 = vector.load %arg12[%c0_146, %c0_147] : memref<1x512xf32, #tpu.memory_space<vmem>>, vector<1x512xf32>
    %567 = tpu.concatenate %49, %564 in 1 : vector<2x128xf32>, vector<2x128xf32> -> vector<2x256xf32>
    %568 = tpu.concatenate %539, %74 in 1 : vector<2x128xf32>, vector<2x128xf32> -> vector<2x256xf32>
    %c0_148 = arith.constant 0 : index
    %c0_149 = arith.constant 0 : index
    %569 = vector.load %arg7[%c0_148, %c0_149] : memref<256x512xf32, #tpu.memory_space<vmem>>, vector<256x512xf32>
    %cst_150 = arith.constant dense<0.000000e+00> : vector<2x512xf32>
    %570 = tpu.matmul %567, %569, %cst_150 {dimension_numbers = #tpu.dot_dimension_numbers<[1], [0], [0], [1], [0, 0, 1, 1], [], []>} : vector<2x256xf32>, vector<256x512xf32>, vector<2x512xf32> -> vector<2x512xf32>
    %c0_151 = arith.constant 0 : index
    %c0_152 = arith.constant 0 : index
    %571 = vector.load %arg8[%c0_151, %c0_152] : memref<128x512xf32, #tpu.memory_space<vmem>>, vector<128x512xf32>
    %cst_153 = arith.constant dense<0.000000e+00> : vector<2x512xf32>
    %572 = tpu.matmul %0, %571, %cst_153 {dimension_numbers = #tpu.dot_dimension_numbers<[1], [0], [0], [1], [0, 0, 1, 1], [], []>} : vector<2x128xf32>, vector<128x512xf32>, vector<2x512xf32> -> vector<2x512xf32>
    %573 = arith.addf %570, %572 : vector<2x512xf32>
    %574 = vector.broadcast %565 : vector<1x512xf32> to vector<2x512xf32>
    %575 = arith.addf %573, %574 : vector<2x512xf32>
    %c0_154 = arith.constant 0 : index
    %c0_155 = arith.constant 0 : index
    %576 = vector.load %arg10[%c0_154, %c0_155] : memref<256x512xf32, #tpu.memory_space<vmem>>, vector<256x512xf32>
    %cst_156 = arith.constant dense<0.000000e+00> : vector<2x512xf32>
    %577 = tpu.matmul %568, %576, %cst_156 {dimension_numbers = #tpu.dot_dimension_numbers<[1], [0], [0], [1], [0, 0, 1, 1], [], []>} : vector<2x256xf32>, vector<256x512xf32>, vector<2x512xf32> -> vector<2x512xf32>
    %c0_157 = arith.constant 0 : index
    %c0_158 = arith.constant 0 : index
    %578 = vector.load %arg11[%c0_157, %c0_158] : memref<128x512xf32, #tpu.memory_space<vmem>>, vector<128x512xf32>
    %cst_159 = arith.constant dense<0.000000e+00> : vector<2x512xf32>
    %579 = tpu.matmul %0, %578, %cst_159 {dimension_numbers = #tpu.dot_dimension_numbers<[1], [0], [0], [1], [0, 0, 1, 1], [], []>} : vector<2x128xf32>, vector<128x512xf32>, vector<2x512xf32> -> vector<2x512xf32>
    %580 = arith.addf %577, %579 : vector<2x512xf32>
    %581 = vector.broadcast %566 : vector<1x512xf32> to vector<2x512xf32>
    %582 = arith.addf %580, %581 : vector<2x512xf32>
    %583 = vector.extract_strided_slice %575 {offsets = [0, 0], sizes = [2, 128], strides = [1, 1]} : vector<2x512xf32> to vector<2x128xf32>
    %584 = arith.negf %583 : vector<2x128xf32>
    %585 = math.exp %584 : vector<2x128xf32>
    %cst_160 = arith.constant 1.000000e+00 : f32
    %586 = vector.broadcast %cst_160 : f32 to vector<2x128xf32>
    %587 = arith.addf %586, %585 : vector<2x128xf32>
    %588 = arith.divf %586, %587 : vector<2x128xf32>
    %589 = vector.extract_strided_slice %575 {offsets = [0, 128], sizes = [2, 128], strides = [1, 1]} : vector<2x512xf32> to vector<2x128xf32>
    %590 = arith.negf %589 : vector<2x128xf32>
    %591 = math.exp %590 : vector<2x128xf32>
    %cst_161 = arith.constant 1.000000e+00 : f32
    %592 = vector.broadcast %cst_161 : f32 to vector<2x128xf32>
    %593 = arith.addf %592, %591 : vector<2x128xf32>
    %594 = arith.divf %592, %593 : vector<2x128xf32>
    %595 = vector.extract_strided_slice %575 {offsets = [0, 256], sizes = [2, 128], strides = [1, 1]} : vector<2x512xf32> to vector<2x128xf32>
    %596 = math.tanh %595 : vector<2x128xf32>
    %597 = vector.extract_strided_slice %575 {offsets = [0, 384], sizes = [2, 128], strides = [1, 1]} : vector<2x512xf32> to vector<2x128xf32>
    %598 = arith.negf %597 : vector<2x128xf32>
    %599 = math.exp %598 : vector<2x128xf32>
    %cst_162 = arith.constant 1.000000e+00 : f32
    %600 = vector.broadcast %cst_162 : f32 to vector<2x128xf32>
    %601 = arith.addf %600, %599 : vector<2x128xf32>
    %602 = arith.divf %600, %601 : vector<2x128xf32>
    %603 = arith.mulf %594, %0 : vector<2x128xf32>
    %604 = arith.mulf %588, %596 : vector<2x128xf32>
    %605 = arith.addf %603, %604 : vector<2x128xf32>
    %606 = math.tanh %605 : vector<2x128xf32>
    %607 = arith.mulf %602, %606 : vector<2x128xf32>
    %608 = vector.extract_strided_slice %582 {offsets = [0, 0], sizes = [2, 128], strides = [1, 1]} : vector<2x512xf32> to vector<2x128xf32>
    %609 = arith.negf %608 : vector<2x128xf32>
    %610 = math.exp %609 : vector<2x128xf32>
    %cst_163 = arith.constant 1.000000e+00 : f32
    %611 = vector.broadcast %cst_163 : f32 to vector<2x128xf32>
    %612 = arith.addf %611, %610 : vector<2x128xf32>
    %613 = arith.divf %611, %612 : vector<2x128xf32>
    %614 = vector.extract_strided_slice %582 {offsets = [0, 128], sizes = [2, 128], strides = [1, 1]} : vector<2x512xf32> to vector<2x128xf32>
    %615 = arith.negf %614 : vector<2x128xf32>
    %616 = math.exp %615 : vector<2x128xf32>
    %cst_164 = arith.constant 1.000000e+00 : f32
    %617 = vector.broadcast %cst_164 : f32 to vector<2x128xf32>
    %618 = arith.addf %617, %616 : vector<2x128xf32>
    %619 = arith.divf %617, %618 : vector<2x128xf32>
    %620 = vector.extract_strided_slice %582 {offsets = [0, 256], sizes = [2, 128], strides = [1, 1]} : vector<2x512xf32> to vector<2x128xf32>
    %621 = math.tanh %620 : vector<2x128xf32>
    %622 = vector.extract_strided_slice %582 {offsets = [0, 384], sizes = [2, 128], strides = [1, 1]} : vector<2x512xf32> to vector<2x128xf32>
    %623 = arith.negf %622 : vector<2x128xf32>
    %624 = math.exp %623 : vector<2x128xf32>
    %cst_165 = arith.constant 1.000000e+00 : f32
    %625 = vector.broadcast %cst_165 : f32 to vector<2x128xf32>
    %626 = arith.addf %625, %624 : vector<2x128xf32>
    %627 = arith.divf %625, %626 : vector<2x128xf32>
    %628 = arith.mulf %619, %0 : vector<2x128xf32>
    %629 = arith.mulf %613, %621 : vector<2x128xf32>
    %630 = arith.addf %628, %629 : vector<2x128xf32>
    %631 = math.tanh %630 : vector<2x128xf32>
    %632 = arith.mulf %627, %631 : vector<2x128xf32>
    %633 = tpu.concatenate %119, %494 in 1 : vector<2x128xf32>, vector<2x128xf32> -> vector<2x256xf32>
    %634 = tpu.concatenate %469, %144 in 1 : vector<2x128xf32>, vector<2x128xf32> -> vector<2x256xf32>
    %c0_166 = arith.constant 0 : index
    %c0_167 = arith.constant 0 : index
    %635 = vector.load %arg7[%c0_166, %c0_167] : memref<256x512xf32, #tpu.memory_space<vmem>>, vector<256x512xf32>
    %cst_168 = arith.constant dense<0.000000e+00> : vector<2x512xf32>
    %636 = tpu.matmul %633, %635, %cst_168 {dimension_numbers = #tpu.dot_dimension_numbers<[1], [0], [0], [1], [0, 0, 1, 1], [], []>} : vector<2x256xf32>, vector<256x512xf32>, vector<2x512xf32> -> vector<2x512xf32>
    %c0_169 = arith.constant 0 : index
    %c0_170 = arith.constant 0 : index
    %637 = vector.load %arg8[%c0_169, %c0_170] : memref<128x512xf32, #tpu.memory_space<vmem>>, vector<128x512xf32>
    %cst_171 = arith.constant dense<0.000000e+00> : vector<2x512xf32>
    %638 = tpu.matmul %607, %637, %cst_171 {dimension_numbers = #tpu.dot_dimension_numbers<[1], [0], [0], [1], [0, 0, 1, 1], [], []>} : vector<2x128xf32>, vector<128x512xf32>, vector<2x512xf32> -> vector<2x512xf32>
    %639 = arith.addf %636, %638 : vector<2x512xf32>
    %640 = vector.broadcast %565 : vector<1x512xf32> to vector<2x512xf32>
    %641 = arith.addf %639, %640 : vector<2x512xf32>
    %c0_172 = arith.constant 0 : index
    %c0_173 = arith.constant 0 : index
    %642 = vector.load %arg10[%c0_172, %c0_173] : memref<256x512xf32, #tpu.memory_space<vmem>>, vector<256x512xf32>
    %cst_174 = arith.constant dense<0.000000e+00> : vector<2x512xf32>
    %643 = tpu.matmul %634, %642, %cst_174 {dimension_numbers = #tpu.dot_dimension_numbers<[1], [0], [0], [1], [0, 0, 1, 1], [], []>} : vector<2x256xf32>, vector<256x512xf32>, vector<2x512xf32> -> vector<2x512xf32>
    %c0_175 = arith.constant 0 : index
    %c0_176 = arith.constant 0 : index
    %644 = vector.load %arg11[%c0_175, %c0_176] : memref<128x512xf32, #tpu.memory_space<vmem>>, vector<128x512xf32>
    %cst_177 = arith.constant dense<0.000000e+00> : vector<2x512xf32>
    %645 = tpu.matmul %632, %644, %cst_177 {dimension_numbers = #tpu.dot_dimension_numbers<[1], [0], [0], [1], [0, 0, 1, 1], [], []>} : vector<2x128xf32>, vector<128x512xf32>, vector<2x512xf32> -> vector<2x512xf32>
    %646 = arith.addf %643, %645 : vector<2x512xf32>
    %647 = vector.broadcast %566 : vector<1x512xf32> to vector<2x512xf32>
    %648 = arith.addf %646, %647 : vector<2x512xf32>
    %649 = vector.extract_strided_slice %641 {offsets = [0, 0], sizes = [2, 128], strides = [1, 1]} : vector<2x512xf32> to vector<2x128xf32>
    %650 = arith.negf %649 : vector<2x128xf32>
    %651 = math.exp %650 : vector<2x128xf32>
    %cst_178 = arith.constant 1.000000e+00 : f32
    %652 = vector.broadcast %cst_178 : f32 to vector<2x128xf32>
    %653 = arith.addf %652, %651 : vector<2x128xf32>
    %654 = arith.divf %652, %653 : vector<2x128xf32>
    %655 = vector.extract_strided_slice %641 {offsets = [0, 128], sizes = [2, 128], strides = [1, 1]} : vector<2x512xf32> to vector<2x128xf32>
    %656 = arith.negf %655 : vector<2x128xf32>
    %657 = math.exp %656 : vector<2x128xf32>
    %cst_179 = arith.constant 1.000000e+00 : f32
    %658 = vector.broadcast %cst_179 : f32 to vector<2x128xf32>
    %659 = arith.addf %658, %657 : vector<2x128xf32>
    %660 = arith.divf %658, %659 : vector<2x128xf32>
    %661 = vector.extract_strided_slice %641 {offsets = [0, 256], sizes = [2, 128], strides = [1, 1]} : vector<2x512xf32> to vector<2x128xf32>
    %662 = math.tanh %661 : vector<2x128xf32>
    %663 = vector.extract_strided_slice %641 {offsets = [0, 384], sizes = [2, 128], strides = [1, 1]} : vector<2x512xf32> to vector<2x128xf32>
    %664 = arith.negf %663 : vector<2x128xf32>
    %665 = math.exp %664 : vector<2x128xf32>
    %cst_180 = arith.constant 1.000000e+00 : f32
    %666 = vector.broadcast %cst_180 : f32 to vector<2x128xf32>
    %667 = arith.addf %666, %665 : vector<2x128xf32>
    %668 = arith.divf %666, %667 : vector<2x128xf32>
    %669 = arith.mulf %660, %605 : vector<2x128xf32>
    %670 = arith.mulf %654, %662 : vector<2x128xf32>
    %671 = arith.addf %669, %670 : vector<2x128xf32>
    %672 = math.tanh %671 : vector<2x128xf32>
    %673 = arith.mulf %668, %672 : vector<2x128xf32>
    %674 = vector.extract_strided_slice %648 {offsets = [0, 0], sizes = [2, 128], strides = [1, 1]} : vector<2x512xf32> to vector<2x128xf32>
    %675 = arith.negf %674 : vector<2x128xf32>
    %676 = math.exp %675 : vector<2x128xf32>
    %cst_181 = arith.constant 1.000000e+00 : f32
    %677 = vector.broadcast %cst_181 : f32 to vector<2x128xf32>
    %678 = arith.addf %677, %676 : vector<2x128xf32>
    %679 = arith.divf %677, %678 : vector<2x128xf32>
    %680 = vector.extract_strided_slice %648 {offsets = [0, 128], sizes = [2, 128], strides = [1, 1]} : vector<2x512xf32> to vector<2x128xf32>
    %681 = arith.negf %680 : vector<2x128xf32>
    %682 = math.exp %681 : vector<2x128xf32>
    %cst_182 = arith.constant 1.000000e+00 : f32
    %683 = vector.broadcast %cst_182 : f32 to vector<2x128xf32>
    %684 = arith.addf %683, %682 : vector<2x128xf32>
    %685 = arith.divf %683, %684 : vector<2x128xf32>
    %686 = vector.extract_strided_slice %648 {offsets = [0, 256], sizes = [2, 128], strides = [1, 1]} : vector<2x512xf32> to vector<2x128xf32>
    %687 = math.tanh %686 : vector<2x128xf32>
    %688 = vector.extract_strided_slice %648 {offsets = [0, 384], sizes = [2, 128], strides = [1, 1]} : vector<2x512xf32> to vector<2x128xf32>
    %689 = arith.negf %688 : vector<2x128xf32>
    %690 = math.exp %689 : vector<2x128xf32>
    %cst_183 = arith.constant 1.000000e+00 : f32
    %691 = vector.broadcast %cst_183 : f32 to vector<2x128xf32>
    %692 = arith.addf %691, %690 : vector<2x128xf32>
    %693 = arith.divf %691, %692 : vector<2x128xf32>
    %694 = arith.mulf %685, %630 : vector<2x128xf32>
    %695 = arith.mulf %679, %687 : vector<2x128xf32>
    %696 = arith.addf %694, %695 : vector<2x128xf32>
    %697 = math.tanh %696 : vector<2x128xf32>
    %698 = arith.mulf %693, %697 : vector<2x128xf32>
    %699 = tpu.concatenate %189, %424 in 1 : vector<2x128xf32>, vector<2x128xf32> -> vector<2x256xf32>
    %700 = tpu.concatenate %399, %214 in 1 : vector<2x128xf32>, vector<2x128xf32> -> vector<2x256xf32>
    %c0_184 = arith.constant 0 : index
    %c0_185 = arith.constant 0 : index
    %701 = vector.load %arg7[%c0_184, %c0_185] : memref<256x512xf32, #tpu.memory_space<vmem>>, vector<256x512xf32>
    %cst_186 = arith.constant dense<0.000000e+00> : vector<2x512xf32>
    %702 = tpu.matmul %699, %701, %cst_186 {dimension_numbers = #tpu.dot_dimension_numbers<[1], [0], [0], [1], [0, 0, 1, 1], [], []>} : vector<2x256xf32>, vector<256x512xf32>, vector<2x512xf32> -> vector<2x512xf32>
    %c0_187 = arith.constant 0 : index
    %c0_188 = arith.constant 0 : index
    %703 = vector.load %arg8[%c0_187, %c0_188] : memref<128x512xf32, #tpu.memory_space<vmem>>, vector<128x512xf32>
    %cst_189 = arith.constant dense<0.000000e+00> : vector<2x512xf32>
    %704 = tpu.matmul %673, %703, %cst_189 {dimension_numbers = #tpu.dot_dimension_numbers<[1], [0], [0], [1], [0, 0, 1, 1], [], []>} : vector<2x128xf32>, vector<128x512xf32>, vector<2x512xf32> -> vector<2x512xf32>
    %705 = arith.addf %702, %704 : vector<2x512xf32>
    %706 = vector.broadcast %565 : vector<1x512xf32> to vector<2x512xf32>
    %707 = arith.addf %705, %706 : vector<2x512xf32>
    %c0_190 = arith.constant 0 : index
    %c0_191 = arith.constant 0 : index
    %708 = vector.load %arg10[%c0_190, %c0_191] : memref<256x512xf32, #tpu.memory_space<vmem>>, vector<256x512xf32>
    %cst_192 = arith.constant dense<0.000000e+00> : vector<2x512xf32>
    %709 = tpu.matmul %700, %708, %cst_192 {dimension_numbers = #tpu.dot_dimension_numbers<[1], [0], [0], [1], [0, 0, 1, 1], [], []>} : vector<2x256xf32>, vector<256x512xf32>, vector<2x512xf32> -> vector<2x512xf32>
    %c0_193 = arith.constant 0 : index
    %c0_194 = arith.constant 0 : index
    %710 = vector.load %arg11[%c0_193, %c0_194] : memref<128x512xf32, #tpu.memory_space<vmem>>, vector<128x512xf32>
    %cst_195 = arith.constant dense<0.000000e+00> : vector<2x512xf32>
    %711 = tpu.matmul %698, %710, %cst_195 {dimension_numbers = #tpu.dot_dimension_numbers<[1], [0], [0], [1], [0, 0, 1, 1], [], []>} : vector<2x128xf32>, vector<128x512xf32>, vector<2x512xf32> -> vector<2x512xf32>
    %712 = arith.addf %709, %711 : vector<2x512xf32>
    %713 = vector.broadcast %566 : vector<1x512xf32> to vector<2x512xf32>
    %714 = arith.addf %712, %713 : vector<2x512xf32>
    %715 = vector.extract_strided_slice %707 {offsets = [0, 0], sizes = [2, 128], strides = [1, 1]} : vector<2x512xf32> to vector<2x128xf32>
    %716 = arith.negf %715 : vector<2x128xf32>
    %717 = math.exp %716 : vector<2x128xf32>
    %cst_196 = arith.constant 1.000000e+00 : f32
    %718 = vector.broadcast %cst_196 : f32 to vector<2x128xf32>
    %719 = arith.addf %718, %717 : vector<2x128xf32>
    %720 = arith.divf %718, %719 : vector<2x128xf32>
    %721 = vector.extract_strided_slice %707 {offsets = [0, 128], sizes = [2, 128], strides = [1, 1]} : vector<2x512xf32> to vector<2x128xf32>
    %722 = arith.negf %721 : vector<2x128xf32>
    %723 = math.exp %722 : vector<2x128xf32>
    %cst_197 = arith.constant 1.000000e+00 : f32
    %724 = vector.broadcast %cst_197 : f32 to vector<2x128xf32>
    %725 = arith.addf %724, %723 : vector<2x128xf32>
    %726 = arith.divf %724, %725 : vector<2x128xf32>
    %727 = vector.extract_strided_slice %707 {offsets = [0, 256], sizes = [2, 128], strides = [1, 1]} : vector<2x512xf32> to vector<2x128xf32>
    %728 = math.tanh %727 : vector<2x128xf32>
    %729 = vector.extract_strided_slice %707 {offsets = [0, 384], sizes = [2, 128], strides = [1, 1]} : vector<2x512xf32> to vector<2x128xf32>
    %730 = arith.negf %729 : vector<2x128xf32>
    %731 = math.exp %730 : vector<2x128xf32>
    %cst_198 = arith.constant 1.000000e+00 : f32
    %732 = vector.broadcast %cst_198 : f32 to vector<2x128xf32>
    %733 = arith.addf %732, %731 : vector<2x128xf32>
    %734 = arith.divf %732, %733 : vector<2x128xf32>
    %735 = arith.mulf %726, %671 : vector<2x128xf32>
    %736 = arith.mulf %720, %728 : vector<2x128xf32>
    %737 = arith.addf %735, %736 : vector<2x128xf32>
    %738 = math.tanh %737 : vector<2x128xf32>
    %739 = arith.mulf %734, %738 : vector<2x128xf32>
    %740 = vector.extract_strided_slice %714 {offsets = [0, 0], sizes = [2, 128], strides = [1, 1]} : vector<2x512xf32> to vector<2x128xf32>
    %741 = arith.negf %740 : vector<2x128xf32>
    %742 = math.exp %741 : vector<2x128xf32>
    %cst_199 = arith.constant 1.000000e+00 : f32
    %743 = vector.broadcast %cst_199 : f32 to vector<2x128xf32>
    %744 = arith.addf %743, %742 : vector<2x128xf32>
    %745 = arith.divf %743, %744 : vector<2x128xf32>
    %746 = vector.extract_strided_slice %714 {offsets = [0, 128], sizes = [2, 128], strides = [1, 1]} : vector<2x512xf32> to vector<2x128xf32>
    %747 = arith.negf %746 : vector<2x128xf32>
    %748 = math.exp %747 : vector<2x128xf32>
    %cst_200 = arith.constant 1.000000e+00 : f32
    %749 = vector.broadcast %cst_200 : f32 to vector<2x128xf32>
    %750 = arith.addf %749, %748 : vector<2x128xf32>
    %751 = arith.divf %749, %750 : vector<2x128xf32>
    %752 = vector.extract_strided_slice %714 {offsets = [0, 256], sizes = [2, 128], strides = [1, 1]} : vector<2x512xf32> to vector<2x128xf32>
    %753 = math.tanh %752 : vector<2x128xf32>
    %754 = vector.extract_strided_slice %714 {offsets = [0, 384], sizes = [2, 128], strides = [1, 1]} : vector<2x512xf32> to vector<2x128xf32>
    %755 = arith.negf %754 : vector<2x128xf32>
    %756 = math.exp %755 : vector<2x128xf32>
    %cst_201 = arith.constant 1.000000e+00 : f32
    %757 = vector.broadcast %cst_201 : f32 to vector<2x128xf32>
    %758 = arith.addf %757, %756 : vector<2x128xf32>
    %759 = arith.divf %757, %758 : vector<2x128xf32>
    %760 = arith.mulf %751, %696 : vector<2x128xf32>
    %761 = arith.mulf %745, %753 : vector<2x128xf32>
    %762 = arith.addf %760, %761 : vector<2x128xf32>
    %763 = math.tanh %762 : vector<2x128xf32>
    %764 = arith.mulf %759, %763 : vector<2x128xf32>
    %765 = tpu.concatenate %259, %354 in 1 : vector<2x128xf32>, vector<2x128xf32> -> vector<2x256xf32>
    %766 = tpu.concatenate %329, %284 in 1 : vector<2x128xf32>, vector<2x128xf32> -> vector<2x256xf32>
    %c0_202 = arith.constant 0 : index
    %c0_203 = arith.constant 0 : index
    %767 = vector.load %arg7[%c0_202, %c0_203] : memref<256x512xf32, #tpu.memory_space<vmem>>, vector<256x512xf32>
    %cst_204 = arith.constant dense<0.000000e+00> : vector<2x512xf32>
    %768 = tpu.matmul %765, %767, %cst_204 {dimension_numbers = #tpu.dot_dimension_numbers<[1], [0], [0], [1], [0, 0, 1, 1], [], []>} : vector<2x256xf32>, vector<256x512xf32>, vector<2x512xf32> -> vector<2x512xf32>
    %c0_205 = arith.constant 0 : index
    %c0_206 = arith.constant 0 : index
    %769 = vector.load %arg8[%c0_205, %c0_206] : memref<128x512xf32, #tpu.memory_space<vmem>>, vector<128x512xf32>
    %cst_207 = arith.constant dense<0.000000e+00> : vector<2x512xf32>
    %770 = tpu.matmul %739, %769, %cst_207 {dimension_numbers = #tpu.dot_dimension_numbers<[1], [0], [0], [1], [0, 0, 1, 1], [], []>} : vector<2x128xf32>, vector<128x512xf32>, vector<2x512xf32> -> vector<2x512xf32>
    %771 = arith.addf %768, %770 : vector<2x512xf32>
    %772 = vector.broadcast %565 : vector<1x512xf32> to vector<2x512xf32>
    %773 = arith.addf %771, %772 : vector<2x512xf32>
    %c0_208 = arith.constant 0 : index
    %c0_209 = arith.constant 0 : index
    %774 = vector.load %arg10[%c0_208, %c0_209] : memref<256x512xf32, #tpu.memory_space<vmem>>, vector<256x512xf32>
    %cst_210 = arith.constant dense<0.000000e+00> : vector<2x512xf32>
    %775 = tpu.matmul %766, %774, %cst_210 {dimension_numbers = #tpu.dot_dimension_numbers<[1], [0], [0], [1], [0, 0, 1, 1], [], []>} : vector<2x256xf32>, vector<256x512xf32>, vector<2x512xf32> -> vector<2x512xf32>
    %c0_211 = arith.constant 0 : index
    %c0_212 = arith.constant 0 : index
    %776 = vector.load %arg11[%c0_211, %c0_212] : memref<128x512xf32, #tpu.memory_space<vmem>>, vector<128x512xf32>
    %cst_213 = arith.constant dense<0.000000e+00> : vector<2x512xf32>
    %777 = tpu.matmul %764, %776, %cst_213 {dimension_numbers = #tpu.dot_dimension_numbers<[1], [0], [0], [1], [0, 0, 1, 1], [], []>} : vector<2x128xf32>, vector<128x512xf32>, vector<2x512xf32> -> vector<2x512xf32>
    %778 = arith.addf %775, %777 : vector<2x512xf32>
    %779 = vector.broadcast %566 : vector<1x512xf32> to vector<2x512xf32>
    %780 = arith.addf %778, %779 : vector<2x512xf32>
    %781 = vector.extract_strided_slice %773 {offsets = [0, 0], sizes = [2, 128], strides = [1, 1]} : vector<2x512xf32> to vector<2x128xf32>
    %782 = arith.negf %781 : vector<2x128xf32>
    %783 = math.exp %782 : vector<2x128xf32>
    %cst_214 = arith.constant 1.000000e+00 : f32
    %784 = vector.broadcast %cst_214 : f32 to vector<2x128xf32>
    %785 = arith.addf %784, %783 : vector<2x128xf32>
    %786 = arith.divf %784, %785 : vector<2x128xf32>
    %787 = vector.extract_strided_slice %773 {offsets = [0, 128], sizes = [2, 128], strides = [1, 1]} : vector<2x512xf32> to vector<2x128xf32>
    %788 = arith.negf %787 : vector<2x128xf32>
    %789 = math.exp %788 : vector<2x128xf32>
    %cst_215 = arith.constant 1.000000e+00 : f32
    %790 = vector.broadcast %cst_215 : f32 to vector<2x128xf32>
    %791 = arith.addf %790, %789 : vector<2x128xf32>
    %792 = arith.divf %790, %791 : vector<2x128xf32>
    %793 = vector.extract_strided_slice %773 {offsets = [0, 256], sizes = [2, 128], strides = [1, 1]} : vector<2x512xf32> to vector<2x128xf32>
    %794 = math.tanh %793 : vector<2x128xf32>
    %795 = vector.extract_strided_slice %773 {offsets = [0, 384], sizes = [2, 128], strides = [1, 1]} : vector<2x512xf32> to vector<2x128xf32>
    %796 = arith.negf %795 : vector<2x128xf32>
    %797 = math.exp %796 : vector<2x128xf32>
    %cst_216 = arith.constant 1.000000e+00 : f32
    %798 = vector.broadcast %cst_216 : f32 to vector<2x128xf32>
    %799 = arith.addf %798, %797 : vector<2x128xf32>
    %800 = arith.divf %798, %799 : vector<2x128xf32>
    %801 = arith.mulf %792, %737 : vector<2x128xf32>
    %802 = arith.mulf %786, %794 : vector<2x128xf32>
    %803 = arith.addf %801, %802 : vector<2x128xf32>
    %804 = math.tanh %803 : vector<2x128xf32>
    %805 = arith.mulf %800, %804 : vector<2x128xf32>
    %806 = vector.extract_strided_slice %780 {offsets = [0, 0], sizes = [2, 128], strides = [1, 1]} : vector<2x512xf32> to vector<2x128xf32>
    %807 = arith.negf %806 : vector<2x128xf32>
    %808 = math.exp %807 : vector<2x128xf32>
    %cst_217 = arith.constant 1.000000e+00 : f32
    %809 = vector.broadcast %cst_217 : f32 to vector<2x128xf32>
    %810 = arith.addf %809, %808 : vector<2x128xf32>
    %811 = arith.divf %809, %810 : vector<2x128xf32>
    %812 = vector.extract_strided_slice %780 {offsets = [0, 128], sizes = [2, 128], strides = [1, 1]} : vector<2x512xf32> to vector<2x128xf32>
    %813 = arith.negf %812 : vector<2x128xf32>
    %814 = math.exp %813 : vector<2x128xf32>
    %cst_218 = arith.constant 1.000000e+00 : f32
    %815 = vector.broadcast %cst_218 : f32 to vector<2x128xf32>
    %816 = arith.addf %815, %814 : vector<2x128xf32>
    %817 = arith.divf %815, %816 : vector<2x128xf32>
    %818 = vector.extract_strided_slice %780 {offsets = [0, 256], sizes = [2, 128], strides = [1, 1]} : vector<2x512xf32> to vector<2x128xf32>
    %819 = math.tanh %818 : vector<2x128xf32>
    %820 = vector.extract_strided_slice %780 {offsets = [0, 384], sizes = [2, 128], strides = [1, 1]} : vector<2x512xf32> to vector<2x128xf32>
    %821 = arith.negf %820 : vector<2x128xf32>
    %822 = math.exp %821 : vector<2x128xf32>
    %cst_219 = arith.constant 1.000000e+00 : f32
    %823 = vector.broadcast %cst_219 : f32 to vector<2x128xf32>
    %824 = arith.addf %823, %822 : vector<2x128xf32>
    %825 = arith.divf %823, %824 : vector<2x128xf32>
    %826 = arith.mulf %817, %762 : vector<2x128xf32>
    %827 = arith.mulf %811, %819 : vector<2x128xf32>
    %828 = arith.addf %826, %827 : vector<2x128xf32>
    %829 = math.tanh %828 : vector<2x128xf32>
    %830 = arith.mulf %825, %829 : vector<2x128xf32>
    %831 = tpu.concatenate %329, %284 in 1 : vector<2x128xf32>, vector<2x128xf32> -> vector<2x256xf32>
    %832 = tpu.concatenate %259, %354 in 1 : vector<2x128xf32>, vector<2x128xf32> -> vector<2x256xf32>
    %c0_220 = arith.constant 0 : index
    %c0_221 = arith.constant 0 : index
    %833 = vector.load %arg7[%c0_220, %c0_221] : memref<256x512xf32, #tpu.memory_space<vmem>>, vector<256x512xf32>
    %cst_222 = arith.constant dense<0.000000e+00> : vector<2x512xf32>
    %834 = tpu.matmul %831, %833, %cst_222 {dimension_numbers = #tpu.dot_dimension_numbers<[1], [0], [0], [1], [0, 0, 1, 1], [], []>} : vector<2x256xf32>, vector<256x512xf32>, vector<2x512xf32> -> vector<2x512xf32>
    %c0_223 = arith.constant 0 : index
    %c0_224 = arith.constant 0 : index
    %835 = vector.load %arg8[%c0_223, %c0_224] : memref<128x512xf32, #tpu.memory_space<vmem>>, vector<128x512xf32>
    %cst_225 = arith.constant dense<0.000000e+00> : vector<2x512xf32>
    %836 = tpu.matmul %805, %835, %cst_225 {dimension_numbers = #tpu.dot_dimension_numbers<[1], [0], [0], [1], [0, 0, 1, 1], [], []>} : vector<2x128xf32>, vector<128x512xf32>, vector<2x512xf32> -> vector<2x512xf32>
    %837 = arith.addf %834, %836 : vector<2x512xf32>
    %838 = vector.broadcast %565 : vector<1x512xf32> to vector<2x512xf32>
    %839 = arith.addf %837, %838 : vector<2x512xf32>
    %c0_226 = arith.constant 0 : index
    %c0_227 = arith.constant 0 : index
    %840 = vector.load %arg10[%c0_226, %c0_227] : memref<256x512xf32, #tpu.memory_space<vmem>>, vector<256x512xf32>
    %cst_228 = arith.constant dense<0.000000e+00> : vector<2x512xf32>
    %841 = tpu.matmul %832, %840, %cst_228 {dimension_numbers = #tpu.dot_dimension_numbers<[1], [0], [0], [1], [0, 0, 1, 1], [], []>} : vector<2x256xf32>, vector<256x512xf32>, vector<2x512xf32> -> vector<2x512xf32>
    %c0_229 = arith.constant 0 : index
    %c0_230 = arith.constant 0 : index
    %842 = vector.load %arg11[%c0_229, %c0_230] : memref<128x512xf32, #tpu.memory_space<vmem>>, vector<128x512xf32>
    %cst_231 = arith.constant dense<0.000000e+00> : vector<2x512xf32>
    %843 = tpu.matmul %830, %842, %cst_231 {dimension_numbers = #tpu.dot_dimension_numbers<[1], [0], [0], [1], [0, 0, 1, 1], [], []>} : vector<2x128xf32>, vector<128x512xf32>, vector<2x512xf32> -> vector<2x512xf32>
    %844 = arith.addf %841, %843 : vector<2x512xf32>
    %845 = vector.broadcast %566 : vector<1x512xf32> to vector<2x512xf32>
    %846 = arith.addf %844, %845 : vector<2x512xf32>
    %847 = vector.extract_strided_slice %839 {offsets = [0, 0], sizes = [2, 128], strides = [1, 1]} : vector<2x512xf32> to vector<2x128xf32>
    %848 = arith.negf %847 : vector<2x128xf32>
    %849 = math.exp %848 : vector<2x128xf32>
    %cst_232 = arith.constant 1.000000e+00 : f32
    %850 = vector.broadcast %cst_232 : f32 to vector<2x128xf32>
    %851 = arith.addf %850, %849 : vector<2x128xf32>
    %852 = arith.divf %850, %851 : vector<2x128xf32>
    %853 = vector.extract_strided_slice %839 {offsets = [0, 128], sizes = [2, 128], strides = [1, 1]} : vector<2x512xf32> to vector<2x128xf32>
    %854 = arith.negf %853 : vector<2x128xf32>
    %855 = math.exp %854 : vector<2x128xf32>
    %cst_233 = arith.constant 1.000000e+00 : f32
    %856 = vector.broadcast %cst_233 : f32 to vector<2x128xf32>
    %857 = arith.addf %856, %855 : vector<2x128xf32>
    %858 = arith.divf %856, %857 : vector<2x128xf32>
    %859 = vector.extract_strided_slice %839 {offsets = [0, 256], sizes = [2, 128], strides = [1, 1]} : vector<2x512xf32> to vector<2x128xf32>
    %860 = math.tanh %859 : vector<2x128xf32>
    %861 = vector.extract_strided_slice %839 {offsets = [0, 384], sizes = [2, 128], strides = [1, 1]} : vector<2x512xf32> to vector<2x128xf32>
    %862 = arith.negf %861 : vector<2x128xf32>
    %863 = math.exp %862 : vector<2x128xf32>
    %cst_234 = arith.constant 1.000000e+00 : f32
    %864 = vector.broadcast %cst_234 : f32 to vector<2x128xf32>
    %865 = arith.addf %864, %863 : vector<2x128xf32>
    %866 = arith.divf %864, %865 : vector<2x128xf32>
    %867 = arith.mulf %858, %803 : vector<2x128xf32>
    %868 = arith.mulf %852, %860 : vector<2x128xf32>
    %869 = arith.addf %867, %868 : vector<2x128xf32>
    %870 = math.tanh %869 : vector<2x128xf32>
    %871 = arith.mulf %866, %870 : vector<2x128xf32>
    %872 = vector.extract_strided_slice %846 {offsets = [0, 0], sizes = [2, 128], strides = [1, 1]} : vector<2x512xf32> to vector<2x128xf32>
    %873 = arith.negf %872 : vector<2x128xf32>
    %874 = math.exp %873 : vector<2x128xf32>
    %cst_235 = arith.constant 1.000000e+00 : f32
    %875 = vector.broadcast %cst_235 : f32 to vector<2x128xf32>
    %876 = arith.addf %875, %874 : vector<2x128xf32>
    %877 = arith.divf %875, %876 : vector<2x128xf32>
    %878 = vector.extract_strided_slice %846 {offsets = [0, 128], sizes = [2, 128], strides = [1, 1]} : vector<2x512xf32> to vector<2x128xf32>
    %879 = arith.negf %878 : vector<2x128xf32>
    %880 = math.exp %879 : vector<2x128xf32>
    %cst_236 = arith.constant 1.000000e+00 : f32
    %881 = vector.broadcast %cst_236 : f32 to vector<2x128xf32>
    %882 = arith.addf %881, %880 : vector<2x128xf32>
    %883 = arith.divf %881, %882 : vector<2x128xf32>
    %884 = vector.extract_strided_slice %846 {offsets = [0, 256], sizes = [2, 128], strides = [1, 1]} : vector<2x512xf32> to vector<2x128xf32>
    %885 = math.tanh %884 : vector<2x128xf32>
    %886 = vector.extract_strided_slice %846 {offsets = [0, 384], sizes = [2, 128], strides = [1, 1]} : vector<2x512xf32> to vector<2x128xf32>
    %887 = arith.negf %886 : vector<2x128xf32>
    %888 = math.exp %887 : vector<2x128xf32>
    %cst_237 = arith.constant 1.000000e+00 : f32
    %889 = vector.broadcast %cst_237 : f32 to vector<2x128xf32>
    %890 = arith.addf %889, %888 : vector<2x128xf32>
    %891 = arith.divf %889, %890 : vector<2x128xf32>
    %892 = arith.mulf %883, %828 : vector<2x128xf32>
    %893 = arith.mulf %877, %885 : vector<2x128xf32>
    %894 = arith.addf %892, %893 : vector<2x128xf32>
    %895 = math.tanh %894 : vector<2x128xf32>
    %896 = arith.mulf %891, %895 : vector<2x128xf32>
    %897 = tpu.concatenate %399, %214 in 1 : vector<2x128xf32>, vector<2x128xf32> -> vector<2x256xf32>
    %898 = tpu.concatenate %189, %424 in 1 : vector<2x128xf32>, vector<2x128xf32> -> vector<2x256xf32>
    %c0_238 = arith.constant 0 : index
    %c0_239 = arith.constant 0 : index
    %899 = vector.load %arg7[%c0_238, %c0_239] : memref<256x512xf32, #tpu.memory_space<vmem>>, vector<256x512xf32>
    %cst_240 = arith.constant dense<0.000000e+00> : vector<2x512xf32>
    %900 = tpu.matmul %897, %899, %cst_240 {dimension_numbers = #tpu.dot_dimension_numbers<[1], [0], [0], [1], [0, 0, 1, 1], [], []>} : vector<2x256xf32>, vector<256x512xf32>, vector<2x512xf32> -> vector<2x512xf32>
    %c0_241 = arith.constant 0 : index
    %c0_242 = arith.constant 0 : index
    %901 = vector.load %arg8[%c0_241, %c0_242] : memref<128x512xf32, #tpu.memory_space<vmem>>, vector<128x512xf32>
    %cst_243 = arith.constant dense<0.000000e+00> : vector<2x512xf32>
    %902 = tpu.matmul %871, %901, %cst_243 {dimension_numbers = #tpu.dot_dimension_numbers<[1], [0], [0], [1], [0, 0, 1, 1], [], []>} : vector<2x128xf32>, vector<128x512xf32>, vector<2x512xf32> -> vector<2x512xf32>
    %903 = arith.addf %900, %902 : vector<2x512xf32>
    %904 = vector.broadcast %565 : vector<1x512xf32> to vector<2x512xf32>
    %905 = arith.addf %903, %904 : vector<2x512xf32>
    %c0_244 = arith.constant 0 : index
    %c0_245 = arith.constant 0 : index
    %906 = vector.load %arg10[%c0_244, %c0_245] : memref<256x512xf32, #tpu.memory_space<vmem>>, vector<256x512xf32>
    %cst_246 = arith.constant dense<0.000000e+00> : vector<2x512xf32>
    %907 = tpu.matmul %898, %906, %cst_246 {dimension_numbers = #tpu.dot_dimension_numbers<[1], [0], [0], [1], [0, 0, 1, 1], [], []>} : vector<2x256xf32>, vector<256x512xf32>, vector<2x512xf32> -> vector<2x512xf32>
    %c0_247 = arith.constant 0 : index
    %c0_248 = arith.constant 0 : index
    %908 = vector.load %arg11[%c0_247, %c0_248] : memref<128x512xf32, #tpu.memory_space<vmem>>, vector<128x512xf32>
    %cst_249 = arith.constant dense<0.000000e+00> : vector<2x512xf32>
    %909 = tpu.matmul %896, %908, %cst_249 {dimension_numbers = #tpu.dot_dimension_numbers<[1], [0], [0], [1], [0, 0, 1, 1], [], []>} : vector<2x128xf32>, vector<128x512xf32>, vector<2x512xf32> -> vector<2x512xf32>
    %910 = arith.addf %907, %909 : vector<2x512xf32>
    %911 = vector.broadcast %566 : vector<1x512xf32> to vector<2x512xf32>
    %912 = arith.addf %910, %911 : vector<2x512xf32>
    %913 = vector.extract_strided_slice %905 {offsets = [0, 0], sizes = [2, 128], strides = [1, 1]} : vector<2x512xf32> to vector<2x128xf32>
    %914 = arith.negf %913 : vector<2x128xf32>
    %915 = math.exp %914 : vector<2x128xf32>
    %cst_250 = arith.constant 1.000000e+00 : f32
    %916 = vector.broadcast %cst_250 : f32 to vector<2x128xf32>
    %917 = arith.addf %916, %915 : vector<2x128xf32>
    %918 = arith.divf %916, %917 : vector<2x128xf32>
    %919 = vector.extract_strided_slice %905 {offsets = [0, 128], sizes = [2, 128], strides = [1, 1]} : vector<2x512xf32> to vector<2x128xf32>
    %920 = arith.negf %919 : vector<2x128xf32>
    %921 = math.exp %920 : vector<2x128xf32>
    %cst_251 = arith.constant 1.000000e+00 : f32
    %922 = vector.broadcast %cst_251 : f32 to vector<2x128xf32>
    %923 = arith.addf %922, %921 : vector<2x128xf32>
    %924 = arith.divf %922, %923 : vector<2x128xf32>
    %925 = vector.extract_strided_slice %905 {offsets = [0, 256], sizes = [2, 128], strides = [1, 1]} : vector<2x512xf32> to vector<2x128xf32>
    %926 = math.tanh %925 : vector<2x128xf32>
    %927 = vector.extract_strided_slice %905 {offsets = [0, 384], sizes = [2, 128], strides = [1, 1]} : vector<2x512xf32> to vector<2x128xf32>
    %928 = arith.negf %927 : vector<2x128xf32>
    %929 = math.exp %928 : vector<2x128xf32>
    %cst_252 = arith.constant 1.000000e+00 : f32
    %930 = vector.broadcast %cst_252 : f32 to vector<2x128xf32>
    %931 = arith.addf %930, %929 : vector<2x128xf32>
    %932 = arith.divf %930, %931 : vector<2x128xf32>
    %933 = arith.mulf %924, %869 : vector<2x128xf32>
    %934 = arith.mulf %918, %926 : vector<2x128xf32>
    %935 = arith.addf %933, %934 : vector<2x128xf32>
    %936 = math.tanh %935 : vector<2x128xf32>
    %937 = arith.mulf %932, %936 : vector<2x128xf32>
    %938 = vector.extract_strided_slice %912 {offsets = [0, 0], sizes = [2, 128], strides = [1, 1]} : vector<2x512xf32> to vector<2x128xf32>
    %939 = arith.negf %938 : vector<2x128xf32>
    %940 = math.exp %939 : vector<2x128xf32>
    %cst_253 = arith.constant 1.000000e+00 : f32
    %941 = vector.broadcast %cst_253 : f32 to vector<2x128xf32>
    %942 = arith.addf %941, %940 : vector<2x128xf32>
    %943 = arith.divf %941, %942 : vector<2x128xf32>
    %944 = vector.extract_strided_slice %912 {offsets = [0, 128], sizes = [2, 128], strides = [1, 1]} : vector<2x512xf32> to vector<2x128xf32>
    %945 = arith.negf %944 : vector<2x128xf32>
    %946 = math.exp %945 : vector<2x128xf32>
    %cst_254 = arith.constant 1.000000e+00 : f32
    %947 = vector.broadcast %cst_254 : f32 to vector<2x128xf32>
    %948 = arith.addf %947, %946 : vector<2x128xf32>
    %949 = arith.divf %947, %948 : vector<2x128xf32>
    %950 = vector.extract_strided_slice %912 {offsets = [0, 256], sizes = [2, 128], strides = [1, 1]} : vector<2x512xf32> to vector<2x128xf32>
    %951 = math.tanh %950 : vector<2x128xf32>
    %952 = vector.extract_strided_slice %912 {offsets = [0, 384], sizes = [2, 128], strides = [1, 1]} : vector<2x512xf32> to vector<2x128xf32>
    %953 = arith.negf %952 : vector<2x128xf32>
    %954 = math.exp %953 : vector<2x128xf32>
    %cst_255 = arith.constant 1.000000e+00 : f32
    %955 = vector.broadcast %cst_255 : f32 to vector<2x128xf32>
    %956 = arith.addf %955, %954 : vector<2x128xf32>
    %957 = arith.divf %955, %956 : vector<2x128xf32>
    %958 = arith.mulf %949, %894 : vector<2x128xf32>
    %959 = arith.mulf %943, %951 : vector<2x128xf32>
    %960 = arith.addf %958, %959 : vector<2x128xf32>
    %961 = math.tanh %960 : vector<2x128xf32>
    %962 = arith.mulf %957, %961 : vector<2x128xf32>
    %963 = tpu.concatenate %469, %144 in 1 : vector<2x128xf32>, vector<2x128xf32> -> vector<2x256xf32>
    %964 = tpu.concatenate %119, %494 in 1 : vector<2x128xf32>, vector<2x128xf32> -> vector<2x256xf32>
    %c0_256 = arith.constant 0 : index
    %c0_257 = arith.constant 0 : index
    %965 = vector.load %arg7[%c0_256, %c0_257] : memref<256x512xf32, #tpu.memory_space<vmem>>, vector<256x512xf32>
    %cst_258 = arith.constant dense<0.000000e+00> : vector<2x512xf32>
    %966 = tpu.matmul %963, %965, %cst_258 {dimension_numbers = #tpu.dot_dimension_numbers<[1], [0], [0], [1], [0, 0, 1, 1], [], []>} : vector<2x256xf32>, vector<256x512xf32>, vector<2x512xf32> -> vector<2x512xf32>
    %c0_259 = arith.constant 0 : index
    %c0_260 = arith.constant 0 : index
    %967 = vector.load %arg8[%c0_259, %c0_260] : memref<128x512xf32, #tpu.memory_space<vmem>>, vector<128x512xf32>
    %cst_261 = arith.constant dense<0.000000e+00> : vector<2x512xf32>
    %968 = tpu.matmul %937, %967, %cst_261 {dimension_numbers = #tpu.dot_dimension_numbers<[1], [0], [0], [1], [0, 0, 1, 1], [], []>} : vector<2x128xf32>, vector<128x512xf32>, vector<2x512xf32> -> vector<2x512xf32>
    %969 = arith.addf %966, %968 : vector<2x512xf32>
    %970 = vector.broadcast %565 : vector<1x512xf32> to vector<2x512xf32>
    %971 = arith.addf %969, %970 : vector<2x512xf32>
    %c0_262 = arith.constant 0 : index
    %c0_263 = arith.constant 0 : index
    %972 = vector.load %arg10[%c0_262, %c0_263] : memref<256x512xf32, #tpu.memory_space<vmem>>, vector<256x512xf32>
    %cst_264 = arith.constant dense<0.000000e+00> : vector<2x512xf32>
    %973 = tpu.matmul %964, %972, %cst_264 {dimension_numbers = #tpu.dot_dimension_numbers<[1], [0], [0], [1], [0, 0, 1, 1], [], []>} : vector<2x256xf32>, vector<256x512xf32>, vector<2x512xf32> -> vector<2x512xf32>
    %c0_265 = arith.constant 0 : index
    %c0_266 = arith.constant 0 : index
    %974 = vector.load %arg11[%c0_265, %c0_266] : memref<128x512xf32, #tpu.memory_space<vmem>>, vector<128x512xf32>
    %cst_267 = arith.constant dense<0.000000e+00> : vector<2x512xf32>
    %975 = tpu.matmul %962, %974, %cst_267 {dimension_numbers = #tpu.dot_dimension_numbers<[1], [0], [0], [1], [0, 0, 1, 1], [], []>} : vector<2x128xf32>, vector<128x512xf32>, vector<2x512xf32> -> vector<2x512xf32>
    %976 = arith.addf %973, %975 : vector<2x512xf32>
    %977 = vector.broadcast %566 : vector<1x512xf32> to vector<2x512xf32>
    %978 = arith.addf %976, %977 : vector<2x512xf32>
    %979 = vector.extract_strided_slice %971 {offsets = [0, 0], sizes = [2, 128], strides = [1, 1]} : vector<2x512xf32> to vector<2x128xf32>
    %980 = arith.negf %979 : vector<2x128xf32>
    %981 = math.exp %980 : vector<2x128xf32>
    %cst_268 = arith.constant 1.000000e+00 : f32
    %982 = vector.broadcast %cst_268 : f32 to vector<2x128xf32>
    %983 = arith.addf %982, %981 : vector<2x128xf32>
    %984 = arith.divf %982, %983 : vector<2x128xf32>
    %985 = vector.extract_strided_slice %971 {offsets = [0, 128], sizes = [2, 128], strides = [1, 1]} : vector<2x512xf32> to vector<2x128xf32>
    %986 = arith.negf %985 : vector<2x128xf32>
    %987 = math.exp %986 : vector<2x128xf32>
    %cst_269 = arith.constant 1.000000e+00 : f32
    %988 = vector.broadcast %cst_269 : f32 to vector<2x128xf32>
    %989 = arith.addf %988, %987 : vector<2x128xf32>
    %990 = arith.divf %988, %989 : vector<2x128xf32>
    %991 = vector.extract_strided_slice %971 {offsets = [0, 256], sizes = [2, 128], strides = [1, 1]} : vector<2x512xf32> to vector<2x128xf32>
    %992 = math.tanh %991 : vector<2x128xf32>
    %993 = vector.extract_strided_slice %971 {offsets = [0, 384], sizes = [2, 128], strides = [1, 1]} : vector<2x512xf32> to vector<2x128xf32>
    %994 = arith.negf %993 : vector<2x128xf32>
    %995 = math.exp %994 : vector<2x128xf32>
    %cst_270 = arith.constant 1.000000e+00 : f32
    %996 = vector.broadcast %cst_270 : f32 to vector<2x128xf32>
    %997 = arith.addf %996, %995 : vector<2x128xf32>
    %998 = arith.divf %996, %997 : vector<2x128xf32>
    %999 = arith.mulf %990, %935 : vector<2x128xf32>
    %1000 = arith.mulf %984, %992 : vector<2x128xf32>
    %1001 = arith.addf %999, %1000 : vector<2x128xf32>
    %1002 = math.tanh %1001 : vector<2x128xf32>
    %1003 = arith.mulf %998, %1002 : vector<2x128xf32>
    %1004 = vector.extract_strided_slice %978 {offsets = [0, 0], sizes = [2, 128], strides = [1, 1]} : vector<2x512xf32> to vector<2x128xf32>
    %1005 = arith.negf %1004 : vector<2x128xf32>
    %1006 = math.exp %1005 : vector<2x128xf32>
    %cst_271 = arith.constant 1.000000e+00 : f32
    %1007 = vector.broadcast %cst_271 : f32 to vector<2x128xf32>
    %1008 = arith.addf %1007, %1006 : vector<2x128xf32>
    %1009 = arith.divf %1007, %1008 : vector<2x128xf32>
    %1010 = vector.extract_strided_slice %978 {offsets = [0, 128], sizes = [2, 128], strides = [1, 1]} : vector<2x512xf32> to vector<2x128xf32>
    %1011 = arith.negf %1010 : vector<2x128xf32>
    %1012 = math.exp %1011 : vector<2x128xf32>
    %cst_272 = arith.constant 1.000000e+00 : f32
    %1013 = vector.broadcast %cst_272 : f32 to vector<2x128xf32>
    %1014 = arith.addf %1013, %1012 : vector<2x128xf32>
    %1015 = arith.divf %1013, %1014 : vector<2x128xf32>
    %1016 = vector.extract_strided_slice %978 {offsets = [0, 256], sizes = [2, 128], strides = [1, 1]} : vector<2x512xf32> to vector<2x128xf32>
    %1017 = math.tanh %1016 : vector<2x128xf32>
    %1018 = vector.extract_strided_slice %978 {offsets = [0, 384], sizes = [2, 128], strides = [1, 1]} : vector<2x512xf32> to vector<2x128xf32>
    %1019 = arith.negf %1018 : vector<2x128xf32>
    %1020 = math.exp %1019 : vector<2x128xf32>
    %cst_273 = arith.constant 1.000000e+00 : f32
    %1021 = vector.broadcast %cst_273 : f32 to vector<2x128xf32>
    %1022 = arith.addf %1021, %1020 : vector<2x128xf32>
    %1023 = arith.divf %1021, %1022 : vector<2x128xf32>
    %1024 = arith.mulf %1015, %960 : vector<2x128xf32>
    %1025 = arith.mulf %1009, %1017 : vector<2x128xf32>
    %1026 = arith.addf %1024, %1025 : vector<2x128xf32>
    %1027 = math.tanh %1026 : vector<2x128xf32>
    %1028 = arith.mulf %1023, %1027 : vector<2x128xf32>
    %1029 = tpu.concatenate %539, %74 in 1 : vector<2x128xf32>, vector<2x128xf32> -> vector<2x256xf32>
    %1030 = tpu.concatenate %49, %564 in 1 : vector<2x128xf32>, vector<2x128xf32> -> vector<2x256xf32>
    %c0_274 = arith.constant 0 : index
    %c0_275 = arith.constant 0 : index
    %1031 = vector.load %arg7[%c0_274, %c0_275] : memref<256x512xf32, #tpu.memory_space<vmem>>, vector<256x512xf32>
    %cst_276 = arith.constant dense<0.000000e+00> : vector<2x512xf32>
    %1032 = tpu.matmul %1029, %1031, %cst_276 {dimension_numbers = #tpu.dot_dimension_numbers<[1], [0], [0], [1], [0, 0, 1, 1], [], []>} : vector<2x256xf32>, vector<256x512xf32>, vector<2x512xf32> -> vector<2x512xf32>
    %c0_277 = arith.constant 0 : index
    %c0_278 = arith.constant 0 : index
    %1033 = vector.load %arg8[%c0_277, %c0_278] : memref<128x512xf32, #tpu.memory_space<vmem>>, vector<128x512xf32>
    %cst_279 = arith.constant dense<0.000000e+00> : vector<2x512xf32>
    %1034 = tpu.matmul %1003, %1033, %cst_279 {dimension_numbers = #tpu.dot_dimension_numbers<[1], [0], [0], [1], [0, 0, 1, 1], [], []>} : vector<2x128xf32>, vector<128x512xf32>, vector<2x512xf32> -> vector<2x512xf32>
    %1035 = arith.addf %1032, %1034 : vector<2x512xf32>
    %1036 = vector.broadcast %565 : vector<1x512xf32> to vector<2x512xf32>
    %1037 = arith.addf %1035, %1036 : vector<2x512xf32>
    %c0_280 = arith.constant 0 : index
    %c0_281 = arith.constant 0 : index
    %1038 = vector.load %arg10[%c0_280, %c0_281] : memref<256x512xf32, #tpu.memory_space<vmem>>, vector<256x512xf32>
    %cst_282 = arith.constant dense<0.000000e+00> : vector<2x512xf32>
    %1039 = tpu.matmul %1030, %1038, %cst_282 {dimension_numbers = #tpu.dot_dimension_numbers<[1], [0], [0], [1], [0, 0, 1, 1], [], []>} : vector<2x256xf32>, vector<256x512xf32>, vector<2x512xf32> -> vector<2x512xf32>
    %c0_283 = arith.constant 0 : index
    %c0_284 = arith.constant 0 : index
    %1040 = vector.load %arg11[%c0_283, %c0_284] : memref<128x512xf32, #tpu.memory_space<vmem>>, vector<128x512xf32>
    %cst_285 = arith.constant dense<0.000000e+00> : vector<2x512xf32>
    %1041 = tpu.matmul %1028, %1040, %cst_285 {dimension_numbers = #tpu.dot_dimension_numbers<[1], [0], [0], [1], [0, 0, 1, 1], [], []>} : vector<2x128xf32>, vector<128x512xf32>, vector<2x512xf32> -> vector<2x512xf32>
    %1042 = arith.addf %1039, %1041 : vector<2x512xf32>
    %1043 = vector.broadcast %566 : vector<1x512xf32> to vector<2x512xf32>
    %1044 = arith.addf %1042, %1043 : vector<2x512xf32>
    %1045 = vector.extract_strided_slice %1037 {offsets = [0, 0], sizes = [2, 128], strides = [1, 1]} : vector<2x512xf32> to vector<2x128xf32>
    %1046 = arith.negf %1045 : vector<2x128xf32>
    %1047 = math.exp %1046 : vector<2x128xf32>
    %cst_286 = arith.constant 1.000000e+00 : f32
    %1048 = vector.broadcast %cst_286 : f32 to vector<2x128xf32>
    %1049 = arith.addf %1048, %1047 : vector<2x128xf32>
    %1050 = arith.divf %1048, %1049 : vector<2x128xf32>
    %1051 = vector.extract_strided_slice %1037 {offsets = [0, 128], sizes = [2, 128], strides = [1, 1]} : vector<2x512xf32> to vector<2x128xf32>
    %1052 = arith.negf %1051 : vector<2x128xf32>
    %1053 = math.exp %1052 : vector<2x128xf32>
    %cst_287 = arith.constant 1.000000e+00 : f32
    %1054 = vector.broadcast %cst_287 : f32 to vector<2x128xf32>
    %1055 = arith.addf %1054, %1053 : vector<2x128xf32>
    %1056 = arith.divf %1054, %1055 : vector<2x128xf32>
    %1057 = vector.extract_strided_slice %1037 {offsets = [0, 256], sizes = [2, 128], strides = [1, 1]} : vector<2x512xf32> to vector<2x128xf32>
    %1058 = math.tanh %1057 : vector<2x128xf32>
    %1059 = vector.extract_strided_slice %1037 {offsets = [0, 384], sizes = [2, 128], strides = [1, 1]} : vector<2x512xf32> to vector<2x128xf32>
    %1060 = arith.negf %1059 : vector<2x128xf32>
    %1061 = math.exp %1060 : vector<2x128xf32>
    %cst_288 = arith.constant 1.000000e+00 : f32
    %1062 = vector.broadcast %cst_288 : f32 to vector<2x128xf32>
    %1063 = arith.addf %1062, %1061 : vector<2x128xf32>
    %1064 = arith.divf %1062, %1063 : vector<2x128xf32>
    %1065 = arith.mulf %1056, %1001 : vector<2x128xf32>
    %1066 = arith.mulf %1050, %1058 : vector<2x128xf32>
    %1067 = arith.addf %1065, %1066 : vector<2x128xf32>
    %1068 = math.tanh %1067 : vector<2x128xf32>
    %1069 = arith.mulf %1064, %1068 : vector<2x128xf32>
    %1070 = vector.extract_strided_slice %1044 {offsets = [0, 0], sizes = [2, 128], strides = [1, 1]} : vector<2x512xf32> to vector<2x128xf32>
    %1071 = arith.negf %1070 : vector<2x128xf32>
    %1072 = math.exp %1071 : vector<2x128xf32>
    %cst_289 = arith.constant 1.000000e+00 : f32
    %1073 = vector.broadcast %cst_289 : f32 to vector<2x128xf32>
    %1074 = arith.addf %1073, %1072 : vector<2x128xf32>
    %1075 = arith.divf %1073, %1074 : vector<2x128xf32>
    %1076 = vector.extract_strided_slice %1044 {offsets = [0, 128], sizes = [2, 128], strides = [1, 1]} : vector<2x512xf32> to vector<2x128xf32>
    %1077 = arith.negf %1076 : vector<2x128xf32>
    %1078 = math.exp %1077 : vector<2x128xf32>
    %cst_290 = arith.constant 1.000000e+00 : f32
    %1079 = vector.broadcast %cst_290 : f32 to vector<2x128xf32>
    %1080 = arith.addf %1079, %1078 : vector<2x128xf32>
    %1081 = arith.divf %1079, %1080 : vector<2x128xf32>
    %1082 = vector.extract_strided_slice %1044 {offsets = [0, 256], sizes = [2, 128], strides = [1, 1]} : vector<2x512xf32> to vector<2x128xf32>
    %1083 = math.tanh %1082 : vector<2x128xf32>
    %1084 = vector.extract_strided_slice %1044 {offsets = [0, 384], sizes = [2, 128], strides = [1, 1]} : vector<2x512xf32> to vector<2x128xf32>
    %1085 = arith.negf %1084 : vector<2x128xf32>
    %1086 = math.exp %1085 : vector<2x128xf32>
    %cst_291 = arith.constant 1.000000e+00 : f32
    %1087 = vector.broadcast %cst_291 : f32 to vector<2x128xf32>
    %1088 = arith.addf %1087, %1086 : vector<2x128xf32>
    %1089 = arith.divf %1087, %1088 : vector<2x128xf32>
    %1090 = arith.mulf %1081, %1026 : vector<2x128xf32>
    %1091 = arith.mulf %1075, %1083 : vector<2x128xf32>
    %1092 = arith.addf %1090, %1091 : vector<2x128xf32>
    %1093 = math.tanh %1092 : vector<2x128xf32>
    %1094 = arith.mulf %1089, %1093 : vector<2x128xf32>
    %1095 = tpu.concatenate %1069, %1094 in 1 : vector<2x128xf32>, vector<2x128xf32> -> vector<2x256xf32>
    %c0_292 = arith.constant 0 : index
    %c0_293 = arith.constant 0 : index
    %1096 = vector.load %arg13[%c0_292, %c0_293] : memref<2x256xf32, #tpu.memory_space<vmem>>, vector<2x256xf32>
    tpu.vector_store %arg13[%c0_292, %c0_293], %1095 {strides = array<i32>} : memref<2x256xf32, #tpu.memory_space<vmem>>, vector<2x256xf32>,
    return
  }
}

</mosaic_0001>

<llo_original>
// kernel: lstm_encoder.1
$region0: #{lstm_encoder.1}
  #allocation0 [shape = 'u32[]', space=smem, size = 0x4, offset = 0x4, fixed_abs, tag = 'smem constant byte address 0x4 - core index']
  #allocation1 [shape = 'u32[144,128]{1,0:T(1,128)}', space=vmem, size = 0x12000, scoped, tag = 'internal scratch']
  %s0 = inlined_call_operand.vmem [shape: f32[8,2,1], index: 0, kind: input, shape index: {}]
  %s1 = inlined_call_operand.vmem [shape: f32[1,512], index: 1, kind: input, shape index: {}]
  %s2 = inlined_call_operand.hbm [shape: f32[128,512], index: 2, kind: input, shape index: {}]
  %s3 = inlined_call_operand.vmem [shape: f32[1,512], index: 3, kind: input, shape index: {}]
  %s4 = inlined_call_operand.vmem [shape: f32[1,512], index: 4, kind: input, shape index: {}]
  %s5 = inlined_call_operand.hbm [shape: f32[128,512], index: 5, kind: input, shape index: {}]
  %s6 = inlined_call_operand.vmem [shape: f32[1,512], index: 6, kind: input, shape index: {}]
  %s7 = inlined_call_operand.hbm [shape: f32[256,512], index: 7, kind: input, shape index: {}]
  %s8 = inlined_call_operand.hbm [shape: f32[128,512], index: 8, kind: input, shape index: {}]
  %s9 = inlined_call_operand.vmem [shape: f32[1,512], index: 9, kind: input, shape index: {}]
  %s10 = inlined_call_operand.hbm [shape: f32[256,512], index: 10, kind: input, shape index: {}]
  %s11 = inlined_call_operand.hbm [shape: f32[128,512], index: 11, kind: input, shape index: {}]
  %s12 = inlined_call_operand.vmem [shape: f32[1,512], index: 12, kind: input, shape index: {}]
  %s13 = inlined_call_operand.vmem [shape: f32[2,256], index: 13, kind: output, shape index: {}]
  %s14 = sld [smem:[#allocation0]]
  $region86: #{lstm_encoder.1} parent=0
    _
  %s16 = ssub.s32 1, %s14
  %s17 = scalar_select 0, %s16, %s14
  $region1: #{lstm_encoder.1} parent=0
    #allocation2 [shape = 'u8[262144]{0}', space=vmem, size = 0x40000, scoped, tag = 'input window, operand 2, single buffered']
    #allocation3 [shape = 's32[1]{0}', space=sflag, size = 0x4, scoped, tag = 'scoped memory for lstm_encoder.1']
    #allocation4 [shape = 'u8[262144]{0}', space=vmem, size = 0x40000, scoped, tag = 'input window, operand 5, single buffered']
    #allocation5 [shape = 's32[1]{0}', space=sflag, size = 0x4, scoped, tag = 'scoped memory for lstm_encoder.1']
    #allocation6 [shape = 'u8[524288]{0}', space=vmem, size = 0x80000, scoped, tag = 'input window, operand 7, single buffered']
    #allocation7 [shape = 'u8[262144]{0}', space=vmem, size = 0x40000, scoped, tag = 'input window, operand 8, single buffered']
    #allocation8 [shape = 's32[1]{0}', space=sflag, size = 0x4, scoped, tag = 'scoped memory for lstm_encoder.1']
    #allocation9 [shape = 'u8[524288]{0}', space=vmem, size = 0x80000, scoped, tag = 'input window, operand 10, single buffered']
    #allocation10 [shape = 'u8[262144]{0}', space=vmem, size = 0x40000, scoped, tag = 'input window, operand 11, single buffered']
    #allocation11 [shape = 's32[1]{0}', space=sflag, size = 0x4, scoped, tag = 'scoped memory for lstm_encoder.1']
    %18 = vsyncpa [#allocation3], 0
    %19 = vsyncpa [#allocation5], 0
    %20 = vsyncpa [#allocation8], 0
    %21 = vsyncpa [#allocation11], 0
    // Predicated region
    $region2: #{lstm_encoder.1} parent=1 // pred_check
      _
    $region3: #{lstm_encoder.1} parent=1 // pred_check_branch
      %23 = sbr.rel (0) target = $region5
    $region4: #{lstm_encoder.1} parent=1 // pred_region
      _
    $region5: #{lstm_encoder.1} parent=1 // pred_fallthru
      _
    // Predicated region
    $region6: #{lstm_encoder.1} parent=1 // pred_check
      _
    $region7: #{lstm_encoder.1} parent=1 // pred_check_branch
      %25 = sbr.rel (0) target = $region9
    $region8: #{lstm_encoder.1} parent=1 // pred_region
      _
    $region9: #{lstm_encoder.1} parent=1 // pred_fallthru
      _
    // Predicated region
    $region10: #{lstm_encoder.1} parent=1 // pred_check
      _
    $region11: #{lstm_encoder.1} parent=1 // pred_check_branch
      %27 = sbr.rel (0) target = $region13
    $region12: #{lstm_encoder.1} parent=1 // pred_region
      %s29 = ssub.s32 8192, 8192
      %30 = vsyncadd [#allocation3], %s29
      %s31 = sshll.u32 [#allocation2], 4
      %s32 = int_to_ptr.vmem [resolvable:$true] %s31
      %37 = dma.hbm_to_vmem [thread:$0]  %s2, 8192, %s32, [#allocation3], 512, 512, 32
    $region13: #{lstm_encoder.1} parent=1 // pred_fallthru
      _
    // Predicated region
    $region14: #{lstm_encoder.1} parent=1 // pred_check
      _
    $region15: #{lstm_encoder.1} parent=1 // pred_check_branch
      %39 = sbr.rel (0) target = $region17
    $region16: #{lstm_encoder.1} parent=1 // pred_region
      _
    $region17: #{lstm_encoder.1} parent=1 // pred_fallthru
      _
    // Predicated region
    $region18: #{lstm_encoder.1} parent=1 // pred_check
      _
    $region19: #{lstm_encoder.1} parent=1 // pred_check_branch
      %41 = sbr.rel (0) target = $region21
    $region20: #{lstm_encoder.1} parent=1 // pred_region
      _
    $region21: #{lstm_encoder.1} parent=1 // pred_fallthru
      _
    // Predicated region
    $region22: #{lstm_encoder.1} parent=1 // pred_check
      _
    $region23: #{lstm_encoder.1} parent=1 // pred_check_branch
      %43 = sbr.rel (0) target = $region25
    $region24: #{lstm_encoder.1} parent=1 // pred_region
      %s45 = ssub.s32 8192, 8192
      %46 = vsyncadd [#allocation5], %s45
      %s47 = sshll.u32 [#allocation4], 4
      %s48 = int_to_ptr.vmem [resolvable:$true] %s47
      %53 = dma.hbm_to_vmem [thread:$0]  %s5, 8192, %s48, [#allocation5], 512, 512, 32
    $region25: #{lstm_encoder.1} parent=1 // pred_fallthru
      _
    // Predicated region
    $region26: #{lstm_encoder.1} parent=1 // pred_check
      _
    $region27: #{lstm_encoder.1} parent=1 // pred_check_branch
      %55 = sbr.rel (0) target = $region29
    $region28: #{lstm_encoder.1} parent=1 // pred_region
      _
    $region29: #{lstm_encoder.1} parent=1 // pred_fallthru
      _
    // Predicated region
    $region30: #{lstm_encoder.1} parent=1 // pred_check
      _
    $region31: #{lstm_encoder.1} parent=1 // pred_check_branch
      %57 = sbr.rel (0) target = $region33
    $region32: #{lstm_encoder.1} parent=1 // pred_region
      %s59 = ssub.s32 16384, 16384
      %60 = vsyncadd [#allocation5], %s59
      %s61 = sshll.u32 [#allocation6], 4
      %s62 = int_to_ptr.vmem [resolvable:$true] %s61
      %67 = dma.hbm_to_vmem [thread:$0]  %s7, 16384, %s62, [#allocation5], 512, 512, 32
    $region33: #{lstm_encoder.1} parent=1 // pred_fallthru
      _
    // Predicated region
    $region34: #{lstm_encoder.1} parent=1 // pred_check
      _
    $region35: #{lstm_encoder.1} parent=1 // pred_check_branch
      %69 = sbr.rel (0) target = $region37
    $region36: #{lstm_encoder.1} parent=1 // pred_region
      %s71 = ssub.s32 8192, 8192
      %72 = vsyncadd [#allocation8], %s71
      %s73 = sshll.u32 [#allocation7], 4
      %s74 = int_to_ptr.vmem [resolvable:$true] %s73
      %79 = dma.hbm_to_vmem [thread:$0]  %s8, 8192, %s74, [#allocation8], 512, 512, 32
    $region37: #{lstm_encoder.1} parent=1 // pred_fallthru
      _
    // Predicated region
    $region38: #{lstm_encoder.1} parent=1 // pred_check
      _
    $region39: #{lstm_encoder.1} parent=1 // pred_check_branch
      %81 = sbr.rel (0) target = $region41
    $region40: #{lstm_encoder.1} parent=1 // pred_region
      _
    $region41: #{lstm_encoder.1} parent=1 // pred_fallthru
      _
    // Predicated region
    $region42: #{lstm_encoder.1} parent=1 // pred_check
      _
    $region43: #{lstm_encoder.1} parent=1 // pred_check_branch
      %83 = sbr.rel (0) target = $region45
    $region44: #{lstm_encoder.1} parent=1 // pred_region
      %s85 = ssub.s32 16384, 16384
      %86 = vsyncadd [#allocation8], %s85
      %s87 = sshll.u32 [#allocation9], 4
      %s88 = int_to_ptr.vmem [resolvable:$true] %s87
      %93 = dma.hbm_to_vmem [thread:$0]  %s10, 16384, %s88, [#allocation8], 512, 512, 32
    $region45: #{lstm_encoder.1} parent=1 // pred_fallthru
      _
    // Predicated region
    $region46: #{lstm_encoder.1} parent=1 // pred_check
      _
    $region47: #{lstm_encoder.1} parent=1 // pred_check_branch
      %95 = sbr.rel (0) target = $region49
    $region48: #{lstm_encoder.1} parent=1 // pred_region
      %s97 = ssub.s32 8192, 8192
      %98 = vsyncadd [#allocation11], %s97
      %s99 = sshll.u32 [#allocation10], 4
      %s100 = int_to_ptr.vmem [resolvable:$true] %s99
      %105 = dma.hbm_to_vmem [thread:$0]  %s11, 8192, %s100, [#allocation11], 512, 512, 32
    $region49: #{lstm_encoder.1} parent=1 // pred_fallthru
      _
    // Predicated region
    $region50: #{lstm_encoder.1} parent=1 // pred_check
      _
    $region51: #{lstm_encoder.1} parent=1 // pred_check_branch
      %107 = sbr.rel (0) target = $region53
    $region52: #{lstm_encoder.1} parent=1 // pred_region
      _
    $region53: #{lstm_encoder.1} parent=1 // pred_fallthru
      _
    // Predicated region
    $region54: #{lstm_encoder.1} parent=1 // pred_check
      _
    $region55: #{lstm_encoder.1} parent=1 // pred_check_branch
      %109 = sbr.rel (0) target = $region57
    $region56: #{lstm_encoder.1} parent=1 // pred_region
      %110 = dma.done [#allocation3], 8192
    $region57: #{lstm_encoder.1} parent=1 // pred_fallthru
      _
    // Predicated region
    $region58: #{lstm_encoder.1} parent=1 // pred_check
      _
    $region59: #{lstm_encoder.1} parent=1 // pred_check_branch
      %112 = sbr.rel (0) target = $region61
    $region60: #{lstm_encoder.1} parent=1 // pred_region
      %113 = dma.done [#allocation5], 8192
    $region61: #{lstm_encoder.1} parent=1 // pred_fallthru
      _
    // Predicated region
    $region62: #{lstm_encoder.1} parent=1 // pred_check
      _
    $region63: #{lstm_encoder.1} parent=1 // pred_check_branch
      %115 = sbr.rel (0) target = $region65
    $region64: #{lstm_encoder.1} parent=1 // pred_region
      %116 = dma.done [#allocation5], 16384
    $region65: #{lstm_encoder.1} parent=1 // pred_fallthru
      _
    // Predicated region
    $region66: #{lstm_encoder.1} parent=1 // pred_check
      _
    $region67: #{lstm_encoder.1} parent=1 // pred_check_branch
      %118 = sbr.rel (0) target = $region69
    $region68: #{lstm_encoder.1} parent=1 // pred_region
      %119 = dma.done [#allocation8], 8192
    $region69: #{lstm_encoder.1} parent=1 // pred_fallthru
      _
    // Predicated region
    $region70: #{lstm_encoder.1} parent=1 // pred_check
      _
    $region71: #{lstm_encoder.1} parent=1 // pred_check_branch
      %121 = sbr.rel (0) target = $region73
    $region72: #{lstm_encoder.1} parent=1 // pred_region
      %122 = dma.done [#allocation8], 16384
    $region73: #{lstm_encoder.1} parent=1 // pred_fallthru
      _
    // Predicated region
    $region74: #{lstm_encoder.1} parent=1 // pred_check
      _
    $region75: #{lstm_encoder.1} parent=1 // pred_check_branch
      %124 = sbr.rel (0) target = $region77
    $region76: #{lstm_encoder.1} parent=1 // pred_region
      %125 = dma.done [#allocation11], 8192
    $region77: #{lstm_encoder.1} parent=1 // pred_fallthru
      _
    %v126 = vld [vmem:[%s1] sm:$0xf]
    %v127 = vld [vmem:[%s4] sm:$0xf]
    %v128 = vld [vmem:[%s3] sm:$0xf]
    %v129 = vld [vmem:[%s6] sm:$0xf]
    %v130 = vld [vmem:[%s0] sm:$0x3]
    %132 = vset.pattern.permute.xlu0 0
    %133 = vperm.xlu0 %132, %v130
    %v134 = vpop.permute.xlu0 %133
    %v137 = vlaneseq
    %v138 = vshrl.u32 %v137, 7
    %v139 = vsub.s32 0, %v138
    %v140 = vrot.slane %v126, %v139
    %v141 = vlaneseq
    %v142 = vshrl.u32 %v141, 7
    %v143 = vsub.s32 1, %v142
    %v144 = vrot.slane %v126, %v143
    %v145 = vlaneseq
    %v146 = vshrl.u32 %v145, 7
    %v147 = vsub.s32 2, %v146
    %v148 = vrot.slane %v126, %v147
    %v149 = vlaneseq
    %v150 = vshrl.u32 %v149, 7
    %v151 = vsub.s32 3, %v150
    %v152 = vrot.slane %v126, %v151
    %v157 = vmul.f32 %v134, %v140
    %v158 = vmul.f32 %v134, %v144
    %v159 = vmul.f32 %v134, %v148
    %v160 = vmul.f32 %v134, %v152
    %v161 = vld [vmem:[#allocation2] sm:$0xff]
    %v162 = vld [vmem:[#allocation2 + $0x8] sm:$0xff]
    %v163 = vld [vmem:[#allocation2 + $0x10] sm:$0xff]
    %v164 = vld [vmem:[#allocation2 + $0x18] sm:$0xff]
    %v165 = vld [vmem:[#allocation2 + $0x20] sm:$0xff]
    %v166 = vld [vmem:[#allocation2 + $0x28] sm:$0xff]
    %v167 = vld [vmem:[#allocation2 + $0x30] sm:$0xff]
    %v168 = vld [vmem:[#allocation2 + $0x38] sm:$0xff]
    %v169 = vld [vmem:[#allocation2 + $0x40] sm:$0xff]
    %v170 = vld [vmem:[#allocation2 + $0x48] sm:$0xff]
    %v171 = vld [vmem:[#allocation2 + $0x50] sm:$0xff]
    %v172 = vld [vmem:[#allocation2 + $0x58] sm:$0xff]
    %v173 = vld [vmem:[#allocation2 + $0x60] sm:$0xff]
    %v174 = vld [vmem:[#allocation2 + $0x68] sm:$0xff]
    %v175 = vld [vmem:[#allocation2 + $0x70] sm:$0xff]
    %v176 = vld [vmem:[#allocation2 + $0x78] sm:$0xff]
    %v177 = vld [vmem:[#allocation2 + $0x80] sm:$0xff]
    %v178 = vld [vmem:[#allocation2 + $0x88] sm:$0xff]
    %v179 = vld [vmem:[#allocation2 + $0x90] sm:$0xff]
    %v180 = vld [vmem:[#allocation2 + $0x98] sm:$0xff]
    %v181 = vld [vmem:[#allocation2 + $0xa0] sm:$0xff]
    %v182 = vld [vmem:[#allocation2 + $0xa8] sm:$0xff]
    %v183 = vld [vmem:[#allocation2 + $0xb0] sm:$0xff]
    %v184 = vld [vmem:[#allocation2 + $0xb8] sm:$0xff]
    %v185 = vld [vmem:[#allocation2 + $0xc0] sm:$0xff]
    %v186 = vld [vmem:[#allocation2 + $0xc8] sm:$0xff]
    %v187 = vld [vmem:[#allocation2 + $0xd0] sm:$0xff]
    %v188 = vld [vmem:[#allocation2 + $0xd8] sm:$0xff]
    %v189 = vld [vmem:[#allocation2 + $0xe0] sm:$0xff]
    %v190 = vld [vmem:[#allocation2 + $0xe8] sm:$0xff]
    %v191 = vld [vmem:[#allocation2 + $0xf0] sm:$0xff]
    %v192 = vld [vmem:[#allocation2 + $0xf8] sm:$0xff]
    %v193 = vld [vmem:[#allocation2 + $0x100] sm:$0xff]
    %v194 = vld [vmem:[#allocation2 + $0x108] sm:$0xff]
    %v195 = vld [vmem:[#allocation2 + $0x110] sm:$0xff]
    %v196 = vld [vmem:[#allocation2 + $0x118] sm:$0xff]
    %v197 = vld [vmem:[#allocation2 + $0x120] sm:$0xff]
    %v198 = vld [vmem:[#allocation2 + $0x128] sm:$0xff]
    %v199 = vld [vmem:[#allocation2 + $0x130] sm:$0xff]
    %v200 = vld [vmem:[#allocation2 + $0x138] sm:$0xff]
    %v201 = vld [vmem:[#allocation2 + $0x140] sm:$0xff]
    %v202 = vld [vmem:[#allocation2 + $0x148] sm:$0xff]
    %v203 = vld [vmem:[#allocation2 + $0x150] sm:$0xff]
    %v204 = vld [vmem:[#allocation2 + $0x158] sm:$0xff]
    %v205 = vld [vmem:[#allocation2 + $0x160] sm:$0xff]
    %v206 = vld [vmem:[#allocation2 + $0x168] sm:$0xff]
    %v207 = vld [vmem:[#allocation2 + $0x170] sm:$0xff]
    %v208 = vld [vmem:[#allocation2 + $0x178] sm:$0xff]
    %v209 = vld [vmem:[#allocation2 + $0x180] sm:$0xff]
    %v210 = vld [vmem:[#allocation2 + $0x188] sm:$0xff]
    %v211 = vld [vmem:[#allocation2 + $0x190] sm:$0xff]
    %v212 = vld [vmem:[#allocation2 + $0x198] sm:$0xff]
    %v213 = vld [vmem:[#allocation2 + $0x1a0] sm:$0xff]
    %v214 = vld [vmem:[#allocation2 + $0x1a8] sm:$0xff]
    %v215 = vld [vmem:[#allocation2 + $0x1b0] sm:$0xff]
    %v216 = vld [vmem:[#allocation2 + $0x1b8] sm:$0xff]
    %v217 = vld [vmem:[#allocation2 + $0x1c0] sm:$0xff]
    %v218 = vld [vmem:[#allocation2 + $0x1c8] sm:$0xff]
    %v219 = vld [vmem:[#allocation2 + $0x1d0] sm:$0xff]
    %v220 = vld [vmem:[#allocation2 + $0x1d8] sm:$0xff]
    %v221 = vld [vmem:[#allocation2 + $0x1e0] sm:$0xff]
    %v222 = vld [vmem:[#allocation2 + $0x1e8] sm:$0xff]
    %v223 = vld [vmem:[#allocation2 + $0x1f0] sm:$0xff]
    %v224 = vld [vmem:[#allocation2 + $0x1f8] sm:$0xff]
    %225 = vmatprep.subr.mxu0 %v162
    %226 = vmatpush1.msra.mxu0 %v161
    %227 = vmatprep.subr.mxu0 %v166
    %228 = vmatpush1.msra.mxu0 %v165
    %229 = vmatprep.subr.mxu0 %v170
    %230 = vmatpush1.msra.mxu0 %v169
    %231 = vmatprep.subr.mxu0 %v174
    %232 = vmatpush1.msra.mxu0 %v173
    %233 = vmatprep.subr.mxu0 %v178
    %234 = vmatpush1.msra.mxu0 %v177
    %235 = vmatprep.subr.mxu0 %v182
    %236 = vmatpush1.msra.mxu0 %v181
    %237 = vmatprep.subr.mxu0 %v186
    %238 = vmatpush1.msra.mxu0 %v185
    %239 = vmatprep.subr.mxu0 %v190
    %240 = vmatpush1.msra.mxu0 %v189
    %241 = vmatprep.subr.mxu0 %v194
    %242 = vmatpush1.msra.mxu0 %v193
    %243 = vmatprep.subr.mxu0 %v198
    %244 = vmatpush1.msra.mxu0 %v197
    %245 = vmatprep.subr.mxu0 %v202
    %246 = vmatpush1.msra.mxu0 %v201
    %247 = vmatprep.subr.mxu0 %v206
    %248 = vmatpush1.msra.mxu0 %v205
    %249 = vmatprep.subr.mxu0 %v210
    %250 = vmatpush1.msra.mxu0 %v209
    %251 = vmatprep.subr.mxu0 %v214
    %252 = vmatpush1.msra.mxu0 %v213
    %253 = vmatprep.subr.mxu0 %v218
    %254 = vmatpush1.msra.mxu0 %v217
    %255 = vmatprep.subr.mxu0 %v222
    %256 = vmatpush1.msra.mxu0 %v221
    %257 = vmatprep.subr.mxu0 0.0
    %258 = vmatpush1.msra.mxu0 0.0
    %259 = vmatprep.subr.mxu0 0.0
    %260 = vmatpush1.msra.mxu0 0.0
    %261 = vmatprep.subr.mxu0 0.0
    %262 = vmatpush1.msra.mxu0 0.0
    %263 = vmatprep.subr.mxu0 0.0
    %264 = vmatpush1.msra.mxu0 0.0
    %265 = vmatprep.subr.mxu0 0.0
    %266 = vmatpush1.msra.mxu0 0.0
    %267 = vmatprep.subr.mxu0 0.0
    %268 = vmatpush1.msra.mxu0 0.0
    %269 = vmatprep.subr.mxu0 0.0
    %270 = vmatpush1.msra.mxu0 0.0
    %271 = vmatprep.subr.mxu0 0.0
    %272 = vmatpush1.msra.mxu0 0.0
    %273 = vmatprep.subr.mxu0 0.0
    %274 = vmatpush1.msra.mxu0 0.0
    %275 = vmatprep.subr.mxu0 0.0
    %276 = vmatpush1.msra.mxu0 0.0
    %277 = vmatprep.subr.mxu0 0.0
    %278 = vmatpush1.msra.mxu0 0.0
    %279 = vmatprep.subr.mxu0 0.0
    %280 = vmatpush1.msra.mxu0 0.0
    %281 = vmatprep.subr.mxu0 0.0
    %282 = vmatpush1.msra.mxu0 0.0
    %283 = vmatprep.subr.mxu0 0.0
    %284 = vmatpush1.msra.mxu0 0.0
    %285 = vmatprep.subr.mxu0 0.0
    %286 = vmatpush1.msra.mxu0 0.0
    %287 = vmatprep.subr.mxu0 0.0
    %288 = vmatpush1.msra.mxu0 0.0
    %289 = vmatprep.mubr.f32.mxu0 0.0
    %290 = vmatmul.mubr.f32.gmra.mrb[0].mxu0 0.0
    %v291 = vpop.f32.mrb[0].mxu0
    %v292 = vadd.f32 0.0, %v291
    %v293 = vpop.f32.mrb[0].mxu0
    %v294 = vadd.f32 0.0, %v293
    %295 = vdwg.mxu0
    %296 = vmatprep.subr.mxu0 %v164
    %297 = vmatpush1.msra.mxu0 %v163
    %298 = vmatprep.subr.mxu0 %v168
    %299 = vmatpush1.msra.mxu0 %v167
    %300 = vmatprep.subr.mxu0 %v172
    %301 = vmatpush1.msra.mxu0 %v171
    %302 = vmatprep.subr.mxu0 %v176
    %303 = vmatpush1.msra.mxu0 %v175
    %304 = vmatprep.subr.mxu0 %v180
    %305 = vmatpush1.msra.mxu0 %v179
    %306 = vmatprep.subr.mxu0 %v184
    %307 = vmatpush1.msra.mxu0 %v183
    %308 = vmatprep.subr.mxu0 %v188
    %309 = vmatpush1.msra.mxu0 %v187
    %310 = vmatprep.subr.mxu0 %v192
    %311 = vmatpush1.msra.mxu0 %v191
    %312 = vmatprep.subr.mxu0 %v196
    %313 = vmatpush1.msra.mxu0 %v195
    %314 = vmatprep.subr.mxu0 %v200
    %315 = vmatpush1.msra.mxu0 %v199
    %316 = vmatprep.subr.mxu0 %v204
    %317 = vmatpush1.msra.mxu0 %v203
    %318 = vmatprep.subr.mxu0 %v208
    %319 = vmatpush1.msra.mxu0 %v207
    %320 = vmatprep.subr.mxu0 %v212
    %321 = vmatpush1.msra.mxu0 %v211
    %322 = vmatprep.subr.mxu0 %v216
    %323 = vmatpush1.msra.mxu0 %v215
    %324 = vmatprep.subr.mxu0 %v220
    %325 = vmatpush1.msra.mxu0 %v219
    %326 = vmatprep.subr.mxu0 %v224
    %327 = vmatpush1.msra.mxu0 %v223
    %328 = vmatprep.subr.mxu0 0.0
    %329 = vmatpush1.msra.mxu0 0.0
    %330 = vmatprep.subr.mxu0 0.0
    %331 = vmatpush1.msra.mxu0 0.0
    %332 = vmatprep.subr.mxu0 0.0
    %333 = vmatpush1.msra.mxu0 0.0
    %334 = vmatprep.subr.mxu0 0.0
    %335 = vmatpush1.msra.mxu0 0.0
    %336 = vmatprep.subr.mxu0 0.0
    %337 = vmatpush1.msra.mxu0 0.0
    %338 = vmatprep.subr.mxu0 0.0
    %339 = vmatpush1.msra.mxu0 0.0
    %340 = vmatprep.subr.mxu0 0.0
    %341 = vmatpush1.msra.mxu0 0.0
    %342 = vmatprep.subr.mxu0 0.0
    %343 = vmatpush1.msra.mxu0 0.0
    %344 = vmatprep.subr.mxu0 0.0
    %345 = vmatpush1.msra.mxu0 0.0
    %346 = vmatprep.subr.mxu0 0.0
    %347 = vmatpush1.msra.mxu0 0.0
    %348 = vmatprep.subr.mxu0 0.0
    %349 = vmatpush1.msra.mxu0 0.0
    %350 = vmatprep.subr.mxu0 0.0
    %351 = vmatpush1.msra.mxu0 0.0
    %352 = vmatprep.subr.mxu0 0.0
    %353 = vmatpush1.msra.mxu0 0.0
    %354 = vmatprep.subr.mxu0 0.0
    %355 = vmatpush1.msra.mxu0 0.0
    %356 = vmatprep.subr.mxu0 0.0
    %357 = vmatpush1.msra.mxu0 0.0
    %358 = vmatprep.subr.mxu0 0.0
    %359 = vmatpush1.msra.mxu0 0.0
    %360 = vmatprep.mubr.f32.mxu0 0.0
    %361 = vmatmul.mubr.f32.gmra.mrb[0].mxu0 0.0
    %v362 = vpop.f32.mrb[0].mxu0
    %v363 = vadd.f32 0.0, %v362
    %v364 = vpop.f32.mrb[0].mxu0
    %v365 = vadd.f32 0.0, %v364
    %366 = vdwg.mxu0
    %v367 = vadd.f32 %v157, %v292
    %v368 = vadd.f32 %v158, %v294
    %v369 = vadd.f32 %v159, %v363
    %v370 = vadd.f32 %v160, %v365
    %v372 = vlaneseq
    %v373 = vshrl.u32 %v372, 7
    %v374 = vsub.s32 0, %v373
    %v375 = vrot.slane %v128, %v374
    %v376 = vlaneseq
    %v377 = vshrl.u32 %v376, 7
    %v378 = vsub.s32 1, %v377
    %v379 = vrot.slane %v128, %v378
    %v380 = vlaneseq
    %v381 = vshrl.u32 %v380, 7
    %v382 = vsub.s32 2, %v381
    %v383 = vrot.slane %v128, %v382
    %v384 = vlaneseq
    %v385 = vshrl.u32 %v384, 7
    %v386 = vsub.s32 3, %v385
    %v387 = vrot.slane %v128, %v386
    %v392 = vadd.f32 %v367, %v375
    %v393 = vadd.f32 %v368, %v379
    %v394 = vadd.f32 %v369, %v383
    %v395 = vadd.f32 %v370, %v387
    %s396 = scalar_lea.vmem %s0, 14
    %v397 = vld [vmem:[%s396] sm:$0x3]
    %399 = vset.pattern.permute.xlu0 0
    %400 = vperm.xlu0 %399, %v397
    %v401 = vpop.permute.xlu0 %400
    %v404 = vlaneseq
    %v405 = vshrl.u32 %v404, 7
    %v406 = vsub.s32 0, %v405
    %v407 = vrot.slane %v127, %v406
    %v408 = vlaneseq
    %v409 = vshrl.u32 %v408, 7
    %v410 = vsub.s32 1, %v409
    %v411 = vrot.slane %v127, %v410
    %v412 = vlaneseq
    %v413 = vshrl.u32 %v412, 7
    %v414 = vsub.s32 2, %v413
    %v415 = vrot.slane %v127, %v414
    %v416 = vlaneseq
    %v417 = vshrl.u32 %v416, 7
    %v418 = vsub.s32 3, %v417
    %v419 = vrot.slane %v127, %v418
    %v424 = vmul.f32 %v401, %v407
    %v425 = vmul.f32 %v401, %v411
    %v426 = vmul.f32 %v401, %v415
    %v427 = vmul.f32 %v401, %v419
    %v428 = vld [vmem:[#allocation4] sm:$0xff]
    %v429 = vld [vmem:[#allocation4 + $0x8] sm:$0xff]
    %v430 = vld [vmem:[#allocation4 + $0x10] sm:$0xff]
    %v431 = vld [vmem:[#allocation4 + $0x18] sm:$0xff]
    %v432 = vld [vmem:[#allocation4 + $0x20] sm:$0xff]
    %v433 = vld [vmem:[#allocation4 + $0x28] sm:$0xff]
    %v434 = vld [vmem:[#allocation4 + $0x30] sm:$0xff]
    %v435 = vld [vmem:[#allocation4 + $0x38] sm:$0xff]
    %v436 = vld [vmem:[#allocation4 + $0x40] sm:$0xff]
    %v437 = vld [vmem:[#allocation4 + $0x48] sm:$0xff]
    %v438 = vld [vmem:[#allocation4 + $0x50] sm:$0xff]
    %v439 = vld [vmem:[#allocation4 + $0x58] sm:$0xff]
    %v440 = vld [vmem:[#allocation4 + $0x60] sm:$0xff]
    %v441 = vld [vmem:[#allocation4 + $0x68] sm:$0xff]
    %v442 = vld [vmem:[#allocation4 + $0x70] sm:$0xff]
    %v443 = vld [vmem:[#allocation4 + $0x78] sm:$0xff]
    %v444 = vld [vmem:[#allocation4 + $0x80] sm:$0xff]
    %v445 = vld [vmem:[#allocation4 + $0x88] sm:$0xff]
    %v446 = vld [vmem:[#allocation4 + $0x90] sm:$0xff]
    %v447 = vld [vmem:[#allocation4 + $0x98] sm:$0xff]
    %v448 = vld [vmem:[#allocation4 + $0xa0] sm:$0xff]
    %v449 = vld [vmem:[#allocation4 + $0xa8] sm:$0xff]
    %v450 = vld [vmem:[#allocation4 + $0xb0] sm:$0xff]
    %v451 = vld [vmem:[#allocation4 + $0xb8] sm:$0xff]
    %v452 = vld [vmem:[#allocation4 + $0xc0] sm:$0xff]
    %v453 = vld [vmem:[#allocation4 + $0xc8] sm:$0xff]
    %v454 = vld [vmem:[#allocation4 + $0xd0] sm:$0xff]
    %v455 = vld [vmem:[#allocation4 + $0xd8] sm:$0xff]
    %v456 = vld [vmem:[#allocation4 + $0xe0] sm:$0xff]
    %v457 = vld [vmem:[#allocation4 + $0xe8] sm:$0xff]
    %v458 = vld [vmem:[#allocation4 + $0xf0] sm:$0xff]
    %v459 = vld [vmem:[#allocation4 + $0xf8] sm:$0xff]
    %v460 = vld [vmem:[#allocation4 + $0x100] sm:$0xff]
    %v461 = vld [vmem:[#allocation4 + $0x108] sm:$0xff]
    %v462 = vld [vmem:[#allocation4 + $0x110] sm:$0xff]
    %v463 = vld [vmem:[#allocation4 + $0x118] sm:$0xff]
    %v464 = vld [vmem:[#allocation4 + $0x120] sm:$0xff]
    %v465 = vld [vmem:[#allocation4 + $0x128] sm:$0xff]
    %v466 = vld [vmem:[#allocation4 + $0x130] sm:$0xff]
    %v467 = vld [vmem:[#allocation4 + $0x138] sm:$0xff]
    %v468 = vld [vmem:[#allocation4 + $0x140] sm:$0xff]
    %v469 = vld [vmem:[#allocation4 + $0x148] sm:$0xff]
    %v470 = vld [vmem:[#allocation4 + $0x150] sm:$0xff]
    %v471 = vld [vmem:[#allocation4 + $0x158] sm:$0xff]
    %v472 = vld [vmem:[#allocation4 + $0x160] sm:$0xff]
    %v473 = vld [vmem:[#allocation4 + $0x168] sm:$0xff]
    %v474 = vld [vmem:[#allocation4 + $0x170] sm:$0xff]
    %v475 = vld [vmem:[#allocation4 + $0x178] sm:$0xff]
    %v476 = vld [vmem:[#allocation4 + $0x180] sm:$0xff]
    %v477 = vld [vmem:[#allocation4 + $0x188] sm:$0xff]
    %v478 = vld [vmem:[#allocation4 + $0x190] sm:$0xff]
    %v479 = vld [vmem:[#allocation4 + $0x198] sm:$0xff]
    %v480 = vld [vmem:[#allocation4 + $0x1a0] sm:$0xff]
    %v481 = vld [vmem:[#allocation4 + $0x1a8] sm:$0xff]
    %v482 = vld [vmem:[#allocation4 + $0x1b0] sm:$0xff]
    %v483 = vld [vmem:[#allocation4 + $0x1b8] sm:$0xff]
    %v484 = vld [vmem:[#allocation4 + $0x1c0] sm:$0xff]
    %v485 = vld [vmem:[#allocation4 + $0x1c8] sm:$0xff]
    %v486 = vld [vmem:[#allocation4 + $0x1d0] sm:$0xff]
    %v487 = vld [vmem:[#allocation4 + $0x1d8] sm:$0xff]
    %v488 = vld [vmem:[#allocation4 + $0x1e0] sm:$0xff]
    %v489 = vld [vmem:[#allocation4 + $0x1e8] sm:$0xff]
    %v490 = vld [vmem:[#allocation4 + $0x1f0] sm:$0xff]
    %v491 = vld [vmem:[#allocation4 + $0x1f8] sm:$0xff]
    %492 = vmatprep.subr.mxu0 %v429
    %493 = vmatpush1.msra.mxu0 %v428
    %494 = vmatprep.subr.mxu0 %v433
    %495 = vmatpush1.msra.mxu0 %v432
    %496 = vmatprep.subr.mxu0 %v437
    %497 = vmatpush1.msra.mxu0 %v436
    %498 = vmatprep.subr.mxu0 %v441
    %499 = vmatpush1.msra.mxu0 %v440
    %500 = vmatprep.subr.mxu0 %v445
    %501 = vmatpush1.msra.mxu0 %v444
    %502 = vmatprep.subr.mxu0 %v449
    %503 = vmatpush1.msra.mxu0 %v448
    %504 = vmatprep.subr.mxu0 %v453
    %505 = vmatpush1.msra.mxu0 %v452
    %506 = vmatprep.subr.mxu0 %v457
    %507 = vmatpush1.msra.mxu0 %v456
    %508 = vmatprep.subr.mxu0 %v461
    %509 = vmatpush1.msra.mxu0 %v460
    %510 = vmatprep.subr.mxu0 %v465
    %511 = vmatpush1.msra.mxu0 %v464
    %512 = vmatprep.subr.mxu0 %v469
    %513 = vmatpush1.msra.mxu0 %v468
    %514 = vmatprep.subr.mxu0 %v473
    %515 = vmatpush1.msra.mxu0 %v472
    %516 = vmatprep.subr.mxu0 %v477
    %517 = vmatpush1.msra.mxu0 %v476
    %518 = vmatprep.subr.mxu0 %v481
    %519 = vmatpush1.msra.mxu0 %v480
    %520 = vmatprep.subr.mxu0 %v485
    %521 = vmatpush1.msra.mxu0 %v484
    %522 = vmatprep.subr.mxu0 %v489
    %523 = vmatpush1.msra.mxu0 %v488
    %524 = vmatprep.subr.mxu0 0.0
    %525 = vmatpush1.msra.mxu0 0.0
    %526 = vmatprep.subr.mxu0 0.0
    %527 = vmatpush1.msra.mxu0 0.0
    %528 = vmatprep.subr.mxu0 0.0
    %529 = vmatpush1.msra.mxu0 0.0
    %530 = vmatprep.subr.mxu0 0.0
    %531 = vmatpush1.msra.mxu0 0.0
    %532 = vmatprep.subr.mxu0 0.0
    %533 = vmatpush1.msra.mxu0 0.0
    %534 = vmatprep.subr.mxu0 0.0
    %535 = vmatpush1.msra.mxu0 0.0
    %536 = vmatprep.subr.mxu0 0.0
    %537 = vmatpush1.msra.mxu0 0.0
    %538 = vmatprep.subr.mxu0 0.0
    %539 = vmatpush1.msra.mxu0 0.0
    %540 = vmatprep.subr.mxu0 0.0
    %541 = vmatpush1.msra.mxu0 0.0
    %542 = vmatprep.subr.mxu0 0.0
    %543 = vmatpush1.msra.mxu0 0.0
    %544 = vmatprep.subr.mxu0 0.0
    %545 = vmatpush1.msra.mxu0 0.0
    %546 = vmatprep.subr.mxu0 0.0
    %547 = vmatpush1.msra.mxu0 0.0
    %548 = vmatprep.subr.mxu0 0.0
    %549 = vmatpush1.msra.mxu0 0.0
    %550 = vmatprep.subr.mxu0 0.0
    %551 = vmatpush1.msra.mxu0 0.0
    %552 = vmatprep.subr.mxu0 0.0
    %553 = vmatpush1.msra.mxu0 0.0
    %554 = vmatprep.subr.mxu0 0.0
    %555 = vmatpush1.msra.mxu0 0.0
    %556 = vmatprep.mubr.f32.mxu0 0.0
    %557 = vmatmul.mubr.f32.gmra.mrb[0].mxu0 0.0
    %v558 = vpop.f32.mrb[0].mxu0
    %v559 = vadd.f32 0.0, %v558
    %v560 = vpop.f32.mrb[0].mxu0
    %v561 = vadd.f32 0.0, %v560
    %562 = vdwg.mxu0
    %563 = vmatprep.subr.mxu0 %v431
    %564 = vmatpush1.msra.mxu0 %v430
    %565 = vmatprep.subr.mxu0 %v435
    %566 = vmatpush1.msra.mxu0 %v434
    %567 = vmatprep.subr.mxu0 %v439
    %568 = vmatpush1.msra.mxu0 %v438
    %569 = vmatprep.subr.mxu0 %v443
    %570 = vmatpush1.msra.mxu0 %v442
    %571 = vmatprep.subr.mxu0 %v447
    %572 = vmatpush1.msra.mxu0 %v446
    %573 = vmatprep.subr.mxu0 %v451
    %574 = vmatpush1.msra.mxu0 %v450
    %575 = vmatprep.subr.mxu0 %v455
    %576 = vmatpush1.msra.mxu0 %v454
    %577 = vmatprep.subr.mxu0 %v459
    %578 = vmatpush1.msra.mxu0 %v458
    %579 = vmatprep.subr.mxu0 %v463
    %580 = vmatpush1.msra.mxu0 %v462
    %581 = vmatprep.subr.mxu0 %v467
    %582 = vmatpush1.msra.mxu0 %v466
    %583 = vmatprep.subr.mxu0 %v471
    %584 = vmatpush1.msra.mxu0 %v470
    %585 = vmatprep.subr.mxu0 %v475
    %586 = vmatpush1.msra.mxu0 %v474
    %587 = vmatprep.subr.mxu0 %v479
    %588 = vmatpush1.msra.mxu0 %v478
    %589 = vmatprep.subr.mxu0 %v483
    %590 = vmatpush1.msra.mxu0 %v482
    %591 = vmatprep.subr.mxu0 %v487
    %592 = vmatpush1.msra.mxu0 %v486
    %593 = vmatprep.subr.mxu0 %v491
    %594 = vmatpush1.msra.mxu0 %v490
    %595 = vmatprep.subr.mxu0 0.0
    %596 = vmatpush1.msra.mxu0 0.0
    %597 = vmatprep.subr.mxu0 0.0
    %598 = vmatpush1.msra.mxu0 0.0
    %599 = vmatprep.subr.mxu0 0.0
    %600 = vmatpush1.msra.mxu0 0.0
    %601 = vmatprep.subr.mxu0 0.0
    %602 = vmatpush1.msra.mxu0 0.0
    %603 = vmatprep.subr.mxu0 0.0
    %604 = vmatpush1.msra.mxu0 0.0
    %605 = vmatprep.subr.mxu0 0.0
    %606 = vmatpush1.msra.mxu0 0.0
    %607 = vmatprep.subr.mxu0 0.0
    %608 = vmatpush1.msra.mxu0 0.0
    %609 = vmatprep.subr.mxu0 0.0
    %610 = vmatpush1.msra.mxu0 0.0
    %611 = vmatprep.subr.mxu0 0.0
    %612 = vmatpush1.msra.mxu0 0.0
    %613 = vmatprep.subr.mxu0 0.0
    %614 = vmatpush1.msra.mxu0 0.0
    %615 = vmatprep.subr.mxu0 0.0
    %616 = vmatpush1.msra.mxu0 0.0
    %617 = vmatprep.subr.mxu0 0.0
    %618 = vmatpush1.msra.mxu0 0.0
    %619 = vmatprep.subr.mxu0 0.0
    %620 = vmatpush1.msra.mxu0 0.0
    %621 = vmatprep.subr.mxu0 0.0
    %622 = vmatpush1.msra.mxu0 0.0
    %623 = vmatprep.subr.mxu0 0.0
    %624 = vmatpush1.msra.mxu0 0.0
    %625 = vmatprep.subr.mxu0 0.0
    %626 = vmatpush1.msra.mxu0 0.0
    %627 = vmatprep.mubr.f32.mxu0 0.0
    %628 = vmatmul.mubr.f32.gmra.mrb[0].mxu0 0.0
    %v629 = vpop.f32.mrb[0].mxu0
    %v630 = vadd.f32 0.0, %v629
    %v631 = vpop.f32.mrb[0].mxu0
    %v632 = vadd.f32 0.0, %v631
    %633 = vdwg.mxu0
    %v634 = vadd.f32 %v424, %v559
    %v635 = vadd.f32 %v425, %v561
    %v636 = vadd.f32 %v426, %v630
    %v637 = vadd.f32 %v427, %v632
    %v639 = vlaneseq
    %v640 = vshrl.u32 %v639, 7
    %v641 = vsub.s32 0, %v640
    %v642 = vrot.slane %v129, %v641
    %v643 = vlaneseq
    %v644 = vshrl.u32 %v643, 7
    %v645 = vsub.s32 1, %v644
    %v646 = vrot.slane %v129, %v645
    %v647 = vlaneseq
    %v648 = vshrl.u32 %v647, 7
    %v649 = vsub.s32 2, %v648
    %v650 = vrot.slane %v129, %v649
    %v651 = vlaneseq
    %v652 = vshrl.u32 %v651, 7
    %v653 = vsub.s32 3, %v652
    %v654 = vrot.slane %v129, %v653
    %v659 = vadd.f32 %v634, %v642
    %v660 = vadd.f32 %v635, %v646
    %v661 = vadd.f32 %v636, %v650
    %v662 = vadd.f32 %v637, %v654
    %v663 = vxor.u32 %v392, 2147483648
    %v664 = vmul.f32 %v663, 1.442695
    %v665 = vpow.pop %v664
    %v666 = vadd.f32 %v665, 1.0
    %v667 = vrcp.pop %v666
    %v668 = vmul.f32 1.0, %v667
    %v669 = vxor.u32 %v393, 2147483648
    %v670 = vmul.f32 %v669, 1.442695
    %v671 = vpow.pop %v670
    %v672 = vadd.f32 %v671, 1.0
    %v673 = vrcp.pop %v672
    %v674 = vmul.f32 1.0, %v673
    %v675 = vtanh.pop %v394
    %v676 = vxor.u32 %v395, 2147483648
    %v677 = vmul.f32 %v676, 1.442695
    %v678 = vpow.pop %v677
    %v679 = vadd.f32 %v678, 1.0
    %v680 = vrcp.pop %v679
    %v681 = vmul.f32 1.0, %v680
    %v682 = vmul.f32 %v674, 0.0
    %v683 = vmul.f32 %v668, %v675
    %v684 = vadd.f32 %v682, %v683
    %v685 = vtanh.pop %v684
    %v686 = vmul.f32 %v681, %v685
    %v687 = vxor.u32 %v659, 2147483648
    %v688 = vmul.f32 %v687, 1.442695
    %v689 = vpow.pop %v688
    %v690 = vadd.f32 %v689, 1.0
    %v691 = vrcp.pop %v690
    %v692 = vmul.f32 1.0, %v691
    %v693 = vxor.u32 %v660, 2147483648
    %v694 = vmul.f32 %v693, 1.442695
    %v695 = vpow.pop %v694
    %v696 = vadd.f32 %v695, 1.0
    %v697 = vrcp.pop %v696
    %v698 = vmul.f32 1.0, %v697
    %v699 = vtanh.pop %v661
    %v700 = vxor.u32 %v662, 2147483648
    %v701 = vmul.f32 %v700, 1.442695
    %v702 = vpow.pop %v701
    %v703 = vadd.f32 %v702, 1.0
    %v704 = vrcp.pop %v703
    %v705 = vmul.f32 1.0, %v704
    %v706 = vmul.f32 %v698, 0.0
    %v707 = vmul.f32 %v692, %v699
    %v708 = vadd.f32 %v706, %v707
    %v709 = vtanh.pop %v708
    %v710 = vmul.f32 %v705, %v709
    %s711 = scalar_lea.vmem %s0, 2
    %v712 = vld [vmem:[%s711] sm:$0x3]
    %714 = vset.pattern.permute.xlu0 0
    %715 = vperm.xlu0 %714, %v712
    %v716 = vpop.permute.xlu0 %715
    %v718 = vmul.f32 %v716, %v140
    %v719 = vmul.f32 %v716, %v144
    %v720 = vmul.f32 %v716, %v148
    %v721 = vmul.f32 %v716, %v152
    %722 = vmatprep.subr.mxu0 %v162
    %723 = vmatpush1.msra.mxu0 %v161
    %724 = vmatprep.subr.mxu0 %v166
    %725 = vmatpush1.msra.mxu0 %v165
    %726 = vmatprep.subr.mxu0 %v170
    %727 = vmatpush1.msra.mxu0 %v169
    %728 = vmatprep.subr.mxu0 %v174
    %729 = vmatpush1.msra.mxu0 %v173
    %730 = vmatprep.subr.mxu0 %v178
    %731 = vmatpush1.msra.mxu0 %v177
    %732 = vmatprep.subr.mxu0 %v182
    %733 = vmatpush1.msra.mxu0 %v181
    %734 = vmatprep.subr.mxu0 %v186
    %735 = vmatpush1.msra.mxu0 %v185
    %736 = vmatprep.subr.mxu0 %v190
    %737 = vmatpush1.msra.mxu0 %v189
    %738 = vmatprep.subr.mxu0 %v194
    %739 = vmatpush1.msra.mxu0 %v193
    %740 = vmatprep.subr.mxu0 %v198
    %741 = vmatpush1.msra.mxu0 %v197
    %742 = vmatprep.subr.mxu0 %v202
    %743 = vmatpush1.msra.mxu0 %v201
    %744 = vmatprep.subr.mxu0 %v206
    %745 = vmatpush1.msra.mxu0 %v205
    %746 = vmatprep.subr.mxu0 %v210
    %747 = vmatpush1.msra.mxu0 %v209
    %748 = vmatprep.subr.mxu0 %v214
    %749 = vmatpush1.msra.mxu0 %v213
    %750 = vmatprep.subr.mxu0 %v218
    %751 = vmatpush1.msra.mxu0 %v217
    %752 = vmatprep.subr.mxu0 %v222
    %753 = vmatpush1.msra.mxu0 %v221
    %754 = vmatprep.subr.mxu0 0.0
    %755 = vmatpush1.msra.mxu0 0.0
    %756 = vmatprep.subr.mxu0 0.0
    %757 = vmatpush1.msra.mxu0 0.0
    %758 = vmatprep.subr.mxu0 0.0
    %759 = vmatpush1.msra.mxu0 0.0
    %760 = vmatprep.subr.mxu0 0.0
    %761 = vmatpush1.msra.mxu0 0.0
    %762 = vmatprep.subr.mxu0 0.0
    %763 = vmatpush1.msra.mxu0 0.0
    %764 = vmatprep.subr.mxu0 0.0
    %765 = vmatpush1.msra.mxu0 0.0
    %766 = vmatprep.subr.mxu0 0.0
    %767 = vmatpush1.msra.mxu0 0.0
    %768 = vmatprep.subr.mxu0 0.0
    %769 = vmatpush1.msra.mxu0 0.0
    %770 = vmatprep.subr.mxu0 0.0
    %771 = vmatpush1.msra.mxu0 0.0
    %772 = vmatprep.subr.mxu0 0.0
    %773 = vmatpush1.msra.mxu0 0.0
    %774 = vmatprep.subr.mxu0 0.0
    %775 = vmatpush1.msra.mxu0 0.0
    %776 = vmatprep.subr.mxu0 0.0
    %777 = vmatpush1.msra.mxu0 0.0
    %778 = vmatprep.subr.mxu0 0.0
    %779 = vmatpush1.msra.mxu0 0.0
    %780 = vmatprep.subr.mxu0 0.0
    %781 = vmatpush1.msra.mxu0 0.0
    %782 = vmatprep.subr.mxu0 0.0
    %783 = vmatpush1.msra.mxu0 0.0
    %784 = vmatprep.subr.mxu0 0.0
    %785 = vmatpush1.msra.mxu0 0.0
    %786 = vmatprep.mubr.f32.mxu0 0.0
    %787 = vmatmul.mubr.f32.gmra.mrb[0].mxu0 %v686
    %v788 = vpop.f32.mrb[0].mxu0
    %v789 = vadd.f32 0.0, %v788
    %v790 = vpop.f32.mrb[0].mxu0
    %v791 = vadd.f32 0.0, %v790
    %792 = vdwg.mxu0
    %793 = vmatprep.subr.mxu0 %v164
    %794 = vmatpush1.msra.mxu0 %v163
    %795 = vmatprep.subr.mxu0 %v168
    %796 = vmatpush1.msra.mxu0 %v167
    %797 = vmatprep.subr.mxu0 %v172
    %798 = vmatpush1.msra.mxu0 %v171
    %799 = vmatprep.subr.mxu0 %v176
    %800 = vmatpush1.msra.mxu0 %v175
    %801 = vmatprep.subr.mxu0 %v180
    %802 = vmatpush1.msra.mxu0 %v179
    %803 = vmatprep.subr.mxu0 %v184
    %804 = vmatpush1.msra.mxu0 %v183
    %805 = vmatprep.subr.mxu0 %v188
    %806 = vmatpush1.msra.mxu0 %v187
    %807 = vmatprep.subr.mxu0 %v192
    %808 = vmatpush1.msra.mxu0 %v191
    %809 = vmatprep.subr.mxu0 %v196
    %810 = vmatpush1.msra.mxu0 %v195
    %811 = vmatprep.subr.mxu0 %v200
    %812 = vmatpush1.msra.mxu0 %v199
    %813 = vmatprep.subr.mxu0 %v204
    %814 = vmatpush1.msra.mxu0 %v203
    %815 = vmatprep.subr.mxu0 %v208
    %816 = vmatpush1.msra.mxu0 %v207
    %817 = vmatprep.subr.mxu0 %v212
    %818 = vmatpush1.msra.mxu0 %v211
    %819 = vmatprep.subr.mxu0 %v216
    %820 = vmatpush1.msra.mxu0 %v215
    %821 = vmatprep.subr.mxu0 %v220
    %822 = vmatpush1.msra.mxu0 %v219
    %823 = vmatprep.subr.mxu0 %v224
    %824 = vmatpush1.msra.mxu0 %v223
    %825 = vmatprep.subr.mxu0 0.0
    %826 = vmatpush1.msra.mxu0 0.0
    %827 = vmatprep.subr.mxu0 0.0
    %828 = vmatpush1.msra.mxu0 0.0
    %829 = vmatprep.subr.mxu0 0.0
    %830 = vmatpush1.msra.mxu0 0.0
    %831 = vmatprep.subr.mxu0 0.0
    %832 = vmatpush1.msra.mxu0 0.0
    %833 = vmatprep.subr.mxu0 0.0
    %834 = vmatpush1.msra.mxu0 0.0
    %835 = vmatprep.subr.mxu0 0.0
    %836 = vmatpush1.msra.mxu0 0.0
    %837 = vmatprep.subr.mxu0 0.0
    %838 = vmatpush1.msra.mxu0 0.0
    %839 = vmatprep.subr.mxu0 0.0
    %840 = vmatpush1.msra.mxu0 0.0
    %841 = vmatprep.subr.mxu0 0.0
    %842 = vmatpush1.msra.mxu0 0.0
    %843 = vmatprep.subr.mxu0 0.0
    %844 = vmatpush1.msra.mxu0 0.0
    %845 = vmatprep.subr.mxu0 0.0
    %846 = vmatpush1.msra.mxu0 0.0
    %847 = vmatprep.subr.mxu0 0.0
    %848 = vmatpush1.msra.mxu0 0.0
    %849 = vmatprep.subr.mxu0 0.0
    %850 = vmatpush1.msra.mxu0 0.0
    %851 = vmatprep.subr.mxu0 0.0
    %852 = vmatpush1.msra.mxu0 0.0
    %853 = vmatprep.subr.mxu0 0.0
    %854 = vmatpush1.msra.mxu0 0.0
    %855 = vmatprep.subr.mxu0 0.0
    %856 = vmatpush1.msra.mxu0 0.0
    %857 = vmatprep.mubr.f32.mxu0 0.0
    %858 = vmatmul.mubr.f32.gmra.mrb[0].mxu0 %v686
    %v859 = vpop.f32.mrb[0].mxu0
    %v860 = vadd.f32 0.0, %v859
    %v861 = vpop.f32.mrb[0].mxu0
    %v862 = vadd.f32 0.0, %v861
    %863 = vdwg.mxu0
    %v864 = vadd.f32 %v718, %v789
    %v865 = vadd.f32 %v719, %v791
    %v866 = vadd.f32 %v720, %v860
    %v867 = vadd.f32 %v721, %v862
    %v868 = vadd.f32 %v864, %v375
    %v869 = vadd.f32 %v865, %v379
    %v870 = vadd.f32 %v866, %v383
    %v871 = vadd.f32 %v867, %v387
    %s872 = scalar_lea.vmem %s0, 12
    %v873 = vld [vmem:[%s872] sm:$0x3]
    %875 = vset.pattern.permute.xlu0 0
    %876 = vperm.xlu0 %875, %v873
    %v877 = vpop.permute.xlu0 %876
    %v879 = vmul.f32 %v877, %v407
    %v880 = vmul.f32 %v877, %v411
    %v881 = vmul.f32 %v877, %v415
    %v882 = vmul.f32 %v877, %v419
    %883 = vmatprep.subr.mxu0 %v429
    %884 = vmatpush1.msra.mxu0 %v428
    %885 = vmatprep.subr.mxu0 %v433
    %886 = vmatpush1.msra.mxu0 %v432
    %887 = vmatprep.subr.mxu0 %v437
    %888 = vmatpush1.msra.mxu0 %v436
    %889 = vmatprep.subr.mxu0 %v441
    %890 = vmatpush1.msra.mxu0 %v440
    %891 = vmatprep.subr.mxu0 %v445
    %892 = vmatpush1.msra.mxu0 %v444
    %893 = vmatprep.subr.mxu0 %v449
    %894 = vmatpush1.msra.mxu0 %v448
    %895 = vmatprep.subr.mxu0 %v453
    %896 = vmatpush1.msra.mxu0 %v452
    %897 = vmatprep.subr.mxu0 %v457
    %898 = vmatpush1.msra.mxu0 %v456
    %899 = vmatprep.subr.mxu0 %v461
    %900 = vmatpush1.msra.mxu0 %v460
    %901 = vmatprep.subr.mxu0 %v465
    %902 = vmatpush1.msra.mxu0 %v464
    %903 = vmatprep.subr.mxu0 %v469
    %904 = vmatpush1.msra.mxu0 %v468
    %905 = vmatprep.subr.mxu0 %v473
    %906 = vmatpush1.msra.mxu0 %v472
    %907 = vmatprep.subr.mxu0 %v477
    %908 = vmatpush1.msra.mxu0 %v476
    %909 = vmatprep.subr.mxu0 %v481
    %910 = vmatpush1.msra.mxu0 %v480
    %911 = vmatprep.subr.mxu0 %v485
    %912 = vmatpush1.msra.mxu0 %v484
    %913 = vmatprep.subr.mxu0 %v489
    %914 = vmatpush1.msra.mxu0 %v488
    %915 = vmatprep.subr.mxu0 0.0
    %916 = vmatpush1.msra.mxu0 0.0
    %917 = vmatprep.subr.mxu0 0.0
    %918 = vmatpush1.msra.mxu0 0.0
    %919 = vmatprep.subr.mxu0 0.0
    %920 = vmatpush1.msra.mxu0 0.0
    %921 = vmatprep.subr.mxu0 0.0
    %922 = vmatpush1.msra.mxu0 0.0
    %923 = vmatprep.subr.mxu0 0.0
    %924 = vmatpush1.msra.mxu0 0.0
    %925 = vmatprep.subr.mxu0 0.0
    %926 = vmatpush1.msra.mxu0 0.0
    %927 = vmatprep.subr.mxu0 0.0
    %928 = vmatpush1.msra.mxu0 0.0
    %929 = vmatprep.subr.mxu0 0.0
    %930 = vmatpush1.msra.mxu0 0.0
    %931 = vmatprep.subr.mxu0 0.0
    %932 = vmatpush1.msra.mxu0 0.0
    %933 = vmatprep.subr.mxu0 0.0
    %934 = vmatpush1.msra.mxu0 0.0
    %935 = vmatprep.subr.mxu0 0.0
    %936 = vmatpush1.msra.mxu0 0.0
    %937 = vmatprep.subr.mxu0 0.0
    %938 = vmatpush1.msra.mxu0 0.0
    %939 = vmatprep.subr.mxu0 0.0
    %940 = vmatpush1.msra.mxu0 0.0
    %941 = vmatprep.subr.mxu0 0.0
    %942 = vmatpush1.msra.mxu0 0.0
    %943 = vmatprep.subr.mxu0 0.0
    %944 = vmatpush1.msra.mxu0 0.0
    %945 = vmatprep.subr.mxu0 0.0
    %946 = vmatpush1.msra.mxu0 0.0
    %947 = vmatprep.mubr.f32.mxu0 0.0
    %948 = vmatmul.mubr.f32.gmra.mrb[0].mxu0 %v710
    %v949 = vpop.f32.mrb[0].mxu0
    %v950 = vadd.f32 0.0, %v949
    %v951 = vpop.f32.mrb[0].mxu0
    %v952 = vadd.f32 0.0, %v951
    %953 = vdwg.mxu0
    %954 = vmatprep.subr.mxu0 %v431
    %955 = vmatpush1.msra.mxu0 %v430
    %956 = vmatprep.subr.mxu0 %v435
    %957 = vmatpush1.msra.mxu0 %v434
    %958 = vmatprep.subr.mxu0 %v439
    %959 = vmatpush1.msra.mxu0 %v438
    %960 = vmatprep.subr.mxu0 %v443
    %961 = vmatpush1.msra.mxu0 %v442
    %962 = vmatprep.subr.mxu0 %v447
    %963 = vmatpush1.msra.mxu0 %v446
    %964 = vmatprep.subr.mxu0 %v451
    %965 = vmatpush1.msra.mxu0 %v450
    %966 = vmatprep.subr.mxu0 %v455
    %967 = vmatpush1.msra.mxu0 %v454
    %968 = vmatprep.subr.mxu0 %v459
    %969 = vmatpush1.msra.mxu0 %v458
    %970 = vmatprep.subr.mxu0 %v463
    %971 = vmatpush1.msra.mxu0 %v462
    %972 = vmatprep.subr.mxu0 %v467
    %973 = vmatpush1.msra.mxu0 %v466
    %974 = vmatprep.subr.mxu0 %v471
    %975 = vmatpush1.msra.mxu0 %v470
    %976 = vmatprep.subr.mxu0 %v475
    %977 = vmatpush1.msra.mxu0 %v474
    %978 = vmatprep.subr.mxu0 %v479
    %979 = vmatpush1.msra.mxu0 %v478
    %980 = vmatprep.subr.mxu0 %v483
    %981 = vmatpush1.msra.mxu0 %v482
    %982 = vmatprep.subr.mxu0 %v487
    %983 = vmatpush1.msra.mxu0 %v486
    %984 = vmatprep.subr.mxu0 %v491
    %985 = vmatpush1.msra.mxu0 %v490
    %986 = vmatprep.subr.mxu0 0.0
    %987 = vmatpush1.msra.mxu0 0.0
    %988 = vmatprep.subr.mxu0 0.0
    %989 = vmatpush1.msra.mxu0 0.0
    %990 = vmatprep.subr.mxu0 0.0
    %991 = vmatpush1.msra.mxu0 0.0
    %992 = vmatprep.subr.mxu0 0.0
    %993 = vmatpush1.msra.mxu0 0.0
    %994 = vmatprep.subr.mxu0 0.0
    %995 = vmatpush1.msra.mxu0 0.0
    %996 = vmatprep.subr.mxu0 0.0
    %997 = vmatpush1.msra.mxu0 0.0
    %998 = vmatprep.subr.mxu0 0.0
    %999 = vmatpush1.msra.mxu0 0.0
    %1000 = vmatprep.subr.mxu0 0.0
    %1001 = vmatpush1.msra.mxu0 0.0
    %1002 = vmatprep.subr.mxu0 0.0
    %1003 = vmatpush1.msra.mxu0 0.0
    %1004 = vmatprep.subr.mxu0 0.0
    %1005 = vmatpush1.msra.mxu0 0.0
    %1006 = vmatprep.subr.mxu0 0.0
    %1007 = vmatpush1.msra.mxu0 0.0
    %1008 = vmatprep.subr.mxu0 0.0
    %1009 = vmatpush1.msra.mxu0 0.0
    %1010 = vmatprep.subr.mxu0 0.0
    %1011 = vmatpush1.msra.mxu0 0.0
    %1012 = vmatprep.subr.mxu0 0.0
    %1013 = vmatpush1.msra.mxu0 0.0
    %1014 = vmatprep.subr.mxu0 0.0
    %1015 = vmatpush1.msra.mxu0 0.0
    %1016 = vmatprep.subr.mxu0 0.0
    %1017 = vmatpush1.msra.mxu0 0.0
    %1018 = vmatprep.mubr.f32.mxu0 0.0
    %1019 = vmatmul.mubr.f32.gmra.mrb[0].mxu0 %v710
    %v1020 = vpop.f32.mrb[0].mxu0
    %v1021 = vadd.f32 0.0, %v1020
    %v1022 = vpop.f32.mrb[0].mxu0
    %v1023 = vadd.f32 0.0, %v1022
    %1024 = vdwg.mxu0
    %v1025 = vadd.f32 %v879, %v950
    %v1026 = vadd.f32 %v880, %v952
    %v1027 = vadd.f32 %v881, %v1021
    %v1028 = vadd.f32 %v882, %v1023
    %v1029 = vadd.f32 %v1025, %v642
    %v1030 = vadd.f32 %v1026, %v646
    %v1031 = vadd.f32 %v1027, %v650
    %v1032 = vadd.f32 %v1028, %v654
    %v1033 = vxor.u32 %v868, 2147483648
    %v1034 = vmul.f32 %v1033, 1.442695
    %v1035 = vpow.pop %v1034
    %v1036 = vadd.f32 %v1035, 1.0
    %v1037 = vrcp.pop %v1036
    %v1038 = vmul.f32 1.0, %v1037
    %v1039 = vxor.u32 %v869, 2147483648
    %v1040 = vmul.f32 %v1039, 1.442695
    %v1041 = vpow.pop %v1040
    %v1042 = vadd.f32 %v1041, 1.0
    %v1043 = vrcp.pop %v1042
    %v1044 = vmul.f32 1.0, %v1043
    %v1045 = vtanh.pop %v870
    %v1046 = vxor.u32 %v871, 2147483648
    %v1047 = vmul.f32 %v1046, 1.442695
    %v1048 = vpow.pop %v1047
    %v1049 = vadd.f32 %v1048, 1.0
    %v1050 = vrcp.pop %v1049
    %v1051 = vmul.f32 1.0, %v1050
    %v1052 = vmul.f32 %v1044, %v684
    %v1053 = vmul.f32 %v1038, %v1045
    %v1054 = vadd.f32 %v1052, %v1053
    %v1055 = vtanh.pop %v1054
    %v1056 = vmul.f32 %v1051, %v1055
    %v1057 = vxor.u32 %v1029, 2147483648
    %v1058 = vmul.f32 %v1057, 1.442695
    %v1059 = vpow.pop %v1058
    %v1060 = vadd.f32 %v1059, 1.0
    %v1061 = vrcp.pop %v1060
    %v1062 = vmul.f32 1.0, %v1061
    %v1063 = vxor.u32 %v1030, 2147483648
    %v1064 = vmul.f32 %v1063, 1.442695
    %v1065 = vpow.pop %v1064
    %v1066 = vadd.f32 %v1065, 1.0
    %v1067 = vrcp.pop %v1066
    %v1068 = vmul.f32 1.0, %v1067
    %v1069 = vtanh.pop %v1031
    %v1070 = vxor.u32 %v1032, 2147483648
    %v1071 = vmul.f32 %v1070, 1.442695
    %v1072 = vpow.pop %v1071
    %v1073 = vadd.f32 %v1072, 1.0
    %v1074 = vrcp.pop %v1073
    %v1075 = vmul.f32 1.0, %v1074
    %v1076 = vmul.f32 %v1068, %v708
    %v1077 = vmul.f32 %v1062, %v1069
    %v1078 = vadd.f32 %v1076, %v1077
    %v1079 = vtanh.pop %v1078
    %v1080 = vmul.f32 %v1075, %v1079
    %s1081 = scalar_lea.vmem %s0, 4
    %v1082 = vld [vmem:[%s1081] sm:$0x3]
    %1084 = vset.pattern.permute.xlu0 0
    %1085 = vperm.xlu0 %1084, %v1082
    %v1086 = vpop.permute.xlu0 %1085
    %v1088 = vmul.f32 %v1086, %v140
    %v1089 = vmul.f32 %v1086, %v144
    %v1090 = vmul.f32 %v1086, %v148
    %v1091 = vmul.f32 %v1086, %v152
    %1092 = vmatprep.subr.mxu0 %v162
    %1093 = vmatpush1.msra.mxu0 %v161
    %1094 = vmatprep.subr.mxu0 %v166
    %1095 = vmatpush1.msra.mxu0 %v165
    %1096 = vmatprep.subr.mxu0 %v170
    %1097 = vmatpush1.msra.mxu0 %v169
    %1098 = vmatprep.subr.mxu0 %v174
    %1099 = vmatpush1.msra.mxu0 %v173
    %1100 = vmatprep.subr.mxu0 %v178
    %1101 = vmatpush1.msra.mxu0 %v177
    %1102 = vmatprep.subr.mxu0 %v182
    %1103 = vmatpush1.msra.mxu0 %v181
    %1104 = vmatprep.subr.mxu0 %v186
    %1105 = vmatpush1.msra.mxu0 %v185
    %1106 = vmatprep.subr.mxu0 %v190
    %1107 = vmatpush1.msra.mxu0 %v189
    %1108 = vmatprep.subr.mxu0 %v194
    %1109 = vmatpush1.msra.mxu0 %v193
    %1110 = vmatprep.subr.mxu0 %v198
    %1111 = vmatpush1.msra.mxu0 %v197
    %1112 = vmatprep.subr.mxu0 %v202
    %1113 = vmatpush1.msra.mxu0 %v201
    %1114 = vmatprep.subr.mxu0 %v206
    %1115 = vmatpush1.msra.mxu0 %v205
    %1116 = vmatprep.subr.mxu0 %v210
    %1117 = vmatpush1.msra.mxu0 %v209
    %1118 = vmatprep.subr.mxu0 %v214
    %1119 = vmatpush1.msra.mxu0 %v213
    %1120 = vmatprep.subr.mxu0 %v218
    %1121 = vmatpush1.msra.mxu0 %v217
    %1122 = vmatprep.subr.mxu0 %v222
    %1123 = vmatpush1.msra.mxu0 %v221
    %1124 = vmatprep.subr.mxu0 0.0
    %1125 = vmatpush1.msra.mxu0 0.0
    %1126 = vmatprep.subr.mxu0 0.0
    %1127 = vmatpush1.msra.mxu0 0.0
    %1128 = vmatprep.subr.mxu0 0.0
    %1129 = vmatpush1.msra.mxu0 0.0
    %1130 = vmatprep.subr.mxu0 0.0
    %1131 = vmatpush1.msra.mxu0 0.0
    %1132 = vmatprep.subr.mxu0 0.0
    %1133 = vmatpush1.msra.mxu0 0.0
    %1134 = vmatprep.subr.mxu0 0.0
    %1135 = vmatpush1.msra.mxu0 0.0
    %1136 = vmatprep.subr.mxu0 0.0
    %1137 = vmatpush1.msra.mxu0 0.0
    %1138 = vmatprep.subr.mxu0 0.0
    %1139 = vmatpush1.msra.mxu0 0.0
    %1140 = vmatprep.subr.mxu0 0.0
    %1141 = vmatpush1.msra.mxu0 0.0
    %1142 = vmatprep.subr.mxu0 0.0
    %1143 = vmatpush1.msra.mxu0 0.0
    %1144 = vmatprep.subr.mxu0 0.0
    %1145 = vmatpush1.msra.mxu0 0.0
    %1146 = vmatprep.subr.mxu0 0.0
    %1147 = vmatpush1.msra.mxu0 0.0
    %1148 = vmatprep.subr.mxu0 0.0
    %1149 = vmatpush1.msra.mxu0 0.0
    %1150 = vmatprep.subr.mxu0 0.0
    %1151 = vmatpush1.msra.mxu0 0.0
    %1152 = vmatprep.subr.mxu0 0.0
    %1153 = vmatpush1.msra.mxu0 0.0
    %1154 = vmatprep.subr.mxu0 0.0
    %1155 = vmatpush1.msra.mxu0 0.0
    %1156 = vmatprep.mubr.f32.mxu0 0.0
    %1157 = vmatmul.mubr.f32.gmra.mrb[0].mxu0 %v1056
    %v1158 = vpop.f32.mrb[0].mxu0
    %v1159 = vadd.f32 0.0, %v1158
    %v1160 = vpop.f32.mrb[0].mxu0
    %v1161 = vadd.f32 0.0, %v1160
    %1162 = vdwg.mxu0
    %1163 = vmatprep.subr.mxu0 %v164
    %1164 = vmatpush1.msra.mxu0 %v163
    %1165 = vmatprep.subr.mxu0 %v168
    %1166 = vmatpush1.msra.mxu0 %v167
    %1167 = vmatprep.subr.mxu0 %v172
    %1168 = vmatpush1.msra.mxu0 %v171
    %1169 = vmatprep.subr.mxu0 %v176
    %1170 = vmatpush1.msra.mxu0 %v175
    %1171 = vmatprep.subr.mxu0 %v180
    %1172 = vmatpush1.msra.mxu0 %v179
    %1173 = vmatprep.subr.mxu0 %v184
    %1174 = vmatpush1.msra.mxu0 %v183
    %1175 = vmatprep.subr.mxu0 %v188
    %1176 = vmatpush1.msra.mxu0 %v187
    %1177 = vmatprep.subr.mxu0 %v192
    %1178 = vmatpush1.msra.mxu0 %v191
    %1179 = vmatprep.subr.mxu0 %v196
    %1180 = vmatpush1.msra.mxu0 %v195
    %1181 = vmatprep.subr.mxu0 %v200
    %1182 = vmatpush1.msra.mxu0 %v199
    %1183 = vmatprep.subr.mxu0 %v204
    %1184 = vmatpush1.msra.mxu0 %v203
    %1185 = vmatprep.subr.mxu0 %v208
    %1186 = vmatpush1.msra.mxu0 %v207
    %1187 = vmatprep.subr.mxu0 %v212
    %1188 = vmatpush1.msra.mxu0 %v211
    %1189 = vmatprep.subr.mxu0 %v216
    %1190 = vmatpush1.msra.mxu0 %v215
    %1191 = vmatprep.subr.mxu0 %v220
    %1192 = vmatpush1.msra.mxu0 %v219
    %1193 = vmatprep.subr.mxu0 %v224
    %1194 = vmatpush1.msra.mxu0 %v223
    %1195 = vmatprep.subr.mxu0 0.0
    %1196 = vmatpush1.msra.mxu0 0.0
    %1197 = vmatprep.subr.mxu0 0.0
    %1198 = vmatpush1.msra.mxu0 0.0
    %1199 = vmatprep.subr.mxu0 0.0
    %1200 = vmatpush1.msra.mxu0 0.0
    %1201 = vmatprep.subr.mxu0 0.0
    %1202 = vmatpush1.msra.mxu0 0.0
    %1203 = vmatprep.subr.mxu0 0.0
    %1204 = vmatpush1.msra.mxu0 0.0
    %1205 = vmatprep.subr.mxu0 0.0
    %1206 = vmatpush1.msra.mxu0 0.0
    %1207 = vmatprep.subr.mxu0 0.0
    %1208 = vmatpush1.msra.mxu0 0.0
    %1209 = vmatprep.subr.mxu0 0.0
    %1210 = vmatpush1.msra.mxu0 0.0
    %1211 = vmatprep.subr.mxu0 0.0
    %1212 = vmatpush1.msra.mxu0 0.0
    %1213 = vmatprep.subr.mxu0 0.0
    %1214 = vmatpush1.msra.mxu0 0.0
    %1215 = vmatprep.subr.mxu0 0.0
    %1216 = vmatpush1.msra.mxu0 0.0
    %1217 = vmatprep.subr.mxu0 0.0
    %1218 = vmatpush1.msra.mxu0 0.0
    %1219 = vmatprep.subr.mxu0 0.0
    %1220 = vmatpush1.msra.mxu0 0.0
    %1221 = vmatprep.subr.mxu0 0.0
    %1222 = vmatpush1.msra.mxu0 0.0
    %1223 = vmatprep.subr.mxu0 0.0
    %1224 = vmatpush1.msra.mxu0 0.0
    %1225 = vmatprep.subr.mxu0 0.0
    %1226 = vmatpush1.msra.mxu0 0.0
    %1227 = vmatprep.mubr.f32.mxu0 0.0
    %1228 = vmatmul.mubr.f32.gmra.mrb[0].mxu0 %v1056
    %v1229 = vpop.f32.mrb[0].mxu0
    %v1230 = vadd.f32 0.0, %v1229
    %v1231 = vpop.f32.mrb[0].mxu0
    %v1232 = vadd.f32 0.0, %v1231
    %1233 = vdwg.mxu0
    %v1234 = vadd.f32 %v1088, %v1159
    %v1235 = vadd.f32 %v1089, %v1161
    %v1236 = vadd.f32 %v1090, %v1230
    %v1237 = vadd.f32 %v1091, %v1232
    %v1238 = vadd.f32 %v1234, %v375
    %v1239 = vadd.f32 %v1235, %v379
    %v1240 = vadd.f32 %v1236, %v383
    %v1241 = vadd.f32 %v1237, %v387
    %s1242 = scalar_lea.vmem %s0, 10
    %v1243 = vld [vmem:[%s1242] sm:$0x3]
    %1245 = vset.pattern.permute.xlu0 0
    %1246 = vperm.xlu0 %1245, %v1243
    %v1247 = vpop.permute.xlu0 %1246
    %v1249 = vmul.f32 %v1247, %v407
    %v1250 = vmul.f32 %v1247, %v411
    %v1251 = vmul.f32 %v1247, %v415
    %v1252 = vmul.f32 %v1247, %v419
    %1253 = vmatprep.subr.mxu0 %v429
    %1254 = vmatpush1.msra.mxu0 %v428
    %1255 = vmatprep.subr.mxu0 %v433
    %1256 = vmatpush1.msra.mxu0 %v432
    %1257 = vmatprep.subr.mxu0 %v437
    %1258 = vmatpush1.msra.mxu0 %v436
    %1259 = vmatprep.subr.mxu0 %v441
    %1260 = vmatpush1.msra.mxu0 %v440
    %1261 = vmatprep.subr.mxu0 %v445
    %1262 = vmatpush1.msra.mxu0 %v444
    %1263 = vmatprep.subr.mxu0 %v449
    %1264 = vmatpush1.msra.mxu0 %v448
    %1265 = vmatprep.subr.mxu0 %v453
    %1266 = vmatpush1.msra.mxu0 %v452
    %1267 = vmatprep.subr.mxu0 %v457
    %1268 = vmatpush1.msra.mxu0 %v456
    %1269 = vmatprep.subr.mxu0 %v461
    %1270 = vmatpush1.msra.mxu0 %v460
    %1271 = vmatprep.subr.mxu0 %v465
    %1272 = vmatpush1.msra.mxu0 %v464
    %1273 = vmatprep.subr.mxu0 %v469
    %1274 = vmatpush1.msra.mxu0 %v468
    %1275 = vmatprep.subr.mxu0 %v473
    %1276 = vmatpush1.msra.mxu0 %v472
    %1277 = vmatprep.subr.mxu0 %v477
    %1278 = vmatpush1.msra.mxu0 %v476
    %1279 = vmatprep.subr.mxu0 %v481
    %1280 = vmatpush1.msra.mxu0 %v480
    %1281 = vmatprep.subr.mxu0 %v485
    %1282 = vmatpush1.msra.mxu0 %v484
    %1283 = vmatprep.subr.mxu0 %v489
    %1284 = vmatpush1.msra.mxu0 %v488
    %1285 = vmatprep.subr.mxu0 0.0
    %1286 = vmatpush1.msra.mxu0 0.0
    %1287 = vmatprep.subr.mxu0 0.0
    %1288 = vmatpush1.msra.mxu0 0.0
    %1289 = vmatprep.subr.mxu0 0.0
    %1290 = vmatpush1.msra.mxu0 0.0
    %1291 = vmatprep.subr.mxu0 0.0
    %1292 = vmatpush1.msra.mxu0 0.0
    %1293 = vmatprep.subr.mxu0 0.0
    %1294 = vmatpush1.msra.mxu0 0.0
    %1295 = vmatprep.subr.mxu0 0.0
    %1296 = vmatpush1.msra.mxu0 0.0
    %1297 = vmatprep.subr.mxu0 0.0
    %1298 = vmatpush1.msra.mxu0 0.0
    %1299 = vmatprep.subr.mxu0 0.0
    %1300 = vmatpush1.msra.mxu0 0.0
    %1301 = vmatprep.subr.mxu0 0.0
    %1302 = vmatpush1.msra.mxu0 0.0
    %1303 = vmatprep.subr.mxu0 0.0
    %1304 = vmatpush1.msra.mxu0 0.0
    %1305 = vmatprep.subr.mxu0 0.0
    %1306 = vmatpush1.msra.mxu0 0.0
    %1307 = vmatprep.subr.mxu0 0.0
    %1308 = vmatpush1.msra.mxu0 0.0
    %1309 = vmatprep.subr.mxu0 0.0
    %1310 = vmatpush1.msra.mxu0 0.0
    %1311 = vmatprep.subr.mxu0 0.0
    %1312 = vmatpush1.msra.mxu0 0.0
    %1313 = vmatprep.subr.mxu0 0.0
    %1314 = vmatpush1.msra.mxu0 0.0
    %1315 = vmatprep.subr.mxu0 0.0
    %1316 = vmatpush1.msra.mxu0 0.0
    %1317 = vmatprep.mubr.f32.mxu0 0.0
    %1318 = vmatmul.mubr.f32.gmra.mrb[0].mxu0 %v1080
    %v1319 = vpop.f32.mrb[0].mxu0
    %v1320 = vadd.f32 0.0, %v1319
    %v1321 = vpop.f32.mrb[0].mxu0
    %v1322 = vadd.f32 0.0, %v1321
    %1323 = vdwg.mxu0
    %1324 = vmatprep.subr.mxu0 %v431
    %1325 = vmatpush1.msra.mxu0 %v430
    %1326 = vmatprep.subr.mxu0 %v435
    %1327 = vmatpush1.msra.mxu0 %v434
    %1328 = vmatprep.subr.mxu0 %v439
    %1329 = vmatpush1.msra.mxu0 %v438
    %1330 = vmatprep.subr.mxu0 %v443
    %1331 = vmatpush1.msra.mxu0 %v442
    %1332 = vmatprep.subr.mxu0 %v447
    %1333 = vmatpush1.msra.mxu0 %v446
    %1334 = vmatprep.subr.mxu0 %v451
    %1335 = vmatpush1.msra.mxu0 %v450
    %1336 = vmatprep.subr.mxu0 %v455
    %1337 = vmatpush1.msra.mxu0 %v454
    %1338 = vmatprep.subr.mxu0 %v459
    %1339 = vmatpush1.msra.mxu0 %v458
    %1340 = vmatprep.subr.mxu0 %v463
    %1341 = vmatpush1.msra.mxu0 %v462
    %1342 = vmatprep.subr.mxu0 %v467
    %1343 = vmatpush1.msra.mxu0 %v466
    %1344 = vmatprep.subr.mxu0 %v471
    %1345 = vmatpush1.msra.mxu0 %v470
    %1346 = vmatprep.subr.mxu0 %v475
    %1347 = vmatpush1.msra.mxu0 %v474
    %1348 = vmatprep.subr.mxu0 %v479
    %1349 = vmatpush1.msra.mxu0 %v478
    %1350 = vmatprep.subr.mxu0 %v483
    %1351 = vmatpush1.msra.mxu0 %v482
    %1352 = vmatprep.subr.mxu0 %v487
    %1353 = vmatpush1.msra.mxu0 %v486
    %1354 = vmatprep.subr.mxu0 %v491
    %1355 = vmatpush1.msra.mxu0 %v490
    %1356 = vmatprep.subr.mxu0 0.0
    %1357 = vmatpush1.msra.mxu0 0.0
    %1358 = vmatprep.subr.mxu0 0.0
    %1359 = vmatpush1.msra.mxu0 0.0
    %1360 = vmatprep.subr.mxu0 0.0
    %1361 = vmatpush1.msra.mxu0 0.0
    %1362 = vmatprep.subr.mxu0 0.0
    %1363 = vmatpush1.msra.mxu0 0.0
    %1364 = vmatprep.subr.mxu0 0.0
    %1365 = vmatpush1.msra.mxu0 0.0
    %1366 = vmatprep.subr.mxu0 0.0
    %1367 = vmatpush1.msra.mxu0 0.0
    %1368 = vmatprep.subr.mxu0 0.0
    %1369 = vmatpush1.msra.mxu0 0.0
    %1370 = vmatprep.subr.mxu0 0.0
    %1371 = vmatpush1.msra.mxu0 0.0
    %1372 = vmatprep.subr.mxu0 0.0
    %1373 = vmatpush1.msra.mxu0 0.0
    %1374 = vmatprep.subr.mxu0 0.0
    %1375 = vmatpush1.msra.mxu0 0.0
    %1376 = vmatprep.subr.mxu0 0.0
    %1377 = vmatpush1.msra.mxu0 0.0
    %1378 = vmatprep.subr.mxu0 0.0
    %1379 = vmatpush1.msra.mxu0 0.0
    %1380 = vmatprep.subr.mxu0 0.0
    %1381 = vmatpush1.msra.mxu0 0.0
    %1382 = vmatprep.subr.mxu0 0.0
    %1383 = vmatpush1.msra.mxu0 0.0
    %1384 = vmatprep.subr.mxu0 0.0
    %1385 = vmatpush1.msra.mxu0 0.0
    %1386 = vmatprep.subr.mxu0 0.0
    %1387 = vmatpush1.msra.mxu0 0.0
    %1388 = vmatprep.mubr.f32.mxu0 0.0
    %1389 = vmatmul.mubr.f32.gmra.mrb[0].mxu0 %v1080
    %v1390 = vpop.f32.mrb[0].mxu0
    %v1391 = vadd.f32 0.0, %v1390
    %v1392 = vpop.f32.mrb[0].mxu0
    %v1393 = vadd.f32 0.0, %v1392
    %1394 = vdwg.mxu0
    %v1395 = vadd.f32 %v1249, %v1320
    %v1396 = vadd.f32 %v1250, %v1322
    %v1397 = vadd.f32 %v1251, %v1391
    %v1398 = vadd.f32 %v1252, %v1393
    %v1399 = vadd.f32 %v1395, %v642
    %v1400 = vadd.f32 %v1396, %v646
    %v1401 = vadd.f32 %v1397, %v650
    %v1402 = vadd.f32 %v1398, %v654
    %v1403 = vxor.u32 %v1238, 2147483648
    %v1404 = vmul.f32 %v1403, 1.442695
    %v1405 = vpow.pop %v1404
    %v1406 = vadd.f32 %v1405, 1.0
    %v1407 = vrcp.pop %v1406
    %v1408 = vmul.f32 1.0, %v1407
    %v1409 = vxor.u32 %v1239, 2147483648
    %v1410 = vmul.f32 %v1409, 1.442695
    %v1411 = vpow.pop %v1410
    %v1412 = vadd.f32 %v1411, 1.0
    %v1413 = vrcp.pop %v1412
    %v1414 = vmul.f32 1.0, %v1413
    %v1415 = vtanh.pop %v1240
    %v1416 = vxor.u32 %v1241, 2147483648
    %v1417 = vmul.f32 %v1416, 1.442695
    %v1418 = vpow.pop %v1417
    %v1419 = vadd.f32 %v1418, 1.0
    %v1420 = vrcp.pop %v1419
    %v1421 = vmul.f32 1.0, %v1420
    %v1422 = vmul.f32 %v1414, %v1054
    %v1423 = vmul.f32 %v1408, %v1415
    %v1424 = vadd.f32 %v1422, %v1423
    %v1425 = vtanh.pop %v1424
    %v1426 = vmul.f32 %v1421, %v1425
    %v1427 = vxor.u32 %v1399, 2147483648
    %v1428 = vmul.f32 %v1427, 1.442695
    %v1429 = vpow.pop %v1428
    %v1430 = vadd.f32 %v1429, 1.0
    %v1431 = vrcp.pop %v1430
    %v1432 = vmul.f32 1.0, %v1431
    %v1433 = vxor.u32 %v1400, 2147483648
    %v1434 = vmul.f32 %v1433, 1.442695
    %v1435 = vpow.pop %v1434
    %v1436 = vadd.f32 %v1435, 1.0
    %v1437 = vrcp.pop %v1436
    %v1438 = vmul.f32 1.0, %v1437
    %v1439 = vtanh.pop %v1401
    %v1440 = vxor.u32 %v1402, 2147483648
    %v1441 = vmul.f32 %v1440, 1.442695
    %v1442 = vpow.pop %v1441
    %v1443 = vadd.f32 %v1442, 1.0
    %v1444 = vrcp.pop %v1443
    %v1445 = vmul.f32 1.0, %v1444
    %v1446 = vmul.f32 %v1438, %v1078
    %v1447 = vmul.f32 %v1432, %v1439
    %v1448 = vadd.f32 %v1446, %v1447
    %v1449 = vtanh.pop %v1448
    %v1450 = vmul.f32 %v1445, %v1449
    %s1451 = scalar_lea.vmem %s0, 6
    %v1452 = vld [vmem:[%s1451] sm:$0x3]
    %1454 = vset.pattern.permute.xlu0 0
    %1455 = vperm.xlu0 %1454, %v1452
    %v1456 = vpop.permute.xlu0 %1455
    %v1458 = vmul.f32 %v1456, %v140
    %v1459 = vmul.f32 %v1456, %v144
    %v1460 = vmul.f32 %v1456, %v148
    %v1461 = vmul.f32 %v1456, %v152
    %1462 = vmatprep.subr.mxu0 %v162
    %1463 = vmatpush1.msra.mxu0 %v161
    %1464 = vmatprep.subr.mxu0 %v166
    %1465 = vmatpush1.msra.mxu0 %v165
    %1466 = vmatprep.subr.mxu0 %v170
    %1467 = vmatpush1.msra.mxu0 %v169
    %1468 = vmatprep.subr.mxu0 %v174
    %1469 = vmatpush1.msra.mxu0 %v173
    %1470 = vmatprep.subr.mxu0 %v178
    %1471 = vmatpush1.msra.mxu0 %v177
    %1472 = vmatprep.subr.mxu0 %v182
    %1473 = vmatpush1.msra.mxu0 %v181
    %1474 = vmatprep.subr.mxu0 %v186
    %1475 = vmatpush1.msra.mxu0 %v185
    %1476 = vmatprep.subr.mxu0 %v190
    %1477 = vmatpush1.msra.mxu0 %v189
    %1478 = vmatprep.subr.mxu0 %v194
    %1479 = vmatpush1.msra.mxu0 %v193
    %1480 = vmatprep.subr.mxu0 %v198
    %1481 = vmatpush1.msra.mxu0 %v197
    %1482 = vmatprep.subr.mxu0 %v202
    %1483 = vmatpush1.msra.mxu0 %v201
    %1484 = vmatprep.subr.mxu0 %v206
    %1485 = vmatpush1.msra.mxu0 %v205
    %1486 = vmatprep.subr.mxu0 %v210
    %1487 = vmatpush1.msra.mxu0 %v209
    %1488 = vmatprep.subr.mxu0 %v214
    %1489 = vmatpush1.msra.mxu0 %v213
    %1490 = vmatprep.subr.mxu0 %v218
    %1491 = vmatpush1.msra.mxu0 %v217
    %1492 = vmatprep.subr.mxu0 %v222
    %1493 = vmatpush1.msra.mxu0 %v221
    %1494 = vmatprep.subr.mxu0 0.0
    %1495 = vmatpush1.msra.mxu0 0.0
    %1496 = vmatprep.subr.mxu0 0.0
    %1497 = vmatpush1.msra.mxu0 0.0
    %1498 = vmatprep.subr.mxu0 0.0
    %1499 = vmatpush1.msra.mxu0 0.0
    %1500 = vmatprep.subr.mxu0 0.0
    %1501 = vmatpush1.msra.mxu0 0.0
    %1502 = vmatprep.subr.mxu0 0.0
    %1503 = vmatpush1.msra.mxu0 0.0
    %1504 = vmatprep.subr.mxu0 0.0
    %1505 = vmatpush1.msra.mxu0 0.0
    %1506 = vmatprep.subr.mxu0 0.0
    %1507 = vmatpush1.msra.mxu0 0.0
    %1508 = vmatprep.subr.mxu0 0.0
    %1509 = vmatpush1.msra.mxu0 0.0
    %1510 = vmatprep.subr.mxu0 0.0
    %1511 = vmatpush1.msra.mxu0 0.0
    %1512 = vmatprep.subr.mxu0 0.0
    %1513 = vmatpush1.msra.mxu0 0.0
    %1514 = vmatprep.subr.mxu0 0.0
    %1515 = vmatpush1.msra.mxu0 0.0
    %1516 = vmatprep.subr.mxu0 0.0
    %1517 = vmatpush1.msra.mxu0 0.0
    %1518 = vmatprep.subr.mxu0 0.0
    %1519 = vmatpush1.msra.mxu0 0.0
    %1520 = vmatprep.subr.mxu0 0.0
    %1521 = vmatpush1.msra.mxu0 0.0
    %1522 = vmatprep.subr.mxu0 0.0
    %1523 = vmatpush1.msra.mxu0 0.0
    %1524 = vmatprep.subr.mxu0 0.0
    %1525 = vmatpush1.msra.mxu0 0.0
    %1526 = vmatprep.mubr.f32.mxu0 0.0
    %1527 = vmatmul.mubr.f32.gmra.mrb[0].mxu0 %v1426
    %v1528 = vpop.f32.mrb[0].mxu0
    %v1529 = vadd.f32 0.0, %v1528
    %v1530 = vpop.f32.mrb[0].mxu0
    %v1531 = vadd.f32 0.0, %v1530
    %1532 = vdwg.mxu0
    %1533 = vmatprep.subr.mxu0 %v164
    %1534 = vmatpush1.msra.mxu0 %v163
    %1535 = vmatprep.subr.mxu0 %v168
    %1536 = vmatpush1.msra.mxu0 %v167
    %1537 = vmatprep.subr.mxu0 %v172
    %1538 = vmatpush1.msra.mxu0 %v171
    %1539 = vmatprep.subr.mxu0 %v176
    %1540 = vmatpush1.msra.mxu0 %v175
    %1541 = vmatprep.subr.mxu0 %v180
    %1542 = vmatpush1.msra.mxu0 %v179
    %1543 = vmatprep.subr.mxu0 %v184
    %1544 = vmatpush1.msra.mxu0 %v183
    %1545 = vmatprep.subr.mxu0 %v188
    %1546 = vmatpush1.msra.mxu0 %v187
    %1547 = vmatprep.subr.mxu0 %v192
    %1548 = vmatpush1.msra.mxu0 %v191
    %1549 = vmatprep.subr.mxu0 %v196
    %1550 = vmatpush1.msra.mxu0 %v195
    %1551 = vmatprep.subr.mxu0 %v200
    %1552 = vmatpush1.msra.mxu0 %v199
    %1553 = vmatprep.subr.mxu0 %v204
    %1554 = vmatpush1.msra.mxu0 %v203
    %1555 = vmatprep.subr.mxu0 %v208
    %1556 = vmatpush1.msra.mxu0 %v207
    %1557 = vmatprep.subr.mxu0 %v212
    %1558 = vmatpush1.msra.mxu0 %v211
    %1559 = vmatprep.subr.mxu0 %v216
    %1560 = vmatpush1.msra.mxu0 %v215
    %1561 = vmatprep.subr.mxu0 %v220
    %1562 = vmatpush1.msra.mxu0 %v219
    %1563 = vmatprep.subr.mxu0 %v224
    %1564 = vmatpush1.msra.mxu0 %v223
    %1565 = vmatprep.subr.mxu0 0.0
    %1566 = vmatpush1.msra.mxu0 0.0
    %1567 = vmatprep.subr.mxu0 0.0
    %1568 = vmatpush1.msra.mxu0 0.0
    %1569 = vmatprep.subr.mxu0 0.0
    %1570 = vmatpush1.msra.mxu0 0.0
    %1571 = vmatprep.subr.mxu0 0.0
    %1572 = vmatpush1.msra.mxu0 0.0
    %1573 = vmatprep.subr.mxu0 0.0
    %1574 = vmatpush1.msra.mxu0 0.0
    %1575 = vmatprep.subr.mxu0 0.0
    %1576 = vmatpush1.msra.mxu0 0.0
    %1577 = vmatprep.subr.mxu0 0.0
    %1578 = vmatpush1.msra.mxu0 0.0
    %1579 = vmatprep.subr.mxu0 0.0
    %1580 = vmatpush1.msra.mxu0 0.0
    %1581 = vmatprep.subr.mxu0 0.0
    %1582 = vmatpush1.msra.mxu0 0.0
    %1583 = vmatprep.subr.mxu0 0.0
    %1584 = vmatpush1.msra.mxu0 0.0
    %1585 = vmatprep.subr.mxu0 0.0
    %1586 = vmatpush1.msra.mxu0 0.0
    %1587 = vmatprep.subr.mxu0 0.0
    %1588 = vmatpush1.msra.mxu0 0.0
    %1589 = vmatprep.subr.mxu0 0.0
    %1590 = vmatpush1.msra.mxu0 0.0
    %1591 = vmatprep.subr.mxu0 0.0
    %1592 = vmatpush1.msra.mxu0 0.0
    %1593 = vmatprep.subr.mxu0 0.0
    %1594 = vmatpush1.msra.mxu0 0.0
    %1595 = vmatprep.subr.mxu0 0.0
    %1596 = vmatpush1.msra.mxu0 0.0
    %1597 = vmatprep.mubr.f32.mxu0 0.0
    %1598 = vmatmul.mubr.f32.gmra.mrb[0].mxu0 %v1426
    %v1599 = vpop.f32.mrb[0].mxu0
    %v1600 = vadd.f32 0.0, %v1599
    %v1601 = vpop.f32.mrb[0].mxu0
    %v1602 = vadd.f32 0.0, %v1601
    %1603 = vdwg.mxu0
    %v1604 = vadd.f32 %v1458, %v1529
    %v1605 = vadd.f32 %v1459, %v1531
    %v1606 = vadd.f32 %v1460, %v1600
    %v1607 = vadd.f32 %v1461, %v1602
    %v1608 = vadd.f32 %v1604, %v375
    %v1609 = vadd.f32 %v1605, %v379
    %v1610 = vadd.f32 %v1606, %v383
    %v1611 = vadd.f32 %v1607, %v387
    %s1612 = scalar_lea.vmem %s0, 8
    %v1613 = vld [vmem:[%s1612] sm:$0x3]
    %1615 = vset.pattern.permute.xlu0 0
    %1616 = vperm.xlu0 %1615, %v1613
    %v1617 = vpop.permute.xlu0 %1616
    %v1619 = vmul.f32 %v1617, %v407
    %v1620 = vmul.f32 %v1617, %v411
    %v1621 = vmul.f32 %v1617, %v415
    %v1622 = vmul.f32 %v1617, %v419
    %1623 = vmatprep.subr.mxu0 %v429
    %1624 = vmatpush1.msra.mxu0 %v428
    %1625 = vmatprep.subr.mxu0 %v433
    %1626 = vmatpush1.msra.mxu0 %v432
    %1627 = vmatprep.subr.mxu0 %v437
    %1628 = vmatpush1.msra.mxu0 %v436
    %1629 = vmatprep.subr.mxu0 %v441
    %1630 = vmatpush1.msra.mxu0 %v440
    %1631 = vmatprep.subr.mxu0 %v445
    %1632 = vmatpush1.msra.mxu0 %v444
    %1633 = vmatprep.subr.mxu0 %v449
    %1634 = vmatpush1.msra.mxu0 %v448
    %1635 = vmatprep.subr.mxu0 %v453
    %1636 = vmatpush1.msra.mxu0 %v452
    %1637 = vmatprep.subr.mxu0 %v457
    %1638 = vmatpush1.msra.mxu0 %v456
    %1639 = vmatprep.subr.mxu0 %v461
    %1640 = vmatpush1.msra.mxu0 %v460
    %1641 = vmatprep.subr.mxu0 %v465
    %1642 = vmatpush1.msra.mxu0 %v464
    %1643 = vmatprep.subr.mxu0 %v469
    %1644 = vmatpush1.msra.mxu0 %v468
    %1645 = vmatprep.subr.mxu0 %v473
    %1646 = vmatpush1.msra.mxu0 %v472
    %1647 = vmatprep.subr.mxu0 %v477
    %1648 = vmatpush1.msra.mxu0 %v476
    %1649 = vmatprep.subr.mxu0 %v481
    %1650 = vmatpush1.msra.mxu0 %v480
    %1651 = vmatprep.subr.mxu0 %v485
    %1652 = vmatpush1.msra.mxu0 %v484
    %1653 = vmatprep.subr.mxu0 %v489
    %1654 = vmatpush1.msra.mxu0 %v488
    %1655 = vmatprep.subr.mxu0 0.0
    %1656 = vmatpush1.msra.mxu0 0.0
    %1657 = vmatprep.subr.mxu0 0.0
    %1658 = vmatpush1.msra.mxu0 0.0
    %1659 = vmatprep.subr.mxu0 0.0
    %1660 = vmatpush1.msra.mxu0 0.0
    %1661 = vmatprep.subr.mxu0 0.0
    %1662 = vmatpush1.msra.mxu0 0.0
    %1663 = vmatprep.subr.mxu0 0.0
    %1664 = vmatpush1.msra.mxu0 0.0
    %1665 = vmatprep.subr.mxu0 0.0
    %1666 = vmatpush1.msra.mxu0 0.0
    %1667 = vmatprep.subr.mxu0 0.0
    %1668 = vmatpush1.msra.mxu0 0.0
    %1669 = vmatprep.subr.mxu0 0.0
    %1670 = vmatpush1.msra.mxu0 0.0
    %1671 = vmatprep.subr.mxu0 0.0
    %1672 = vmatpush1.msra.mxu0 0.0
    %1673 = vmatprep.subr.mxu0 0.0
    %1674 = vmatpush1.msra.mxu0 0.0
    %1675 = vmatprep.subr.mxu0 0.0
    %1676 = vmatpush1.msra.mxu0 0.0
    %1677 = vmatprep.subr.mxu0 0.0
    %1678 = vmatpush1.msra.mxu0 0.0
    %1679 = vmatprep.subr.mxu0 0.0
    %1680 = vmatpush1.msra.mxu0 0.0
    %1681 = vmatprep.subr.mxu0 0.0
    %1682 = vmatpush1.msra.mxu0 0.0
    %1683 = vmatprep.subr.mxu0 0.0
    %1684 = vmatpush1.msra.mxu0 0.0
    %1685 = vmatprep.subr.mxu0 0.0
    %1686 = vmatpush1.msra.mxu0 0.0
    %1687 = vmatprep.mubr.f32.mxu0 0.0
    %1688 = vmatmul.mubr.f32.gmra.mrb[0].mxu0 %v1450
    %v1689 = vpop.f32.mrb[0].mxu0
    %v1690 = vadd.f32 0.0, %v1689
    %v1691 = vpop.f32.mrb[0].mxu0
    %v1692 = vadd.f32 0.0, %v1691
    %1693 = vdwg.mxu0
    %1694 = vmatprep.subr.mxu0 %v431
    %1695 = vmatpush1.msra.mxu0 %v430
    %1696 = vmatprep.subr.mxu0 %v435
    %1697 = vmatpush1.msra.mxu0 %v434
    %1698 = vmatprep.subr.mxu0 %v439
    %1699 = vmatpush1.msra.mxu0 %v438
    %1700 = vmatprep.subr.mxu0 %v443
    %1701 = vmatpush1.msra.mxu0 %v442
    %1702 = vmatprep.subr.mxu0 %v447
    %1703 = vmatpush1.msra.mxu0 %v446
    %1704 = vmatprep.subr.mxu0 %v451
    %1705 = vmatpush1.msra.mxu0 %v450
    %1706 = vmatprep.subr.mxu0 %v455
    %1707 = vmatpush1.msra.mxu0 %v454
    %1708 = vmatprep.subr.mxu0 %v459
    %1709 = vmatpush1.msra.mxu0 %v458
    %1710 = vmatprep.subr.mxu0 %v463
    %1711 = vmatpush1.msra.mxu0 %v462
    %1712 = vmatprep.subr.mxu0 %v467
    %1713 = vmatpush1.msra.mxu0 %v466
    %1714 = vmatprep.subr.mxu0 %v471
    %1715 = vmatpush1.msra.mxu0 %v470
    %1716 = vmatprep.subr.mxu0 %v475
    %1717 = vmatpush1.msra.mxu0 %v474
    %1718 = vmatprep.subr.mxu0 %v479
    %1719 = vmatpush1.msra.mxu0 %v478
    %1720 = vmatprep.subr.mxu0 %v483
    %1721 = vmatpush1.msra.mxu0 %v482
    %1722 = vmatprep.subr.mxu0 %v487
    %1723 = vmatpush1.msra.mxu0 %v486
    %1724 = vmatprep.subr.mxu0 %v491
    %1725 = vmatpush1.msra.mxu0 %v490
    %1726 = vmatprep.subr.mxu0 0.0
    %1727 = vmatpush1.msra.mxu0 0.0
    %1728 = vmatprep.subr.mxu0 0.0
    %1729 = vmatpush1.msra.mxu0 0.0
    %1730 = vmatprep.subr.mxu0 0.0
    %1731 = vmatpush1.msra.mxu0 0.0
    %1732 = vmatprep.subr.mxu0 0.0
    %1733 = vmatpush1.msra.mxu0 0.0
    %1734 = vmatprep.subr.mxu0 0.0
    %1735 = vmatpush1.msra.mxu0 0.0
    %1736 = vmatprep.subr.mxu0 0.0
    %1737 = vmatpush1.msra.mxu0 0.0
    %1738 = vmatprep.subr.mxu0 0.0
    %1739 = vmatpush1.msra.mxu0 0.0
    %1740 = vmatprep.subr.mxu0 0.0
    %1741 = vmatpush1.msra.mxu0 0.0
    %1742 = vmatprep.subr.mxu0 0.0
    %1743 = vmatpush1.msra.mxu0 0.0
    %1744 = vmatprep.subr.mxu0 0.0
    %1745 = vmatpush1.msra.mxu0 0.0
    %1746 = vmatprep.subr.mxu0 0.0
    %1747 = vmatpush1.msra.mxu0 0.0
    %1748 = vmatprep.subr.mxu0 0.0
    %1749 = vmatpush1.msra.mxu0 0.0
    %1750 = vmatprep.subr.mxu0 0.0
    %1751 = vmatpush1.msra.mxu0 0.0
    %1752 = vmatprep.subr.mxu0 0.0
    %1753 = vmatpush1.msra.mxu0 0.0
    %1754 = vmatprep.subr.mxu0 0.0
    %1755 = vmatpush1.msra.mxu0 0.0
    %1756 = vmatprep.subr.mxu0 0.0
    %1757 = vmatpush1.msra.mxu0 0.0
    %1758 = vmatprep.mubr.f32.mxu0 0.0
    %1759 = vmatmul.mubr.f32.gmra.mrb[0].mxu0 %v1450
    %v1760 = vpop.f32.mrb[0].mxu0
    %v1761 = vadd.f32 0.0, %v1760
    %v1762 = vpop.f32.mrb[0].mxu0
    %v1763 = vadd.f32 0.0, %v1762
    %1764 = vdwg.mxu0
    %v1765 = vadd.f32 %v1619, %v1690
    %v1766 = vadd.f32 %v1620, %v1692
    %v1767 = vadd.f32 %v1621, %v1761
    %v1768 = vadd.f32 %v1622, %v1763
    %v1769 = vadd.f32 %v1765, %v642
    %v1770 = vadd.f32 %v1766, %v646
    %v1771 = vadd.f32 %v1767, %v650
    %v1772 = vadd.f32 %v1768, %v654
    %v1773 = vxor.u32 %v1608, 2147483648
    %v1774 = vmul.f32 %v1773, 1.442695
    %v1775 = vpow.pop %v1774
    %v1776 = vadd.f32 %v1775, 1.0
    %v1777 = vrcp.pop %v1776
    %v1778 = vmul.f32 1.0, %v1777
    %v1779 = vxor.u32 %v1609, 2147483648
    %v1780 = vmul.f32 %v1779, 1.442695
    %v1781 = vpow.pop %v1780
    %v1782 = vadd.f32 %v1781, 1.0
    %v1783 = vrcp.pop %v1782
    %v1784 = vmul.f32 1.0, %v1783
    %v1785 = vtanh.pop %v1610
    %v1786 = vxor.u32 %v1611, 2147483648
    %v1787 = vmul.f32 %v1786, 1.442695
    %v1788 = vpow.pop %v1787
    %v1789 = vadd.f32 %v1788, 1.0
    %v1790 = vrcp.pop %v1789
    %v1791 = vmul.f32 1.0, %v1790
    %v1792 = vmul.f32 %v1784, %v1424
    %v1793 = vmul.f32 %v1778, %v1785
    %v1794 = vadd.f32 %v1792, %v1793
    %v1795 = vtanh.pop %v1794
    %v1796 = vmul.f32 %v1791, %v1795
    %v1797 = vxor.u32 %v1769, 2147483648
    %v1798 = vmul.f32 %v1797, 1.442695
    %v1799 = vpow.pop %v1798
    %v1800 = vadd.f32 %v1799, 1.0
    %v1801 = vrcp.pop %v1800
    %v1802 = vmul.f32 1.0, %v1801
    %v1803 = vxor.u32 %v1770, 2147483648
    %v1804 = vmul.f32 %v1803, 1.442695
    %v1805 = vpow.pop %v1804
    %v1806 = vadd.f32 %v1805, 1.0
    %v1807 = vrcp.pop %v1806
    %v1808 = vmul.f32 1.0, %v1807
    %v1809 = vtanh.pop %v1771
    %v1810 = vxor.u32 %v1772, 2147483648
    %v1811 = vmul.f32 %v1810, 1.442695
    %v1812 = vpow.pop %v1811
    %v1813 = vadd.f32 %v1812, 1.0
    %v1814 = vrcp.pop %v1813
    %v1815 = vmul.f32 1.0, %v1814
    %v1816 = vmul.f32 %v1808, %v1448
    %v1817 = vmul.f32 %v1802, %v1809
    %v1818 = vadd.f32 %v1816, %v1817
    %v1819 = vtanh.pop %v1818
    %v1820 = vmul.f32 %v1815, %v1819
    %v1821 = vmul.f32 %v1617, %v140
    %v1822 = vmul.f32 %v1617, %v144
    %v1823 = vmul.f32 %v1617, %v148
    %v1824 = vmul.f32 %v1617, %v152
    %1825 = vmatprep.subr.mxu0 %v162
    %1826 = vmatpush1.msra.mxu0 %v161
    %1827 = vmatprep.subr.mxu0 %v166
    %1828 = vmatpush1.msra.mxu0 %v165
    %1829 = vmatprep.subr.mxu0 %v170
    %1830 = vmatpush1.msra.mxu0 %v169
    %1831 = vmatprep.subr.mxu0 %v174
    %1832 = vmatpush1.msra.mxu0 %v173
    %1833 = vmatprep.subr.mxu0 %v178
    %1834 = vmatpush1.msra.mxu0 %v177
    %1835 = vmatprep.subr.mxu0 %v182
    %1836 = vmatpush1.msra.mxu0 %v181
    %1837 = vmatprep.subr.mxu0 %v186
    %1838 = vmatpush1.msra.mxu0 %v185
    %1839 = vmatprep.subr.mxu0 %v190
    %1840 = vmatpush1.msra.mxu0 %v189
    %1841 = vmatprep.subr.mxu0 %v194
    %1842 = vmatpush1.msra.mxu0 %v193
    %1843 = vmatprep.subr.mxu0 %v198
    %1844 = vmatpush1.msra.mxu0 %v197
    %1845 = vmatprep.subr.mxu0 %v202
    %1846 = vmatpush1.msra.mxu0 %v201
    %1847 = vmatprep.subr.mxu0 %v206
    %1848 = vmatpush1.msra.mxu0 %v205
    %1849 = vmatprep.subr.mxu0 %v210
    %1850 = vmatpush1.msra.mxu0 %v209
    %1851 = vmatprep.subr.mxu0 %v214
    %1852 = vmatpush1.msra.mxu0 %v213
    %1853 = vmatprep.subr.mxu0 %v218
    %1854 = vmatpush1.msra.mxu0 %v217
    %1855 = vmatprep.subr.mxu0 %v222
    %1856 = vmatpush1.msra.mxu0 %v221
    %1857 = vmatprep.subr.mxu0 0.0
    %1858 = vmatpush1.msra.mxu0 0.0
    %1859 = vmatprep.subr.mxu0 0.0
    %1860 = vmatpush1.msra.mxu0 0.0
    %1861 = vmatprep.subr.mxu0 0.0
    %1862 = vmatpush1.msra.mxu0 0.0
    %1863 = vmatprep.subr.mxu0 0.0
    %1864 = vmatpush1.msra.mxu0 0.0
    %1865 = vmatprep.subr.mxu0 0.0
    %1866 = vmatpush1.msra.mxu0 0.0
    %1867 = vmatprep.subr.mxu0 0.0
    %1868 = vmatpush1.msra.mxu0 0.0
    %1869 = vmatprep.subr.mxu0 0.0
    %1870 = vmatpush1.msra.mxu0 0.0
    %1871 = vmatprep.subr.mxu0 0.0
    %1872 = vmatpush1.msra.mxu0 0.0
    %1873 = vmatprep.subr.mxu0 0.0
    %1874 = vmatpush1.msra.mxu0 0.0
    %1875 = vmatprep.subr.mxu0 0.0
    %1876 = vmatpush1.msra.mxu0 0.0
    %1877 = vmatprep.subr.mxu0 0.0
    %1878 = vmatpush1.msra.mxu0 0.0
    %1879 = vmatprep.subr.mxu0 0.0
    %1880 = vmatpush1.msra.mxu0 0.0
    %1881 = vmatprep.subr.mxu0 0.0
    %1882 = vmatpush1.msra.mxu0 0.0
    %1883 = vmatprep.subr.mxu0 0.0
    %1884 = vmatpush1.msra.mxu0 0.0
    %1885 = vmatprep.subr.mxu0 0.0
    %1886 = vmatpush1.msra.mxu0 0.0
    %1887 = vmatprep.subr.mxu0 0.0
    %1888 = vmatpush1.msra.mxu0 0.0
    %1889 = vmatprep.mubr.f32.mxu0 0.0
    %1890 = vmatmul.mubr.f32.gmra.mrb[0].mxu0 %v1796
    %v1891 = vpop.f32.mrb[0].mxu0
    %v1892 = vadd.f32 0.0, %v1891
    %v1893 = vpop.f32.mrb[0].mxu0
    %v1894 = vadd.f32 0.0, %v1893
    %1895 = vdwg.mxu0
    %1896 = vmatprep.subr.mxu0 %v164
    %1897 = vmatpush1.msra.mxu0 %v163
    %1898 = vmatprep.subr.mxu0 %v168
    %1899 = vmatpush1.msra.mxu0 %v167
    %1900 = vmatprep.subr.mxu0 %v172
    %1901 = vmatpush1.msra.mxu0 %v171
    %1902 = vmatprep.subr.mxu0 %v176
    %1903 = vmatpush1.msra.mxu0 %v175
    %1904 = vmatprep.subr.mxu0 %v180
    %1905 = vmatpush1.msra.mxu0 %v179
    %1906 = vmatprep.subr.mxu0 %v184
    %1907 = vmatpush1.msra.mxu0 %v183
    %1908 = vmatprep.subr.mxu0 %v188
    %1909 = vmatpush1.msra.mxu0 %v187
    %1910 = vmatprep.subr.mxu0 %v192
    %1911 = vmatpush1.msra.mxu0 %v191
    %1912 = vmatprep.subr.mxu0 %v196
    %1913 = vmatpush1.msra.mxu0 %v195
    %1914 = vmatprep.subr.mxu0 %v200
    %1915 = vmatpush1.msra.mxu0 %v199
    %1916 = vmatprep.subr.mxu0 %v204
    %1917 = vmatpush1.msra.mxu0 %v203
    %1918 = vmatprep.subr.mxu0 %v208
    %1919 = vmatpush1.msra.mxu0 %v207
    %1920 = vmatprep.subr.mxu0 %v212
    %1921 = vmatpush1.msra.mxu0 %v211
    %1922 = vmatprep.subr.mxu0 %v216
    %1923 = vmatpush1.msra.mxu0 %v215
    %1924 = vmatprep.subr.mxu0 %v220
    %1925 = vmatpush1.msra.mxu0 %v219
    %1926 = vmatprep.subr.mxu0 %v224
    %1927 = vmatpush1.msra.mxu0 %v223
    %1928 = vmatprep.subr.mxu0 0.0
    %1929 = vmatpush1.msra.mxu0 0.0
    %1930 = vmatprep.subr.mxu0 0.0
    %1931 = vmatpush1.msra.mxu0 0.0
    %1932 = vmatprep.subr.mxu0 0.0
    %1933 = vmatpush1.msra.mxu0 0.0
    %1934 = vmatprep.subr.mxu0 0.0
    %1935 = vmatpush1.msra.mxu0 0.0
    %1936 = vmatprep.subr.mxu0 0.0
    %1937 = vmatpush1.msra.mxu0 0.0
    %1938 = vmatprep.subr.mxu0 0.0
    %1939 = vmatpush1.msra.mxu0 0.0
    %1940 = vmatprep.subr.mxu0 0.0
    %1941 = vmatpush1.msra.mxu0 0.0
    %1942 = vmatprep.subr.mxu0 0.0
    %1943 = vmatpush1.msra.mxu0 0.0
    %1944 = vmatprep.subr.mxu0 0.0
    %1945 = vmatpush1.msra.mxu0 0.0
    %1946 = vmatprep.subr.mxu0 0.0
    %1947 = vmatpush1.msra.mxu0 0.0
    %1948 = vmatprep.subr.mxu0 0.0
    %1949 = vmatpush1.msra.mxu0 0.0
    %1950 = vmatprep.subr.mxu0 0.0
    %1951 = vmatpush1.msra.mxu0 0.0
    %1952 = vmatprep.subr.mxu0 0.0
    %1953 = vmatpush1.msra.mxu0 0.0
    %1954 = vmatprep.subr.mxu0 0.0
    %1955 = vmatpush1.msra.mxu0 0.0
    %1956 = vmatprep.subr.mxu0 0.0
    %1957 = vmatpush1.msra.mxu0 0.0
    %1958 = vmatprep.subr.mxu0 0.0
    %1959 = vmatpush1.msra.mxu0 0.0
    %1960 = vmatprep.mubr.f32.mxu0 0.0
    %1961 = vmatmul.mubr.f32.gmra.mrb[0].mxu0 %v1796
    %v1962 = vpop.f32.mrb[0].mxu0
    %v1963 = vadd.f32 0.0, %v1962
    %v1964 = vpop.f32.mrb[0].mxu0
    %v1965 = vadd.f32 0.0, %v1964
    %1966 = vdwg.mxu0
    %v1967 = vadd.f32 %v1821, %v1892
    %v1968 = vadd.f32 %v1822, %v1894
    %v1969 = vadd.f32 %v1823, %v1963
    %v1970 = vadd.f32 %v1824, %v1965
    %v1971 = vadd.f32 %v1967, %v375
    %v1972 = vadd.f32 %v1968, %v379
    %v1973 = vadd.f32 %v1969, %v383
    %v1974 = vadd.f32 %v1970, %v387
    %v1975 = vmul.f32 %v1456, %v407
    %v1976 = vmul.f32 %v1456, %v411
    %v1977 = vmul.f32 %v1456, %v415
    %v1978 = vmul.f32 %v1456, %v419
    %1979 = vmatprep.subr.mxu0 %v429
    %1980 = vmatpush1.msra.mxu0 %v428
    %1981 = vmatprep.subr.mxu0 %v433
    %1982 = vmatpush1.msra.mxu0 %v432
    %1983 = vmatprep.subr.mxu0 %v437
    %1984 = vmatpush1.msra.mxu0 %v436
    %1985 = vmatprep.subr.mxu0 %v441
    %1986 = vmatpush1.msra.mxu0 %v440
    %1987 = vmatprep.subr.mxu0 %v445
    %1988 = vmatpush1.msra.mxu0 %v444
    %1989 = vmatprep.subr.mxu0 %v449
    %1990 = vmatpush1.msra.mxu0 %v448
    %1991 = vmatprep.subr.mxu0 %v453
    %1992 = vmatpush1.msra.mxu0 %v452
    %1993 = vmatprep.subr.mxu0 %v457
    %1994 = vmatpush1.msra.mxu0 %v456
    %1995 = vmatprep.subr.mxu0 %v461
    %1996 = vmatpush1.msra.mxu0 %v460
    %1997 = vmatprep.subr.mxu0 %v465
    %1998 = vmatpush1.msra.mxu0 %v464
    %1999 = vmatprep.subr.mxu0 %v469
    %2000 = vmatpush1.msra.mxu0 %v468
    %2001 = vmatprep.subr.mxu0 %v473
    %2002 = vmatpush1.msra.mxu0 %v472
    %2003 = vmatprep.subr.mxu0 %v477
    %2004 = vmatpush1.msra.mxu0 %v476
    %2005 = vmatprep.subr.mxu0 %v481
    %2006 = vmatpush1.msra.mxu0 %v480
    %2007 = vmatprep.subr.mxu0 %v485
    %2008 = vmatpush1.msra.mxu0 %v484
    %2009 = vmatprep.subr.mxu0 %v489
    %2010 = vmatpush1.msra.mxu0 %v488
    %2011 = vmatprep.subr.mxu0 0.0
    %2012 = vmatpush1.msra.mxu0 0.0
    %2013 = vmatprep.subr.mxu0 0.0
    %2014 = vmatpush1.msra.mxu0 0.0
    %2015 = vmatprep.subr.mxu0 0.0
    %2016 = vmatpush1.msra.mxu0 0.0
    %2017 = vmatprep.subr.mxu0 0.0
    %2018 = vmatpush1.msra.mxu0 0.0
    %2019 = vmatprep.subr.mxu0 0.0
    %2020 = vmatpush1.msra.mxu0 0.0
    %2021 = vmatprep.subr.mxu0 0.0
    %2022 = vmatpush1.msra.mxu0 0.0
    %2023 = vmatprep.subr.mxu0 0.0
    %2024 = vmatpush1.msra.mxu0 0.0
    %2025 = vmatprep.subr.mxu0 0.0
    %2026 = vmatpush1.msra.mxu0 0.0
    %2027 = vmatprep.subr.mxu0 0.0
    %2028 = vmatpush1.msra.mxu0 0.0
    %2029 = vmatprep.subr.mxu0 0.0
    %2030 = vmatpush1.msra.mxu0 0.0
    %2031 = vmatprep.subr.mxu0 0.0
    %2032 = vmatpush1.msra.mxu0 0.0
    %2033 = vmatprep.subr.mxu0 0.0
    %2034 = vmatpush1.msra.mxu0 0.0
    %2035 = vmatprep.subr.mxu0 0.0
    %2036 = vmatpush1.msra.mxu0 0.0
    %2037 = vmatprep.subr.mxu0 0.0
    %2038 = vmatpush1.msra.mxu0 0.0
    %2039 = vmatprep.subr.mxu0 0.0
    %2040 = vmatpush1.msra.mxu0 0.0
    %2041 = vmatprep.subr.mxu0 0.0
    %2042 = vmatpush1.msra.mxu0 0.0
    %2043 = vmatprep.mubr.f32.mxu0 0.0
    %2044 = vmatmul.mubr.f32.gmra.mrb[0].mxu0 %v1820
    %v2045 = vpop.f32.mrb[0].mxu0
    %v2046 = vadd.f32 0.0, %v2045
    %v2047 = vpop.f32.mrb[0].mxu0
    %v2048 = vadd.f32 0.0, %v2047
    %2049 = vdwg.mxu0
    %2050 = vmatprep.subr.mxu0 %v431
    %2051 = vmatpush1.msra.mxu0 %v430
    %2052 = vmatprep.subr.mxu0 %v435
    %2053 = vmatpush1.msra.mxu0 %v434
    %2054 = vmatprep.subr.mxu0 %v439
    %2055 = vmatpush1.msra.mxu0 %v438
    %2056 = vmatprep.subr.mxu0 %v443
    %2057 = vmatpush1.msra.mxu0 %v442
    %2058 = vmatprep.subr.mxu0 %v447
    %2059 = vmatpush1.msra.mxu0 %v446
    %2060 = vmatprep.subr.mxu0 %v451
    %2061 = vmatpush1.msra.mxu0 %v450
    %2062 = vmatprep.subr.mxu0 %v455
    %2063 = vmatpush1.msra.mxu0 %v454
    %2064 = vmatprep.subr.mxu0 %v459
    %2065 = vmatpush1.msra.mxu0 %v458
    %2066 = vmatprep.subr.mxu0 %v463
    %2067 = vmatpush1.msra.mxu0 %v462
    %2068 = vmatprep.subr.mxu0 %v467
    %2069 = vmatpush1.msra.mxu0 %v466
    %2070 = vmatprep.subr.mxu0 %v471
    %2071 = vmatpush1.msra.mxu0 %v470
    %2072 = vmatprep.subr.mxu0 %v475
    %2073 = vmatpush1.msra.mxu0 %v474
    %2074 = vmatprep.subr.mxu0 %v479
    %2075 = vmatpush1.msra.mxu0 %v478
    %2076 = vmatprep.subr.mxu0 %v483
    %2077 = vmatpush1.msra.mxu0 %v482
    %2078 = vmatprep.subr.mxu0 %v487
    %2079 = vmatpush1.msra.mxu0 %v486
    %2080 = vmatprep.subr.mxu0 %v491
    %2081 = vmatpush1.msra.mxu0 %v490
    %2082 = vmatprep.subr.mxu0 0.0
    %2083 = vmatpush1.msra.mxu0 0.0
    %2084 = vmatprep.subr.mxu0 0.0
    %2085 = vmatpush1.msra.mxu0 0.0
    %2086 = vmatprep.subr.mxu0 0.0
    %2087 = vmatpush1.msra.mxu0 0.0
    %2088 = vmatprep.subr.mxu0 0.0
    %2089 = vmatpush1.msra.mxu0 0.0
    %2090 = vmatprep.subr.mxu0 0.0
    %2091 = vmatpush1.msra.mxu0 0.0
    %2092 = vmatprep.subr.mxu0 0.0
    %2093 = vmatpush1.msra.mxu0 0.0
    %2094 = vmatprep.subr.mxu0 0.0
    %2095 = vmatpush1.msra.mxu0 0.0
    %2096 = vmatprep.subr.mxu0 0.0
    %2097 = vmatpush1.msra.mxu0 0.0
    %2098 = vmatprep.subr.mxu0 0.0
    %2099 = vmatpush1.msra.mxu0 0.0
    %2100 = vmatprep.subr.mxu0 0.0
    %2101 = vmatpush1.msra.mxu0 0.0
    %2102 = vmatprep.subr.mxu0 0.0
    %2103 = vmatpush1.msra.mxu0 0.0
    %2104 = vmatprep.subr.mxu0 0.0
    %2105 = vmatpush1.msra.mxu0 0.0
    %2106 = vmatprep.subr.mxu0 0.0
    %2107 = vmatpush1.msra.mxu0 0.0
    %2108 = vmatprep.subr.mxu0 0.0
    %2109 = vmatpush1.msra.mxu0 0.0
    %2110 = vmatprep.subr.mxu0 0.0
    %2111 = vmatpush1.msra.mxu0 0.0
    %2112 = vmatprep.subr.mxu0 0.0
    %2113 = vmatpush1.msra.mxu0 0.0
    %2114 = vmatprep.mubr.f32.mxu0 0.0
    %2115 = vmatmul.mubr.f32.gmra.mrb[0].mxu0 %v1820
    %v2116 = vpop.f32.mrb[0].mxu0
    %v2117 = vadd.f32 0.0, %v2116
    %v2118 = vpop.f32.mrb[0].mxu0
    %v2119 = vadd.f32 0.0, %v2118
    %2120 = vdwg.mxu0
    %v2121 = vadd.f32 %v1975, %v2046
    %v2122 = vadd.f32 %v1976, %v2048
    %v2123 = vadd.f32 %v1977, %v2117
    %v2124 = vadd.f32 %v1978, %v2119
    %v2125 = vadd.f32 %v2121, %v642
    %v2126 = vadd.f32 %v2122, %v646
    %v2127 = vadd.f32 %v2123, %v650
    %v2128 = vadd.f32 %v2124, %v654
    %v2129 = vxor.u32 %v1971, 2147483648
    %v2130 = vmul.f32 %v2129, 1.442695
    %v2131 = vpow.pop %v2130
    %v2132 = vadd.f32 %v2131, 1.0
    %v2133 = vrcp.pop %v2132
    %v2134 = vmul.f32 1.0, %v2133
    %v2135 = vxor.u32 %v1972, 2147483648
    %v2136 = vmul.f32 %v2135, 1.442695
    %v2137 = vpow.pop %v2136
    %v2138 = vadd.f32 %v2137, 1.0
    %v2139 = vrcp.pop %v2138
    %v2140 = vmul.f32 1.0, %v2139
    %v2141 = vtanh.pop %v1973
    %v2142 = vxor.u32 %v1974, 2147483648
    %v2143 = vmul.f32 %v2142, 1.442695
    %v2144 = vpow.pop %v2143
    %v2145 = vadd.f32 %v2144, 1.0
    %v2146 = vrcp.pop %v2145
    %v2147 = vmul.f32 1.0, %v2146
    %v2148 = vmul.f32 %v2140, %v1794
    %v2149 = vmul.f32 %v2134, %v2141
    %v2150 = vadd.f32 %v2148, %v2149
    %v2151 = vtanh.pop %v2150
    %v2152 = vmul.f32 %v2147, %v2151
    %v2153 = vxor.u32 %v2125, 2147483648
    %v2154 = vmul.f32 %v2153, 1.442695
    %v2155 = vpow.pop %v2154
    %v2156 = vadd.f32 %v2155, 1.0
    %v2157 = vrcp.pop %v2156
    %v2158 = vmul.f32 1.0, %v2157
    %v2159 = vxor.u32 %v2126, 2147483648
    %v2160 = vmul.f32 %v2159, 1.442695
    %v2161 = vpow.pop %v2160
    %v2162 = vadd.f32 %v2161, 1.0
    %v2163 = vrcp.pop %v2162
    %v2164 = vmul.f32 1.0, %v2163
    %v2165 = vtanh.pop %v2127
    %v2166 = vxor.u32 %v2128, 2147483648
    %v2167 = vmul.f32 %v2166, 1.442695
    %v2168 = vpow.pop %v2167
    %v2169 = vadd.f32 %v2168, 1.0
    %v2170 = vrcp.pop %v2169
    %v2171 = vmul.f32 1.0, %v2170
    %v2172 = vmul.f32 %v2164, %v1818
    %v2173 = vmul.f32 %v2158, %v2165
    %v2174 = vadd.f32 %v2172, %v2173
    %v2175 = vtanh.pop %v2174
    %v2176 = vmul.f32 %v2171, %v2175
    %v2177 = vmul.f32 %v1247, %v140
    %v2178 = vmul.f32 %v1247, %v144
    %v2179 = vmul.f32 %v1247, %v148
    %v2180 = vmul.f32 %v1247, %v152
    %2181 = vmatprep.subr.mxu0 %v162
    %2182 = vmatpush1.msra.mxu0 %v161
    %2183 = vmatprep.subr.mxu0 %v166
    %2184 = vmatpush1.msra.mxu0 %v165
    %2185 = vmatprep.subr.mxu0 %v170
    %2186 = vmatpush1.msra.mxu0 %v169
    %2187 = vmatprep.subr.mxu0 %v174
    %2188 = vmatpush1.msra.mxu0 %v173
    %2189 = vmatprep.subr.mxu0 %v178
    %2190 = vmatpush1.msra.mxu0 %v177
    %2191 = vmatprep.subr.mxu0 %v182
    %2192 = vmatpush1.msra.mxu0 %v181
    %2193 = vmatprep.subr.mxu0 %v186
    %2194 = vmatpush1.msra.mxu0 %v185
    %2195 = vmatprep.subr.mxu0 %v190
    %2196 = vmatpush1.msra.mxu0 %v189
    %2197 = vmatprep.subr.mxu0 %v194
    %2198 = vmatpush1.msra.mxu0 %v193
    %2199 = vmatprep.subr.mxu0 %v198
    %2200 = vmatpush1.msra.mxu0 %v197
    %2201 = vmatprep.subr.mxu0 %v202
    %2202 = vmatpush1.msra.mxu0 %v201
    %2203 = vmatprep.subr.mxu0 %v206
    %2204 = vmatpush1.msra.mxu0 %v205
    %2205 = vmatprep.subr.mxu0 %v210
    %2206 = vmatpush1.msra.mxu0 %v209
    %2207 = vmatprep.subr.mxu0 %v214
    %2208 = vmatpush1.msra.mxu0 %v213
    %2209 = vmatprep.subr.mxu0 %v218
    %2210 = vmatpush1.msra.mxu0 %v217
    %2211 = vmatprep.subr.mxu0 %v222
    %2212 = vmatpush1.msra.mxu0 %v221
    %2213 = vmatprep.subr.mxu0 0.0
    %2214 = vmatpush1.msra.mxu0 0.0
    %2215 = vmatprep.subr.mxu0 0.0
    %2216 = vmatpush1.msra.mxu0 0.0
    %2217 = vmatprep.subr.mxu0 0.0
    %2218 = vmatpush1.msra.mxu0 0.0
    %2219 = vmatprep.subr.mxu0 0.0
    %2220 = vmatpush1.msra.mxu0 0.0
    %2221 = vmatprep.subr.mxu0 0.0
    %2222 = vmatpush1.msra.mxu0 0.0
    %2223 = vmatprep.subr.mxu0 0.0
    %2224 = vmatpush1.msra.mxu0 0.0
    %2225 = vmatprep.subr.mxu0 0.0
    %2226 = vmatpush1.msra.mxu0 0.0
    %2227 = vmatprep.subr.mxu0 0.0
    %2228 = vmatpush1.msra.mxu0 0.0
    %2229 = vmatprep.subr.mxu0 0.0
    %2230 = vmatpush1.msra.mxu0 0.0
    %2231 = vmatprep.subr.mxu0 0.0
    %2232 = vmatpush1.msra.mxu0 0.0
    %2233 = vmatprep.subr.mxu0 0.0
    %2234 = vmatpush1.msra.mxu0 0.0
    %2235 = vmatprep.subr.mxu0 0.0
    %2236 = vmatpush1.msra.mxu0 0.0
    %2237 = vmatprep.subr.mxu0 0.0
    %2238 = vmatpush1.msra.mxu0 0.0
    %2239 = vmatprep.subr.mxu0 0.0
    %2240 = vmatpush1.msra.mxu0 0.0
    %2241 = vmatprep.subr.mxu0 0.0
    %2242 = vmatpush1.msra.mxu0 0.0
    %2243 = vmatprep.subr.mxu0 0.0
    %2244 = vmatpush1.msra.mxu0 0.0
    %2245 = vmatprep.mubr.f32.mxu0 0.0
    %2246 = vmatmul.mubr.f32.gmra.mrb[0].mxu0 %v2152
    %v2247 = vpop.f32.mrb[0].mxu0
    %v2248 = vadd.f32 0.0, %v2247
    %v2249 = vpop.f32.mrb[0].mxu0
    %v2250 = vadd.f32 0.0, %v2249
    %2251 = vdwg.mxu0
    %2252 = vmatprep.subr.mxu0 %v164
    %2253 = vmatpush1.msra.mxu0 %v163
    %2254 = vmatprep.subr.mxu0 %v168
    %2255 = vmatpush1.msra.mxu0 %v167
    %2256 = vmatprep.subr.mxu0 %v172
    %2257 = vmatpush1.msra.mxu0 %v171
    %2258 = vmatprep.subr.mxu0 %v176
    %2259 = vmatpush1.msra.mxu0 %v175
    %2260 = vmatprep.subr.mxu0 %v180
    %2261 = vmatpush1.msra.mxu0 %v179
    %2262 = vmatprep.subr.mxu0 %v184
    %2263 = vmatpush1.msra.mxu0 %v183
    %2264 = vmatprep.subr.mxu0 %v188
    %2265 = vmatpush1.msra.mxu0 %v187
    %2266 = vmatprep.subr.mxu0 %v192
    %2267 = vmatpush1.msra.mxu0 %v191
    %2268 = vmatprep.subr.mxu0 %v196
    %2269 = vmatpush1.msra.mxu0 %v195
    %2270 = vmatprep.subr.mxu0 %v200
    %2271 = vmatpush1.msra.mxu0 %v199
    %2272 = vmatprep.subr.mxu0 %v204
    %2273 = vmatpush1.msra.mxu0 %v203
    %2274 = vmatprep.subr.mxu0 %v208
    %2275 = vmatpush1.msra.mxu0 %v207
    %2276 = vmatprep.subr.mxu0 %v212
    %2277 = vmatpush1.msra.mxu0 %v211
    %2278 = vmatprep.subr.mxu0 %v216
    %2279 = vmatpush1.msra.mxu0 %v215
    %2280 = vmatprep.subr.mxu0 %v220
    %2281 = vmatpush1.msra.mxu0 %v219
    %2282 = vmatprep.subr.mxu0 %v224
    %2283 = vmatpush1.msra.mxu0 %v223
    %2284 = vmatprep.subr.mxu0 0.0
    %2285 = vmatpush1.msra.mxu0 0.0
    %2286 = vmatprep.subr.mxu0 0.0
    %2287 = vmatpush1.msra.mxu0 0.0
    %2288 = vmatprep.subr.mxu0 0.0
    %2289 = vmatpush1.msra.mxu0 0.0
    %2290 = vmatprep.subr.mxu0 0.0
    %2291 = vmatpush1.msra.mxu0 0.0
    %2292 = vmatprep.subr.mxu0 0.0
    %2293 = vmatpush1.msra.mxu0 0.0
    %2294 = vmatprep.subr.mxu0 0.0
    %2295 = vmatpush1.msra.mxu0 0.0
    %2296 = vmatprep.subr.mxu0 0.0
    %2297 = vmatpush1.msra.mxu0 0.0
    %2298 = vmatprep.subr.mxu0 0.0
    %2299 = vmatpush1.msra.mxu0 0.0
    %2300 = vmatprep.subr.mxu0 0.0
    %2301 = vmatpush1.msra.mxu0 0.0
    %2302 = vmatprep.subr.mxu0 0.0
    %2303 = vmatpush1.msra.mxu0 0.0
    %2304 = vmatprep.subr.mxu0 0.0
    %2305 = vmatpush1.msra.mxu0 0.0
    %2306 = vmatprep.subr.mxu0 0.0
    %2307 = vmatpush1.msra.mxu0 0.0
    %2308 = vmatprep.subr.mxu0 0.0
    %2309 = vmatpush1.msra.mxu0 0.0
    %2310 = vmatprep.subr.mxu0 0.0
    %2311 = vmatpush1.msra.mxu0 0.0
    %2312 = vmatprep.subr.mxu0 0.0
    %2313 = vmatpush1.msra.mxu0 0.0
    %2314 = vmatprep.subr.mxu0 0.0
    %2315 = vmatpush1.msra.mxu0 0.0
    %2316 = vmatprep.mubr.f32.mxu0 0.0
    %2317 = vmatmul.mubr.f32.gmra.mrb[0].mxu0 %v2152
    %v2318 = vpop.f32.mrb[0].mxu0
    %v2319 = vadd.f32 0.0, %v2318
    %v2320 = vpop.f32.mrb[0].mxu0
    %v2321 = vadd.f32 0.0, %v2320
    %2322 = vdwg.mxu0
    %v2323 = vadd.f32 %v2177, %v2248
    %v2324 = vadd.f32 %v2178, %v2250
    %v2325 = vadd.f32 %v2179, %v2319
    %v2326 = vadd.f32 %v2180, %v2321
    %v2327 = vadd.f32 %v2323, %v375
    %v2328 = vadd.f32 %v2324, %v379
    %v2329 = vadd.f32 %v2325, %v383
    %v2330 = vadd.f32 %v2326, %v387
    %v2331 = vmul.f32 %v1086, %v407
    %v2332 = vmul.f32 %v1086, %v411
    %v2333 = vmul.f32 %v1086, %v415
    %v2334 = vmul.f32 %v1086, %v419
    %2335 = vmatprep.subr.mxu0 %v429
    %2336 = vmatpush1.msra.mxu0 %v428
    %2337 = vmatprep.subr.mxu0 %v433
    %2338 = vmatpush1.msra.mxu0 %v432
    %2339 = vmatprep.subr.mxu0 %v437
    %2340 = vmatpush1.msra.mxu0 %v436
    %2341 = vmatprep.subr.mxu0 %v441
    %2342 = vmatpush1.msra.mxu0 %v440
    %2343 = vmatprep.subr.mxu0 %v445
    %2344 = vmatpush1.msra.mxu0 %v444
    %2345 = vmatprep.subr.mxu0 %v449
    %2346 = vmatpush1.msra.mxu0 %v448
    %2347 = vmatprep.subr.mxu0 %v453
    %2348 = vmatpush1.msra.mxu0 %v452
    %2349 = vmatprep.subr.mxu0 %v457
    %2350 = vmatpush1.msra.mxu0 %v456
    %2351 = vmatprep.subr.mxu0 %v461
    %2352 = vmatpush1.msra.mxu0 %v460
    %2353 = vmatprep.subr.mxu0 %v465
    %2354 = vmatpush1.msra.mxu0 %v464
    %2355 = vmatprep.subr.mxu0 %v469
    %2356 = vmatpush1.msra.mxu0 %v468
    %2357 = vmatprep.subr.mxu0 %v473
    %2358 = vmatpush1.msra.mxu0 %v472
    %2359 = vmatprep.subr.mxu0 %v477
    %2360 = vmatpush1.msra.mxu0 %v476
    %2361 = vmatprep.subr.mxu0 %v481
    %2362 = vmatpush1.msra.mxu0 %v480
    %2363 = vmatprep.subr.mxu0 %v485
    %2364 = vmatpush1.msra.mxu0 %v484
    %2365 = vmatprep.subr.mxu0 %v489
    %2366 = vmatpush1.msra.mxu0 %v488
    %2367 = vmatprep.subr.mxu0 0.0
    %2368 = vmatpush1.msra.mxu0 0.0
    %2369 = vmatprep.subr.mxu0 0.0
    %2370 = vmatpush1.msra.mxu0 0.0
    %2371 = vmatprep.subr.mxu0 0.0
    %2372 = vmatpush1.msra.mxu0 0.0
    %2373 = vmatprep.subr.mxu0 0.0
    %2374 = vmatpush1.msra.mxu0 0.0
    %2375 = vmatprep.subr.mxu0 0.0
    %2376 = vmatpush1.msra.mxu0 0.0
    %2377 = vmatprep.subr.mxu0 0.0
    %2378 = vmatpush1.msra.mxu0 0.0
    %2379 = vmatprep.subr.mxu0 0.0
    %2380 = vmatpush1.msra.mxu0 0.0
    %2381 = vmatprep.subr.mxu0 0.0
    %2382 = vmatpush1.msra.mxu0 0.0
    %2383 = vmatprep.subr.mxu0 0.0
    %2384 = vmatpush1.msra.mxu0 0.0
    %2385 = vmatprep.subr.mxu0 0.0
    %2386 = vmatpush1.msra.mxu0 0.0
    %2387 = vmatprep.subr.mxu0 0.0
    %2388 = vmatpush1.msra.mxu0 0.0
    %2389 = vmatprep.subr.mxu0 0.0
    %2390 = vmatpush1.msra.mxu0 0.0
    %2391 = vmatprep.subr.mxu0 0.0
    %2392 = vmatpush1.msra.mxu0 0.0
    %2393 = vmatprep.subr.mxu0 0.0
    %2394 = vmatpush1.msra.mxu0 0.0
    %2395 = vmatprep.subr.mxu0 0.0
    %2396 = vmatpush1.msra.mxu0 0.0
    %2397 = vmatprep.subr.mxu0 0.0
    %2398 = vmatpush1.msra.mxu0 0.0
    %2399 = vmatprep.mubr.f32.mxu0 0.0
    %2400 = vmatmul.mubr.f32.gmra.mrb[0].mxu0 %v2176
    %v2401 = vpop.f32.mrb[0].mxu0
    %v2402 = vadd.f32 0.0, %v2401
    %v2403 = vpop.f32.mrb[0].mxu0
    %v2404 = vadd.f32 0.0, %v2403
    %2405 = vdwg.mxu0
    %2406 = vmatprep.subr.mxu0 %v431
    %2407 = vmatpush1.msra.mxu0 %v430
    %2408 = vmatprep.subr.mxu0 %v435
    %2409 = vmatpush1.msra.mxu0 %v434
    %2410 = vmatprep.subr.mxu0 %v439
    %2411 = vmatpush1.msra.mxu0 %v438
    %2412 = vmatprep.subr.mxu0 %v443
    %2413 = vmatpush1.msra.mxu0 %v442
    %2414 = vmatprep.subr.mxu0 %v447
    %2415 = vmatpush1.msra.mxu0 %v446
    %2416 = vmatprep.subr.mxu0 %v451
    %2417 = vmatpush1.msra.mxu0 %v450
    %2418 = vmatprep.subr.mxu0 %v455
    %2419 = vmatpush1.msra.mxu0 %v454
    %2420 = vmatprep.subr.mxu0 %v459
    %2421 = vmatpush1.msra.mxu0 %v458
    %2422 = vmatprep.subr.mxu0 %v463
    %2423 = vmatpush1.msra.mxu0 %v462
    %2424 = vmatprep.subr.mxu0 %v467
    %2425 = vmatpush1.msra.mxu0 %v466
    %2426 = vmatprep.subr.mxu0 %v471
    %2427 = vmatpush1.msra.mxu0 %v470
    %2428 = vmatprep.subr.mxu0 %v475
    %2429 = vmatpush1.msra.mxu0 %v474
    %2430 = vmatprep.subr.mxu0 %v479
    %2431 = vmatpush1.msra.mxu0 %v478
    %2432 = vmatprep.subr.mxu0 %v483
    %2433 = vmatpush1.msra.mxu0 %v482
    %2434 = vmatprep.subr.mxu0 %v487
    %2435 = vmatpush1.msra.mxu0 %v486
    %2436 = vmatprep.subr.mxu0 %v491
    %2437 = vmatpush1.msra.mxu0 %v490
    %2438 = vmatprep.subr.mxu0 0.0
    %2439 = vmatpush1.msra.mxu0 0.0
    %2440 = vmatprep.subr.mxu0 0.0
    %2441 = vmatpush1.msra.mxu0 0.0
    %2442 = vmatprep.subr.mxu0 0.0
    %2443 = vmatpush1.msra.mxu0 0.0
    %2444 = vmatprep.subr.mxu0 0.0
    %2445 = vmatpush1.msra.mxu0 0.0
    %2446 = vmatprep.subr.mxu0 0.0
    %2447 = vmatpush1.msra.mxu0 0.0
    %2448 = vmatprep.subr.mxu0 0.0
    %2449 = vmatpush1.msra.mxu0 0.0
    %2450 = vmatprep.subr.mxu0 0.0
    %2451 = vmatpush1.msra.mxu0 0.0
    %2452 = vmatprep.subr.mxu0 0.0
    %2453 = vmatpush1.msra.mxu0 0.0
    %2454 = vmatprep.subr.mxu0 0.0
    %2455 = vmatpush1.msra.mxu0 0.0
    %2456 = vmatprep.subr.mxu0 0.0
    %2457 = vmatpush1.msra.mxu0 0.0
    %2458 = vmatprep.subr.mxu0 0.0
    %2459 = vmatpush1.msra.mxu0 0.0
    %2460 = vmatprep.subr.mxu0 0.0
    %2461 = vmatpush1.msra.mxu0 0.0
    %2462 = vmatprep.subr.mxu0 0.0
    %2463 = vmatpush1.msra.mxu0 0.0
    %2464 = vmatprep.subr.mxu0 0.0
    %2465 = vmatpush1.msra.mxu0 0.0
    %2466 = vmatprep.subr.mxu0 0.0
    %2467 = vmatpush1.msra.mxu0 0.0
    %2468 = vmatprep.subr.mxu0 0.0
    %2469 = vmatpush1.msra.mxu0 0.0
    %2470 = vmatprep.mubr.f32.mxu0 0.0
    %2471 = vmatmul.mubr.f32.gmra.mrb[0].mxu0 %v2176
    %v2472 = vpop.f32.mrb[0].mxu0
    %v2473 = vadd.f32 0.0, %v2472
    %v2474 = vpop.f32.mrb[0].mxu0
    %v2475 = vadd.f32 0.0, %v2474
    %2476 = vdwg.mxu0
    %v2477 = vadd.f32 %v2331, %v2402
    %v2478 = vadd.f32 %v2332, %v2404
    %v2479 = vadd.f32 %v2333, %v2473
    %v2480 = vadd.f32 %v2334, %v2475
    %v2481 = vadd.f32 %v2477, %v642
    %v2482 = vadd.f32 %v2478, %v646
    %v2483 = vadd.f32 %v2479, %v650
    %v2484 = vadd.f32 %v2480, %v654
    %v2485 = vxor.u32 %v2327, 2147483648
    %v2486 = vmul.f32 %v2485, 1.442695
    %v2487 = vpow.pop %v2486
    %v2488 = vadd.f32 %v2487, 1.0
    %v2489 = vrcp.pop %v2488
    %v2490 = vmul.f32 1.0, %v2489
    %v2491 = vxor.u32 %v2328, 2147483648
    %v2492 = vmul.f32 %v2491, 1.442695
    %v2493 = vpow.pop %v2492
    %v2494 = vadd.f32 %v2493, 1.0
    %v2495 = vrcp.pop %v2494
    %v2496 = vmul.f32 1.0, %v2495
    %v2497 = vtanh.pop %v2329
    %v2498 = vxor.u32 %v2330, 2147483648
    %v2499 = vmul.f32 %v2498, 1.442695
    %v2500 = vpow.pop %v2499
    %v2501 = vadd.f32 %v2500, 1.0
    %v2502 = vrcp.pop %v2501
    %v2503 = vmul.f32 1.0, %v2502
    %v2504 = vmul.f32 %v2496, %v2150
    %v2505 = vmul.f32 %v2490, %v2497
    %v2506 = vadd.f32 %v2504, %v2505
    %v2507 = vtanh.pop %v2506
    %v2508 = vmul.f32 %v2503, %v2507
    %v2509 = vxor.u32 %v2481, 2147483648
    %v2510 = vmul.f32 %v2509, 1.442695
    %v2511 = vpow.pop %v2510
    %v2512 = vadd.f32 %v2511, 1.0
    %v2513 = vrcp.pop %v2512
    %v2514 = vmul.f32 1.0, %v2513
    %v2515 = vxor.u32 %v2482, 2147483648
    %v2516 = vmul.f32 %v2515, 1.442695
    %v2517 = vpow.pop %v2516
    %v2518 = vadd.f32 %v2517, 1.0
    %v2519 = vrcp.pop %v2518
    %v2520 = vmul.f32 1.0, %v2519
    %v2521 = vtanh.pop %v2483
    %v2522 = vxor.u32 %v2484, 2147483648
    %v2523 = vmul.f32 %v2522, 1.442695
    %v2524 = vpow.pop %v2523
    %v2525 = vadd.f32 %v2524, 1.0
    %v2526 = vrcp.pop %v2525
    %v2527 = vmul.f32 1.0, %v2526
    %v2528 = vmul.f32 %v2520, %v2174
    %v2529 = vmul.f32 %v2514, %v2521
    %v2530 = vadd.f32 %v2528, %v2529
    %v2531 = vtanh.pop %v2530
    %v2532 = vmul.f32 %v2527, %v2531
    %v2533 = vmul.f32 %v877, %v140
    %v2534 = vmul.f32 %v877, %v144
    %v2535 = vmul.f32 %v877, %v148
    %v2536 = vmul.f32 %v877, %v152
    %2537 = vmatprep.subr.mxu0 %v162
    %2538 = vmatpush1.msra.mxu0 %v161
    %2539 = vmatprep.subr.mxu0 %v166
    %2540 = vmatpush1.msra.mxu0 %v165
    %2541 = vmatprep.subr.mxu0 %v170
    %2542 = vmatpush1.msra.mxu0 %v169
    %2543 = vmatprep.subr.mxu0 %v174
    %2544 = vmatpush1.msra.mxu0 %v173
    %2545 = vmatprep.subr.mxu0 %v178
    %2546 = vmatpush1.msra.mxu0 %v177
    %2547 = vmatprep.subr.mxu0 %v182
    %2548 = vmatpush1.msra.mxu0 %v181
    %2549 = vmatprep.subr.mxu0 %v186
    %2550 = vmatpush1.msra.mxu0 %v185
    %2551 = vmatprep.subr.mxu0 %v190
    %2552 = vmatpush1.msra.mxu0 %v189
    %2553 = vmatprep.subr.mxu0 %v194
    %2554 = vmatpush1.msra.mxu0 %v193
    %2555 = vmatprep.subr.mxu0 %v198
    %2556 = vmatpush1.msra.mxu0 %v197
    %2557 = vmatprep.subr.mxu0 %v202
    %2558 = vmatpush1.msra.mxu0 %v201
    %2559 = vmatprep.subr.mxu0 %v206
    %2560 = vmatpush1.msra.mxu0 %v205
    %2561 = vmatprep.subr.mxu0 %v210
    %2562 = vmatpush1.msra.mxu0 %v209
    %2563 = vmatprep.subr.mxu0 %v214
    %2564 = vmatpush1.msra.mxu0 %v213
    %2565 = vmatprep.subr.mxu0 %v218
    %2566 = vmatpush1.msra.mxu0 %v217
    %2567 = vmatprep.subr.mxu0 %v222
    %2568 = vmatpush1.msra.mxu0 %v221
    %2569 = vmatprep.subr.mxu0 0.0
    %2570 = vmatpush1.msra.mxu0 0.0
    %2571 = vmatprep.subr.mxu0 0.0
    %2572 = vmatpush1.msra.mxu0 0.0
    %2573 = vmatprep.subr.mxu0 0.0
    %2574 = vmatpush1.msra.mxu0 0.0
    %2575 = vmatprep.subr.mxu0 0.0
    %2576 = vmatpush1.msra.mxu0 0.0
    %2577 = vmatprep.subr.mxu0 0.0
    %2578 = vmatpush1.msra.mxu0 0.0
    %2579 = vmatprep.subr.mxu0 0.0
    %2580 = vmatpush1.msra.mxu0 0.0
    %2581 = vmatprep.subr.mxu0 0.0
    %2582 = vmatpush1.msra.mxu0 0.0
    %2583 = vmatprep.subr.mxu0 0.0
    %2584 = vmatpush1.msra.mxu0 0.0
    %2585 = vmatprep.subr.mxu0 0.0
    %2586 = vmatpush1.msra.mxu0 0.0
    %2587 = vmatprep.subr.mxu0 0.0
    %2588 = vmatpush1.msra.mxu0 0.0
    %2589 = vmatprep.subr.mxu0 0.0
    %2590 = vmatpush1.msra.mxu0 0.0
    %2591 = vmatprep.subr.mxu0 0.0
    %2592 = vmatpush1.msra.mxu0 0.0
    %2593 = vmatprep.subr.mxu0 0.0
    %2594 = vmatpush1.msra.mxu0 0.0
    %2595 = vmatprep.subr.mxu0 0.0
    %2596 = vmatpush1.msra.mxu0 0.0
    %2597 = vmatprep.subr.mxu0 0.0
    %2598 = vmatpush1.msra.mxu0 0.0
    %2599 = vmatprep.subr.mxu0 0.0
    %2600 = vmatpush1.msra.mxu0 0.0
    %2601 = vmatprep.mubr.f32.mxu0 0.0
    %2602 = vmatmul.mubr.f32.gmra.mrb[0].mxu0 %v2508
    %v2603 = vpop.f32.mrb[0].mxu0
    %v2604 = vadd.f32 0.0, %v2603
    %v2605 = vpop.f32.mrb[0].mxu0
    %v2606 = vadd.f32 0.0, %v2605
    %2607 = vdwg.mxu0
    %2608 = vmatprep.subr.mxu0 %v164
    %2609 = vmatpush1.msra.mxu0 %v163
    %2610 = vmatprep.subr.mxu0 %v168
    %2611 = vmatpush1.msra.mxu0 %v167
    %2612 = vmatprep.subr.mxu0 %v172
    %2613 = vmatpush1.msra.mxu0 %v171
    %2614 = vmatprep.subr.mxu0 %v176
    %2615 = vmatpush1.msra.mxu0 %v175
    %2616 = vmatprep.subr.mxu0 %v180
    %2617 = vmatpush1.msra.mxu0 %v179
    %2618 = vmatprep.subr.mxu0 %v184
    %2619 = vmatpush1.msra.mxu0 %v183
    %2620 = vmatprep.subr.mxu0 %v188
    %2621 = vmatpush1.msra.mxu0 %v187
    %2622 = vmatprep.subr.mxu0 %v192
    %2623 = vmatpush1.msra.mxu0 %v191
    %2624 = vmatprep.subr.mxu0 %v196
    %2625 = vmatpush1.msra.mxu0 %v195
    %2626 = vmatprep.subr.mxu0 %v200
    %2627 = vmatpush1.msra.mxu0 %v199
    %2628 = vmatprep.subr.mxu0 %v204
    %2629 = vmatpush1.msra.mxu0 %v203
    %2630 = vmatprep.subr.mxu0 %v208
    %2631 = vmatpush1.msra.mxu0 %v207
    %2632 = vmatprep.subr.mxu0 %v212
    %2633 = vmatpush1.msra.mxu0 %v211
    %2634 = vmatprep.subr.mxu0 %v216
    %2635 = vmatpush1.msra.mxu0 %v215
    %2636 = vmatprep.subr.mxu0 %v220
    %2637 = vmatpush1.msra.mxu0 %v219
    %2638 = vmatprep.subr.mxu0 %v224
    %2639 = vmatpush1.msra.mxu0 %v223
    %2640 = vmatprep.subr.mxu0 0.0
    %2641 = vmatpush1.msra.mxu0 0.0
    %2642 = vmatprep.subr.mxu0 0.0
    %2643 = vmatpush1.msra.mxu0 0.0
    %2644 = vmatprep.subr.mxu0 0.0
    %2645 = vmatpush1.msra.mxu0 0.0
    %2646 = vmatprep.subr.mxu0 0.0
    %2647 = vmatpush1.msra.mxu0 0.0
    %2648 = vmatprep.subr.mxu0 0.0
    %2649 = vmatpush1.msra.mxu0 0.0
    %2650 = vmatprep.subr.mxu0 0.0
    %2651 = vmatpush1.msra.mxu0 0.0
    %2652 = vmatprep.subr.mxu0 0.0
    %2653 = vmatpush1.msra.mxu0 0.0
    %2654 = vmatprep.subr.mxu0 0.0
    %2655 = vmatpush1.msra.mxu0 0.0
    %2656 = vmatprep.subr.mxu0 0.0
    %2657 = vmatpush1.msra.mxu0 0.0
    %2658 = vmatprep.subr.mxu0 0.0
    %2659 = vmatpush1.msra.mxu0 0.0
    %2660 = vmatprep.subr.mxu0 0.0
    %2661 = vmatpush1.msra.mxu0 0.0
    %2662 = vmatprep.subr.mxu0 0.0
    %2663 = vmatpush1.msra.mxu0 0.0
    %2664 = vmatprep.subr.mxu0 0.0
    %2665 = vmatpush1.msra.mxu0 0.0
    %2666 = vmatprep.subr.mxu0 0.0
    %2667 = vmatpush1.msra.mxu0 0.0
    %2668 = vmatprep.subr.mxu0 0.0
    %2669 = vmatpush1.msra.mxu0 0.0
    %2670 = vmatprep.subr.mxu0 0.0
    %2671 = vmatpush1.msra.mxu0 0.0
    %2672 = vmatprep.mubr.f32.mxu0 0.0
    %2673 = vmatmul.mubr.f32.gmra.mrb[0].mxu0 %v2508
    %v2674 = vpop.f32.mrb[0].mxu0
    %v2675 = vadd.f32 0.0, %v2674
    %v2676 = vpop.f32.mrb[0].mxu0
    %v2677 = vadd.f32 0.0, %v2676
    %2678 = vdwg.mxu0
    %v2679 = vadd.f32 %v2533, %v2604
    %v2680 = vadd.f32 %v2534, %v2606
    %v2681 = vadd.f32 %v2535, %v2675
    %v2682 = vadd.f32 %v2536, %v2677
    %v2683 = vadd.f32 %v2679, %v375
    %v2684 = vadd.f32 %v2680, %v379
    %v2685 = vadd.f32 %v2681, %v383
    %v2686 = vadd.f32 %v2682, %v387
    %v2687 = vmul.f32 %v716, %v407
    %v2688 = vmul.f32 %v716, %v411
    %v2689 = vmul.f32 %v716, %v415
    %v2690 = vmul.f32 %v716, %v419
    %2691 = vmatprep.subr.mxu0 %v429
    %2692 = vmatpush1.msra.mxu0 %v428
    %2693 = vmatprep.subr.mxu0 %v433
    %2694 = vmatpush1.msra.mxu0 %v432
    %2695 = vmatprep.subr.mxu0 %v437
    %2696 = vmatpush1.msra.mxu0 %v436
    %2697 = vmatprep.subr.mxu0 %v441
    %2698 = vmatpush1.msra.mxu0 %v440
    %2699 = vmatprep.subr.mxu0 %v445
    %2700 = vmatpush1.msra.mxu0 %v444
    %2701 = vmatprep.subr.mxu0 %v449
    %2702 = vmatpush1.msra.mxu0 %v448
    %2703 = vmatprep.subr.mxu0 %v453
    %2704 = vmatpush1.msra.mxu0 %v452
    %2705 = vmatprep.subr.mxu0 %v457
    %2706 = vmatpush1.msra.mxu0 %v456
    %2707 = vmatprep.subr.mxu0 %v461
    %2708 = vmatpush1.msra.mxu0 %v460
    %2709 = vmatprep.subr.mxu0 %v465
    %2710 = vmatpush1.msra.mxu0 %v464
    %2711 = vmatprep.subr.mxu0 %v469
    %2712 = vmatpush1.msra.mxu0 %v468
    %2713 = vmatprep.subr.mxu0 %v473
    %2714 = vmatpush1.msra.mxu0 %v472
    %2715 = vmatprep.subr.mxu0 %v477
    %2716 = vmatpush1.msra.mxu0 %v476
    %2717 = vmatprep.subr.mxu0 %v481
    %2718 = vmatpush1.msra.mxu0 %v480
    %2719 = vmatprep.subr.mxu0 %v485
    %2720 = vmatpush1.msra.mxu0 %v484
    %2721 = vmatprep.subr.mxu0 %v489
    %2722 = vmatpush1.msra.mxu0 %v488
    %2723 = vmatprep.subr.mxu0 0.0
    %2724 = vmatpush1.msra.mxu0 0.0
    %2725 = vmatprep.subr.mxu0 0.0
    %2726 = vmatpush1.msra.mxu0 0.0
    %2727 = vmatprep.subr.mxu0 0.0
    %2728 = vmatpush1.msra.mxu0 0.0
    %2729 = vmatprep.subr.mxu0 0.0
    %2730 = vmatpush1.msra.mxu0 0.0
    %2731 = vmatprep.subr.mxu0 0.0
    %2732 = vmatpush1.msra.mxu0 0.0
    %2733 = vmatprep.subr.mxu0 0.0
    %2734 = vmatpush1.msra.mxu0 0.0
    %2735 = vmatprep.subr.mxu0 0.0
    %2736 = vmatpush1.msra.mxu0 0.0
    %2737 = vmatprep.subr.mxu0 0.0
    %2738 = vmatpush1.msra.mxu0 0.0
    %2739 = vmatprep.subr.mxu0 0.0
    %2740 = vmatpush1.msra.mxu0 0.0
    %2741 = vmatprep.subr.mxu0 0.0
    %2742 = vmatpush1.msra.mxu0 0.0
    %2743 = vmatprep.subr.mxu0 0.0
    %2744 = vmatpush1.msra.mxu0 0.0
    %2745 = vmatprep.subr.mxu0 0.0
    %2746 = vmatpush1.msra.mxu0 0.0
    %2747 = vmatprep.subr.mxu0 0.0
    %2748 = vmatpush1.msra.mxu0 0.0
    %2749 = vmatprep.subr.mxu0 0.0
    %2750 = vmatpush1.msra.mxu0 0.0
    %2751 = vmatprep.subr.mxu0 0.0
    %2752 = vmatpush1.msra.mxu0 0.0
    %2753 = vmatprep.subr.mxu0 0.0
    %2754 = vmatpush1.msra.mxu0 0.0
    %2755 = vmatprep.mubr.f32.mxu0 0.0
    %2756 = vmatmul.mubr.f32.gmra.mrb[0].mxu0 %v2532
    %v2757 = vpop.f32.mrb[0].mxu0
    %v2758 = vadd.f32 0.0, %v2757
    %v2759 = vpop.f32.mrb[0].mxu0
    %v2760 = vadd.f32 0.0, %v2759
    %2761 = vdwg.mxu0
    %2762 = vmatprep.subr.mxu0 %v431
    %2763 = vmatpush1.msra.mxu0 %v430
    %2764 = vmatprep.subr.mxu0 %v435
    %2765 = vmatpush1.msra.mxu0 %v434
    %2766 = vmatprep.subr.mxu0 %v439
    %2767 = vmatpush1.msra.mxu0 %v438
    %2768 = vmatprep.subr.mxu0 %v443
    %2769 = vmatpush1.msra.mxu0 %v442
    %2770 = vmatprep.subr.mxu0 %v447
    %2771 = vmatpush1.msra.mxu0 %v446
    %2772 = vmatprep.subr.mxu0 %v451
    %2773 = vmatpush1.msra.mxu0 %v450
    %2774 = vmatprep.subr.mxu0 %v455
    %2775 = vmatpush1.msra.mxu0 %v454
    %2776 = vmatprep.subr.mxu0 %v459
    %2777 = vmatpush1.msra.mxu0 %v458
    %2778 = vmatprep.subr.mxu0 %v463
    %2779 = vmatpush1.msra.mxu0 %v462
    %2780 = vmatprep.subr.mxu0 %v467
    %2781 = vmatpush1.msra.mxu0 %v466
    %2782 = vmatprep.subr.mxu0 %v471
    %2783 = vmatpush1.msra.mxu0 %v470
    %2784 = vmatprep.subr.mxu0 %v475
    %2785 = vmatpush1.msra.mxu0 %v474
    %2786 = vmatprep.subr.mxu0 %v479
    %2787 = vmatpush1.msra.mxu0 %v478
    %2788 = vmatprep.subr.mxu0 %v483
    %2789 = vmatpush1.msra.mxu0 %v482
    %2790 = vmatprep.subr.mxu0 %v487
    %2791 = vmatpush1.msra.mxu0 %v486
    %2792 = vmatprep.subr.mxu0 %v491
    %2793 = vmatpush1.msra.mxu0 %v490
    %2794 = vmatprep.subr.mxu0 0.0
    %2795 = vmatpush1.msra.mxu0 0.0
    %2796 = vmatprep.subr.mxu0 0.0
    %2797 = vmatpush1.msra.mxu0 0.0
    %2798 = vmatprep.subr.mxu0 0.0
    %2799 = vmatpush1.msra.mxu0 0.0
    %2800 = vmatprep.subr.mxu0 0.0
    %2801 = vmatpush1.msra.mxu0 0.0
    %2802 = vmatprep.subr.mxu0 0.0
    %2803 = vmatpush1.msra.mxu0 0.0
    %2804 = vmatprep.subr.mxu0 0.0
    %2805 = vmatpush1.msra.mxu0 0.0
    %2806 = vmatprep.subr.mxu0 0.0
    %2807 = vmatpush1.msra.mxu0 0.0
    %2808 = vmatprep.subr.mxu0 0.0
    %2809 = vmatpush1.msra.mxu0 0.0
    %2810 = vmatprep.subr.mxu0 0.0
    %2811 = vmatpush1.msra.mxu0 0.0
    %2812 = vmatprep.subr.mxu0 0.0
    %2813 = vmatpush1.msra.mxu0 0.0
    %2814 = vmatprep.subr.mxu0 0.0
    %2815 = vmatpush1.msra.mxu0 0.0
    %2816 = vmatprep.subr.mxu0 0.0
    %2817 = vmatpush1.msra.mxu0 0.0
    %2818 = vmatprep.subr.mxu0 0.0
    %2819 = vmatpush1.msra.mxu0 0.0
    %2820 = vmatprep.subr.mxu0 0.0
    %2821 = vmatpush1.msra.mxu0 0.0
    %2822 = vmatprep.subr.mxu0 0.0
    %2823 = vmatpush1.msra.mxu0 0.0
    %2824 = vmatprep.subr.mxu0 0.0
    %2825 = vmatpush1.msra.mxu0 0.0
    %2826 = vmatprep.mubr.f32.mxu0 0.0
    %2827 = vmatmul.mubr.f32.gmra.mrb[0].mxu0 %v2532
    %v2828 = vpop.f32.mrb[0].mxu0
    %v2829 = vadd.f32 0.0, %v2828
    %v2830 = vpop.f32.mrb[0].mxu0
    %v2831 = vadd.f32 0.0, %v2830
    %2832 = vdwg.mxu0
    %v2833 = vadd.f32 %v2687, %v2758
    %v2834 = vadd.f32 %v2688, %v2760
    %v2835 = vadd.f32 %v2689, %v2829
    %v2836 = vadd.f32 %v2690, %v2831
    %v2837 = vadd.f32 %v2833, %v642
    %v2838 = vadd.f32 %v2834, %v646
    %v2839 = vadd.f32 %v2835, %v650
    %v2840 = vadd.f32 %v2836, %v654
    %v2841 = vxor.u32 %v2683, 2147483648
    %v2842 = vmul.f32 %v2841, 1.442695
    %v2843 = vpow.pop %v2842
    %v2844 = vadd.f32 %v2843, 1.0
    %v2845 = vrcp.pop %v2844
    %v2846 = vmul.f32 1.0, %v2845
    %v2847 = vxor.u32 %v2684, 2147483648
    %v2848 = vmul.f32 %v2847, 1.442695
    %v2849 = vpow.pop %v2848
    %v2850 = vadd.f32 %v2849, 1.0
    %v2851 = vrcp.pop %v2850
    %v2852 = vmul.f32 1.0, %v2851
    %v2853 = vtanh.pop %v2685
    %v2854 = vxor.u32 %v2686, 2147483648
    %v2855 = vmul.f32 %v2854, 1.442695
    %v2856 = vpow.pop %v2855
    %v2857 = vadd.f32 %v2856, 1.0
    %v2858 = vrcp.pop %v2857
    %v2859 = vmul.f32 1.0, %v2858
    %v2860 = vmul.f32 %v2852, %v2506
    %v2861 = vmul.f32 %v2846, %v2853
    %v2862 = vadd.f32 %v2860, %v2861
    %v2863 = vtanh.pop %v2862
    %v2864 = vmul.f32 %v2859, %v2863
    %v2865 = vxor.u32 %v2837, 2147483648
    %v2866 = vmul.f32 %v2865, 1.442695
    %v2867 = vpow.pop %v2866
    %v2868 = vadd.f32 %v2867, 1.0
    %v2869 = vrcp.pop %v2868
    %v2870 = vmul.f32 1.0, %v2869
    %v2871 = vxor.u32 %v2838, 2147483648
    %v2872 = vmul.f32 %v2871, 1.442695
    %v2873 = vpow.pop %v2872
    %v2874 = vadd.f32 %v2873, 1.0
    %v2875 = vrcp.pop %v2874
    %v2876 = vmul.f32 1.0, %v2875
    %v2877 = vtanh.pop %v2839
    %v2878 = vxor.u32 %v2840, 2147483648
    %v2879 = vmul.f32 %v2878, 1.442695
    %v2880 = vpow.pop %v2879
    %v2881 = vadd.f32 %v2880, 1.0
    %v2882 = vrcp.pop %v2881
    %v2883 = vmul.f32 1.0, %v2882
    %v2884 = vmul.f32 %v2876, %v2530
    %v2885 = vmul.f32 %v2870, %v2877
    %v2886 = vadd.f32 %v2884, %v2885
    %v2887 = vtanh.pop %v2886
    %v2888 = vmul.f32 %v2883, %v2887
    %v2889 = vmul.f32 %v401, %v140
    %v2890 = vmul.f32 %v401, %v144
    %v2891 = vmul.f32 %v401, %v148
    %v2892 = vmul.f32 %v401, %v152
    %2893 = vmatprep.subr.mxu0 %v162
    %2894 = vmatpush1.msra.mxu0 %v161
    %2895 = vmatprep.subr.mxu0 %v166
    %2896 = vmatpush1.msra.mxu0 %v165
    %2897 = vmatprep.subr.mxu0 %v170
    %2898 = vmatpush1.msra.mxu0 %v169
    %2899 = vmatprep.subr.mxu0 %v174
    %2900 = vmatpush1.msra.mxu0 %v173
    %2901 = vmatprep.subr.mxu0 %v178
    %2902 = vmatpush1.msra.mxu0 %v177
    %2903 = vmatprep.subr.mxu0 %v182
    %2904 = vmatpush1.msra.mxu0 %v181
    %2905 = vmatprep.subr.mxu0 %v186
    %2906 = vmatpush1.msra.mxu0 %v185
    %2907 = vmatprep.subr.mxu0 %v190
    %2908 = vmatpush1.msra.mxu0 %v189
    %2909 = vmatprep.subr.mxu0 %v194
    %2910 = vmatpush1.msra.mxu0 %v193
    %2911 = vmatprep.subr.mxu0 %v198
    %2912 = vmatpush1.msra.mxu0 %v197
    %2913 = vmatprep.subr.mxu0 %v202
    %2914 = vmatpush1.msra.mxu0 %v201
    %2915 = vmatprep.subr.mxu0 %v206
    %2916 = vmatpush1.msra.mxu0 %v205
    %2917 = vmatprep.subr.mxu0 %v210
    %2918 = vmatpush1.msra.mxu0 %v209
    %2919 = vmatprep.subr.mxu0 %v214
    %2920 = vmatpush1.msra.mxu0 %v213
    %2921 = vmatprep.subr.mxu0 %v218
    %2922 = vmatpush1.msra.mxu0 %v217
    %2923 = vmatprep.subr.mxu0 %v222
    %2924 = vmatpush1.msra.mxu0 %v221
    %2925 = vmatprep.subr.mxu0 0.0
    %2926 = vmatpush1.msra.mxu0 0.0
    %2927 = vmatprep.subr.mxu0 0.0
    %2928 = vmatpush1.msra.mxu0 0.0
    %2929 = vmatprep.subr.mxu0 0.0
    %2930 = vmatpush1.msra.mxu0 0.0
    %2931 = vmatprep.subr.mxu0 0.0
    %2932 = vmatpush1.msra.mxu0 0.0
    %2933 = vmatprep.subr.mxu0 0.0
    %2934 = vmatpush1.msra.mxu0 0.0
    %2935 = vmatprep.subr.mxu0 0.0
    %2936 = vmatpush1.msra.mxu0 0.0
    %2937 = vmatprep.subr.mxu0 0.0
    %2938 = vmatpush1.msra.mxu0 0.0
    %2939 = vmatprep.subr.mxu0 0.0
    %2940 = vmatpush1.msra.mxu0 0.0
    %2941 = vmatprep.subr.mxu0 0.0
    %2942 = vmatpush1.msra.mxu0 0.0
    %2943 = vmatprep.subr.mxu0 0.0
    %2944 = vmatpush1.msra.mxu0 0.0
    %2945 = vmatprep.subr.mxu0 0.0
    %2946 = vmatpush1.msra.mxu0 0.0
    %2947 = vmatprep.subr.mxu0 0.0
    %2948 = vmatpush1.msra.mxu0 0.0
    %2949 = vmatprep.subr.mxu0 0.0
    %2950 = vmatpush1.msra.mxu0 0.0
    %2951 = vmatprep.subr.mxu0 0.0
    %2952 = vmatpush1.msra.mxu0 0.0
    %2953 = vmatprep.subr.mxu0 0.0
    %2954 = vmatpush1.msra.mxu0 0.0
    %2955 = vmatprep.subr.mxu0 0.0
    %2956 = vmatpush1.msra.mxu0 0.0
    %2957 = vmatprep.mubr.f32.mxu0 0.0
    %2958 = vmatmul.mubr.f32.gmra.mrb[0].mxu0 %v2864
    %v2959 = vpop.f32.mrb[0].mxu0
    %v2960 = vadd.f32 0.0, %v2959
    %v2961 = vpop.f32.mrb[0].mxu0
    %v2962 = vadd.f32 0.0, %v2961
    %2963 = vdwg.mxu0
    %2964 = vmatprep.subr.mxu0 %v164
    %2965 = vmatpush1.msra.mxu0 %v163
    %2966 = vmatprep.subr.mxu0 %v168
    %2967 = vmatpush1.msra.mxu0 %v167
    %2968 = vmatprep.subr.mxu0 %v172
    %2969 = vmatpush1.msra.mxu0 %v171
    %2970 = vmatprep.subr.mxu0 %v176
    %2971 = vmatpush1.msra.mxu0 %v175
    %2972 = vmatprep.subr.mxu0 %v180
    %2973 = vmatpush1.msra.mxu0 %v179
    %2974 = vmatprep.subr.mxu0 %v184
    %2975 = vmatpush1.msra.mxu0 %v183
    %2976 = vmatprep.subr.mxu0 %v188
    %2977 = vmatpush1.msra.mxu0 %v187
    %2978 = vmatprep.subr.mxu0 %v192
    %2979 = vmatpush1.msra.mxu0 %v191
    %2980 = vmatprep.subr.mxu0 %v196
    %2981 = vmatpush1.msra.mxu0 %v195
    %2982 = vmatprep.subr.mxu0 %v200
    %2983 = vmatpush1.msra.mxu0 %v199
    %2984 = vmatprep.subr.mxu0 %v204
    %2985 = vmatpush1.msra.mxu0 %v203
    %2986 = vmatprep.subr.mxu0 %v208
    %2987 = vmatpush1.msra.mxu0 %v207
    %2988 = vmatprep.subr.mxu0 %v212
    %2989 = vmatpush1.msra.mxu0 %v211
    %2990 = vmatprep.subr.mxu0 %v216
    %2991 = vmatpush1.msra.mxu0 %v215
    %2992 = vmatprep.subr.mxu0 %v220
    %2993 = vmatpush1.msra.mxu0 %v219
    %2994 = vmatprep.subr.mxu0 %v224
    %2995 = vmatpush1.msra.mxu0 %v223
    %2996 = vmatprep.subr.mxu0 0.0
    %2997 = vmatpush1.msra.mxu0 0.0
    %2998 = vmatprep.subr.mxu0 0.0
    %2999 = vmatpush1.msra.mxu0 0.0
    %3000 = vmatprep.subr.mxu0 0.0
    %3001 = vmatpush1.msra.mxu0 0.0
    %3002 = vmatprep.subr.mxu0 0.0
    %3003 = vmatpush1.msra.mxu0 0.0
    %3004 = vmatprep.subr.mxu0 0.0
    %3005 = vmatpush1.msra.mxu0 0.0
    %3006 = vmatprep.subr.mxu0 0.0
    %3007 = vmatpush1.msra.mxu0 0.0
    %3008 = vmatprep.subr.mxu0 0.0
    %3009 = vmatpush1.msra.mxu0 0.0
    %3010 = vmatprep.subr.mxu0 0.0
    %3011 = vmatpush1.msra.mxu0 0.0
    %3012 = vmatprep.subr.mxu0 0.0
    %3013 = vmatpush1.msra.mxu0 0.0
    %3014 = vmatprep.subr.mxu0 0.0
    %3015 = vmatpush1.msra.mxu0 0.0
    %3016 = vmatprep.subr.mxu0 0.0
    %3017 = vmatpush1.msra.mxu0 0.0
    %3018 = vmatprep.subr.mxu0 0.0
    %3019 = vmatpush1.msra.mxu0 0.0
    %3020 = vmatprep.subr.mxu0 0.0
    %3021 = vmatpush1.msra.mxu0 0.0
    %3022 = vmatprep.subr.mxu0 0.0
    %3023 = vmatpush1.msra.mxu0 0.0
    %3024 = vmatprep.subr.mxu0 0.0
    %3025 = vmatpush1.msra.mxu0 0.0
    %3026 = vmatprep.subr.mxu0 0.0
    %3027 = vmatpush1.msra.mxu0 0.0
    %3028 = vmatprep.mubr.f32.mxu0 0.0
    %3029 = vmatmul.mubr.f32.gmra.mrb[0].mxu0 %v2864
    %v3030 = vpop.f32.mrb[0].mxu0
    %v3031 = vadd.f32 0.0, %v3030
    %v3032 = vpop.f32.mrb[0].mxu0
    %v3033 = vadd.f32 0.0, %v3032
    %3034 = vdwg.mxu0
    %v3035 = vadd.f32 %v2889, %v2960
    %v3036 = vadd.f32 %v2890, %v2962
    %v3037 = vadd.f32 %v2891, %v3031
    %v3038 = vadd.f32 %v2892, %v3033
    %v3039 = vadd.f32 %v3035, %v375
    %v3040 = vadd.f32 %v3036, %v379
    %v3041 = vadd.f32 %v3037, %v383
    %v3042 = vadd.f32 %v3038, %v387
    %v3043 = vmul.f32 %v134, %v407
    %v3044 = vmul.f32 %v134, %v411
    %v3045 = vmul.f32 %v134, %v415
    %v3046 = vmul.f32 %v134, %v419
    %3047 = vmatprep.subr.mxu0 %v429
    %3048 = vmatpush1.msra.mxu0 %v428
    %3049 = vmatprep.subr.mxu0 %v433
    %3050 = vmatpush1.msra.mxu0 %v432
    %3051 = vmatprep.subr.mxu0 %v437
    %3052 = vmatpush1.msra.mxu0 %v436
    %3053 = vmatprep.subr.mxu0 %v441
    %3054 = vmatpush1.msra.mxu0 %v440
    %3055 = vmatprep.subr.mxu0 %v445
    %3056 = vmatpush1.msra.mxu0 %v444
    %3057 = vmatprep.subr.mxu0 %v449
    %3058 = vmatpush1.msra.mxu0 %v448
    %3059 = vmatprep.subr.mxu0 %v453
    %3060 = vmatpush1.msra.mxu0 %v452
    %3061 = vmatprep.subr.mxu0 %v457
    %3062 = vmatpush1.msra.mxu0 %v456
    %3063 = vmatprep.subr.mxu0 %v461
    %3064 = vmatpush1.msra.mxu0 %v460
    %3065 = vmatprep.subr.mxu0 %v465
    %3066 = vmatpush1.msra.mxu0 %v464
    %3067 = vmatprep.subr.mxu0 %v469
    %3068 = vmatpush1.msra.mxu0 %v468
    %3069 = vmatprep.subr.mxu0 %v473
    %3070 = vmatpush1.msra.mxu0 %v472
    %3071 = vmatprep.subr.mxu0 %v477
    %3072 = vmatpush1.msra.mxu0 %v476
    %3073 = vmatprep.subr.mxu0 %v481
    %3074 = vmatpush1.msra.mxu0 %v480
    %3075 = vmatprep.subr.mxu0 %v485
    %3076 = vmatpush1.msra.mxu0 %v484
    %3077 = vmatprep.subr.mxu0 %v489
    %3078 = vmatpush1.msra.mxu0 %v488
    %3079 = vmatprep.subr.mxu0 0.0
    %3080 = vmatpush1.msra.mxu0 0.0
    %3081 = vmatprep.subr.mxu0 0.0
    %3082 = vmatpush1.msra.mxu0 0.0
    %3083 = vmatprep.subr.mxu0 0.0
    %3084 = vmatpush1.msra.mxu0 0.0
    %3085 = vmatprep.subr.mxu0 0.0
    %3086 = vmatpush1.msra.mxu0 0.0
    %3087 = vmatprep.subr.mxu0 0.0
    %3088 = vmatpush1.msra.mxu0 0.0
    %3089 = vmatprep.subr.mxu0 0.0
    %3090 = vmatpush1.msra.mxu0 0.0
    %3091 = vmatprep.subr.mxu0 0.0
    %3092 = vmatpush1.msra.mxu0 0.0
    %3093 = vmatprep.subr.mxu0 0.0
    %3094 = vmatpush1.msra.mxu0 0.0
    %3095 = vmatprep.subr.mxu0 0.0
    %3096 = vmatpush1.msra.mxu0 0.0
    %3097 = vmatprep.subr.mxu0 0.0
    %3098 = vmatpush1.msra.mxu0 0.0
    %3099 = vmatprep.subr.mxu0 0.0
    %3100 = vmatpush1.msra.mxu0 0.0
    %3101 = vmatprep.subr.mxu0 0.0
    %3102 = vmatpush1.msra.mxu0 0.0
    %3103 = vmatprep.subr.mxu0 0.0
    %3104 = vmatpush1.msra.mxu0 0.0
    %3105 = vmatprep.subr.mxu0 0.0
    %3106 = vmatpush1.msra.mxu0 0.0
    %3107 = vmatprep.subr.mxu0 0.0
    %3108 = vmatpush1.msra.mxu0 0.0
    %3109 = vmatprep.subr.mxu0 0.0
    %3110 = vmatpush1.msra.mxu0 0.0
    %3111 = vmatprep.mubr.f32.mxu0 0.0
    %3112 = vmatmul.mubr.f32.gmra.mrb[0].mxu0 %v2888
    %v3113 = vpop.f32.mrb[0].mxu0
    %v3114 = vadd.f32 0.0, %v3113
    %v3115 = vpop.f32.mrb[0].mxu0
    %v3116 = vadd.f32 0.0, %v3115
    %3117 = vdwg.mxu0
    %3118 = vmatprep.subr.mxu0 %v431
    %3119 = vmatpush1.msra.mxu0 %v430
    %3120 = vmatprep.subr.mxu0 %v435
    %3121 = vmatpush1.msra.mxu0 %v434
    %3122 = vmatprep.subr.mxu0 %v439
    %3123 = vmatpush1.msra.mxu0 %v438
    %3124 = vmatprep.subr.mxu0 %v443
    %3125 = vmatpush1.msra.mxu0 %v442
    %3126 = vmatprep.subr.mxu0 %v447
    %3127 = vmatpush1.msra.mxu0 %v446
    %3128 = vmatprep.subr.mxu0 %v451
    %3129 = vmatpush1.msra.mxu0 %v450
    %3130 = vmatprep.subr.mxu0 %v455
    %3131 = vmatpush1.msra.mxu0 %v454
    %3132 = vmatprep.subr.mxu0 %v459
    %3133 = vmatpush1.msra.mxu0 %v458
    %3134 = vmatprep.subr.mxu0 %v463
    %3135 = vmatpush1.msra.mxu0 %v462
    %3136 = vmatprep.subr.mxu0 %v467
    %3137 = vmatpush1.msra.mxu0 %v466
    %3138 = vmatprep.subr.mxu0 %v471
    %3139 = vmatpush1.msra.mxu0 %v470
    %3140 = vmatprep.subr.mxu0 %v475
    %3141 = vmatpush1.msra.mxu0 %v474
    %3142 = vmatprep.subr.mxu0 %v479
    %3143 = vmatpush1.msra.mxu0 %v478
    %3144 = vmatprep.subr.mxu0 %v483
    %3145 = vmatpush1.msra.mxu0 %v482
    %3146 = vmatprep.subr.mxu0 %v487
    %3147 = vmatpush1.msra.mxu0 %v486
    %3148 = vmatprep.subr.mxu0 %v491
    %3149 = vmatpush1.msra.mxu0 %v490
    %3150 = vmatprep.subr.mxu0 0.0
    %3151 = vmatpush1.msra.mxu0 0.0
    %3152 = vmatprep.subr.mxu0 0.0
    %3153 = vmatpush1.msra.mxu0 0.0
    %3154 = vmatprep.subr.mxu0 0.0
    %3155 = vmatpush1.msra.mxu0 0.0
    %3156 = vmatprep.subr.mxu0 0.0
    %3157 = vmatpush1.msra.mxu0 0.0
    %3158 = vmatprep.subr.mxu0 0.0
    %3159 = vmatpush1.msra.mxu0 0.0
    %3160 = vmatprep.subr.mxu0 0.0
    %3161 = vmatpush1.msra.mxu0 0.0
    %3162 = vmatprep.subr.mxu0 0.0
    %3163 = vmatpush1.msra.mxu0 0.0
    %3164 = vmatprep.subr.mxu0 0.0
    %3165 = vmatpush1.msra.mxu0 0.0
    %3166 = vmatprep.subr.mxu0 0.0
    %3167 = vmatpush1.msra.mxu0 0.0
    %3168 = vmatprep.subr.mxu0 0.0
    %3169 = vmatpush1.msra.mxu0 0.0
    %3170 = vmatprep.subr.mxu0 0.0
    %3171 = vmatpush1.msra.mxu0 0.0
    %3172 = vmatprep.subr.mxu0 0.0
    %3173 = vmatpush1.msra.mxu0 0.0
    %3174 = vmatprep.subr.mxu0 0.0
    %3175 = vmatpush1.msra.mxu0 0.0
    %3176 = vmatprep.subr.mxu0 0.0
    %3177 = vmatpush1.msra.mxu0 0.0
    %3178 = vmatprep.subr.mxu0 0.0
    %3179 = vmatpush1.msra.mxu0 0.0
    %3180 = vmatprep.subr.mxu0 0.0
    %3181 = vmatpush1.msra.mxu0 0.0
    %3182 = vmatprep.mubr.f32.mxu0 0.0
    %3183 = vmatmul.mubr.f32.gmra.mrb[0].mxu0 %v2888
    %v3184 = vpop.f32.mrb[0].mxu0
    %v3185 = vadd.f32 0.0, %v3184
    %v3186 = vpop.f32.mrb[0].mxu0
    %v3187 = vadd.f32 0.0, %v3186
    %3188 = vdwg.mxu0
    %v3189 = vadd.f32 %v3043, %v3114
    %v3190 = vadd.f32 %v3044, %v3116
    %v3191 = vadd.f32 %v3045, %v3185
    %v3192 = vadd.f32 %v3046, %v3187
    %v3193 = vadd.f32 %v3189, %v642
    %v3194 = vadd.f32 %v3190, %v646
    %v3195 = vadd.f32 %v3191, %v650
    %v3196 = vadd.f32 %v3192, %v654
    %v3197 = vxor.u32 %v3039, 2147483648
    %v3198 = vmul.f32 %v3197, 1.442695
    %v3199 = vpow.pop %v3198
    %v3200 = vadd.f32 %v3199, 1.0
    %v3201 = vrcp.pop %v3200
    %v3202 = vmul.f32 1.0, %v3201
    %v3203 = vxor.u32 %v3040, 2147483648
    %v3204 = vmul.f32 %v3203, 1.442695
    %v3205 = vpow.pop %v3204
    %v3206 = vadd.f32 %v3205, 1.0
    %v3207 = vrcp.pop %v3206
    %v3208 = vmul.f32 1.0, %v3207
    %v3209 = vtanh.pop %v3041
    %v3210 = vxor.u32 %v3042, 2147483648
    %v3211 = vmul.f32 %v3210, 1.442695
    %v3212 = vpow.pop %v3211
    %v3213 = vadd.f32 %v3212, 1.0
    %v3214 = vrcp.pop %v3213
    %v3215 = vmul.f32 1.0, %v3214
    %v3216 = vmul.f32 %v3208, %v2862
    %v3217 = vmul.f32 %v3202, %v3209
    %v3218 = vadd.f32 %v3216, %v3217
    %v3219 = vtanh.pop %v3218
    %v3220 = vmul.f32 %v3215, %v3219
    %v3221 = vxor.u32 %v3193, 2147483648
    %v3222 = vmul.f32 %v3221, 1.442695
    %v3223 = vpow.pop %v3222
    %v3224 = vadd.f32 %v3223, 1.0
    %v3225 = vrcp.pop %v3224
    %v3226 = vmul.f32 1.0, %v3225
    %v3227 = vxor.u32 %v3194, 2147483648
    %v3228 = vmul.f32 %v3227, 1.442695
    %v3229 = vpow.pop %v3228
    %v3230 = vadd.f32 %v3229, 1.0
    %v3231 = vrcp.pop %v3230
    %v3232 = vmul.f32 1.0, %v3231
    %v3233 = vtanh.pop %v3195
    %v3234 = vxor.u32 %v3196, 2147483648
    %v3235 = vmul.f32 %v3234, 1.442695
    %v3236 = vpow.pop %v3235
    %v3237 = vadd.f32 %v3236, 1.0
    %v3238 = vrcp.pop %v3237
    %v3239 = vmul.f32 1.0, %v3238
    %v3240 = vmul.f32 %v3232, %v2886
    %v3241 = vmul.f32 %v3226, %v3233
    %v3242 = vadd.f32 %v3240, %v3241
    %v3243 = vtanh.pop %v3242
    %v3244 = vmul.f32 %v3239, %v3243
    %v3245 = vld [vmem:[%s9] sm:$0xf]
    %v3246 = vld [vmem:[%s12] sm:$0xf]
    %v3247 = vld [vmem:[#allocation6] sm:$0xff]
    %v3248 = vld [vmem:[#allocation6 + $0x8] sm:$0xff]
    %v3249 = vld [vmem:[#allocation6 + $0x10] sm:$0xff]
    %v3250 = vld [vmem:[#allocation6 + $0x18] sm:$0xff]
    %v3251 = vld [vmem:[#allocation6 + $0x20] sm:$0xff]
    %v3252 = vld [vmem:[#allocation6 + $0x28] sm:$0xff]
    %v3253 = vld [vmem:[#allocation6 + $0x30] sm:$0xff]
    %v3254 = vld [vmem:[#allocation6 + $0x38] sm:$0xff]
    %v3255 = vld [vmem:[#allocation6 + $0x40] sm:$0xff]
    %v3256 = vld [vmem:[#allocation6 + $0x48] sm:$0xff]
    %v3257 = vld [vmem:[#allocation6 + $0x50] sm:$0xff]
    %v3258 = vld [vmem:[#allocation6 + $0x58] sm:$0xff]
    %v3259 = vld [vmem:[#allocation6 + $0x60] sm:$0xff]
    %v3260 = vld [vmem:[#allocation6 + $0x68] sm:$0xff]
    %v3261 = vld [vmem:[#allocation6 + $0x70] sm:$0xff]
    %v3262 = vld [vmem:[#allocation6 + $0x78] sm:$0xff]
    %v3263 = vld [vmem:[#allocation6 + $0x80] sm:$0xff]
    %v3264 = vld [vmem:[#allocation6 + $0x88] sm:$0xff]
    %v3265 = vld [vmem:[#allocation6 + $0x90] sm:$0xff]
    %v3266 = vld [vmem:[#allocation6 + $0x98] sm:$0xff]
    %v3267 = vld [vmem:[#allocation6 + $0xa0] sm:$0xff]
    %v3268 = vld [vmem:[#allocation6 + $0xa8] sm:$0xff]
    %v3269 = vld [vmem:[#allocation6 + $0xb0] sm:$0xff]
    %v3270 = vld [vmem:[#allocation6 + $0xb8] sm:$0xff]
    %v3271 = vld [vmem:[#allocation6 + $0xc0] sm:$0xff]
    %v3272 = vld [vmem:[#allocation6 + $0xc8] sm:$0xff]
    %v3273 = vld [vmem:[#allocation6 + $0xd0] sm:$0xff]
    %v3274 = vld [vmem:[#allocation6 + $0xd8] sm:$0xff]
    %v3275 = vld [vmem:[#allocation6 + $0xe0] sm:$0xff]
    %v3276 = vld [vmem:[#allocation6 + $0xe8] sm:$0xff]
    %v3277 = vld [vmem:[#allocation6 + $0xf0] sm:$0xff]
    %v3278 = vld [vmem:[#allocation6 + $0xf8] sm:$0xff]
    %v3279 = vld [vmem:[#allocation6 + $0x100] sm:$0xff]
    %v3280 = vld [vmem:[#allocation6 + $0x108] sm:$0xff]
    %v3281 = vld [vmem:[#allocation6 + $0x110] sm:$0xff]
    %v3282 = vld [vmem:[#allocation6 + $0x118] sm:$0xff]
    %v3283 = vld [vmem:[#allocation6 + $0x120] sm:$0xff]
    %v3284 = vld [vmem:[#allocation6 + $0x128] sm:$0xff]
    %v3285 = vld [vmem:[#allocation6 + $0x130] sm:$0xff]
    %v3286 = vld [vmem:[#allocation6 + $0x138] sm:$0xff]
    %v3287 = vld [vmem:[#allocation6 + $0x140] sm:$0xff]
    %v3288 = vld [vmem:[#allocation6 + $0x148] sm:$0xff]
    %v3289 = vld [vmem:[#allocation6 + $0x150] sm:$0xff]
    %v3290 = vld [vmem:[#allocation6 + $0x158] sm:$0xff]
    %v3291 = vld [vmem:[#allocation6 + $0x160] sm:$0xff]
    %v3292 = vld [vmem:[#allocation6 + $0x168] sm:$0xff]
    %v3293 = vld [vmem:[#allocation6 + $0x170] sm:$0xff]
    %v3294 = vld [vmem:[#allocation6 + $0x178] sm:$0xff]
    %v3295 = vld [vmem:[#allocation6 + $0x180] sm:$0xff]
    %v3296 = vld [vmem:[#allocation6 + $0x188] sm:$0xff]
    %v3297 = vld [vmem:[#allocation6 + $0x190] sm:$0xff]
    %v3298 = vld [vmem:[#allocation6 + $0x198] sm:$0xff]
    %v3299 = vld [vmem:[#allocation6 + $0x1a0] sm:$0xff]
    %v3300 = vld [vmem:[#allocation6 + $0x1a8] sm:$0xff]
    %v3301 = vld [vmem:[#allocation6 + $0x1b0] sm:$0xff]
    %v3302 = vld [vmem:[#allocation6 + $0x1b8] sm:$0xff]
    %v3303 = vld [vmem:[#allocation6 + $0x1c0] sm:$0xff]
    %v3304 = vld [vmem:[#allocation6 + $0x1c8] sm:$0xff]
    %v3305 = vld [vmem:[#allocation6 + $0x1d0] sm:$0xff]
    %v3306 = vld [vmem:[#allocation6 + $0x1d8] sm:$0xff]
    %v3307 = vld [vmem:[#allocation6 + $0x1e0] sm:$0xff]
    %v3308 = vld [vmem:[#allocation6 + $0x1e8] sm:$0xff]
    %v3309 = vld [vmem:[#allocation6 + $0x1f0] sm:$0xff]
    %v3310 = vld [vmem:[#allocation6 + $0x1f8] sm:$0xff]
    %v3311 = vld [vmem:[#allocation6 + $0x200] sm:$0xff]
    %v3312 = vld [vmem:[#allocation6 + $0x208] sm:$0xff]
    %v3313 = vld [vmem:[#allocation6 + $0x210] sm:$0xff]
    %v3314 = vld [vmem:[#allocation6 + $0x218] sm:$0xff]
    %v3315 = vld [vmem:[#allocation6 + $0x220] sm:$0xff]
    %v3316 = vld [vmem:[#allocation6 + $0x228] sm:$0xff]
    %v3317 = vld [vmem:[#allocation6 + $0x230] sm:$0xff]
    %v3318 = vld [vmem:[#allocation6 + $0x238] sm:$0xff]
    %v3319 = vld [vmem:[#allocation6 + $0x240] sm:$0xff]
    %v3320 = vld [vmem:[#allocation6 + $0x248] sm:$0xff]
    %v3321 = vld [vmem:[#allocation6 + $0x250] sm:$0xff]
    %v3322 = vld [vmem:[#allocation6 + $0x258] sm:$0xff]
    %v3323 = vld [vmem:[#allocation6 + $0x260] sm:$0xff]
    %v3324 = vld [vmem:[#allocation6 + $0x268] sm:$0xff]
    %v3325 = vld [vmem:[#allocation6 + $0x270] sm:$0xff]
    %v3326 = vld [vmem:[#allocation6 + $0x278] sm:$0xff]
    %v3327 = vld [vmem:[#allocation6 + $0x280] sm:$0xff]
    %v3328 = vld [vmem:[#allocation6 + $0x288] sm:$0xff]
    %v3329 = vld [vmem:[#allocation6 + $0x290] sm:$0xff]
    %v3330 = vld [vmem:[#allocation6 + $0x298] sm:$0xff]
    %v3331 = vld [vmem:[#allocation6 + $0x2a0] sm:$0xff]
    %v3332 = vld [vmem:[#allocation6 + $0x2a8] sm:$0xff]
    %v3333 = vld [vmem:[#allocation6 + $0x2b0] sm:$0xff]
    %v3334 = vld [vmem:[#allocation6 + $0x2b8] sm:$0xff]
    %v3335 = vld [vmem:[#allocation6 + $0x2c0] sm:$0xff]
    %v3336 = vld [vmem:[#allocation6 + $0x2c8] sm:$0xff]
    %v3337 = vld [vmem:[#allocation6 + $0x2d0] sm:$0xff]
    %v3338 = vld [vmem:[#allocation6 + $0x2d8] sm:$0xff]
    %v3339 = vld [vmem:[#allocation6 + $0x2e0] sm:$0xff]
    %v3340 = vld [vmem:[#allocation6 + $0x2e8] sm:$0xff]
    %v3341 = vld [vmem:[#allocation6 + $0x2f0] sm:$0xff]
    %v3342 = vld [vmem:[#allocation6 + $0x2f8] sm:$0xff]
    %v3343 = vld [vmem:[#allocation6 + $0x300] sm:$0xff]
    %v3344 = vld [vmem:[#allocation6 + $0x308] sm:$0xff]
    %v3345 = vld [vmem:[#allocation6 + $0x310] sm:$0xff]
    %v3346 = vld [vmem:[#allocation6 + $0x318] sm:$0xff]
    %v3347 = vld [vmem:[#allocation6 + $0x320] sm:$0xff]
    %v3348 = vld [vmem:[#allocation6 + $0x328] sm:$0xff]
    %v3349 = vld [vmem:[#allocation6 + $0x330] sm:$0xff]
    %v3350 = vld [vmem:[#allocation6 + $0x338] sm:$0xff]
    %v3351 = vld [vmem:[#allocation6 + $0x340] sm:$0xff]
    %v3352 = vld [vmem:[#allocation6 + $0x348] sm:$0xff]
    %v3353 = vld [vmem:[#allocation6 + $0x350] sm:$0xff]
    %v3354 = vld [vmem:[#allocation6 + $0x358] sm:$0xff]
    %v3355 = vld [vmem:[#allocation6 + $0x360] sm:$0xff]
    %v3356 = vld [vmem:[#allocation6 + $0x368] sm:$0xff]
    %v3357 = vld [vmem:[#allocation6 + $0x370] sm:$0xff]
    %v3358 = vld [vmem:[#allocation6 + $0x378] sm:$0xff]
    %v3359 = vld [vmem:[#allocation6 + $0x380] sm:$0xff]
    %v3360 = vld [vmem:[#allocation6 + $0x388] sm:$0xff]
    %v3361 = vld [vmem:[#allocation6 + $0x390] sm:$0xff]
    %v3362 = vld [vmem:[#allocation6 + $0x398] sm:$0xff]
    %v3363 = vld [vmem:[#allocation6 + $0x3a0] sm:$0xff]
    %v3364 = vld [vmem:[#allocation6 + $0x3a8] sm:$0xff]
    %v3365 = vld [vmem:[#allocation6 + $0x3b0] sm:$0xff]
    %v3366 = vld [vmem:[#allocation6 + $0x3b8] sm:$0xff]
    %v3367 = vld [vmem:[#allocation6 + $0x3c0] sm:$0xff]
    %v3368 = vld [vmem:[#allocation6 + $0x3c8] sm:$0xff]
    %v3369 = vld [vmem:[#allocation6 + $0x3d0] sm:$0xff]
    %v3370 = vld [vmem:[#allocation6 + $0x3d8] sm:$0xff]
    %v3371 = vld [vmem:[#allocation6 + $0x3e0] sm:$0xff]
    %v3372 = vld [vmem:[#allocation6 + $0x3e8] sm:$0xff]
    %v3373 = vld [vmem:[#allocation6 + $0x3f0] sm:$0xff]
    %v3374 = vld [vmem:[#allocation6 + $0x3f8] sm:$0xff]
    %v3375 = vld [vmem:[#allocation7] sm:$0xff]
    %v3376 = vld [vmem:[#allocation7 + $0x8] sm:$0xff]
    %v3377 = vld [vmem:[#allocation7 + $0x10] sm:$0xff]
    %v3378 = vld [vmem:[#allocation7 + $0x18] sm:$0xff]
    %v3379 = vld [vmem:[#allocation7 + $0x20] sm:$0xff]
    %v3380 = vld [vmem:[#allocation7 + $0x28] sm:$0xff]
    %v3381 = vld [vmem:[#allocation7 + $0x30] sm:$0xff]
    %v3382 = vld [vmem:[#allocation7 + $0x38] sm:$0xff]
    %v3383 = vld [vmem:[#allocation7 + $0x40] sm:$0xff]
    %v3384 = vld [vmem:[#allocation7 + $0x48] sm:$0xff]
    %v3385 = vld [vmem:[#allocation7 + $0x50] sm:$0xff]
    %v3386 = vld [vmem:[#allocation7 + $0x58] sm:$0xff]
    %v3387 = vld [vmem:[#allocation7 + $0x60] sm:$0xff]
    %v3388 = vld [vmem:[#allocation7 + $0x68] sm:$0xff]
    %v3389 = vld [vmem:[#allocation7 + $0x70] sm:$0xff]
    %v3390 = vld [vmem:[#allocation7 + $0x78] sm:$0xff]
    %v3391 = vld [vmem:[#allocation7 + $0x80] sm:$0xff]
    %v3392 = vld [vmem:[#allocation7 + $0x88] sm:$0xff]
    %v3393 = vld [vmem:[#allocation7 + $0x90] sm:$0xff]
    %v3394 = vld [vmem:[#allocation7 + $0x98] sm:$0xff]
    %v3395 = vld [vmem:[#allocation7 + $0xa0] sm:$0xff]
    %v3396 = vld [vmem:[#allocation7 + $0xa8] sm:$0xff]
    %v3397 = vld [vmem:[#allocation7 + $0xb0] sm:$0xff]
    %v3398 = vld [vmem:[#allocation7 + $0xb8] sm:$0xff]
    %v3399 = vld [vmem:[#allocation7 + $0xc0] sm:$0xff]
    %v3400 = vld [vmem:[#allocation7 + $0xc8] sm:$0xff]
    %v3401 = vld [vmem:[#allocation7 + $0xd0] sm:$0xff]
    %v3402 = vld [vmem:[#allocation7 + $0xd8] sm:$0xff]
    %v3403 = vld [vmem:[#allocation7 + $0xe0] sm:$0xff]
    %v3404 = vld [vmem:[#allocation7 + $0xe8] sm:$0xff]
    %v3405 = vld [vmem:[#allocation7 + $0xf0] sm:$0xff]
    %v3406 = vld [vmem:[#allocation7 + $0xf8] sm:$0xff]
    %v3407 = vld [vmem:[#allocation7 + $0x100] sm:$0xff]
    %v3408 = vld [vmem:[#allocation7 + $0x108] sm:$0xff]
    %v3409 = vld [vmem:[#allocation7 + $0x110] sm:$0xff]
    %v3410 = vld [vmem:[#allocation7 + $0x118] sm:$0xff]
    %v3411 = vld [vmem:[#allocation7 + $0x120] sm:$0xff]
    %v3412 = vld [vmem:[#allocation7 + $0x128] sm:$0xff]
    %v3413 = vld [vmem:[#allocation7 + $0x130] sm:$0xff]
    %v3414 = vld [vmem:[#allocation7 + $0x138] sm:$0xff]
    %v3415 = vld [vmem:[#allocation7 + $0x140] sm:$0xff]
    %v3416 = vld [vmem:[#allocation7 + $0x148] sm:$0xff]
    %v3417 = vld [vmem:[#allocation7 + $0x150] sm:$0xff]
    %v3418 = vld [vmem:[#allocation7 + $0x158] sm:$0xff]
    %v3419 = vld [vmem:[#allocation7 + $0x160] sm:$0xff]
    %v3420 = vld [vmem:[#allocation7 + $0x168] sm:$0xff]
    %v3421 = vld [vmem:[#allocation7 + $0x170] sm:$0xff]
    %v3422 = vld [vmem:[#allocation7 + $0x178] sm:$0xff]
    %v3423 = vld [vmem:[#allocation7 + $0x180] sm:$0xff]
    %v3424 = vld [vmem:[#allocation7 + $0x188] sm:$0xff]
    %v3425 = vld [vmem:[#allocation7 + $0x190] sm:$0xff]
    %v3426 = vld [vmem:[#allocation7 + $0x198] sm:$0xff]
    %v3427 = vld [vmem:[#allocation7 + $0x1a0] sm:$0xff]
    %v3428 = vld [vmem:[#allocation7 + $0x1a8] sm:$0xff]
    %v3429 = vld [vmem:[#allocation7 + $0x1b0] sm:$0xff]
    %v3430 = vld [vmem:[#allocation7 + $0x1b8] sm:$0xff]
    %v3431 = vld [vmem:[#allocation7 + $0x1c0] sm:$0xff]
    %v3432 = vld [vmem:[#allocation7 + $0x1c8] sm:$0xff]
    %v3433 = vld [vmem:[#allocation7 + $0x1d0] sm:$0xff]
    %v3434 = vld [vmem:[#allocation7 + $0x1d8] sm:$0xff]
    %v3435 = vld [vmem:[#allocation7 + $0x1e0] sm:$0xff]
    %v3436 = vld [vmem:[#allocation7 + $0x1e8] sm:$0xff]
    %v3437 = vld [vmem:[#allocation7 + $0x1f0] sm:$0xff]
    %v3438 = vld [vmem:[#allocation7 + $0x1f8] sm:$0xff]
    %3439 = vmatprep.subr.mxu0 %v3376
    %3440 = vmatpush1.msra.mxu0 %v3375
    %3441 = vmatprep.subr.mxu0 %v3380
    %3442 = vmatpush1.msra.mxu0 %v3379
    %3443 = vmatprep.subr.mxu0 %v3384
    %3444 = vmatpush1.msra.mxu0 %v3383
    %3445 = vmatprep.subr.mxu0 %v3388
    %3446 = vmatpush1.msra.mxu0 %v3387
    %3447 = vmatprep.subr.mxu0 %v3392
    %3448 = vmatpush1.msra.mxu0 %v3391
    %3449 = vmatprep.subr.mxu0 %v3396
    %3450 = vmatpush1.msra.mxu0 %v3395
    %3451 = vmatprep.subr.mxu0 %v3400
    %3452 = vmatpush1.msra.mxu0 %v3399
    %3453 = vmatprep.subr.mxu0 %v3404
    %3454 = vmatpush1.msra.mxu0 %v3403
    %3455 = vmatprep.subr.mxu0 %v3408
    %3456 = vmatpush1.msra.mxu0 %v3407
    %3457 = vmatprep.subr.mxu0 %v3412
    %3458 = vmatpush1.msra.mxu0 %v3411
    %3459 = vmatprep.subr.mxu0 %v3416
    %3460 = vmatpush1.msra.mxu0 %v3415
    %3461 = vmatprep.subr.mxu0 %v3420
    %3462 = vmatpush1.msra.mxu0 %v3419
    %3463 = vmatprep.subr.mxu0 %v3424
    %3464 = vmatpush1.msra.mxu0 %v3423
    %3465 = vmatprep.subr.mxu0 %v3428
    %3466 = vmatpush1.msra.mxu0 %v3427
    %3467 = vmatprep.subr.mxu0 %v3432
    %3468 = vmatpush1.msra.mxu0 %v3431
    %3469 = vmatprep.subr.mxu0 %v3436
    %3470 = vmatpush1.msra.mxu0 %v3435
    %3471 = vmatprep.subr.mxu0 0.0
    %3472 = vmatpush1.msra.mxu0 0.0
    %3473 = vmatprep.subr.mxu0 0.0
    %3474 = vmatpush1.msra.mxu0 0.0
    %3475 = vmatprep.subr.mxu0 0.0
    %3476 = vmatpush1.msra.mxu0 0.0
    %3477 = vmatprep.subr.mxu0 0.0
    %3478 = vmatpush1.msra.mxu0 0.0
    %3479 = vmatprep.subr.mxu0 0.0
    %3480 = vmatpush1.msra.mxu0 0.0
    %3481 = vmatprep.subr.mxu0 0.0
    %3482 = vmatpush1.msra.mxu0 0.0
    %3483 = vmatprep.subr.mxu0 0.0
    %3484 = vmatpush1.msra.mxu0 0.0
    %3485 = vmatprep.subr.mxu0 0.0
    %3486 = vmatpush1.msra.mxu0 0.0
    %3487 = vmatprep.subr.mxu0 0.0
    %3488 = vmatpush1.msra.mxu0 0.0
    %3489 = vmatprep.subr.mxu0 0.0
    %3490 = vmatpush1.msra.mxu0 0.0
    %3491 = vmatprep.subr.mxu0 0.0
    %3492 = vmatpush1.msra.mxu0 0.0
    %3493 = vmatprep.subr.mxu0 0.0
    %3494 = vmatpush1.msra.mxu0 0.0
    %3495 = vmatprep.subr.mxu0 0.0
    %3496 = vmatpush1.msra.mxu0 0.0
    %3497 = vmatprep.subr.mxu0 0.0
    %3498 = vmatpush1.msra.mxu0 0.0
    %3499 = vmatprep.subr.mxu0 0.0
    %3500 = vmatpush1.msra.mxu0 0.0
    %3501 = vmatprep.subr.mxu0 0.0
    %3502 = vmatpush1.msra.mxu0 0.0
    %3503 = vmatprep.mubr.f32.mxu0 0.0
    %3504 = vmatmul.mubr.f32.gmra.mrb[0].mxu0 0.0
    %v3505 = vpop.f32.mrb[0].mxu0
    %v3506 = vadd.f32 0.0, %v3505
    %v3507 = vpop.f32.mrb[0].mxu0
    %v3508 = vadd.f32 0.0, %v3507
    %3509 = vdwg.mxu0
    %3510 = vmatprep.subr.mxu0 %v3378
    %3511 = vmatpush1.msra.mxu0 %v3377
    %3512 = vmatprep.subr.mxu0 %v3382
    %3513 = vmatpush1.msra.mxu0 %v3381
    %3514 = vmatprep.subr.mxu0 %v3386
    %3515 = vmatpush1.msra.mxu0 %v3385
    %3516 = vmatprep.subr.mxu0 %v3390
    %3517 = vmatpush1.msra.mxu0 %v3389
    %3518 = vmatprep.subr.mxu0 %v3394
    %3519 = vmatpush1.msra.mxu0 %v3393
    %3520 = vmatprep.subr.mxu0 %v3398
    %3521 = vmatpush1.msra.mxu0 %v3397
    %3522 = vmatprep.subr.mxu0 %v3402
    %3523 = vmatpush1.msra.mxu0 %v3401
    %3524 = vmatprep.subr.mxu0 %v3406
    %3525 = vmatpush1.msra.mxu0 %v3405
    %3526 = vmatprep.subr.mxu0 %v3410
    %3527 = vmatpush1.msra.mxu0 %v3409
    %3528 = vmatprep.subr.mxu0 %v3414
    %3529 = vmatpush1.msra.mxu0 %v3413
    %3530 = vmatprep.subr.mxu0 %v3418
    %3531 = vmatpush1.msra.mxu0 %v3417
    %3532 = vmatprep.subr.mxu0 %v3422
    %3533 = vmatpush1.msra.mxu0 %v3421
    %3534 = vmatprep.subr.mxu0 %v3426
    %3535 = vmatpush1.msra.mxu0 %v3425
    %3536 = vmatprep.subr.mxu0 %v3430
    %3537 = vmatpush1.msra.mxu0 %v3429
    %3538 = vmatprep.subr.mxu0 %v3434
    %3539 = vmatpush1.msra.mxu0 %v3433
    %3540 = vmatprep.subr.mxu0 %v3438
    %3541 = vmatpush1.msra.mxu0 %v3437
    %3542 = vmatprep.subr.mxu0 0.0
    %3543 = vmatpush1.msra.mxu0 0.0
    %3544 = vmatprep.subr.mxu0 0.0
    %3545 = vmatpush1.msra.mxu0 0.0
    %3546 = vmatprep.subr.mxu0 0.0
    %3547 = vmatpush1.msra.mxu0 0.0
    %3548 = vmatprep.subr.mxu0 0.0
    %3549 = vmatpush1.msra.mxu0 0.0
    %3550 = vmatprep.subr.mxu0 0.0
    %3551 = vmatpush1.msra.mxu0 0.0
    %3552 = vmatprep.subr.mxu0 0.0
    %3553 = vmatpush1.msra.mxu0 0.0
    %3554 = vmatprep.subr.mxu0 0.0
    %3555 = vmatpush1.msra.mxu0 0.0
    %3556 = vmatprep.subr.mxu0 0.0
    %3557 = vmatpush1.msra.mxu0 0.0
    %3558 = vmatprep.subr.mxu0 0.0
    %3559 = vmatpush1.msra.mxu0 0.0
    %3560 = vmatprep.subr.mxu0 0.0
    %3561 = vmatpush1.msra.mxu0 0.0
    %3562 = vmatprep.subr.mxu0 0.0
    %3563 = vmatpush1.msra.mxu0 0.0
    %3564 = vmatprep.subr.mxu0 0.0
    %3565 = vmatpush1.msra.mxu0 0.0
    %3566 = vmatprep.subr.mxu0 0.0
    %3567 = vmatpush1.msra.mxu0 0.0
    %3568 = vmatprep.subr.mxu0 0.0
    %3569 = vmatpush1.msra.mxu0 0.0
    %3570 = vmatprep.subr.mxu0 0.0
    %3571 = vmatpush1.msra.mxu0 0.0
    %3572 = vmatprep.subr.mxu0 0.0
    %3573 = vmatpush1.msra.mxu0 0.0
    %3574 = vmatprep.mubr.f32.mxu0 0.0
    %3575 = vmatmul.mubr.f32.gmra.mrb[0].mxu0 0.0
    %v3576 = vpop.f32.mrb[0].mxu0
    %v3577 = vadd.f32 0.0, %v3576
    %v3578 = vpop.f32.mrb[0].mxu0
    %v3579 = vadd.f32 0.0, %v3578
    %3580 = vdwg.mxu0
    %3581 = vmatprep.subr.mxu0 %v3248
    %3582 = vmatpush1.msra.mxu0 %v3247
    %3583 = vmatprep.subr.mxu0 %v3252
    %3584 = vmatpush1.msra.mxu0 %v3251
    %3585 = vmatprep.subr.mxu0 %v3256
    %3586 = vmatpush1.msra.mxu0 %v3255
    %3587 = vmatprep.subr.mxu0 %v3260
    %3588 = vmatpush1.msra.mxu0 %v3259
    %3589 = vmatprep.subr.mxu0 %v3264
    %3590 = vmatpush1.msra.mxu0 %v3263
    %3591 = vmatprep.subr.mxu0 %v3268
    %3592 = vmatpush1.msra.mxu0 %v3267
    %3593 = vmatprep.subr.mxu0 %v3272
    %3594 = vmatpush1.msra.mxu0 %v3271
    %3595 = vmatprep.subr.mxu0 %v3276
    %3596 = vmatpush1.msra.mxu0 %v3275
    %3597 = vmatprep.subr.mxu0 %v3280
    %3598 = vmatpush1.msra.mxu0 %v3279
    %3599 = vmatprep.subr.mxu0 %v3284
    %3600 = vmatpush1.msra.mxu0 %v3283
    %3601 = vmatprep.subr.mxu0 %v3288
    %3602 = vmatpush1.msra.mxu0 %v3287
    %3603 = vmatprep.subr.mxu0 %v3292
    %3604 = vmatpush1.msra.mxu0 %v3291
    %3605 = vmatprep.subr.mxu0 %v3296
    %3606 = vmatpush1.msra.mxu0 %v3295
    %3607 = vmatprep.subr.mxu0 %v3300
    %3608 = vmatpush1.msra.mxu0 %v3299
    %3609 = vmatprep.subr.mxu0 %v3304
    %3610 = vmatpush1.msra.mxu0 %v3303
    %3611 = vmatprep.subr.mxu0 %v3308
    %3612 = vmatpush1.msra.mxu0 %v3307
    %3613 = vmatprep.subr.mxu0 %v3312
    %3614 = vmatpush1.msra.mxu0 %v3311
    %3615 = vmatprep.subr.mxu0 %v3316
    %3616 = vmatpush1.msra.mxu0 %v3315
    %3617 = vmatprep.subr.mxu0 %v3320
    %3618 = vmatpush1.msra.mxu0 %v3319
    %3619 = vmatprep.subr.mxu0 %v3324
    %3620 = vmatpush1.msra.mxu0 %v3323
    %3621 = vmatprep.subr.mxu0 %v3328
    %3622 = vmatpush1.msra.mxu0 %v3327
    %3623 = vmatprep.subr.mxu0 %v3332
    %3624 = vmatpush1.msra.mxu0 %v3331
    %3625 = vmatprep.subr.mxu0 %v3336
    %3626 = vmatpush1.msra.mxu0 %v3335
    %3627 = vmatprep.subr.mxu0 %v3340
    %3628 = vmatpush1.msra.mxu0 %v3339
    %3629 = vmatprep.subr.mxu0 %v3344
    %3630 = vmatpush1.msra.mxu0 %v3343
    %3631 = vmatprep.subr.mxu0 %v3348
    %3632 = vmatpush1.msra.mxu0 %v3347
    %3633 = vmatprep.subr.mxu0 %v3352
    %3634 = vmatpush1.msra.mxu0 %v3351
    %3635 = vmatprep.subr.mxu0 %v3356
    %3636 = vmatpush1.msra.mxu0 %v3355
    %3637 = vmatprep.subr.mxu0 %v3360
    %3638 = vmatpush1.msra.mxu0 %v3359
    %3639 = vmatprep.subr.mxu0 %v3364
    %3640 = vmatpush1.msra.mxu0 %v3363
    %3641 = vmatprep.subr.mxu0 %v3368
    %3642 = vmatpush1.msra.mxu0 %v3367
    %3643 = vmatprep.subr.mxu0 %v3372
    %3644 = vmatpush1.msra.mxu0 %v3371
    %3645 = vmatprep.mubr.f32.mxu0 %v3244
    %3646 = vmatmul.mubr.f32.gmra.mrb[0].mxu0 %v686
    %v3647 = vpop.f32.mrb[0].mxu0
    %v3648 = vadd.f32 %v3506, %v3647
    %v3649 = vpop.f32.mrb[0].mxu0
    %v3650 = vadd.f32 %v3508, %v3649
    %3651 = vdwg.mxu0
    %3652 = vmatprep.subr.mxu0 %v3250
    %3653 = vmatpush1.msra.mxu0 %v3249
    %3654 = vmatprep.subr.mxu0 %v3254
    %3655 = vmatpush1.msra.mxu0 %v3253
    %3656 = vmatprep.subr.mxu0 %v3258
    %3657 = vmatpush1.msra.mxu0 %v3257
    %3658 = vmatprep.subr.mxu0 %v3262
    %3659 = vmatpush1.msra.mxu0 %v3261
    %3660 = vmatprep.subr.mxu0 %v3266
    %3661 = vmatpush1.msra.mxu0 %v3265
    %3662 = vmatprep.subr.mxu0 %v3270
    %3663 = vmatpush1.msra.mxu0 %v3269
    %3664 = vmatprep.subr.mxu0 %v3274
    %3665 = vmatpush1.msra.mxu0 %v3273
    %3666 = vmatprep.subr.mxu0 %v3278
    %3667 = vmatpush1.msra.mxu0 %v3277
    %3668 = vmatprep.subr.mxu0 %v3282
    %3669 = vmatpush1.msra.mxu0 %v3281
    %3670 = vmatprep.subr.mxu0 %v3286
    %3671 = vmatpush1.msra.mxu0 %v3285
    %3672 = vmatprep.subr.mxu0 %v3290
    %3673 = vmatpush1.msra.mxu0 %v3289
    %3674 = vmatprep.subr.mxu0 %v3294
    %3675 = vmatpush1.msra.mxu0 %v3293
    %3676 = vmatprep.subr.mxu0 %v3298
    %3677 = vmatpush1.msra.mxu0 %v3297
    %3678 = vmatprep.subr.mxu0 %v3302
    %3679 = vmatpush1.msra.mxu0 %v3301
    %3680 = vmatprep.subr.mxu0 %v3306
    %3681 = vmatpush1.msra.mxu0 %v3305
    %3682 = vmatprep.subr.mxu0 %v3310
    %3683 = vmatpush1.msra.mxu0 %v3309
    %3684 = vmatprep.subr.mxu0 %v3314
    %3685 = vmatpush1.msra.mxu0 %v3313
    %3686 = vmatprep.subr.mxu0 %v3318
    %3687 = vmatpush1.msra.mxu0 %v3317
    %3688 = vmatprep.subr.mxu0 %v3322
    %3689 = vmatpush1.msra.mxu0 %v3321
    %3690 = vmatprep.subr.mxu0 %v3326
    %3691 = vmatpush1.msra.mxu0 %v3325
    %3692 = vmatprep.subr.mxu0 %v3330
    %3693 = vmatpush1.msra.mxu0 %v3329
    %3694 = vmatprep.subr.mxu0 %v3334
    %3695 = vmatpush1.msra.mxu0 %v3333
    %3696 = vmatprep.subr.mxu0 %v3338
    %3697 = vmatpush1.msra.mxu0 %v3337
    %3698 = vmatprep.subr.mxu0 %v3342
    %3699 = vmatpush1.msra.mxu0 %v3341
    %3700 = vmatprep.subr.mxu0 %v3346
    %3701 = vmatpush1.msra.mxu0 %v3345
    %3702 = vmatprep.subr.mxu0 %v3350
    %3703 = vmatpush1.msra.mxu0 %v3349
    %3704 = vmatprep.subr.mxu0 %v3354
    %3705 = vmatpush1.msra.mxu0 %v3353
    %3706 = vmatprep.subr.mxu0 %v3358
    %3707 = vmatpush1.msra.mxu0 %v3357
    %3708 = vmatprep.subr.mxu0 %v3362
    %3709 = vmatpush1.msra.mxu0 %v3361
    %3710 = vmatprep.subr.mxu0 %v3366
    %3711 = vmatpush1.msra.mxu0 %v3365
    %3712 = vmatprep.subr.mxu0 %v3370
    %3713 = vmatpush1.msra.mxu0 %v3369
    %3714 = vmatprep.subr.mxu0 %v3374
    %3715 = vmatpush1.msra.mxu0 %v3373
    %3716 = vmatprep.mubr.f32.mxu0 %v3244
    %3717 = vmatmul.mubr.f32.gmra.mrb[0].mxu0 %v686
    %v3718 = vpop.f32.mrb[0].mxu0
    %v3719 = vadd.f32 %v3577, %v3718
    %v3720 = vpop.f32.mrb[0].mxu0
    %v3721 = vadd.f32 %v3579, %v3720
    %3722 = vdwg.mxu0
    %v3724 = vlaneseq
    %v3725 = vshrl.u32 %v3724, 7
    %v3726 = vsub.s32 0, %v3725
    %v3727 = vrot.slane %v3245, %v3726
    %v3728 = vlaneseq
    %v3729 = vshrl.u32 %v3728, 7
    %v3730 = vsub.s32 1, %v3729
    %v3731 = vrot.slane %v3245, %v3730
    %v3732 = vlaneseq
    %v3733 = vshrl.u32 %v3732, 7
    %v3734 = vsub.s32 2, %v3733
    %v3735 = vrot.slane %v3245, %v3734
    %v3736 = vlaneseq
    %v3737 = vshrl.u32 %v3736, 7
    %v3738 = vsub.s32 3, %v3737
    %v3739 = vrot.slane %v3245, %v3738
    %v3744 = vadd.f32 %v3648, %v3727
    %v3745 = vadd.f32 %v3650, %v3731
    %v3746 = vadd.f32 %v3719, %v3735
    %v3747 = vadd.f32 %v3721, %v3739
    %v3748 = vld [vmem:[#allocation9] sm:$0xff]
    %v3749 = vld [vmem:[#allocation9 + $0x8] sm:$0xff]
    %v3750 = vld [vmem:[#allocation9 + $0x10] sm:$0xff]
    %v3751 = vld [vmem:[#allocation9 + $0x18] sm:$0xff]
    %v3752 = vld [vmem:[#allocation9 + $0x20] sm:$0xff]
    %v3753 = vld [vmem:[#allocation9 + $0x28] sm:$0xff]
    %v3754 = vld [vmem:[#allocation9 + $0x30] sm:$0xff]
    %v3755 = vld [vmem:[#allocation9 + $0x38] sm:$0xff]
    %v3756 = vld [vmem:[#allocation9 + $0x40] sm:$0xff]
    %v3757 = vld [vmem:[#allocation9 + $0x48] sm:$0xff]
    %v3758 = vld [vmem:[#allocation9 + $0x50] sm:$0xff]
    %v3759 = vld [vmem:[#allocation9 + $0x58] sm:$0xff]
    %v3760 = vld [vmem:[#allocation9 + $0x60] sm:$0xff]
    %v3761 = vld [vmem:[#allocation9 + $0x68] sm:$0xff]
    %v3762 = vld [vmem:[#allocation9 + $0x70] sm:$0xff]
    %v3763 = vld [vmem:[#allocation9 + $0x78] sm:$0xff]
    %v3764 = vld [vmem:[#allocation9 + $0x80] sm:$0xff]
    %v3765 = vld [vmem:[#allocation9 + $0x88] sm:$0xff]
    %v3766 = vld [vmem:[#allocation9 + $0x90] sm:$0xff]
    %v3767 = vld [vmem:[#allocation9 + $0x98] sm:$0xff]
    %v3768 = vld [vmem:[#allocation9 + $0xa0] sm:$0xff]
    %v3769 = vld [vmem:[#allocation9 + $0xa8] sm:$0xff]
    %v3770 = vld [vmem:[#allocation9 + $0xb0] sm:$0xff]
    %v3771 = vld [vmem:[#allocation9 + $0xb8] sm:$0xff]
    %v3772 = vld [vmem:[#allocation9 + $0xc0] sm:$0xff]
    %v3773 = vld [vmem:[#allocation9 + $0xc8] sm:$0xff]
    %v3774 = vld [vmem:[#allocation9 + $0xd0] sm:$0xff]
    %v3775 = vld [vmem:[#allocation9 + $0xd8] sm:$0xff]
    %v3776 = vld [vmem:[#allocation9 + $0xe0] sm:$0xff]
    %v3777 = vld [vmem:[#allocation9 + $0xe8] sm:$0xff]
    %v3778 = vld [vmem:[#allocation9 + $0xf0] sm:$0xff]
    %v3779 = vld [vmem:[#allocation9 + $0xf8] sm:$0xff]
    %v3780 = vld [vmem:[#allocation9 + $0x100] sm:$0xff]
    %v3781 = vld [vmem:[#allocation9 + $0x108] sm:$0xff]
    %v3782 = vld [vmem:[#allocation9 + $0x110] sm:$0xff]
    %v3783 = vld [vmem:[#allocation9 + $0x118] sm:$0xff]
    %v3784 = vld [vmem:[#allocation9 + $0x120] sm:$0xff]
    %v3785 = vld [vmem:[#allocation9 + $0x128] sm:$0xff]
    %v3786 = vld [vmem:[#allocation9 + $0x130] sm:$0xff]
    %v3787 = vld [vmem:[#allocation9 + $0x138] sm:$0xff]
    %v3788 = vld [vmem:[#allocation9 + $0x140] sm:$0xff]
    %v3789 = vld [vmem:[#allocation9 + $0x148] sm:$0xff]
    %v3790 = vld [vmem:[#allocation9 + $0x150] sm:$0xff]
    %v3791 = vld [vmem:[#allocation9 + $0x158] sm:$0xff]
    %v3792 = vld [vmem:[#allocation9 + $0x160] sm:$0xff]
    %v3793 = vld [vmem:[#allocation9 + $0x168] sm:$0xff]
    %v3794 = vld [vmem:[#allocation9 + $0x170] sm:$0xff]
    %v3795 = vld [vmem:[#allocation9 + $0x178] sm:$0xff]
    %v3796 = vld [vmem:[#allocation9 + $0x180] sm:$0xff]
    %v3797 = vld [vmem:[#allocation9 + $0x188] sm:$0xff]
    %v3798 = vld [vmem:[#allocation9 + $0x190] sm:$0xff]
    %v3799 = vld [vmem:[#allocation9 + $0x198] sm:$0xff]
    %v3800 = vld [vmem:[#allocation9 + $0x1a0] sm:$0xff]
    %v3801 = vld [vmem:[#allocation9 + $0x1a8] sm:$0xff]
    %v3802 = vld [vmem:[#allocation9 + $0x1b0] sm:$0xff]
    %v3803 = vld [vmem:[#allocation9 + $0x1b8] sm:$0xff]
    %v3804 = vld [vmem:[#allocation9 + $0x1c0] sm:$0xff]
    %v3805 = vld [vmem:[#allocation9 + $0x1c8] sm:$0xff]
    %v3806 = vld [vmem:[#allocation9 + $0x1d0] sm:$0xff]
    %v3807 = vld [vmem:[#allocation9 + $0x1d8] sm:$0xff]
    %v3808 = vld [vmem:[#allocation9 + $0x1e0] sm:$0xff]
    %v3809 = vld [vmem:[#allocation9 + $0x1e8] sm:$0xff]
    %v3810 = vld [vmem:[#allocation9 + $0x1f0] sm:$0xff]
    %v3811 = vld [vmem:[#allocation9 + $0x1f8] sm:$0xff]
    %v3812 = vld [vmem:[#allocation9 + $0x200] sm:$0xff]
    %v3813 = vld [vmem:[#allocation9 + $0x208] sm:$0xff]
    %v3814 = vld [vmem:[#allocation9 + $0x210] sm:$0xff]
    %v3815 = vld [vmem:[#allocation9 + $0x218] sm:$0xff]
    %v3816 = vld [vmem:[#allocation9 + $0x220] sm:$0xff]
    %v3817 = vld [vmem:[#allocation9 + $0x228] sm:$0xff]
    %v3818 = vld [vmem:[#allocation9 + $0x230] sm:$0xff]
    %v3819 = vld [vmem:[#allocation9 + $0x238] sm:$0xff]
    %v3820 = vld [vmem:[#allocation9 + $0x240] sm:$0xff]
    %v3821 = vld [vmem:[#allocation9 + $0x248] sm:$0xff]
    %v3822 = vld [vmem:[#allocation9 + $0x250] sm:$0xff]
    %v3823 = vld [vmem:[#allocation9 + $0x258] sm:$0xff]
    %v3824 = vld [vmem:[#allocation9 + $0x260] sm:$0xff]
    %v3825 = vld [vmem:[#allocation9 + $0x268] sm:$0xff]
    %v3826 = vld [vmem:[#allocation9 + $0x270] sm:$0xff]
    %v3827 = vld [vmem:[#allocation9 + $0x278] sm:$0xff]
    %v3828 = vld [vmem:[#allocation9 + $0x280] sm:$0xff]
    %v3829 = vld [vmem:[#allocation9 + $0x288] sm:$0xff]
    %v3830 = vld [vmem:[#allocation9 + $0x290] sm:$0xff]
    %v3831 = vld [vmem:[#allocation9 + $0x298] sm:$0xff]
    %v3832 = vld [vmem:[#allocation9 + $0x2a0] sm:$0xff]
    %v3833 = vld [vmem:[#allocation9 + $0x2a8] sm:$0xff]
    %v3834 = vld [vmem:[#allocation9 + $0x2b0] sm:$0xff]
    %v3835 = vld [vmem:[#allocation9 + $0x2b8] sm:$0xff]
    %v3836 = vld [vmem:[#allocation9 + $0x2c0] sm:$0xff]
    %v3837 = vld [vmem:[#allocation9 + $0x2c8] sm:$0xff]
    %v3838 = vld [vmem:[#allocation9 + $0x2d0] sm:$0xff]
    %v3839 = vld [vmem:[#allocation9 + $0x2d8] sm:$0xff]
    %v3840 = vld [vmem:[#allocation9 + $0x2e0] sm:$0xff]
    %v3841 = vld [vmem:[#allocation9 + $0x2e8] sm:$0xff]
    %v3842 = vld [vmem:[#allocation9 + $0x2f0] sm:$0xff]
    %v3843 = vld [vmem:[#allocation9 + $0x2f8] sm:$0xff]
    %v3844 = vld [vmem:[#allocation9 + $0x300] sm:$0xff]
    %v3845 = vld [vmem:[#allocation9 + $0x308] sm:$0xff]
    %v3846 = vld [vmem:[#allocation9 + $0x310] sm:$0xff]
    %v3847 = vld [vmem:[#allocation9 + $0x318] sm:$0xff]
    %v3848 = vld [vmem:[#allocation9 + $0x320] sm:$0xff]
    %v3849 = vld [vmem:[#allocation9 + $0x328] sm:$0xff]
    %v3850 = vld [vmem:[#allocation9 + $0x330] sm:$0xff]
    %v3851 = vld [vmem:[#allocation9 + $0x338] sm:$0xff]
    %v3852 = vld [vmem:[#allocation9 + $0x340] sm:$0xff]
    %v3853 = vld [vmem:[#allocation9 + $0x348] sm:$0xff]
    %v3854 = vld [vmem:[#allocation9 + $0x350] sm:$0xff]
    %v3855 = vld [vmem:[#allocation9 + $0x358] sm:$0xff]
    %v3856 = vld [vmem:[#allocation9 + $0x360] sm:$0xff]
    %v3857 = vld [vmem:[#allocation9 + $0x368] sm:$0xff]
    %v3858 = vld [vmem:[#allocation9 + $0x370] sm:$0xff]
    %v3859 = vld [vmem:[#allocation9 + $0x378] sm:$0xff]
    %v3860 = vld [vmem:[#allocation9 + $0x380] sm:$0xff]
    %v3861 = vld [vmem:[#allocation9 + $0x388] sm:$0xff]
    %v3862 = vld [vmem:[#allocation9 + $0x390] sm:$0xff]
    %v3863 = vld [vmem:[#allocation9 + $0x398] sm:$0xff]
    %v3864 = vld [vmem:[#allocation9 + $0x3a0] sm:$0xff]
    %v3865 = vld [vmem:[#allocation9 + $0x3a8] sm:$0xff]
    %v3866 = vld [vmem:[#allocation9 + $0x3b0] sm:$0xff]
    %v3867 = vld [vmem:[#allocation9 + $0x3b8] sm:$0xff]
    %v3868 = vld [vmem:[#allocation9 + $0x3c0] sm:$0xff]
    %v3869 = vld [vmem:[#allocation9 + $0x3c8] sm:$0xff]
    %v3870 = vld [vmem:[#allocation9 + $0x3d0] sm:$0xff]
    %v3871 = vld [vmem:[#allocation9 + $0x3d8] sm:$0xff]
    %v3872 = vld [vmem:[#allocation9 + $0x3e0] sm:$0xff]
    %v3873 = vld [vmem:[#allocation9 + $0x3e8] sm:$0xff]
    %v3874 = vld [vmem:[#allocation9 + $0x3f0] sm:$0xff]
    %v3875 = vld [vmem:[#allocation9 + $0x3f8] sm:$0xff]
    %v3876 = vld [vmem:[#allocation10] sm:$0xff]
    %v3877 = vld [vmem:[#allocation10 + $0x8] sm:$0xff]
    %v3878 = vld [vmem:[#allocation10 + $0x10] sm:$0xff]
    %v3879 = vld [vmem:[#allocation10 + $0x18] sm:$0xff]
    %v3880 = vld [vmem:[#allocation10 + $0x20] sm:$0xff]
    %v3881 = vld [vmem:[#allocation10 + $0x28] sm:$0xff]
    %v3882 = vld [vmem:[#allocation10 + $0x30] sm:$0xff]
    %v3883 = vld [vmem:[#allocation10 + $0x38] sm:$0xff]
    %v3884 = vld [vmem:[#allocation10 + $0x40] sm:$0xff]
    %v3885 = vld [vmem:[#allocation10 + $0x48] sm:$0xff]
    %v3886 = vld [vmem:[#allocation10 + $0x50] sm:$0xff]
    %v3887 = vld [vmem:[#allocation10 + $0x58] sm:$0xff]
    %v3888 = vld [vmem:[#allocation10 + $0x60] sm:$0xff]
    %v3889 = vld [vmem:[#allocation10 + $0x68] sm:$0xff]
    %v3890 = vld [vmem:[#allocation10 + $0x70] sm:$0xff]
    %v3891 = vld [vmem:[#allocation10 + $0x78] sm:$0xff]
    %v3892 = vld [vmem:[#allocation10 + $0x80] sm:$0xff]
    %v3893 = vld [vmem:[#allocation10 + $0x88] sm:$0xff]
    %v3894 = vld [vmem:[#allocation10 + $0x90] sm:$0xff]
    %v3895 = vld [vmem:[#allocation10 + $0x98] sm:$0xff]
    %v3896 = vld [vmem:[#allocation10 + $0xa0] sm:$0xff]
    %v3897 = vld [vmem:[#allocation10 + $0xa8] sm:$0xff]
    %v3898 = vld [vmem:[#allocation10 + $0xb0] sm:$0xff]
    %v3899 = vld [vmem:[#allocation10 + $0xb8] sm:$0xff]
    %v3900 = vld [vmem:[#allocation10 + $0xc0] sm:$0xff]
    %v3901 = vld [vmem:[#allocation10 + $0xc8] sm:$0xff]
    %v3902 = vld [vmem:[#allocation10 + $0xd0] sm:$0xff]
    %v3903 = vld [vmem:[#allocation10 + $0xd8] sm:$0xff]
    %v3904 = vld [vmem:[#allocation10 + $0xe0] sm:$0xff]
    %v3905 = vld [vmem:[#allocation10 + $0xe8] sm:$0xff]
    %v3906 = vld [vmem:[#allocation10 + $0xf0] sm:$0xff]
    %v3907 = vld [vmem:[#allocation10 + $0xf8] sm:$0xff]
    %v3908 = vld [vmem:[#allocation10 + $0x100] sm:$0xff]
    %v3909 = vld [vmem:[#allocation10 + $0x108] sm:$0xff]
    %v3910 = vld [vmem:[#allocation10 + $0x110] sm:$0xff]
    %v3911 = vld [vmem:[#allocation10 + $0x118] sm:$0xff]
    %v3912 = vld [vmem:[#allocation10 + $0x120] sm:$0xff]
    %v3913 = vld [vmem:[#allocation10 + $0x128] sm:$0xff]
    %v3914 = vld [vmem:[#allocation10 + $0x130] sm:$0xff]
    %v3915 = vld [vmem:[#allocation10 + $0x138] sm:$0xff]
    %v3916 = vld [vmem:[#allocation10 + $0x140] sm:$0xff]
    %v3917 = vld [vmem:[#allocation10 + $0x148] sm:$0xff]
    %v3918 = vld [vmem:[#allocation10 + $0x150] sm:$0xff]
    %v3919 = vld [vmem:[#allocation10 + $0x158] sm:$0xff]
    %v3920 = vld [vmem:[#allocation10 + $0x160] sm:$0xff]
    %v3921 = vld [vmem:[#allocation10 + $0x168] sm:$0xff]
    %v3922 = vld [vmem:[#allocation10 + $0x170] sm:$0xff]
    %v3923 = vld [vmem:[#allocation10 + $0x178] sm:$0xff]
    %v3924 = vld [vmem:[#allocation10 + $0x180] sm:$0xff]
    %v3925 = vld [vmem:[#allocation10 + $0x188] sm:$0xff]
    %v3926 = vld [vmem:[#allocation10 + $0x190] sm:$0xff]
    %v3927 = vld [vmem:[#allocation10 + $0x198] sm:$0xff]
    %v3928 = vld [vmem:[#allocation10 + $0x1a0] sm:$0xff]
    %v3929 = vld [vmem:[#allocation10 + $0x1a8] sm:$0xff]
    %v3930 = vld [vmem:[#allocation10 + $0x1b0] sm:$0xff]
    %v3931 = vld [vmem:[#allocation10 + $0x1b8] sm:$0xff]
    %v3932 = vld [vmem:[#allocation10 + $0x1c0] sm:$0xff]
    %v3933 = vld [vmem:[#allocation10 + $0x1c8] sm:$0xff]
    %v3934 = vld [vmem:[#allocation10 + $0x1d0] sm:$0xff]
    %v3935 = vld [vmem:[#allocation10 + $0x1d8] sm:$0xff]
    %v3936 = vld [vmem:[#allocation10 + $0x1e0] sm:$0xff]
    %v3937 = vld [vmem:[#allocation10 + $0x1e8] sm:$0xff]
    %v3938 = vld [vmem:[#allocation10 + $0x1f0] sm:$0xff]
    %v3939 = vld [vmem:[#allocation10 + $0x1f8] sm:$0xff]
    %3940 = vmatprep.subr.mxu0 %v3877
    %3941 = vmatpush1.msra.mxu0 %v3876
    %3942 = vmatprep.subr.mxu0 %v3881
    %3943 = vmatpush1.msra.mxu0 %v3880
    %3944 = vmatprep.subr.mxu0 %v3885
    %3945 = vmatpush1.msra.mxu0 %v3884
    %3946 = vmatprep.subr.mxu0 %v3889
    %3947 = vmatpush1.msra.mxu0 %v3888
    %3948 = vmatprep.subr.mxu0 %v3893
    %3949 = vmatpush1.msra.mxu0 %v3892
    %3950 = vmatprep.subr.mxu0 %v3897
    %3951 = vmatpush1.msra.mxu0 %v3896
    %3952 = vmatprep.subr.mxu0 %v3901
    %3953 = vmatpush1.msra.mxu0 %v3900
    %3954 = vmatprep.subr.mxu0 %v3905
    %3955 = vmatpush1.msra.mxu0 %v3904
    %3956 = vmatprep.subr.mxu0 %v3909
    %3957 = vmatpush1.msra.mxu0 %v3908
    %3958 = vmatprep.subr.mxu0 %v3913
    %3959 = vmatpush1.msra.mxu0 %v3912
    %3960 = vmatprep.subr.mxu0 %v3917
    %3961 = vmatpush1.msra.mxu0 %v3916
    %3962 = vmatprep.subr.mxu0 %v3921
    %3963 = vmatpush1.msra.mxu0 %v3920
    %3964 = vmatprep.subr.mxu0 %v3925
    %3965 = vmatpush1.msra.mxu0 %v3924
    %3966 = vmatprep.subr.mxu0 %v3929
    %3967 = vmatpush1.msra.mxu0 %v3928
    %3968 = vmatprep.subr.mxu0 %v3933
    %3969 = vmatpush1.msra.mxu0 %v3932
    %3970 = vmatprep.subr.mxu0 %v3937
    %3971 = vmatpush1.msra.mxu0 %v3936
    %3972 = vmatprep.subr.mxu0 0.0
    %3973 = vmatpush1.msra.mxu0 0.0
    %3974 = vmatprep.subr.mxu0 0.0
    %3975 = vmatpush1.msra.mxu0 0.0
    %3976 = vmatprep.subr.mxu0 0.0
    %3977 = vmatpush1.msra.mxu0 0.0
    %3978 = vmatprep.subr.mxu0 0.0
    %3979 = vmatpush1.msra.mxu0 0.0
    %3980 = vmatprep.subr.mxu0 0.0
    %3981 = vmatpush1.msra.mxu0 0.0
    %3982 = vmatprep.subr.mxu0 0.0
    %3983 = vmatpush1.msra.mxu0 0.0
    %3984 = vmatprep.subr.mxu0 0.0
    %3985 = vmatpush1.msra.mxu0 0.0
    %3986 = vmatprep.subr.mxu0 0.0
    %3987 = vmatpush1.msra.mxu0 0.0
    %3988 = vmatprep.subr.mxu0 0.0
    %3989 = vmatpush1.msra.mxu0 0.0
    %3990 = vmatprep.subr.mxu0 0.0
    %3991 = vmatpush1.msra.mxu0 0.0
    %3992 = vmatprep.subr.mxu0 0.0
    %3993 = vmatpush1.msra.mxu0 0.0
    %3994 = vmatprep.subr.mxu0 0.0
    %3995 = vmatpush1.msra.mxu0 0.0
    %3996 = vmatprep.subr.mxu0 0.0
    %3997 = vmatpush1.msra.mxu0 0.0
    %3998 = vmatprep.subr.mxu0 0.0
    %3999 = vmatpush1.msra.mxu0 0.0
    %4000 = vmatprep.subr.mxu0 0.0
    %4001 = vmatpush1.msra.mxu0 0.0
    %4002 = vmatprep.subr.mxu0 0.0
    %4003 = vmatpush1.msra.mxu0 0.0
    %4004 = vmatprep.mubr.f32.mxu0 0.0
    %4005 = vmatmul.mubr.f32.gmra.mrb[0].mxu0 0.0
    %v4006 = vpop.f32.mrb[0].mxu0
    %v4007 = vadd.f32 0.0, %v4006
    %v4008 = vpop.f32.mrb[0].mxu0
    %v4009 = vadd.f32 0.0, %v4008
    %4010 = vdwg.mxu0
    %4011 = vmatprep.subr.mxu0 %v3879
    %4012 = vmatpush1.msra.mxu0 %v3878
    %4013 = vmatprep.subr.mxu0 %v3883
    %4014 = vmatpush1.msra.mxu0 %v3882
    %4015 = vmatprep.subr.mxu0 %v3887
    %4016 = vmatpush1.msra.mxu0 %v3886
    %4017 = vmatprep.subr.mxu0 %v3891
    %4018 = vmatpush1.msra.mxu0 %v3890
    %4019 = vmatprep.subr.mxu0 %v3895
    %4020 = vmatpush1.msra.mxu0 %v3894
    %4021 = vmatprep.subr.mxu0 %v3899
    %4022 = vmatpush1.msra.mxu0 %v3898
    %4023 = vmatprep.subr.mxu0 %v3903
    %4024 = vmatpush1.msra.mxu0 %v3902
    %4025 = vmatprep.subr.mxu0 %v3907
    %4026 = vmatpush1.msra.mxu0 %v3906
    %4027 = vmatprep.subr.mxu0 %v3911
    %4028 = vmatpush1.msra.mxu0 %v3910
    %4029 = vmatprep.subr.mxu0 %v3915
    %4030 = vmatpush1.msra.mxu0 %v3914
    %4031 = vmatprep.subr.mxu0 %v3919
    %4032 = vmatpush1.msra.mxu0 %v3918
    %4033 = vmatprep.subr.mxu0 %v3923
    %4034 = vmatpush1.msra.mxu0 %v3922
    %4035 = vmatprep.subr.mxu0 %v3927
    %4036 = vmatpush1.msra.mxu0 %v3926
    %4037 = vmatprep.subr.mxu0 %v3931
    %4038 = vmatpush1.msra.mxu0 %v3930
    %4039 = vmatprep.subr.mxu0 %v3935
    %4040 = vmatpush1.msra.mxu0 %v3934
    %4041 = vmatprep.subr.mxu0 %v3939
    %4042 = vmatpush1.msra.mxu0 %v3938
    %4043 = vmatprep.subr.mxu0 0.0
    %4044 = vmatpush1.msra.mxu0 0.0
    %4045 = vmatprep.subr.mxu0 0.0
    %4046 = vmatpush1.msra.mxu0 0.0
    %4047 = vmatprep.subr.mxu0 0.0
    %4048 = vmatpush1.msra.mxu0 0.0
    %4049 = vmatprep.subr.mxu0 0.0
    %4050 = vmatpush1.msra.mxu0 0.0
    %4051 = vmatprep.subr.mxu0 0.0
    %4052 = vmatpush1.msra.mxu0 0.0
    %4053 = vmatprep.subr.mxu0 0.0
    %4054 = vmatpush1.msra.mxu0 0.0
    %4055 = vmatprep.subr.mxu0 0.0
    %4056 = vmatpush1.msra.mxu0 0.0
    %4057 = vmatprep.subr.mxu0 0.0
    %4058 = vmatpush1.msra.mxu0 0.0
    %4059 = vmatprep.subr.mxu0 0.0
    %4060 = vmatpush1.msra.mxu0 0.0
    %4061 = vmatprep.subr.mxu0 0.0
    %4062 = vmatpush1.msra.mxu0 0.0
    %4063 = vmatprep.subr.mxu0 0.0
    %4064 = vmatpush1.msra.mxu0 0.0
    %4065 = vmatprep.subr.mxu0 0.0
    %4066 = vmatpush1.msra.mxu0 0.0
    %4067 = vmatprep.subr.mxu0 0.0
    %4068 = vmatpush1.msra.mxu0 0.0
    %4069 = vmatprep.subr.mxu0 0.0
    %4070 = vmatpush1.msra.mxu0 0.0
    %4071 = vmatprep.subr.mxu0 0.0
    %4072 = vmatpush1.msra.mxu0 0.0
    %4073 = vmatprep.subr.mxu0 0.0
    %4074 = vmatpush1.msra.mxu0 0.0
    %4075 = vmatprep.mubr.f32.mxu0 0.0
    %4076 = vmatmul.mubr.f32.gmra.mrb[0].mxu0 0.0
    %v4077 = vpop.f32.mrb[0].mxu0
    %v4078 = vadd.f32 0.0, %v4077
    %v4079 = vpop.f32.mrb[0].mxu0
    %v4080 = vadd.f32 0.0, %v4079
    %4081 = vdwg.mxu0
    %4082 = vmatprep.subr.mxu0 %v3749
    %4083 = vmatpush1.msra.mxu0 %v3748
    %4084 = vmatprep.subr.mxu0 %v3753
    %4085 = vmatpush1.msra.mxu0 %v3752
    %4086 = vmatprep.subr.mxu0 %v3757
    %4087 = vmatpush1.msra.mxu0 %v3756
    %4088 = vmatprep.subr.mxu0 %v3761
    %4089 = vmatpush1.msra.mxu0 %v3760
    %4090 = vmatprep.subr.mxu0 %v3765
    %4091 = vmatpush1.msra.mxu0 %v3764
    %4092 = vmatprep.subr.mxu0 %v3769
    %4093 = vmatpush1.msra.mxu0 %v3768
    %4094 = vmatprep.subr.mxu0 %v3773
    %4095 = vmatpush1.msra.mxu0 %v3772
    %4096 = vmatprep.subr.mxu0 %v3777
    %4097 = vmatpush1.msra.mxu0 %v3776
    %4098 = vmatprep.subr.mxu0 %v3781
    %4099 = vmatpush1.msra.mxu0 %v3780
    %4100 = vmatprep.subr.mxu0 %v3785
    %4101 = vmatpush1.msra.mxu0 %v3784
    %4102 = vmatprep.subr.mxu0 %v3789
    %4103 = vmatpush1.msra.mxu0 %v3788
    %4104 = vmatprep.subr.mxu0 %v3793
    %4105 = vmatpush1.msra.mxu0 %v3792
    %4106 = vmatprep.subr.mxu0 %v3797
    %4107 = vmatpush1.msra.mxu0 %v3796
    %4108 = vmatprep.subr.mxu0 %v3801
    %4109 = vmatpush1.msra.mxu0 %v3800
    %4110 = vmatprep.subr.mxu0 %v3805
    %4111 = vmatpush1.msra.mxu0 %v3804
    %4112 = vmatprep.subr.mxu0 %v3809
    %4113 = vmatpush1.msra.mxu0 %v3808
    %4114 = vmatprep.subr.mxu0 %v3813
    %4115 = vmatpush1.msra.mxu0 %v3812
    %4116 = vmatprep.subr.mxu0 %v3817
    %4117 = vmatpush1.msra.mxu0 %v3816
    %4118 = vmatprep.subr.mxu0 %v3821
    %4119 = vmatpush1.msra.mxu0 %v3820
    %4120 = vmatprep.subr.mxu0 %v3825
    %4121 = vmatpush1.msra.mxu0 %v3824
    %4122 = vmatprep.subr.mxu0 %v3829
    %4123 = vmatpush1.msra.mxu0 %v3828
    %4124 = vmatprep.subr.mxu0 %v3833
    %4125 = vmatpush1.msra.mxu0 %v3832
    %4126 = vmatprep.subr.mxu0 %v3837
    %4127 = vmatpush1.msra.mxu0 %v3836
    %4128 = vmatprep.subr.mxu0 %v3841
    %4129 = vmatpush1.msra.mxu0 %v3840
    %4130 = vmatprep.subr.mxu0 %v3845
    %4131 = vmatpush1.msra.mxu0 %v3844
    %4132 = vmatprep.subr.mxu0 %v3849
    %4133 = vmatpush1.msra.mxu0 %v3848
    %4134 = vmatprep.subr.mxu0 %v3853
    %4135 = vmatpush1.msra.mxu0 %v3852
    %4136 = vmatprep.subr.mxu0 %v3857
    %4137 = vmatpush1.msra.mxu0 %v3856
    %4138 = vmatprep.subr.mxu0 %v3861
    %4139 = vmatpush1.msra.mxu0 %v3860
    %4140 = vmatprep.subr.mxu0 %v3865
    %4141 = vmatpush1.msra.mxu0 %v3864
    %4142 = vmatprep.subr.mxu0 %v3869
    %4143 = vmatpush1.msra.mxu0 %v3868
    %4144 = vmatprep.subr.mxu0 %v3873
    %4145 = vmatpush1.msra.mxu0 %v3872
    %4146 = vmatprep.mubr.f32.mxu0 %v710
    %4147 = vmatmul.mubr.f32.gmra.mrb[0].mxu0 %v3220
    %v4148 = vpop.f32.mrb[0].mxu0
    %v4149 = vadd.f32 %v4007, %v4148
    %v4150 = vpop.f32.mrb[0].mxu0
    %v4151 = vadd.f32 %v4009, %v4150
    %4152 = vdwg.mxu0
    %4153 = vmatprep.subr.mxu0 %v3751
    %4154 = vmatpush1.msra.mxu0 %v3750
    %4155 = vmatprep.subr.mxu0 %v3755
    %4156 = vmatpush1.msra.mxu0 %v3754
    %4157 = vmatprep.subr.mxu0 %v3759
    %4158 = vmatpush1.msra.mxu0 %v3758
    %4159 = vmatprep.subr.mxu0 %v3763
    %4160 = vmatpush1.msra.mxu0 %v3762
    %4161 = vmatprep.subr.mxu0 %v3767
    %4162 = vmatpush1.msra.mxu0 %v3766
    %4163 = vmatprep.subr.mxu0 %v3771
    %4164 = vmatpush1.msra.mxu0 %v3770
    %4165 = vmatprep.subr.mxu0 %v3775
    %4166 = vmatpush1.msra.mxu0 %v3774
    %4167 = vmatprep.subr.mxu0 %v3779
    %4168 = vmatpush1.msra.mxu0 %v3778
    %4169 = vmatprep.subr.mxu0 %v3783
    %4170 = vmatpush1.msra.mxu0 %v3782
    %4171 = vmatprep.subr.mxu0 %v3787
    %4172 = vmatpush1.msra.mxu0 %v3786
    %4173 = vmatprep.subr.mxu0 %v3791
    %4174 = vmatpush1.msra.mxu0 %v3790
    %4175 = vmatprep.subr.mxu0 %v3795
    %4176 = vmatpush1.msra.mxu0 %v3794
    %4177 = vmatprep.subr.mxu0 %v3799
    %4178 = vmatpush1.msra.mxu0 %v3798
    %4179 = vmatprep.subr.mxu0 %v3803
    %4180 = vmatpush1.msra.mxu0 %v3802
    %4181 = vmatprep.subr.mxu0 %v3807
    %4182 = vmatpush1.msra.mxu0 %v3806
    %4183 = vmatprep.subr.mxu0 %v3811
    %4184 = vmatpush1.msra.mxu0 %v3810
    %4185 = vmatprep.subr.mxu0 %v3815
    %4186 = vmatpush1.msra.mxu0 %v3814
    %4187 = vmatprep.subr.mxu0 %v3819
    %4188 = vmatpush1.msra.mxu0 %v3818
    %4189 = vmatprep.subr.mxu0 %v3823
    %4190 = vmatpush1.msra.mxu0 %v3822
    %4191 = vmatprep.subr.mxu0 %v3827
    %4192 = vmatpush1.msra.mxu0 %v3826
    %4193 = vmatprep.subr.mxu0 %v3831
    %4194 = vmatpush1.msra.mxu0 %v3830
    %4195 = vmatprep.subr.mxu0 %v3835
    %4196 = vmatpush1.msra.mxu0 %v3834
    %4197 = vmatprep.subr.mxu0 %v3839
    %4198 = vmatpush1.msra.mxu0 %v3838
    %4199 = vmatprep.subr.mxu0 %v3843
    %4200 = vmatpush1.msra.mxu0 %v3842
    %4201 = vmatprep.subr.mxu0 %v3847
    %4202 = vmatpush1.msra.mxu0 %v3846
    %4203 = vmatprep.subr.mxu0 %v3851
    %4204 = vmatpush1.msra.mxu0 %v3850
    %4205 = vmatprep.subr.mxu0 %v3855
    %4206 = vmatpush1.msra.mxu0 %v3854
    %4207 = vmatprep.subr.mxu0 %v3859
    %4208 = vmatpush1.msra.mxu0 %v3858
    %4209 = vmatprep.subr.mxu0 %v3863
    %4210 = vmatpush1.msra.mxu0 %v3862
    %4211 = vmatprep.subr.mxu0 %v3867
    %4212 = vmatpush1.msra.mxu0 %v3866
    %4213 = vmatprep.subr.mxu0 %v3871
    %4214 = vmatpush1.msra.mxu0 %v3870
    %4215 = vmatprep.subr.mxu0 %v3875
    %4216 = vmatpush1.msra.mxu0 %v3874
    %4217 = vmatprep.mubr.f32.mxu0 %v710
    %4218 = vmatmul.mubr.f32.gmra.mrb[0].mxu0 %v3220
    %v4219 = vpop.f32.mrb[0].mxu0
    %v4220 = vadd.f32 %v4078, %v4219
    %v4221 = vpop.f32.mrb[0].mxu0
    %v4222 = vadd.f32 %v4080, %v4221
    %4223 = vdwg.mxu0
    %v4225 = vlaneseq
    %v4226 = vshrl.u32 %v4225, 7
    %v4227 = vsub.s32 0, %v4226
    %v4228 = vrot.slane %v3246, %v4227
    %v4229 = vlaneseq
    %v4230 = vshrl.u32 %v4229, 7
    %v4231 = vsub.s32 1, %v4230
    %v4232 = vrot.slane %v3246, %v4231
    %v4233 = vlaneseq
    %v4234 = vshrl.u32 %v4233, 7
    %v4235 = vsub.s32 2, %v4234
    %v4236 = vrot.slane %v3246, %v4235
    %v4237 = vlaneseq
    %v4238 = vshrl.u32 %v4237, 7
    %v4239 = vsub.s32 3, %v4238
    %v4240 = vrot.slane %v3246, %v4239
    %v4245 = vadd.f32 %v4149, %v4228
    %v4246 = vadd.f32 %v4151, %v4232
    %v4247 = vadd.f32 %v4220, %v4236
    %v4248 = vadd.f32 %v4222, %v4240
    %v4249 = vxor.u32 %v3744, 2147483648
    %v4250 = vmul.f32 %v4249, 1.442695
    %v4251 = vpow.pop %v4250
    %v4252 = vadd.f32 %v4251, 1.0
    %v4253 = vrcp.pop %v4252
    %v4254 = vmul.f32 1.0, %v4253
    %v4255 = vxor.u32 %v3745, 2147483648
    %v4256 = vmul.f32 %v4255, 1.442695
    %v4257 = vpow.pop %v4256
    %v4258 = vadd.f32 %v4257, 1.0
    %v4259 = vrcp.pop %v4258
    %v4260 = vmul.f32 1.0, %v4259
    %v4261 = vtanh.pop %v3746
    %v4262 = vxor.u32 %v3747, 2147483648
    %v4263 = vmul.f32 %v4262, 1.442695
    %v4264 = vpow.pop %v4263
    %v4265 = vadd.f32 %v4264, 1.0
    %v4266 = vrcp.pop %v4265
    %v4267 = vmul.f32 1.0, %v4266
    %v4268 = vmul.f32 %v4260, 0.0
    %v4269 = vmul.f32 %v4254, %v4261
    %v4270 = vadd.f32 %v4268, %v4269
    %v4271 = vtanh.pop %v4270
    %v4272 = vmul.f32 %v4267, %v4271
    %v4273 = vxor.u32 %v4245, 2147483648
    %v4274 = vmul.f32 %v4273, 1.442695
    %v4275 = vpow.pop %v4274
    %v4276 = vadd.f32 %v4275, 1.0
    %v4277 = vrcp.pop %v4276
    %v4278 = vmul.f32 1.0, %v4277
    %v4279 = vxor.u32 %v4246, 2147483648
    %v4280 = vmul.f32 %v4279, 1.442695
    %v4281 = vpow.pop %v4280
    %v4282 = vadd.f32 %v4281, 1.0
    %v4283 = vrcp.pop %v4282
    %v4284 = vmul.f32 1.0, %v4283
    %v4285 = vtanh.pop %v4247
    %v4286 = vxor.u32 %v4248, 2147483648
    %v4287 = vmul.f32 %v4286, 1.442695
    %v4288 = vpow.pop %v4287
    %v4289 = vadd.f32 %v4288, 1.0
    %v4290 = vrcp.pop %v4289
    %v4291 = vmul.f32 1.0, %v4290
    %v4292 = vmul.f32 %v4284, 0.0
    %v4293 = vmul.f32 %v4278, %v4285
    %v4294 = vadd.f32 %v4292, %v4293
    %v4295 = vtanh.pop %v4294
    %v4296 = vmul.f32 %v4291, %v4295
    %4297 = vmatprep.subr.mxu0 %v3376
    %4298 = vmatpush1.msra.mxu0 %v3375
    %4299 = vmatprep.subr.mxu0 %v3380
    %4300 = vmatpush1.msra.mxu0 %v3379
    %4301 = vmatprep.subr.mxu0 %v3384
    %4302 = vmatpush1.msra.mxu0 %v3383
    %4303 = vmatprep.subr.mxu0 %v3388
    %4304 = vmatpush1.msra.mxu0 %v3387
    %4305 = vmatprep.subr.mxu0 %v3392
    %4306 = vmatpush1.msra.mxu0 %v3391
    %4307 = vmatprep.subr.mxu0 %v3396
    %4308 = vmatpush1.msra.mxu0 %v3395
    %4309 = vmatprep.subr.mxu0 %v3400
    %4310 = vmatpush1.msra.mxu0 %v3399
    %4311 = vmatprep.subr.mxu0 %v3404
    %4312 = vmatpush1.msra.mxu0 %v3403
    %4313 = vmatprep.subr.mxu0 %v3408
    %4314 = vmatpush1.msra.mxu0 %v3407
    %4315 = vmatprep.subr.mxu0 %v3412
    %4316 = vmatpush1.msra.mxu0 %v3411
    %4317 = vmatprep.subr.mxu0 %v3416
    %4318 = vmatpush1.msra.mxu0 %v3415
    %4319 = vmatprep.subr.mxu0 %v3420
    %4320 = vmatpush1.msra.mxu0 %v3419
    %4321 = vmatprep.subr.mxu0 %v3424
    %4322 = vmatpush1.msra.mxu0 %v3423
    %4323 = vmatprep.subr.mxu0 %v3428
    %4324 = vmatpush1.msra.mxu0 %v3427
    %4325 = vmatprep.subr.mxu0 %v3432
    %4326 = vmatpush1.msra.mxu0 %v3431
    %4327 = vmatprep.subr.mxu0 %v3436
    %4328 = vmatpush1.msra.mxu0 %v3435
    %4329 = vmatprep.subr.mxu0 0.0
    %4330 = vmatpush1.msra.mxu0 0.0
    %4331 = vmatprep.subr.mxu0 0.0
    %4332 = vmatpush1.msra.mxu0 0.0
    %4333 = vmatprep.subr.mxu0 0.0
    %4334 = vmatpush1.msra.mxu0 0.0
    %4335 = vmatprep.subr.mxu0 0.0
    %4336 = vmatpush1.msra.mxu0 0.0
    %4337 = vmatprep.subr.mxu0 0.0
    %4338 = vmatpush1.msra.mxu0 0.0
    %4339 = vmatprep.subr.mxu0 0.0
    %4340 = vmatpush1.msra.mxu0 0.0
    %4341 = vmatprep.subr.mxu0 0.0
    %4342 = vmatpush1.msra.mxu0 0.0
    %4343 = vmatprep.subr.mxu0 0.0
    %4344 = vmatpush1.msra.mxu0 0.0
    %4345 = vmatprep.subr.mxu0 0.0
    %4346 = vmatpush1.msra.mxu0 0.0
    %4347 = vmatprep.subr.mxu0 0.0
    %4348 = vmatpush1.msra.mxu0 0.0
    %4349 = vmatprep.subr.mxu0 0.0
    %4350 = vmatpush1.msra.mxu0 0.0
    %4351 = vmatprep.subr.mxu0 0.0
    %4352 = vmatpush1.msra.mxu0 0.0
    %4353 = vmatprep.subr.mxu0 0.0
    %4354 = vmatpush1.msra.mxu0 0.0
    %4355 = vmatprep.subr.mxu0 0.0
    %4356 = vmatpush1.msra.mxu0 0.0
    %4357 = vmatprep.subr.mxu0 0.0
    %4358 = vmatpush1.msra.mxu0 0.0
    %4359 = vmatprep.subr.mxu0 0.0
    %4360 = vmatpush1.msra.mxu0 0.0
    %4361 = vmatprep.mubr.f32.mxu0 0.0
    %4362 = vmatmul.mubr.f32.gmra.mrb[0].mxu0 %v4272
    %v4363 = vpop.f32.mrb[0].mxu0
    %v4364 = vadd.f32 0.0, %v4363
    %v4365 = vpop.f32.mrb[0].mxu0
    %v4366 = vadd.f32 0.0, %v4365
    %4367 = vdwg.mxu0
    %4368 = vmatprep.subr.mxu0 %v3378
    %4369 = vmatpush1.msra.mxu0 %v3377
    %4370 = vmatprep.subr.mxu0 %v3382
    %4371 = vmatpush1.msra.mxu0 %v3381
    %4372 = vmatprep.subr.mxu0 %v3386
    %4373 = vmatpush1.msra.mxu0 %v3385
    %4374 = vmatprep.subr.mxu0 %v3390
    %4375 = vmatpush1.msra.mxu0 %v3389
    %4376 = vmatprep.subr.mxu0 %v3394
    %4377 = vmatpush1.msra.mxu0 %v3393
    %4378 = vmatprep.subr.mxu0 %v3398
    %4379 = vmatpush1.msra.mxu0 %v3397
    %4380 = vmatprep.subr.mxu0 %v3402
    %4381 = vmatpush1.msra.mxu0 %v3401
    %4382 = vmatprep.subr.mxu0 %v3406
    %4383 = vmatpush1.msra.mxu0 %v3405
    %4384 = vmatprep.subr.mxu0 %v3410
    %4385 = vmatpush1.msra.mxu0 %v3409
    %4386 = vmatprep.subr.mxu0 %v3414
    %4387 = vmatpush1.msra.mxu0 %v3413
    %4388 = vmatprep.subr.mxu0 %v3418
    %4389 = vmatpush1.msra.mxu0 %v3417
    %4390 = vmatprep.subr.mxu0 %v3422
    %4391 = vmatpush1.msra.mxu0 %v3421
    %4392 = vmatprep.subr.mxu0 %v3426
    %4393 = vmatpush1.msra.mxu0 %v3425
    %4394 = vmatprep.subr.mxu0 %v3430
    %4395 = vmatpush1.msra.mxu0 %v3429
    %4396 = vmatprep.subr.mxu0 %v3434
    %4397 = vmatpush1.msra.mxu0 %v3433
    %4398 = vmatprep.subr.mxu0 %v3438
    %4399 = vmatpush1.msra.mxu0 %v3437
    %4400 = vmatprep.subr.mxu0 0.0
    %4401 = vmatpush1.msra.mxu0 0.0
    %4402 = vmatprep.subr.mxu0 0.0
    %4403 = vmatpush1.msra.mxu0 0.0
    %4404 = vmatprep.subr.mxu0 0.0
    %4405 = vmatpush1.msra.mxu0 0.0
    %4406 = vmatprep.subr.mxu0 0.0
    %4407 = vmatpush1.msra.mxu0 0.0
    %4408 = vmatprep.subr.mxu0 0.0
    %4409 = vmatpush1.msra.mxu0 0.0
    %4410 = vmatprep.subr.mxu0 0.0
    %4411 = vmatpush1.msra.mxu0 0.0
    %4412 = vmatprep.subr.mxu0 0.0
    %4413 = vmatpush1.msra.mxu0 0.0
    %4414 = vmatprep.subr.mxu0 0.0
    %4415 = vmatpush1.msra.mxu0 0.0
    %4416 = vmatprep.subr.mxu0 0.0
    %4417 = vmatpush1.msra.mxu0 0.0
    %4418 = vmatprep.subr.mxu0 0.0
    %4419 = vmatpush1.msra.mxu0 0.0
    %4420 = vmatprep.subr.mxu0 0.0
    %4421 = vmatpush1.msra.mxu0 0.0
    %4422 = vmatprep.subr.mxu0 0.0
    %4423 = vmatpush1.msra.mxu0 0.0
    %4424 = vmatprep.subr.mxu0 0.0
    %4425 = vmatpush1.msra.mxu0 0.0
    %4426 = vmatprep.subr.mxu0 0.0
    %4427 = vmatpush1.msra.mxu0 0.0
    %4428 = vmatprep.subr.mxu0 0.0
    %4429 = vmatpush1.msra.mxu0 0.0
    %4430 = vmatprep.subr.mxu0 0.0
    %4431 = vmatpush1.msra.mxu0 0.0
    %4432 = vmatprep.mubr.f32.mxu0 0.0
    %4433 = vmatmul.mubr.f32.gmra.mrb[0].mxu0 %v4272
    %v4434 = vpop.f32.mrb[0].mxu0
    %v4435 = vadd.f32 0.0, %v4434
    %v4436 = vpop.f32.mrb[0].mxu0
    %v4437 = vadd.f32 0.0, %v4436
    %4438 = vdwg.mxu0
    %4439 = vmatprep.subr.mxu0 %v3248
    %4440 = vmatpush1.msra.mxu0 %v3247
    %4441 = vmatprep.subr.mxu0 %v3252
    %4442 = vmatpush1.msra.mxu0 %v3251
    %4443 = vmatprep.subr.mxu0 %v3256
    %4444 = vmatpush1.msra.mxu0 %v3255
    %4445 = vmatprep.subr.mxu0 %v3260
    %4446 = vmatpush1.msra.mxu0 %v3259
    %4447 = vmatprep.subr.mxu0 %v3264
    %4448 = vmatpush1.msra.mxu0 %v3263
    %4449 = vmatprep.subr.mxu0 %v3268
    %4450 = vmatpush1.msra.mxu0 %v3267
    %4451 = vmatprep.subr.mxu0 %v3272
    %4452 = vmatpush1.msra.mxu0 %v3271
    %4453 = vmatprep.subr.mxu0 %v3276
    %4454 = vmatpush1.msra.mxu0 %v3275
    %4455 = vmatprep.subr.mxu0 %v3280
    %4456 = vmatpush1.msra.mxu0 %v3279
    %4457 = vmatprep.subr.mxu0 %v3284
    %4458 = vmatpush1.msra.mxu0 %v3283
    %4459 = vmatprep.subr.mxu0 %v3288
    %4460 = vmatpush1.msra.mxu0 %v3287
    %4461 = vmatprep.subr.mxu0 %v3292
    %4462 = vmatpush1.msra.mxu0 %v3291
    %4463 = vmatprep.subr.mxu0 %v3296
    %4464 = vmatpush1.msra.mxu0 %v3295
    %4465 = vmatprep.subr.mxu0 %v3300
    %4466 = vmatpush1.msra.mxu0 %v3299
    %4467 = vmatprep.subr.mxu0 %v3304
    %4468 = vmatpush1.msra.mxu0 %v3303
    %4469 = vmatprep.subr.mxu0 %v3308
    %4470 = vmatpush1.msra.mxu0 %v3307
    %4471 = vmatprep.subr.mxu0 %v3312
    %4472 = vmatpush1.msra.mxu0 %v3311
    %4473 = vmatprep.subr.mxu0 %v3316
    %4474 = vmatpush1.msra.mxu0 %v3315
    %4475 = vmatprep.subr.mxu0 %v3320
    %4476 = vmatpush1.msra.mxu0 %v3319
    %4477 = vmatprep.subr.mxu0 %v3324
    %4478 = vmatpush1.msra.mxu0 %v3323
    %4479 = vmatprep.subr.mxu0 %v3328
    %4480 = vmatpush1.msra.mxu0 %v3327
    %4481 = vmatprep.subr.mxu0 %v3332
    %4482 = vmatpush1.msra.mxu0 %v3331
    %4483 = vmatprep.subr.mxu0 %v3336
    %4484 = vmatpush1.msra.mxu0 %v3335
    %4485 = vmatprep.subr.mxu0 %v3340
    %4486 = vmatpush1.msra.mxu0 %v3339
    %4487 = vmatprep.subr.mxu0 %v3344
    %4488 = vmatpush1.msra.mxu0 %v3343
    %4489 = vmatprep.subr.mxu0 %v3348
    %4490 = vmatpush1.msra.mxu0 %v3347
    %4491 = vmatprep.subr.mxu0 %v3352
    %4492 = vmatpush1.msra.mxu0 %v3351
    %4493 = vmatprep.subr.mxu0 %v3356
    %4494 = vmatpush1.msra.mxu0 %v3355
    %4495 = vmatprep.subr.mxu0 %v3360
    %4496 = vmatpush1.msra.mxu0 %v3359
    %4497 = vmatprep.subr.mxu0 %v3364
    %4498 = vmatpush1.msra.mxu0 %v3363
    %4499 = vmatprep.subr.mxu0 %v3368
    %4500 = vmatpush1.msra.mxu0 %v3367
    %4501 = vmatprep.subr.mxu0 %v3372
    %4502 = vmatpush1.msra.mxu0 %v3371
    %4503 = vmatprep.mubr.f32.mxu0 %v2888
    %4504 = vmatmul.mubr.f32.gmra.mrb[0].mxu0 %v1056
    %v4505 = vpop.f32.mrb[0].mxu0
    %v4506 = vadd.f32 %v4364, %v4505
    %v4507 = vpop.f32.mrb[0].mxu0
    %v4508 = vadd.f32 %v4366, %v4507
    %4509 = vdwg.mxu0
    %4510 = vmatprep.subr.mxu0 %v3250
    %4511 = vmatpush1.msra.mxu0 %v3249
    %4512 = vmatprep.subr.mxu0 %v3254
    %4513 = vmatpush1.msra.mxu0 %v3253
    %4514 = vmatprep.subr.mxu0 %v3258
    %4515 = vmatpush1.msra.mxu0 %v3257
    %4516 = vmatprep.subr.mxu0 %v3262
    %4517 = vmatpush1.msra.mxu0 %v3261
    %4518 = vmatprep.subr.mxu0 %v3266
    %4519 = vmatpush1.msra.mxu0 %v3265
    %4520 = vmatprep.subr.mxu0 %v3270
    %4521 = vmatpush1.msra.mxu0 %v3269
    %4522 = vmatprep.subr.mxu0 %v3274
    %4523 = vmatpush1.msra.mxu0 %v3273
    %4524 = vmatprep.subr.mxu0 %v3278
    %4525 = vmatpush1.msra.mxu0 %v3277
    %4526 = vmatprep.subr.mxu0 %v3282
    %4527 = vmatpush1.msra.mxu0 %v3281
    %4528 = vmatprep.subr.mxu0 %v3286
    %4529 = vmatpush1.msra.mxu0 %v3285
    %4530 = vmatprep.subr.mxu0 %v3290
    %4531 = vmatpush1.msra.mxu0 %v3289
    %4532 = vmatprep.subr.mxu0 %v3294
    %4533 = vmatpush1.msra.mxu0 %v3293
    %4534 = vmatprep.subr.mxu0 %v3298
    %4535 = vmatpush1.msra.mxu0 %v3297
    %4536 = vmatprep.subr.mxu0 %v3302
    %4537 = vmatpush1.msra.mxu0 %v3301
    %4538 = vmatprep.subr.mxu0 %v3306
    %4539 = vmatpush1.msra.mxu0 %v3305
    %4540 = vmatprep.subr.mxu0 %v3310
    %4541 = vmatpush1.msra.mxu0 %v3309
    %4542 = vmatprep.subr.mxu0 %v3314
    %4543 = vmatpush1.msra.mxu0 %v3313
    %4544 = vmatprep.subr.mxu0 %v3318
    %4545 = vmatpush1.msra.mxu0 %v3317
    %4546 = vmatprep.subr.mxu0 %v3322
    %4547 = vmatpush1.msra.mxu0 %v3321
    %4548 = vmatprep.subr.mxu0 %v3326
    %4549 = vmatpush1.msra.mxu0 %v3325
    %4550 = vmatprep.subr.mxu0 %v3330
    %4551 = vmatpush1.msra.mxu0 %v3329
    %4552 = vmatprep.subr.mxu0 %v3334
    %4553 = vmatpush1.msra.mxu0 %v3333
    %4554 = vmatprep.subr.mxu0 %v3338
    %4555 = vmatpush1.msra.mxu0 %v3337
    %4556 = vmatprep.subr.mxu0 %v3342
    %4557 = vmatpush1.msra.mxu0 %v3341
    %4558 = vmatprep.subr.mxu0 %v3346
    %4559 = vmatpush1.msra.mxu0 %v3345
    %4560 = vmatprep.subr.mxu0 %v3350
    %4561 = vmatpush1.msra.mxu0 %v3349
    %4562 = vmatprep.subr.mxu0 %v3354
    %4563 = vmatpush1.msra.mxu0 %v3353
    %4564 = vmatprep.subr.mxu0 %v3358
    %4565 = vmatpush1.msra.mxu0 %v3357
    %4566 = vmatprep.subr.mxu0 %v3362
    %4567 = vmatpush1.msra.mxu0 %v3361
    %4568 = vmatprep.subr.mxu0 %v3366
    %4569 = vmatpush1.msra.mxu0 %v3365
    %4570 = vmatprep.subr.mxu0 %v3370
    %4571 = vmatpush1.msra.mxu0 %v3369
    %4572 = vmatprep.subr.mxu0 %v3374
    %4573 = vmatpush1.msra.mxu0 %v3373
    %4574 = vmatprep.mubr.f32.mxu0 %v2888
    %4575 = vmatmul.mubr.f32.gmra.mrb[0].mxu0 %v1056
    %v4576 = vpop.f32.mrb[0].mxu0
    %v4577 = vadd.f32 %v4435, %v4576
    %v4578 = vpop.f32.mrb[0].mxu0
    %v4579 = vadd.f32 %v4437, %v4578
    %4580 = vdwg.mxu0
    %v4581 = vadd.f32 %v4506, %v3727
    %v4582 = vadd.f32 %v4508, %v3731
    %v4583 = vadd.f32 %v4577, %v3735
    %v4584 = vadd.f32 %v4579, %v3739
    %4585 = vmatprep.subr.mxu0 %v3877
    %4586 = vmatpush1.msra.mxu0 %v3876
    %4587 = vmatprep.subr.mxu0 %v3881
    %4588 = vmatpush1.msra.mxu0 %v3880
    %4589 = vmatprep.subr.mxu0 %v3885
    %4590 = vmatpush1.msra.mxu0 %v3884
    %4591 = vmatprep.subr.mxu0 %v3889
    %4592 = vmatpush1.msra.mxu0 %v3888
    %4593 = vmatprep.subr.mxu0 %v3893
    %4594 = vmatpush1.msra.mxu0 %v3892
    %4595 = vmatprep.subr.mxu0 %v3897
    %4596 = vmatpush1.msra.mxu0 %v3896
    %4597 = vmatprep.subr.mxu0 %v3901
    %4598 = vmatpush1.msra.mxu0 %v3900
    %4599 = vmatprep.subr.mxu0 %v3905
    %4600 = vmatpush1.msra.mxu0 %v3904
    %4601 = vmatprep.subr.mxu0 %v3909
    %4602 = vmatpush1.msra.mxu0 %v3908
    %4603 = vmatprep.subr.mxu0 %v3913
    %4604 = vmatpush1.msra.mxu0 %v3912
    %4605 = vmatprep.subr.mxu0 %v3917
    %4606 = vmatpush1.msra.mxu0 %v3916
    %4607 = vmatprep.subr.mxu0 %v3921
    %4608 = vmatpush1.msra.mxu0 %v3920
    %4609 = vmatprep.subr.mxu0 %v3925
    %4610 = vmatpush1.msra.mxu0 %v3924
    %4611 = vmatprep.subr.mxu0 %v3929
    %4612 = vmatpush1.msra.mxu0 %v3928
    %4613 = vmatprep.subr.mxu0 %v3933
    %4614 = vmatpush1.msra.mxu0 %v3932
    %4615 = vmatprep.subr.mxu0 %v3937
    %4616 = vmatpush1.msra.mxu0 %v3936
    %4617 = vmatprep.subr.mxu0 0.0
    %4618 = vmatpush1.msra.mxu0 0.0
    %4619 = vmatprep.subr.mxu0 0.0
    %4620 = vmatpush1.msra.mxu0 0.0
    %4621 = vmatprep.subr.mxu0 0.0
    %4622 = vmatpush1.msra.mxu0 0.0
    %4623 = vmatprep.subr.mxu0 0.0
    %4624 = vmatpush1.msra.mxu0 0.0
    %4625 = vmatprep.subr.mxu0 0.0
    %4626 = vmatpush1.msra.mxu0 0.0
    %4627 = vmatprep.subr.mxu0 0.0
    %4628 = vmatpush1.msra.mxu0 0.0
    %4629 = vmatprep.subr.mxu0 0.0
    %4630 = vmatpush1.msra.mxu0 0.0
    %4631 = vmatprep.subr.mxu0 0.0
    %4632 = vmatpush1.msra.mxu0 0.0
    %4633 = vmatprep.subr.mxu0 0.0
    %4634 = vmatpush1.msra.mxu0 0.0
    %4635 = vmatprep.subr.mxu0 0.0
    %4636 = vmatpush1.msra.mxu0 0.0
    %4637 = vmatprep.subr.mxu0 0.0
    %4638 = vmatpush1.msra.mxu0 0.0
    %4639 = vmatprep.subr.mxu0 0.0
    %4640 = vmatpush1.msra.mxu0 0.0
    %4641 = vmatprep.subr.mxu0 0.0
    %4642 = vmatpush1.msra.mxu0 0.0
    %4643 = vmatprep.subr.mxu0 0.0
    %4644 = vmatpush1.msra.mxu0 0.0
    %4645 = vmatprep.subr.mxu0 0.0
    %4646 = vmatpush1.msra.mxu0 0.0
    %4647 = vmatprep.subr.mxu0 0.0
    %4648 = vmatpush1.msra.mxu0 0.0
    %4649 = vmatprep.mubr.f32.mxu0 0.0
    %4650 = vmatmul.mubr.f32.gmra.mrb[0].mxu0 %v4296
    %v4651 = vpop.f32.mrb[0].mxu0
    %v4652 = vadd.f32 0.0, %v4651
    %v4653 = vpop.f32.mrb[0].mxu0
    %v4654 = vadd.f32 0.0, %v4653
    %4655 = vdwg.mxu0
    %4656 = vmatprep.subr.mxu0 %v3879
    %4657 = vmatpush1.msra.mxu0 %v3878
    %4658 = vmatprep.subr.mxu0 %v3883
    %4659 = vmatpush1.msra.mxu0 %v3882
    %4660 = vmatprep.subr.mxu0 %v3887
    %4661 = vmatpush1.msra.mxu0 %v3886
    %4662 = vmatprep.subr.mxu0 %v3891
    %4663 = vmatpush1.msra.mxu0 %v3890
    %4664 = vmatprep.subr.mxu0 %v3895
    %4665 = vmatpush1.msra.mxu0 %v3894
    %4666 = vmatprep.subr.mxu0 %v3899
    %4667 = vmatpush1.msra.mxu0 %v3898
    %4668 = vmatprep.subr.mxu0 %v3903
    %4669 = vmatpush1.msra.mxu0 %v3902
    %4670 = vmatprep.subr.mxu0 %v3907
    %4671 = vmatpush1.msra.mxu0 %v3906
    %4672 = vmatprep.subr.mxu0 %v3911
    %4673 = vmatpush1.msra.mxu0 %v3910
    %4674 = vmatprep.subr.mxu0 %v3915
    %4675 = vmatpush1.msra.mxu0 %v3914
    %4676 = vmatprep.subr.mxu0 %v3919
    %4677 = vmatpush1.msra.mxu0 %v3918
    %4678 = vmatprep.subr.mxu0 %v3923
    %4679 = vmatpush1.msra.mxu0 %v3922
    %4680 = vmatprep.subr.mxu0 %v3927
    %4681 = vmatpush1.msra.mxu0 %v3926
    %4682 = vmatprep.subr.mxu0 %v3931
    %4683 = vmatpush1.msra.mxu0 %v3930
    %4684 = vmatprep.subr.mxu0 %v3935
    %4685 = vmatpush1.msra.mxu0 %v3934
    %4686 = vmatprep.subr.mxu0 %v3939
    %4687 = vmatpush1.msra.mxu0 %v3938
    %4688 = vmatprep.subr.mxu0 0.0
    %4689 = vmatpush1.msra.mxu0 0.0
    %4690 = vmatprep.subr.mxu0 0.0
    %4691 = vmatpush1.msra.mxu0 0.0
    %4692 = vmatprep.subr.mxu0 0.0
    %4693 = vmatpush1.msra.mxu0 0.0
    %4694 = vmatprep.subr.mxu0 0.0
    %4695 = vmatpush1.msra.mxu0 0.0
    %4696 = vmatprep.subr.mxu0 0.0
    %4697 = vmatpush1.msra.mxu0 0.0
    %4698 = vmatprep.subr.mxu0 0.0
    %4699 = vmatpush1.msra.mxu0 0.0
    %4700 = vmatprep.subr.mxu0 0.0
    %4701 = vmatpush1.msra.mxu0 0.0
    %4702 = vmatprep.subr.mxu0 0.0
    %4703 = vmatpush1.msra.mxu0 0.0
    %4704 = vmatprep.subr.mxu0 0.0
    %4705 = vmatpush1.msra.mxu0 0.0
    %4706 = vmatprep.subr.mxu0 0.0
    %4707 = vmatpush1.msra.mxu0 0.0
    %4708 = vmatprep.subr.mxu0 0.0
    %4709 = vmatpush1.msra.mxu0 0.0
    %4710 = vmatprep.subr.mxu0 0.0
    %4711 = vmatpush1.msra.mxu0 0.0
    %4712 = vmatprep.subr.mxu0 0.0
    %4713 = vmatpush1.msra.mxu0 0.0
    %4714 = vmatprep.subr.mxu0 0.0
    %4715 = vmatpush1.msra.mxu0 0.0
    %4716 = vmatprep.subr.mxu0 0.0
    %4717 = vmatpush1.msra.mxu0 0.0
    %4718 = vmatprep.subr.mxu0 0.0
    %4719 = vmatpush1.msra.mxu0 0.0
    %4720 = vmatprep.mubr.f32.mxu0 0.0
    %4721 = vmatmul.mubr.f32.gmra.mrb[0].mxu0 %v4296
    %v4722 = vpop.f32.mrb[0].mxu0
    %v4723 = vadd.f32 0.0, %v4722
    %v4724 = vpop.f32.mrb[0].mxu0
    %v4725 = vadd.f32 0.0, %v4724
    %4726 = vdwg.mxu0
    %4727 = vmatprep.subr.mxu0 %v3749
    %4728 = vmatpush1.msra.mxu0 %v3748
    %4729 = vmatprep.subr.mxu0 %v3753
    %4730 = vmatpush1.msra.mxu0 %v3752
    %4731 = vmatprep.subr.mxu0 %v3757
    %4732 = vmatpush1.msra.mxu0 %v3756
    %4733 = vmatprep.subr.mxu0 %v3761
    %4734 = vmatpush1.msra.mxu0 %v3760
    %4735 = vmatprep.subr.mxu0 %v3765
    %4736 = vmatpush1.msra.mxu0 %v3764
    %4737 = vmatprep.subr.mxu0 %v3769
    %4738 = vmatpush1.msra.mxu0 %v3768
    %4739 = vmatprep.subr.mxu0 %v3773
    %4740 = vmatpush1.msra.mxu0 %v3772
    %4741 = vmatprep.subr.mxu0 %v3777
    %4742 = vmatpush1.msra.mxu0 %v3776
    %4743 = vmatprep.subr.mxu0 %v3781
    %4744 = vmatpush1.msra.mxu0 %v3780
    %4745 = vmatprep.subr.mxu0 %v3785
    %4746 = vmatpush1.msra.mxu0 %v3784
    %4747 = vmatprep.subr.mxu0 %v3789
    %4748 = vmatpush1.msra.mxu0 %v3788
    %4749 = vmatprep.subr.mxu0 %v3793
    %4750 = vmatpush1.msra.mxu0 %v3792
    %4751 = vmatprep.subr.mxu0 %v3797
    %4752 = vmatpush1.msra.mxu0 %v3796
    %4753 = vmatprep.subr.mxu0 %v3801
    %4754 = vmatpush1.msra.mxu0 %v3800
    %4755 = vmatprep.subr.mxu0 %v3805
    %4756 = vmatpush1.msra.mxu0 %v3804
    %4757 = vmatprep.subr.mxu0 %v3809
    %4758 = vmatpush1.msra.mxu0 %v3808
    %4759 = vmatprep.subr.mxu0 %v3813
    %4760 = vmatpush1.msra.mxu0 %v3812
    %4761 = vmatprep.subr.mxu0 %v3817
    %4762 = vmatpush1.msra.mxu0 %v3816
    %4763 = vmatprep.subr.mxu0 %v3821
    %4764 = vmatpush1.msra.mxu0 %v3820
    %4765 = vmatprep.subr.mxu0 %v3825
    %4766 = vmatpush1.msra.mxu0 %v3824
    %4767 = vmatprep.subr.mxu0 %v3829
    %4768 = vmatpush1.msra.mxu0 %v3828
    %4769 = vmatprep.subr.mxu0 %v3833
    %4770 = vmatpush1.msra.mxu0 %v3832
    %4771 = vmatprep.subr.mxu0 %v3837
    %4772 = vmatpush1.msra.mxu0 %v3836
    %4773 = vmatprep.subr.mxu0 %v3841
    %4774 = vmatpush1.msra.mxu0 %v3840
    %4775 = vmatprep.subr.mxu0 %v3845
    %4776 = vmatpush1.msra.mxu0 %v3844
    %4777 = vmatprep.subr.mxu0 %v3849
    %4778 = vmatpush1.msra.mxu0 %v3848
    %4779 = vmatprep.subr.mxu0 %v3853
    %4780 = vmatpush1.msra.mxu0 %v3852
    %4781 = vmatprep.subr.mxu0 %v3857
    %4782 = vmatpush1.msra.mxu0 %v3856
    %4783 = vmatprep.subr.mxu0 %v3861
    %4784 = vmatpush1.msra.mxu0 %v3860
    %4785 = vmatprep.subr.mxu0 %v3865
    %4786 = vmatpush1.msra.mxu0 %v3864
    %4787 = vmatprep.subr.mxu0 %v3869
    %4788 = vmatpush1.msra.mxu0 %v3868
    %4789 = vmatprep.subr.mxu0 %v3873
    %4790 = vmatpush1.msra.mxu0 %v3872
    %4791 = vmatprep.mubr.f32.mxu0 %v1080
    %4792 = vmatmul.mubr.f32.gmra.mrb[0].mxu0 %v2864
    %v4793 = vpop.f32.mrb[0].mxu0
    %v4794 = vadd.f32 %v4652, %v4793
    %v4795 = vpop.f32.mrb[0].mxu0
    %v4796 = vadd.f32 %v4654, %v4795
    %4797 = vdwg.mxu0
    %4798 = vmatprep.subr.mxu0 %v3751
    %4799 = vmatpush1.msra.mxu0 %v3750
    %4800 = vmatprep.subr.mxu0 %v3755
    %4801 = vmatpush1.msra.mxu0 %v3754
    %4802 = vmatprep.subr.mxu0 %v3759
    %4803 = vmatpush1.msra.mxu0 %v3758
    %4804 = vmatprep.subr.mxu0 %v3763
    %4805 = vmatpush1.msra.mxu0 %v3762
    %4806 = vmatprep.subr.mxu0 %v3767
    %4807 = vmatpush1.msra.mxu0 %v3766
    %4808 = vmatprep.subr.mxu0 %v3771
    %4809 = vmatpush1.msra.mxu0 %v3770
    %4810 = vmatprep.subr.mxu0 %v3775
    %4811 = vmatpush1.msra.mxu0 %v3774
    %4812 = vmatprep.subr.mxu0 %v3779
    %4813 = vmatpush1.msra.mxu0 %v3778
    %4814 = vmatprep.subr.mxu0 %v3783
    %4815 = vmatpush1.msra.mxu0 %v3782
    %4816 = vmatprep.subr.mxu0 %v3787
    %4817 = vmatpush1.msra.mxu0 %v3786
    %4818 = vmatprep.subr.mxu0 %v3791
    %4819 = vmatpush1.msra.mxu0 %v3790
    %4820 = vmatprep.subr.mxu0 %v3795
    %4821 = vmatpush1.msra.mxu0 %v3794
    %4822 = vmatprep.subr.mxu0 %v3799
    %4823 = vmatpush1.msra.mxu0 %v3798
    %4824 = vmatprep.subr.mxu0 %v3803
    %4825 = vmatpush1.msra.mxu0 %v3802
    %4826 = vmatprep.subr.mxu0 %v3807
    %4827 = vmatpush1.msra.mxu0 %v3806
    %4828 = vmatprep.subr.mxu0 %v3811
    %4829 = vmatpush1.msra.mxu0 %v3810
    %4830 = vmatprep.subr.mxu0 %v3815
    %4831 = vmatpush1.msra.mxu0 %v3814
    %4832 = vmatprep.subr.mxu0 %v3819
    %4833 = vmatpush1.msra.mxu0 %v3818
    %4834 = vmatprep.subr.mxu0 %v3823
    %4835 = vmatpush1.msra.mxu0 %v3822
    %4836 = vmatprep.subr.mxu0 %v3827
    %4837 = vmatpush1.msra.mxu0 %v3826
    %4838 = vmatprep.subr.mxu0 %v3831
    %4839 = vmatpush1.msra.mxu0 %v3830
    %4840 = vmatprep.subr.mxu0 %v3835
    %4841 = vmatpush1.msra.mxu0 %v3834
    %4842 = vmatprep.subr.mxu0 %v3839
    %4843 = vmatpush1.msra.mxu0 %v3838
    %4844 = vmatprep.subr.mxu0 %v3843
    %4845 = vmatpush1.msra.mxu0 %v3842
    %4846 = vmatprep.subr.mxu0 %v3847
    %4847 = vmatpush1.msra.mxu0 %v3846
    %4848 = vmatprep.subr.mxu0 %v3851
    %4849 = vmatpush1.msra.mxu0 %v3850
    %4850 = vmatprep.subr.mxu0 %v3855
    %4851 = vmatpush1.msra.mxu0 %v3854
    %4852 = vmatprep.subr.mxu0 %v3859
    %4853 = vmatpush1.msra.mxu0 %v3858
    %4854 = vmatprep.subr.mxu0 %v3863
    %4855 = vmatpush1.msra.mxu0 %v3862
    %4856 = vmatprep.subr.mxu0 %v3867
    %4857 = vmatpush1.msra.mxu0 %v3866
    %4858 = vmatprep.subr.mxu0 %v3871
    %4859 = vmatpush1.msra.mxu0 %v3870
    %4860 = vmatprep.subr.mxu0 %v3875
    %4861 = vmatpush1.msra.mxu0 %v3874
    %4862 = vmatprep.mubr.f32.mxu0 %v1080
    %4863 = vmatmul.mubr.f32.gmra.mrb[0].mxu0 %v2864
    %v4864 = vpop.f32.mrb[0].mxu0
    %v4865 = vadd.f32 %v4723, %v4864
    %v4866 = vpop.f32.mrb[0].mxu0
    %v4867 = vadd.f32 %v4725, %v4866
    %4868 = vdwg.mxu0
    %v4869 = vadd.f32 %v4794, %v4228
    %v4870 = vadd.f32 %v4796, %v4232
    %v4871 = vadd.f32 %v4865, %v4236
    %v4872 = vadd.f32 %v4867, %v4240
    %v4873 = vxor.u32 %v4581, 2147483648
    %v4874 = vmul.f32 %v4873, 1.442695
    %v4875 = vpow.pop %v4874
    %v4876 = vadd.f32 %v4875, 1.0
    %v4877 = vrcp.pop %v4876
    %v4878 = vmul.f32 1.0, %v4877
    %v4879 = vxor.u32 %v4582, 2147483648
    %v4880 = vmul.f32 %v4879, 1.442695
    %v4881 = vpow.pop %v4880
    %v4882 = vadd.f32 %v4881, 1.0
    %v4883 = vrcp.pop %v4882
    %v4884 = vmul.f32 1.0, %v4883
    %v4885 = vtanh.pop %v4583
    %v4886 = vxor.u32 %v4584, 2147483648
    %v4887 = vmul.f32 %v4886, 1.442695
    %v4888 = vpow.pop %v4887
    %v4889 = vadd.f32 %v4888, 1.0
    %v4890 = vrcp.pop %v4889
    %v4891 = vmul.f32 1.0, %v4890
    %v4892 = vmul.f32 %v4884, %v4270
    %v4893 = vmul.f32 %v4878, %v4885
    %v4894 = vadd.f32 %v4892, %v4893
    %v4895 = vtanh.pop %v4894
    %v4896 = vmul.f32 %v4891, %v4895
    %v4897 = vxor.u32 %v4869, 2147483648
    %v4898 = vmul.f32 %v4897, 1.442695
    %v4899 = vpow.pop %v4898
    %v4900 = vadd.f32 %v4899, 1.0
    %v4901 = vrcp.pop %v4900
    %v4902 = vmul.f32 1.0, %v4901
    %v4903 = vxor.u32 %v4870, 2147483648
    %v4904 = vmul.f32 %v4903, 1.442695
    %v4905 = vpow.pop %v4904
    %v4906 = vadd.f32 %v4905, 1.0
    %v4907 = vrcp.pop %v4906
    %v4908 = vmul.f32 1.0, %v4907
    %v4909 = vtanh.pop %v4871
    %v4910 = vxor.u32 %v4872, 2147483648
    %v4911 = vmul.f32 %v4910, 1.442695
    %v4912 = vpow.pop %v4911
    %v4913 = vadd.f32 %v4912, 1.0
    %v4914 = vrcp.pop %v4913
    %v4915 = vmul.f32 1.0, %v4914
    %v4916 = vmul.f32 %v4908, %v4294
    %v4917 = vmul.f32 %v4902, %v4909
    %v4918 = vadd.f32 %v4916, %v4917
    %v4919 = vtanh.pop %v4918
    %v4920 = vmul.f32 %v4915, %v4919
    %4921 = vmatprep.subr.mxu0 %v3376
    %4922 = vmatpush1.msra.mxu0 %v3375
    %4923 = vmatprep.subr.mxu0 %v3380
    %4924 = vmatpush1.msra.mxu0 %v3379
    %4925 = vmatprep.subr.mxu0 %v3384
    %4926 = vmatpush1.msra.mxu0 %v3383
    %4927 = vmatprep.subr.mxu0 %v3388
    %4928 = vmatpush1.msra.mxu0 %v3387
    %4929 = vmatprep.subr.mxu0 %v3392
    %4930 = vmatpush1.msra.mxu0 %v3391
    %4931 = vmatprep.subr.mxu0 %v3396
    %4932 = vmatpush1.msra.mxu0 %v3395
    %4933 = vmatprep.subr.mxu0 %v3400
    %4934 = vmatpush1.msra.mxu0 %v3399
    %4935 = vmatprep.subr.mxu0 %v3404
    %4936 = vmatpush1.msra.mxu0 %v3403
    %4937 = vmatprep.subr.mxu0 %v3408
    %4938 = vmatpush1.msra.mxu0 %v3407
    %4939 = vmatprep.subr.mxu0 %v3412
    %4940 = vmatpush1.msra.mxu0 %v3411
    %4941 = vmatprep.subr.mxu0 %v3416
    %4942 = vmatpush1.msra.mxu0 %v3415
    %4943 = vmatprep.subr.mxu0 %v3420
    %4944 = vmatpush1.msra.mxu0 %v3419
    %4945 = vmatprep.subr.mxu0 %v3424
    %4946 = vmatpush1.msra.mxu0 %v3423
    %4947 = vmatprep.subr.mxu0 %v3428
    %4948 = vmatpush1.msra.mxu0 %v3427
    %4949 = vmatprep.subr.mxu0 %v3432
    %4950 = vmatpush1.msra.mxu0 %v3431
    %4951 = vmatprep.subr.mxu0 %v3436
    %4952 = vmatpush1.msra.mxu0 %v3435
    %4953 = vmatprep.subr.mxu0 0.0
    %4954 = vmatpush1.msra.mxu0 0.0
    %4955 = vmatprep.subr.mxu0 0.0
    %4956 = vmatpush1.msra.mxu0 0.0
    %4957 = vmatprep.subr.mxu0 0.0
    %4958 = vmatpush1.msra.mxu0 0.0
    %4959 = vmatprep.subr.mxu0 0.0
    %4960 = vmatpush1.msra.mxu0 0.0
    %4961 = vmatprep.subr.mxu0 0.0
    %4962 = vmatpush1.msra.mxu0 0.0
    %4963 = vmatprep.subr.mxu0 0.0
    %4964 = vmatpush1.msra.mxu0 0.0
    %4965 = vmatprep.subr.mxu0 0.0
    %4966 = vmatpush1.msra.mxu0 0.0
    %4967 = vmatprep.subr.mxu0 0.0
    %4968 = vmatpush1.msra.mxu0 0.0
    %4969 = vmatprep.subr.mxu0 0.0
    %4970 = vmatpush1.msra.mxu0 0.0
    %4971 = vmatprep.subr.mxu0 0.0
    %4972 = vmatpush1.msra.mxu0 0.0
    %4973 = vmatprep.subr.mxu0 0.0
    %4974 = vmatpush1.msra.mxu0 0.0
    %4975 = vmatprep.subr.mxu0 0.0
    %4976 = vmatpush1.msra.mxu0 0.0
    %4977 = vmatprep.subr.mxu0 0.0
    %4978 = vmatpush1.msra.mxu0 0.0
    %4979 = vmatprep.subr.mxu0 0.0
    %4980 = vmatpush1.msra.mxu0 0.0
    %4981 = vmatprep.subr.mxu0 0.0
    %4982 = vmatpush1.msra.mxu0 0.0
    %4983 = vmatprep.subr.mxu0 0.0
    %4984 = vmatpush1.msra.mxu0 0.0
    %4985 = vmatprep.mubr.f32.mxu0 0.0
    %4986 = vmatmul.mubr.f32.gmra.mrb[0].mxu0 %v4896
    %v4987 = vpop.f32.mrb[0].mxu0
    %v4988 = vadd.f32 0.0, %v4987
    %v4989 = vpop.f32.mrb[0].mxu0
    %v4990 = vadd.f32 0.0, %v4989
    %4991 = vdwg.mxu0
    %4992 = vmatprep.subr.mxu0 %v3378
    %4993 = vmatpush1.msra.mxu0 %v3377
    %4994 = vmatprep.subr.mxu0 %v3382
    %4995 = vmatpush1.msra.mxu0 %v3381
    %4996 = vmatprep.subr.mxu0 %v3386
    %4997 = vmatpush1.msra.mxu0 %v3385
    %4998 = vmatprep.subr.mxu0 %v3390
    %4999 = vmatpush1.msra.mxu0 %v3389
    %5000 = vmatprep.subr.mxu0 %v3394
    %5001 = vmatpush1.msra.mxu0 %v3393
    %5002 = vmatprep.subr.mxu0 %v3398
    %5003 = vmatpush1.msra.mxu0 %v3397
    %5004 = vmatprep.subr.mxu0 %v3402
    %5005 = vmatpush1.msra.mxu0 %v3401
    %5006 = vmatprep.subr.mxu0 %v3406
    %5007 = vmatpush1.msra.mxu0 %v3405
    %5008 = vmatprep.subr.mxu0 %v3410
    %5009 = vmatpush1.msra.mxu0 %v3409
    %5010 = vmatprep.subr.mxu0 %v3414
    %5011 = vmatpush1.msra.mxu0 %v3413
    %5012 = vmatprep.subr.mxu0 %v3418
    %5013 = vmatpush1.msra.mxu0 %v3417
    %5014 = vmatprep.subr.mxu0 %v3422
    %5015 = vmatpush1.msra.mxu0 %v3421
    %5016 = vmatprep.subr.mxu0 %v3426
    %5017 = vmatpush1.msra.mxu0 %v3425
    %5018 = vmatprep.subr.mxu0 %v3430
    %5019 = vmatpush1.msra.mxu0 %v3429
    %5020 = vmatprep.subr.mxu0 %v3434
    %5021 = vmatpush1.msra.mxu0 %v3433
    %5022 = vmatprep.subr.mxu0 %v3438
    %5023 = vmatpush1.msra.mxu0 %v3437
    %5024 = vmatprep.subr.mxu0 0.0
    %5025 = vmatpush1.msra.mxu0 0.0
    %5026 = vmatprep.subr.mxu0 0.0
    %5027 = vmatpush1.msra.mxu0 0.0
    %5028 = vmatprep.subr.mxu0 0.0
    %5029 = vmatpush1.msra.mxu0 0.0
    %5030 = vmatprep.subr.mxu0 0.0
    %5031 = vmatpush1.msra.mxu0 0.0
    %5032 = vmatprep.subr.mxu0 0.0
    %5033 = vmatpush1.msra.mxu0 0.0
    %5034 = vmatprep.subr.mxu0 0.0
    %5035 = vmatpush1.msra.mxu0 0.0
    %5036 = vmatprep.subr.mxu0 0.0
    %5037 = vmatpush1.msra.mxu0 0.0
    %5038 = vmatprep.subr.mxu0 0.0
    %5039 = vmatpush1.msra.mxu0 0.0
    %5040 = vmatprep.subr.mxu0 0.0
    %5041 = vmatpush1.msra.mxu0 0.0
    %5042 = vmatprep.subr.mxu0 0.0
    %5043 = vmatpush1.msra.mxu0 0.0
    %5044 = vmatprep.subr.mxu0 0.0
    %5045 = vmatpush1.msra.mxu0 0.0
    %5046 = vmatprep.subr.mxu0 0.0
    %5047 = vmatpush1.msra.mxu0 0.0
    %5048 = vmatprep.subr.mxu0 0.0
    %5049 = vmatpush1.msra.mxu0 0.0
    %5050 = vmatprep.subr.mxu0 0.0
    %5051 = vmatpush1.msra.mxu0 0.0
    %5052 = vmatprep.subr.mxu0 0.0
    %5053 = vmatpush1.msra.mxu0 0.0
    %5054 = vmatprep.subr.mxu0 0.0
    %5055 = vmatpush1.msra.mxu0 0.0
    %5056 = vmatprep.mubr.f32.mxu0 0.0
    %5057 = vmatmul.mubr.f32.gmra.mrb[0].mxu0 %v4896
    %v5058 = vpop.f32.mrb[0].mxu0
    %v5059 = vadd.f32 0.0, %v5058
    %v5060 = vpop.f32.mrb[0].mxu0
    %v5061 = vadd.f32 0.0, %v5060
    %5062 = vdwg.mxu0
    %5063 = vmatprep.subr.mxu0 %v3248
    %5064 = vmatpush1.msra.mxu0 %v3247
    %5065 = vmatprep.subr.mxu0 %v3252
    %5066 = vmatpush1.msra.mxu0 %v3251
    %5067 = vmatprep.subr.mxu0 %v3256
    %5068 = vmatpush1.msra.mxu0 %v3255
    %5069 = vmatprep.subr.mxu0 %v3260
    %5070 = vmatpush1.msra.mxu0 %v3259
    %5071 = vmatprep.subr.mxu0 %v3264
    %5072 = vmatpush1.msra.mxu0 %v3263
    %5073 = vmatprep.subr.mxu0 %v3268
    %5074 = vmatpush1.msra.mxu0 %v3267
    %5075 = vmatprep.subr.mxu0 %v3272
    %5076 = vmatpush1.msra.mxu0 %v3271
    %5077 = vmatprep.subr.mxu0 %v3276
    %5078 = vmatpush1.msra.mxu0 %v3275
    %5079 = vmatprep.subr.mxu0 %v3280
    %5080 = vmatpush1.msra.mxu0 %v3279
    %5081 = vmatprep.subr.mxu0 %v3284
    %5082 = vmatpush1.msra.mxu0 %v3283
    %5083 = vmatprep.subr.mxu0 %v3288
    %5084 = vmatpush1.msra.mxu0 %v3287
    %5085 = vmatprep.subr.mxu0 %v3292
    %5086 = vmatpush1.msra.mxu0 %v3291
    %5087 = vmatprep.subr.mxu0 %v3296
    %5088 = vmatpush1.msra.mxu0 %v3295
    %5089 = vmatprep.subr.mxu0 %v3300
    %5090 = vmatpush1.msra.mxu0 %v3299
    %5091 = vmatprep.subr.mxu0 %v3304
    %5092 = vmatpush1.msra.mxu0 %v3303
    %5093 = vmatprep.subr.mxu0 %v3308
    %5094 = vmatpush1.msra.mxu0 %v3307
    %5095 = vmatprep.subr.mxu0 %v3312
    %5096 = vmatpush1.msra.mxu0 %v3311
    %5097 = vmatprep.subr.mxu0 %v3316
    %5098 = vmatpush1.msra.mxu0 %v3315
    %5099 = vmatprep.subr.mxu0 %v3320
    %5100 = vmatpush1.msra.mxu0 %v3319
    %5101 = vmatprep.subr.mxu0 %v3324
    %5102 = vmatpush1.msra.mxu0 %v3323
    %5103 = vmatprep.subr.mxu0 %v3328
    %5104 = vmatpush1.msra.mxu0 %v3327
    %5105 = vmatprep.subr.mxu0 %v3332
    %5106 = vmatpush1.msra.mxu0 %v3331
    %5107 = vmatprep.subr.mxu0 %v3336
    %5108 = vmatpush1.msra.mxu0 %v3335
    %5109 = vmatprep.subr.mxu0 %v3340
    %5110 = vmatpush1.msra.mxu0 %v3339
    %5111 = vmatprep.subr.mxu0 %v3344
    %5112 = vmatpush1.msra.mxu0 %v3343
    %5113 = vmatprep.subr.mxu0 %v3348
    %5114 = vmatpush1.msra.mxu0 %v3347
    %5115 = vmatprep.subr.mxu0 %v3352
    %5116 = vmatpush1.msra.mxu0 %v3351
    %5117 = vmatprep.subr.mxu0 %v3356
    %5118 = vmatpush1.msra.mxu0 %v3355
    %5119 = vmatprep.subr.mxu0 %v3360
    %5120 = vmatpush1.msra.mxu0 %v3359
    %5121 = vmatprep.subr.mxu0 %v3364
    %5122 = vmatpush1.msra.mxu0 %v3363
    %5123 = vmatprep.subr.mxu0 %v3368
    %5124 = vmatpush1.msra.mxu0 %v3367
    %5125 = vmatprep.subr.mxu0 %v3372
    %5126 = vmatpush1.msra.mxu0 %v3371
    %5127 = vmatprep.mubr.f32.mxu0 %v2532
    %5128 = vmatmul.mubr.f32.gmra.mrb[0].mxu0 %v1426
    %v5129 = vpop.f32.mrb[0].mxu0
    %v5130 = vadd.f32 %v4988, %v5129
    %v5131 = vpop.f32.mrb[0].mxu0
    %v5132 = vadd.f32 %v4990, %v5131
    %5133 = vdwg.mxu0
    %5134 = vmatprep.subr.mxu0 %v3250
    %5135 = vmatpush1.msra.mxu0 %v3249
    %5136 = vmatprep.subr.mxu0 %v3254
    %5137 = vmatpush1.msra.mxu0 %v3253
    %5138 = vmatprep.subr.mxu0 %v3258
    %5139 = vmatpush1.msra.mxu0 %v3257
    %5140 = vmatprep.subr.mxu0 %v3262
    %5141 = vmatpush1.msra.mxu0 %v3261
    %5142 = vmatprep.subr.mxu0 %v3266
    %5143 = vmatpush1.msra.mxu0 %v3265
    %5144 = vmatprep.subr.mxu0 %v3270
    %5145 = vmatpush1.msra.mxu0 %v3269
    %5146 = vmatprep.subr.mxu0 %v3274
    %5147 = vmatpush1.msra.mxu0 %v3273
    %5148 = vmatprep.subr.mxu0 %v3278
    %5149 = vmatpush1.msra.mxu0 %v3277
    %5150 = vmatprep.subr.mxu0 %v3282
    %5151 = vmatpush1.msra.mxu0 %v3281
    %5152 = vmatprep.subr.mxu0 %v3286
    %5153 = vmatpush1.msra.mxu0 %v3285
    %5154 = vmatprep.subr.mxu0 %v3290
    %5155 = vmatpush1.msra.mxu0 %v3289
    %5156 = vmatprep.subr.mxu0 %v3294
    %5157 = vmatpush1.msra.mxu0 %v3293
    %5158 = vmatprep.subr.mxu0 %v3298
    %5159 = vmatpush1.msra.mxu0 %v3297
    %5160 = vmatprep.subr.mxu0 %v3302
    %5161 = vmatpush1.msra.mxu0 %v3301
    %5162 = vmatprep.subr.mxu0 %v3306
    %5163 = vmatpush1.msra.mxu0 %v3305
    %5164 = vmatprep.subr.mxu0 %v3310
    %5165 = vmatpush1.msra.mxu0 %v3309
    %5166 = vmatprep.subr.mxu0 %v3314
    %5167 = vmatpush1.msra.mxu0 %v3313
    %5168 = vmatprep.subr.mxu0 %v3318
    %5169 = vmatpush1.msra.mxu0 %v3317
    %5170 = vmatprep.subr.mxu0 %v3322
    %5171 = vmatpush1.msra.mxu0 %v3321
    %5172 = vmatprep.subr.mxu0 %v3326
    %5173 = vmatpush1.msra.mxu0 %v3325
    %5174 = vmatprep.subr.mxu0 %v3330
    %5175 = vmatpush1.msra.mxu0 %v3329
    %5176 = vmatprep.subr.mxu0 %v3334
    %5177 = vmatpush1.msra.mxu0 %v3333
    %5178 = vmatprep.subr.mxu0 %v3338
    %5179 = vmatpush1.msra.mxu0 %v3337
    %5180 = vmatprep.subr.mxu0 %v3342
    %5181 = vmatpush1.msra.mxu0 %v3341
    %5182 = vmatprep.subr.mxu0 %v3346
    %5183 = vmatpush1.msra.mxu0 %v3345
    %5184 = vmatprep.subr.mxu0 %v3350
    %5185 = vmatpush1.msra.mxu0 %v3349
    %5186 = vmatprep.subr.mxu0 %v3354
    %5187 = vmatpush1.msra.mxu0 %v3353
    %5188 = vmatprep.subr.mxu0 %v3358
    %5189 = vmatpush1.msra.mxu0 %v3357
    %5190 = vmatprep.subr.mxu0 %v3362
    %5191 = vmatpush1.msra.mxu0 %v3361
    %5192 = vmatprep.subr.mxu0 %v3366
    %5193 = vmatpush1.msra.mxu0 %v3365
    %5194 = vmatprep.subr.mxu0 %v3370
    %5195 = vmatpush1.msra.mxu0 %v3369
    %5196 = vmatprep.subr.mxu0 %v3374
    %5197 = vmatpush1.msra.mxu0 %v3373
    %5198 = vmatprep.mubr.f32.mxu0 %v2532
    %5199 = vmatmul.mubr.f32.gmra.mrb[0].mxu0 %v1426
    %v5200 = vpop.f32.mrb[0].mxu0
    %v5201 = vadd.f32 %v5059, %v5200
    %v5202 = vpop.f32.mrb[0].mxu0
    %v5203 = vadd.f32 %v5061, %v5202
    %5204 = vdwg.mxu0
    %v5205 = vadd.f32 %v5130, %v3727
    %v5206 = vadd.f32 %v5132, %v3731
    %v5207 = vadd.f32 %v5201, %v3735
    %v5208 = vadd.f32 %v5203, %v3739
    %5209 = vmatprep.subr.mxu0 %v3877
    %5210 = vmatpush1.msra.mxu0 %v3876
    %5211 = vmatprep.subr.mxu0 %v3881
    %5212 = vmatpush1.msra.mxu0 %v3880
    %5213 = vmatprep.subr.mxu0 %v3885
    %5214 = vmatpush1.msra.mxu0 %v3884
    %5215 = vmatprep.subr.mxu0 %v3889
    %5216 = vmatpush1.msra.mxu0 %v3888
    %5217 = vmatprep.subr.mxu0 %v3893
    %5218 = vmatpush1.msra.mxu0 %v3892
    %5219 = vmatprep.subr.mxu0 %v3897
    %5220 = vmatpush1.msra.mxu0 %v3896
    %5221 = vmatprep.subr.mxu0 %v3901
    %5222 = vmatpush1.msra.mxu0 %v3900
    %5223 = vmatprep.subr.mxu0 %v3905
    %5224 = vmatpush1.msra.mxu0 %v3904
    %5225 = vmatprep.subr.mxu0 %v3909
    %5226 = vmatpush1.msra.mxu0 %v3908
    %5227 = vmatprep.subr.mxu0 %v3913
    %5228 = vmatpush1.msra.mxu0 %v3912
    %5229 = vmatprep.subr.mxu0 %v3917
    %5230 = vmatpush1.msra.mxu0 %v3916
    %5231 = vmatprep.subr.mxu0 %v3921
    %5232 = vmatpush1.msra.mxu0 %v3920
    %5233 = vmatprep.subr.mxu0 %v3925
    %5234 = vmatpush1.msra.mxu0 %v3924
    %5235 = vmatprep.subr.mxu0 %v3929
    %5236 = vmatpush1.msra.mxu0 %v3928
    %5237 = vmatprep.subr.mxu0 %v3933
    %5238 = vmatpush1.msra.mxu0 %v3932
    %5239 = vmatprep.subr.mxu0 %v3937
    %5240 = vmatpush1.msra.mxu0 %v3936
    %5241 = vmatprep.subr.mxu0 0.0
    %5242 = vmatpush1.msra.mxu0 0.0
    %5243 = vmatprep.subr.mxu0 0.0
    %5244 = vmatpush1.msra.mxu0 0.0
    %5245 = vmatprep.subr.mxu0 0.0
    %5246 = vmatpush1.msra.mxu0 0.0
    %5247 = vmatprep.subr.mxu0 0.0
    %5248 = vmatpush1.msra.mxu0 0.0
    %5249 = vmatprep.subr.mxu0 0.0
    %5250 = vmatpush1.msra.mxu0 0.0
    %5251 = vmatprep.subr.mxu0 0.0
    %5252 = vmatpush1.msra.mxu0 0.0
    %5253 = vmatprep.subr.mxu0 0.0
    %5254 = vmatpush1.msra.mxu0 0.0
    %5255 = vmatprep.subr.mxu0 0.0
    %5256 = vmatpush1.msra.mxu0 0.0
    %5257 = vmatprep.subr.mxu0 0.0
    %5258 = vmatpush1.msra.mxu0 0.0
    %5259 = vmatprep.subr.mxu0 0.0
    %5260 = vmatpush1.msra.mxu0 0.0
    %5261 = vmatprep.subr.mxu0 0.0
    %5262 = vmatpush1.msra.mxu0 0.0
    %5263 = vmatprep.subr.mxu0 0.0
    %5264 = vmatpush1.msra.mxu0 0.0
    %5265 = vmatprep.subr.mxu0 0.0
    %5266 = vmatpush1.msra.mxu0 0.0
    %5267 = vmatprep.subr.mxu0 0.0
    %5268 = vmatpush1.msra.mxu0 0.0
    %5269 = vmatprep.subr.mxu0 0.0
    %5270 = vmatpush1.msra.mxu0 0.0
    %5271 = vmatprep.subr.mxu0 0.0
    %5272 = vmatpush1.msra.mxu0 0.0
    %5273 = vmatprep.mubr.f32.mxu0 0.0
    %5274 = vmatmul.mubr.f32.gmra.mrb[0].mxu0 %v4920
    %v5275 = vpop.f32.mrb[0].mxu0
    %v5276 = vadd.f32 0.0, %v5275
    %v5277 = vpop.f32.mrb[0].mxu0
    %v5278 = vadd.f32 0.0, %v5277
    %5279 = vdwg.mxu0
    %5280 = vmatprep.subr.mxu0 %v3879
    %5281 = vmatpush1.msra.mxu0 %v3878
    %5282 = vmatprep.subr.mxu0 %v3883
    %5283 = vmatpush1.msra.mxu0 %v3882
    %5284 = vmatprep.subr.mxu0 %v3887
    %5285 = vmatpush1.msra.mxu0 %v3886
    %5286 = vmatprep.subr.mxu0 %v3891
    %5287 = vmatpush1.msra.mxu0 %v3890
    %5288 = vmatprep.subr.mxu0 %v3895
    %5289 = vmatpush1.msra.mxu0 %v3894
    %5290 = vmatprep.subr.mxu0 %v3899
    %5291 = vmatpush1.msra.mxu0 %v3898
    %5292 = vmatprep.subr.mxu0 %v3903
    %5293 = vmatpush1.msra.mxu0 %v3902
    %5294 = vmatprep.subr.mxu0 %v3907
    %5295 = vmatpush1.msra.mxu0 %v3906
    %5296 = vmatprep.subr.mxu0 %v3911
    %5297 = vmatpush1.msra.mxu0 %v3910
    %5298 = vmatprep.subr.mxu0 %v3915
    %5299 = vmatpush1.msra.mxu0 %v3914
    %5300 = vmatprep.subr.mxu0 %v3919
    %5301 = vmatpush1.msra.mxu0 %v3918
    %5302 = vmatprep.subr.mxu0 %v3923
    %5303 = vmatpush1.msra.mxu0 %v3922
    %5304 = vmatprep.subr.mxu0 %v3927
    %5305 = vmatpush1.msra.mxu0 %v3926
    %5306 = vmatprep.subr.mxu0 %v3931
    %5307 = vmatpush1.msra.mxu0 %v3930
    %5308 = vmatprep.subr.mxu0 %v3935
    %5309 = vmatpush1.msra.mxu0 %v3934
    %5310 = vmatprep.subr.mxu0 %v3939
    %5311 = vmatpush1.msra.mxu0 %v3938
    %5312 = vmatprep.subr.mxu0 0.0
    %5313 = vmatpush1.msra.mxu0 0.0
    %5314 = vmatprep.subr.mxu0 0.0
    %5315 = vmatpush1.msra.mxu0 0.0
    %5316 = vmatprep.subr.mxu0 0.0
    %5317 = vmatpush1.msra.mxu0 0.0
    %5318 = vmatprep.subr.mxu0 0.0
    %5319 = vmatpush1.msra.mxu0 0.0
    %5320 = vmatprep.subr.mxu0 0.0
    %5321 = vmatpush1.msra.mxu0 0.0
    %5322 = vmatprep.subr.mxu0 0.0
    %5323 = vmatpush1.msra.mxu0 0.0
    %5324 = vmatprep.subr.mxu0 0.0
    %5325 = vmatpush1.msra.mxu0 0.0
    %5326 = vmatprep.subr.mxu0 0.0
    %5327 = vmatpush1.msra.mxu0 0.0
    %5328 = vmatprep.subr.mxu0 0.0
    %5329 = vmatpush1.msra.mxu0 0.0
    %5330 = vmatprep.subr.mxu0 0.0
    %5331 = vmatpush1.msra.mxu0 0.0
    %5332 = vmatprep.subr.mxu0 0.0
    %5333 = vmatpush1.msra.mxu0 0.0
    %5334 = vmatprep.subr.mxu0 0.0
    %5335 = vmatpush1.msra.mxu0 0.0
    %5336 = vmatprep.subr.mxu0 0.0
    %5337 = vmatpush1.msra.mxu0 0.0
    %5338 = vmatprep.subr.mxu0 0.0
    %5339 = vmatpush1.msra.mxu0 0.0
    %5340 = vmatprep.subr.mxu0 0.0
    %5341 = vmatpush1.msra.mxu0 0.0
    %5342 = vmatprep.subr.mxu0 0.0
    %5343 = vmatpush1.msra.mxu0 0.0
    %5344 = vmatprep.mubr.f32.mxu0 0.0
    %5345 = vmatmul.mubr.f32.gmra.mrb[0].mxu0 %v4920
    %v5346 = vpop.f32.mrb[0].mxu0
    %v5347 = vadd.f32 0.0, %v5346
    %v5348 = vpop.f32.mrb[0].mxu0
    %v5349 = vadd.f32 0.0, %v5348
    %5350 = vdwg.mxu0
    %5351 = vmatprep.subr.mxu0 %v3749
    %5352 = vmatpush1.msra.mxu0 %v3748
    %5353 = vmatprep.subr.mxu0 %v3753
    %5354 = vmatpush1.msra.mxu0 %v3752
    %5355 = vmatprep.subr.mxu0 %v3757
    %5356 = vmatpush1.msra.mxu0 %v3756
    %5357 = vmatprep.subr.mxu0 %v3761
    %5358 = vmatpush1.msra.mxu0 %v3760
    %5359 = vmatprep.subr.mxu0 %v3765
    %5360 = vmatpush1.msra.mxu0 %v3764
    %5361 = vmatprep.subr.mxu0 %v3769
    %5362 = vmatpush1.msra.mxu0 %v3768
    %5363 = vmatprep.subr.mxu0 %v3773
    %5364 = vmatpush1.msra.mxu0 %v3772
    %5365 = vmatprep.subr.mxu0 %v3777
    %5366 = vmatpush1.msra.mxu0 %v3776
    %5367 = vmatprep.subr.mxu0 %v3781
    %5368 = vmatpush1.msra.mxu0 %v3780
    %5369 = vmatprep.subr.mxu0 %v3785
    %5370 = vmatpush1.msra.mxu0 %v3784
    %5371 = vmatprep.subr.mxu0 %v3789
    %5372 = vmatpush1.msra.mxu0 %v3788
    %5373 = vmatprep.subr.mxu0 %v3793
    %5374 = vmatpush1.msra.mxu0 %v3792
    %5375 = vmatprep.subr.mxu0 %v3797
    %5376 = vmatpush1.msra.mxu0 %v3796
    %5377 = vmatprep.subr.mxu0 %v3801
    %5378 = vmatpush1.msra.mxu0 %v3800
    %5379 = vmatprep.subr.mxu0 %v3805
    %5380 = vmatpush1.msra.mxu0 %v3804
    %5381 = vmatprep.subr.mxu0 %v3809
    %5382 = vmatpush1.msra.mxu0 %v3808
    %5383 = vmatprep.subr.mxu0 %v3813
    %5384 = vmatpush1.msra.mxu0 %v3812
    %5385 = vmatprep.subr.mxu0 %v3817
    %5386 = vmatpush1.msra.mxu0 %v3816
    %5387 = vmatprep.subr.mxu0 %v3821
    %5388 = vmatpush1.msra.mxu0 %v3820
    %5389 = vmatprep.subr.mxu0 %v3825
    %5390 = vmatpush1.msra.mxu0 %v3824
    %5391 = vmatprep.subr.mxu0 %v3829
    %5392 = vmatpush1.msra.mxu0 %v3828
    %5393 = vmatprep.subr.mxu0 %v3833
    %5394 = vmatpush1.msra.mxu0 %v3832
    %5395 = vmatprep.subr.mxu0 %v3837
    %5396 = vmatpush1.msra.mxu0 %v3836
    %5397 = vmatprep.subr.mxu0 %v3841
    %5398 = vmatpush1.msra.mxu0 %v3840
    %5399 = vmatprep.subr.mxu0 %v3845
    %5400 = vmatpush1.msra.mxu0 %v3844
    %5401 = vmatprep.subr.mxu0 %v3849
    %5402 = vmatpush1.msra.mxu0 %v3848
    %5403 = vmatprep.subr.mxu0 %v3853
    %5404 = vmatpush1.msra.mxu0 %v3852
    %5405 = vmatprep.subr.mxu0 %v3857
    %5406 = vmatpush1.msra.mxu0 %v3856
    %5407 = vmatprep.subr.mxu0 %v3861
    %5408 = vmatpush1.msra.mxu0 %v3860
    %5409 = vmatprep.subr.mxu0 %v3865
    %5410 = vmatpush1.msra.mxu0 %v3864
    %5411 = vmatprep.subr.mxu0 %v3869
    %5412 = vmatpush1.msra.mxu0 %v3868
    %5413 = vmatprep.subr.mxu0 %v3873
    %5414 = vmatpush1.msra.mxu0 %v3872
    %5415 = vmatprep.mubr.f32.mxu0 %v1450
    %5416 = vmatmul.mubr.f32.gmra.mrb[0].mxu0 %v2508
    %v5417 = vpop.f32.mrb[0].mxu0
    %v5418 = vadd.f32 %v5276, %v5417
    %v5419 = vpop.f32.mrb[0].mxu0
    %v5420 = vadd.f32 %v5278, %v5419
    %5421 = vdwg.mxu0
    %5422 = vmatprep.subr.mxu0 %v3751
    %5423 = vmatpush1.msra.mxu0 %v3750
    %5424 = vmatprep.subr.mxu0 %v3755
    %5425 = vmatpush1.msra.mxu0 %v3754
    %5426 = vmatprep.subr.mxu0 %v3759
    %5427 = vmatpush1.msra.mxu0 %v3758
    %5428 = vmatprep.subr.mxu0 %v3763
    %5429 = vmatpush1.msra.mxu0 %v3762
    %5430 = vmatprep.subr.mxu0 %v3767
    %5431 = vmatpush1.msra.mxu0 %v3766
    %5432 = vmatprep.subr.mxu0 %v3771
    %5433 = vmatpush1.msra.mxu0 %v3770
    %5434 = vmatprep.subr.mxu0 %v3775
    %5435 = vmatpush1.msra.mxu0 %v3774
    %5436 = vmatprep.subr.mxu0 %v3779
    %5437 = vmatpush1.msra.mxu0 %v3778
    %5438 = vmatprep.subr.mxu0 %v3783
    %5439 = vmatpush1.msra.mxu0 %v3782
    %5440 = vmatprep.subr.mxu0 %v3787
    %5441 = vmatpush1.msra.mxu0 %v3786
    %5442 = vmatprep.subr.mxu0 %v3791
    %5443 = vmatpush1.msra.mxu0 %v3790
    %5444 = vmatprep.subr.mxu0 %v3795
    %5445 = vmatpush1.msra.mxu0 %v3794
    %5446 = vmatprep.subr.mxu0 %v3799
    %5447 = vmatpush1.msra.mxu0 %v3798
    %5448 = vmatprep.subr.mxu0 %v3803
    %5449 = vmatpush1.msra.mxu0 %v3802
    %5450 = vmatprep.subr.mxu0 %v3807
    %5451 = vmatpush1.msra.mxu0 %v3806
    %5452 = vmatprep.subr.mxu0 %v3811
    %5453 = vmatpush1.msra.mxu0 %v3810
    %5454 = vmatprep.subr.mxu0 %v3815
    %5455 = vmatpush1.msra.mxu0 %v3814
    %5456 = vmatprep.subr.mxu0 %v3819
    %5457 = vmatpush1.msra.mxu0 %v3818
    %5458 = vmatprep.subr.mxu0 %v3823
    %5459 = vmatpush1.msra.mxu0 %v3822
    %5460 = vmatprep.subr.mxu0 %v3827
    %5461 = vmatpush1.msra.mxu0 %v3826
    %5462 = vmatprep.subr.mxu0 %v3831
    %5463 = vmatpush1.msra.mxu0 %v3830
    %5464 = vmatprep.subr.mxu0 %v3835
    %5465 = vmatpush1.msra.mxu0 %v3834
    %5466 = vmatprep.subr.mxu0 %v3839
    %5467 = vmatpush1.msra.mxu0 %v3838
    %5468 = vmatprep.subr.mxu0 %v3843
    %5469 = vmatpush1.msra.mxu0 %v3842
    %5470 = vmatprep.subr.mxu0 %v3847
    %5471 = vmatpush1.msra.mxu0 %v3846
    %5472 = vmatprep.subr.mxu0 %v3851
    %5473 = vmatpush1.msra.mxu0 %v3850
    %5474 = vmatprep.subr.mxu0 %v3855
    %5475 = vmatpush1.msra.mxu0 %v3854
    %5476 = vmatprep.subr.mxu0 %v3859
    %5477 = vmatpush1.msra.mxu0 %v3858
    %5478 = vmatprep.subr.mxu0 %v3863
    %5479 = vmatpush1.msra.mxu0 %v3862
    %5480 = vmatprep.subr.mxu0 %v3867
    %5481 = vmatpush1.msra.mxu0 %v3866
    %5482 = vmatprep.subr.mxu0 %v3871
    %5483 = vmatpush1.msra.mxu0 %v3870
    %5484 = vmatprep.subr.mxu0 %v3875
    %5485 = vmatpush1.msra.mxu0 %v3874
    %5486 = vmatprep.mubr.f32.mxu0 %v1450
    %5487 = vmatmul.mubr.f32.gmra.mrb[0].mxu0 %v2508
    %v5488 = vpop.f32.mrb[0].mxu0
    %v5489 = vadd.f32 %v5347, %v5488
    %v5490 = vpop.f32.mrb[0].mxu0
    %v5491 = vadd.f32 %v5349, %v5490
    %5492 = vdwg.mxu0
    %v5493 = vadd.f32 %v5418, %v4228
    %v5494 = vadd.f32 %v5420, %v4232
    %v5495 = vadd.f32 %v5489, %v4236
    %v5496 = vadd.f32 %v5491, %v4240
    %v5497 = vxor.u32 %v5205, 2147483648
    %v5498 = vmul.f32 %v5497, 1.442695
    %v5499 = vpow.pop %v5498
    %v5500 = vadd.f32 %v5499, 1.0
    %v5501 = vrcp.pop %v5500
    %v5502 = vmul.f32 1.0, %v5501
    %v5503 = vxor.u32 %v5206, 2147483648
    %v5504 = vmul.f32 %v5503, 1.442695
    %v5505 = vpow.pop %v5504
    %v5506 = vadd.f32 %v5505, 1.0
    %v5507 = vrcp.pop %v5506
    %v5508 = vmul.f32 1.0, %v5507
    %v5509 = vtanh.pop %v5207
    %v5510 = vxor.u32 %v5208, 2147483648
    %v5511 = vmul.f32 %v5510, 1.442695
    %v5512 = vpow.pop %v5511
    %v5513 = vadd.f32 %v5512, 1.0
    %v5514 = vrcp.pop %v5513
    %v5515 = vmul.f32 1.0, %v5514
    %v5516 = vmul.f32 %v5508, %v4894
    %v5517 = vmul.f32 %v5502, %v5509
    %v5518 = vadd.f32 %v5516, %v5517
    %v5519 = vtanh.pop %v5518
    %v5520 = vmul.f32 %v5515, %v5519
    %v5521 = vxor.u32 %v5493, 2147483648
    %v5522 = vmul.f32 %v5521, 1.442695
    %v5523 = vpow.pop %v5522
    %v5524 = vadd.f32 %v5523, 1.0
    %v5525 = vrcp.pop %v5524
    %v5526 = vmul.f32 1.0, %v5525
    %v5527 = vxor.u32 %v5494, 2147483648
    %v5528 = vmul.f32 %v5527, 1.442695
    %v5529 = vpow.pop %v5528
    %v5530 = vadd.f32 %v5529, 1.0
    %v5531 = vrcp.pop %v5530
    %v5532 = vmul.f32 1.0, %v5531
    %v5533 = vtanh.pop %v5495
    %v5534 = vxor.u32 %v5496, 2147483648
    %v5535 = vmul.f32 %v5534, 1.442695
    %v5536 = vpow.pop %v5535
    %v5537 = vadd.f32 %v5536, 1.0
    %v5538 = vrcp.pop %v5537
    %v5539 = vmul.f32 1.0, %v5538
    %v5540 = vmul.f32 %v5532, %v4918
    %v5541 = vmul.f32 %v5526, %v5533
    %v5542 = vadd.f32 %v5540, %v5541
    %v5543 = vtanh.pop %v5542
    %v5544 = vmul.f32 %v5539, %v5543
    %5545 = vmatprep.subr.mxu0 %v3376
    %5546 = vmatpush1.msra.mxu0 %v3375
    %5547 = vmatprep.subr.mxu0 %v3380
    %5548 = vmatpush1.msra.mxu0 %v3379
    %5549 = vmatprep.subr.mxu0 %v3384
    %5550 = vmatpush1.msra.mxu0 %v3383
    %5551 = vmatprep.subr.mxu0 %v3388
    %5552 = vmatpush1.msra.mxu0 %v3387
    %5553 = vmatprep.subr.mxu0 %v3392
    %5554 = vmatpush1.msra.mxu0 %v3391
    %5555 = vmatprep.subr.mxu0 %v3396
    %5556 = vmatpush1.msra.mxu0 %v3395
    %5557 = vmatprep.subr.mxu0 %v3400
    %5558 = vmatpush1.msra.mxu0 %v3399
    %5559 = vmatprep.subr.mxu0 %v3404
    %5560 = vmatpush1.msra.mxu0 %v3403
    %5561 = vmatprep.subr.mxu0 %v3408
    %5562 = vmatpush1.msra.mxu0 %v3407
    %5563 = vmatprep.subr.mxu0 %v3412
    %5564 = vmatpush1.msra.mxu0 %v3411
    %5565 = vmatprep.subr.mxu0 %v3416
    %5566 = vmatpush1.msra.mxu0 %v3415
    %5567 = vmatprep.subr.mxu0 %v3420
    %5568 = vmatpush1.msra.mxu0 %v3419
    %5569 = vmatprep.subr.mxu0 %v3424
    %5570 = vmatpush1.msra.mxu0 %v3423
    %5571 = vmatprep.subr.mxu0 %v3428
    %5572 = vmatpush1.msra.mxu0 %v3427
    %5573 = vmatprep.subr.mxu0 %v3432
    %5574 = vmatpush1.msra.mxu0 %v3431
    %5575 = vmatprep.subr.mxu0 %v3436
    %5576 = vmatpush1.msra.mxu0 %v3435
    %5577 = vmatprep.subr.mxu0 0.0
    %5578 = vmatpush1.msra.mxu0 0.0
    %5579 = vmatprep.subr.mxu0 0.0
    %5580 = vmatpush1.msra.mxu0 0.0
    %5581 = vmatprep.subr.mxu0 0.0
    %5582 = vmatpush1.msra.mxu0 0.0
    %5583 = vmatprep.subr.mxu0 0.0
    %5584 = vmatpush1.msra.mxu0 0.0
    %5585 = vmatprep.subr.mxu0 0.0
    %5586 = vmatpush1.msra.mxu0 0.0
    %5587 = vmatprep.subr.mxu0 0.0
    %5588 = vmatpush1.msra.mxu0 0.0
    %5589 = vmatprep.subr.mxu0 0.0
    %5590 = vmatpush1.msra.mxu0 0.0
    %5591 = vmatprep.subr.mxu0 0.0
    %5592 = vmatpush1.msra.mxu0 0.0
    %5593 = vmatprep.subr.mxu0 0.0
    %5594 = vmatpush1.msra.mxu0 0.0
    %5595 = vmatprep.subr.mxu0 0.0
    %5596 = vmatpush1.msra.mxu0 0.0
    %5597 = vmatprep.subr.mxu0 0.0
    %5598 = vmatpush1.msra.mxu0 0.0
    %5599 = vmatprep.subr.mxu0 0.0
    %5600 = vmatpush1.msra.mxu0 0.0
    %5601 = vmatprep.subr.mxu0 0.0
    %5602 = vmatpush1.msra.mxu0 0.0
    %5603 = vmatprep.subr.mxu0 0.0
    %5604 = vmatpush1.msra.mxu0 0.0
    %5605 = vmatprep.subr.mxu0 0.0
    %5606 = vmatpush1.msra.mxu0 0.0
    %5607 = vmatprep.subr.mxu0 0.0
    %5608 = vmatpush1.msra.mxu0 0.0
    %5609 = vmatprep.mubr.f32.mxu0 0.0
    %5610 = vmatmul.mubr.f32.gmra.mrb[0].mxu0 %v5520
    %v5611 = vpop.f32.mrb[0].mxu0
    %v5612 = vadd.f32 0.0, %v5611
    %v5613 = vpop.f32.mrb[0].mxu0
    %v5614 = vadd.f32 0.0, %v5613
    %5615 = vdwg.mxu0
    %5616 = vmatprep.subr.mxu0 %v3378
    %5617 = vmatpush1.msra.mxu0 %v3377
    %5618 = vmatprep.subr.mxu0 %v3382
    %5619 = vmatpush1.msra.mxu0 %v3381
    %5620 = vmatprep.subr.mxu0 %v3386
    %5621 = vmatpush1.msra.mxu0 %v3385
    %5622 = vmatprep.subr.mxu0 %v3390
    %5623 = vmatpush1.msra.mxu0 %v3389
    %5624 = vmatprep.subr.mxu0 %v3394
    %5625 = vmatpush1.msra.mxu0 %v3393
    %5626 = vmatprep.subr.mxu0 %v3398
    %5627 = vmatpush1.msra.mxu0 %v3397
    %5628 = vmatprep.subr.mxu0 %v3402
    %5629 = vmatpush1.msra.mxu0 %v3401
    %5630 = vmatprep.subr.mxu0 %v3406
    %5631 = vmatpush1.msra.mxu0 %v3405
    %5632 = vmatprep.subr.mxu0 %v3410
    %5633 = vmatpush1.msra.mxu0 %v3409
    %5634 = vmatprep.subr.mxu0 %v3414
    %5635 = vmatpush1.msra.mxu0 %v3413
    %5636 = vmatprep.subr.mxu0 %v3418
    %5637 = vmatpush1.msra.mxu0 %v3417
    %5638 = vmatprep.subr.mxu0 %v3422
    %5639 = vmatpush1.msra.mxu0 %v3421
    %5640 = vmatprep.subr.mxu0 %v3426
    %5641 = vmatpush1.msra.mxu0 %v3425
    %5642 = vmatprep.subr.mxu0 %v3430
    %5643 = vmatpush1.msra.mxu0 %v3429
    %5644 = vmatprep.subr.mxu0 %v3434
    %5645 = vmatpush1.msra.mxu0 %v3433
    %5646 = vmatprep.subr.mxu0 %v3438
    %5647 = vmatpush1.msra.mxu0 %v3437
    %5648 = vmatprep.subr.mxu0 0.0
    %5649 = vmatpush1.msra.mxu0 0.0
    %5650 = vmatprep.subr.mxu0 0.0
    %5651 = vmatpush1.msra.mxu0 0.0
    %5652 = vmatprep.subr.mxu0 0.0
    %5653 = vmatpush1.msra.mxu0 0.0
    %5654 = vmatprep.subr.mxu0 0.0
    %5655 = vmatpush1.msra.mxu0 0.0
    %5656 = vmatprep.subr.mxu0 0.0
    %5657 = vmatpush1.msra.mxu0 0.0
    %5658 = vmatprep.subr.mxu0 0.0
    %5659 = vmatpush1.msra.mxu0 0.0
    %5660 = vmatprep.subr.mxu0 0.0
    %5661 = vmatpush1.msra.mxu0 0.0
    %5662 = vmatprep.subr.mxu0 0.0
    %5663 = vmatpush1.msra.mxu0 0.0
    %5664 = vmatprep.subr.mxu0 0.0
    %5665 = vmatpush1.msra.mxu0 0.0
    %5666 = vmatprep.subr.mxu0 0.0
    %5667 = vmatpush1.msra.mxu0 0.0
    %5668 = vmatprep.subr.mxu0 0.0
    %5669 = vmatpush1.msra.mxu0 0.0
    %5670 = vmatprep.subr.mxu0 0.0
    %5671 = vmatpush1.msra.mxu0 0.0
    %5672 = vmatprep.subr.mxu0 0.0
    %5673 = vmatpush1.msra.mxu0 0.0
    %5674 = vmatprep.subr.mxu0 0.0
    %5675 = vmatpush1.msra.mxu0 0.0
    %5676 = vmatprep.subr.mxu0 0.0
    %5677 = vmatpush1.msra.mxu0 0.0
    %5678 = vmatprep.subr.mxu0 0.0
    %5679 = vmatpush1.msra.mxu0 0.0
    %5680 = vmatprep.mubr.f32.mxu0 0.0
    %5681 = vmatmul.mubr.f32.gmra.mrb[0].mxu0 %v5520
    %v5682 = vpop.f32.mrb[0].mxu0
    %v5683 = vadd.f32 0.0, %v5682
    %v5684 = vpop.f32.mrb[0].mxu0
    %v5685 = vadd.f32 0.0, %v5684
    %5686 = vdwg.mxu0
    %5687 = vmatprep.subr.mxu0 %v3248
    %5688 = vmatpush1.msra.mxu0 %v3247
    %5689 = vmatprep.subr.mxu0 %v3252
    %5690 = vmatpush1.msra.mxu0 %v3251
    %5691 = vmatprep.subr.mxu0 %v3256
    %5692 = vmatpush1.msra.mxu0 %v3255
    %5693 = vmatprep.subr.mxu0 %v3260
    %5694 = vmatpush1.msra.mxu0 %v3259
    %5695 = vmatprep.subr.mxu0 %v3264
    %5696 = vmatpush1.msra.mxu0 %v3263
    %5697 = vmatprep.subr.mxu0 %v3268
    %5698 = vmatpush1.msra.mxu0 %v3267
    %5699 = vmatprep.subr.mxu0 %v3272
    %5700 = vmatpush1.msra.mxu0 %v3271
    %5701 = vmatprep.subr.mxu0 %v3276
    %5702 = vmatpush1.msra.mxu0 %v3275
    %5703 = vmatprep.subr.mxu0 %v3280
    %5704 = vmatpush1.msra.mxu0 %v3279
    %5705 = vmatprep.subr.mxu0 %v3284
    %5706 = vmatpush1.msra.mxu0 %v3283
    %5707 = vmatprep.subr.mxu0 %v3288
    %5708 = vmatpush1.msra.mxu0 %v3287
    %5709 = vmatprep.subr.mxu0 %v3292
    %5710 = vmatpush1.msra.mxu0 %v3291
    %5711 = vmatprep.subr.mxu0 %v3296
    %5712 = vmatpush1.msra.mxu0 %v3295
    %5713 = vmatprep.subr.mxu0 %v3300
    %5714 = vmatpush1.msra.mxu0 %v3299
    %5715 = vmatprep.subr.mxu0 %v3304
    %5716 = vmatpush1.msra.mxu0 %v3303
    %5717 = vmatprep.subr.mxu0 %v3308
    %5718 = vmatpush1.msra.mxu0 %v3307
    %5719 = vmatprep.subr.mxu0 %v3312
    %5720 = vmatpush1.msra.mxu0 %v3311
    %5721 = vmatprep.subr.mxu0 %v3316
    %5722 = vmatpush1.msra.mxu0 %v3315
    %5723 = vmatprep.subr.mxu0 %v3320
    %5724 = vmatpush1.msra.mxu0 %v3319
    %5725 = vmatprep.subr.mxu0 %v3324
    %5726 = vmatpush1.msra.mxu0 %v3323
    %5727 = vmatprep.subr.mxu0 %v3328
    %5728 = vmatpush1.msra.mxu0 %v3327
    %5729 = vmatprep.subr.mxu0 %v3332
    %5730 = vmatpush1.msra.mxu0 %v3331
    %5731 = vmatprep.subr.mxu0 %v3336
    %5732 = vmatpush1.msra.mxu0 %v3335
    %5733 = vmatprep.subr.mxu0 %v3340
    %5734 = vmatpush1.msra.mxu0 %v3339
    %5735 = vmatprep.subr.mxu0 %v3344
    %5736 = vmatpush1.msra.mxu0 %v3343
    %5737 = vmatprep.subr.mxu0 %v3348
    %5738 = vmatpush1.msra.mxu0 %v3347
    %5739 = vmatprep.subr.mxu0 %v3352
    %5740 = vmatpush1.msra.mxu0 %v3351
    %5741 = vmatprep.subr.mxu0 %v3356
    %5742 = vmatpush1.msra.mxu0 %v3355
    %5743 = vmatprep.subr.mxu0 %v3360
    %5744 = vmatpush1.msra.mxu0 %v3359
    %5745 = vmatprep.subr.mxu0 %v3364
    %5746 = vmatpush1.msra.mxu0 %v3363
    %5747 = vmatprep.subr.mxu0 %v3368
    %5748 = vmatpush1.msra.mxu0 %v3367
    %5749 = vmatprep.subr.mxu0 %v3372
    %5750 = vmatpush1.msra.mxu0 %v3371
    %5751 = vmatprep.mubr.f32.mxu0 %v2176
    %5752 = vmatmul.mubr.f32.gmra.mrb[0].mxu0 %v1796
    %v5753 = vpop.f32.mrb[0].mxu0
    %v5754 = vadd.f32 %v5612, %v5753
    %v5755 = vpop.f32.mrb[0].mxu0
    %v5756 = vadd.f32 %v5614, %v5755
    %5757 = vdwg.mxu0
    %5758 = vmatprep.subr.mxu0 %v3250
    %5759 = vmatpush1.msra.mxu0 %v3249
    %5760 = vmatprep.subr.mxu0 %v3254
    %5761 = vmatpush1.msra.mxu0 %v3253
    %5762 = vmatprep.subr.mxu0 %v3258
    %5763 = vmatpush1.msra.mxu0 %v3257
    %5764 = vmatprep.subr.mxu0 %v3262
    %5765 = vmatpush1.msra.mxu0 %v3261
    %5766 = vmatprep.subr.mxu0 %v3266
    %5767 = vmatpush1.msra.mxu0 %v3265
    %5768 = vmatprep.subr.mxu0 %v3270
    %5769 = vmatpush1.msra.mxu0 %v3269
    %5770 = vmatprep.subr.mxu0 %v3274
    %5771 = vmatpush1.msra.mxu0 %v3273
    %5772 = vmatprep.subr.mxu0 %v3278
    %5773 = vmatpush1.msra.mxu0 %v3277
    %5774 = vmatprep.subr.mxu0 %v3282
    %5775 = vmatpush1.msra.mxu0 %v3281
    %5776 = vmatprep.subr.mxu0 %v3286
    %5777 = vmatpush1.msra.mxu0 %v3285
    %5778 = vmatprep.subr.mxu0 %v3290
    %5779 = vmatpush1.msra.mxu0 %v3289
    %5780 = vmatprep.subr.mxu0 %v3294
    %5781 = vmatpush1.msra.mxu0 %v3293
    %5782 = vmatprep.subr.mxu0 %v3298
    %5783 = vmatpush1.msra.mxu0 %v3297
    %5784 = vmatprep.subr.mxu0 %v3302
    %5785 = vmatpush1.msra.mxu0 %v3301
    %5786 = vmatprep.subr.mxu0 %v3306
    %5787 = vmatpush1.msra.mxu0 %v3305
    %5788 = vmatprep.subr.mxu0 %v3310
    %5789 = vmatpush1.msra.mxu0 %v3309
    %5790 = vmatprep.subr.mxu0 %v3314
    %5791 = vmatpush1.msra.mxu0 %v3313
    %5792 = vmatprep.subr.mxu0 %v3318
    %5793 = vmatpush1.msra.mxu0 %v3317
    %5794 = vmatprep.subr.mxu0 %v3322
    %5795 = vmatpush1.msra.mxu0 %v3321
    %5796 = vmatprep.subr.mxu0 %v3326
    %5797 = vmatpush1.msra.mxu0 %v3325
    %5798 = vmatprep.subr.mxu0 %v3330
    %5799 = vmatpush1.msra.mxu0 %v3329
    %5800 = vmatprep.subr.mxu0 %v3334
    %5801 = vmatpush1.msra.mxu0 %v3333
    %5802 = vmatprep.subr.mxu0 %v3338
    %5803 = vmatpush1.msra.mxu0 %v3337
    %5804 = vmatprep.subr.mxu0 %v3342
    %5805 = vmatpush1.msra.mxu0 %v3341
    %5806 = vmatprep.subr.mxu0 %v3346
    %5807 = vmatpush1.msra.mxu0 %v3345
    %5808 = vmatprep.subr.mxu0 %v3350
    %5809 = vmatpush1.msra.mxu0 %v3349
    %5810 = vmatprep.subr.mxu0 %v3354
    %5811 = vmatpush1.msra.mxu0 %v3353
    %5812 = vmatprep.subr.mxu0 %v3358
    %5813 = vmatpush1.msra.mxu0 %v3357
    %5814 = vmatprep.subr.mxu0 %v3362
    %5815 = vmatpush1.msra.mxu0 %v3361
    %5816 = vmatprep.subr.mxu0 %v3366
    %5817 = vmatpush1.msra.mxu0 %v3365
    %5818 = vmatprep.subr.mxu0 %v3370
    %5819 = vmatpush1.msra.mxu0 %v3369
    %5820 = vmatprep.subr.mxu0 %v3374
    %5821 = vmatpush1.msra.mxu0 %v3373
    %5822 = vmatprep.mubr.f32.mxu0 %v2176
    %5823 = vmatmul.mubr.f32.gmra.mrb[0].mxu0 %v1796
    %v5824 = vpop.f32.mrb[0].mxu0
    %v5825 = vadd.f32 %v5683, %v5824
    %v5826 = vpop.f32.mrb[0].mxu0
    %v5827 = vadd.f32 %v5685, %v5826
    %5828 = vdwg.mxu0
    %v5829 = vadd.f32 %v5754, %v3727
    %v5830 = vadd.f32 %v5756, %v3731
    %v5831 = vadd.f32 %v5825, %v3735
    %v5832 = vadd.f32 %v5827, %v3739
    %5833 = vmatprep.subr.mxu0 %v3877
    %5834 = vmatpush1.msra.mxu0 %v3876
    %5835 = vmatprep.subr.mxu0 %v3881
    %5836 = vmatpush1.msra.mxu0 %v3880
    %5837 = vmatprep.subr.mxu0 %v3885
    %5838 = vmatpush1.msra.mxu0 %v3884
    %5839 = vmatprep.subr.mxu0 %v3889
    %5840 = vmatpush1.msra.mxu0 %v3888
    %5841 = vmatprep.subr.mxu0 %v3893
    %5842 = vmatpush1.msra.mxu0 %v3892
    %5843 = vmatprep.subr.mxu0 %v3897
    %5844 = vmatpush1.msra.mxu0 %v3896
    %5845 = vmatprep.subr.mxu0 %v3901
    %5846 = vmatpush1.msra.mxu0 %v3900
    %5847 = vmatprep.subr.mxu0 %v3905
    %5848 = vmatpush1.msra.mxu0 %v3904
    %5849 = vmatprep.subr.mxu0 %v3909
    %5850 = vmatpush1.msra.mxu0 %v3908
    %5851 = vmatprep.subr.mxu0 %v3913
    %5852 = vmatpush1.msra.mxu0 %v3912
    %5853 = vmatprep.subr.mxu0 %v3917
    %5854 = vmatpush1.msra.mxu0 %v3916
    %5855 = vmatprep.subr.mxu0 %v3921
    %5856 = vmatpush1.msra.mxu0 %v3920
    %5857 = vmatprep.subr.mxu0 %v3925
    %5858 = vmatpush1.msra.mxu0 %v3924
    %5859 = vmatprep.subr.mxu0 %v3929
    %5860 = vmatpush1.msra.mxu0 %v3928
    %5861 = vmatprep.subr.mxu0 %v3933
    %5862 = vmatpush1.msra.mxu0 %v3932
    %5863 = vmatprep.subr.mxu0 %v3937
    %5864 = vmatpush1.msra.mxu0 %v3936
    %5865 = vmatprep.subr.mxu0 0.0
    %5866 = vmatpush1.msra.mxu0 0.0
    %5867 = vmatprep.subr.mxu0 0.0
    %5868 = vmatpush1.msra.mxu0 0.0
    %5869 = vmatprep.subr.mxu0 0.0
    %5870 = vmatpush1.msra.mxu0 0.0
    %5871 = vmatprep.subr.mxu0 0.0
    %5872 = vmatpush1.msra.mxu0 0.0
    %5873 = vmatprep.subr.mxu0 0.0
    %5874 = vmatpush1.msra.mxu0 0.0
    %5875 = vmatprep.subr.mxu0 0.0
    %5876 = vmatpush1.msra.mxu0 0.0
    %5877 = vmatprep.subr.mxu0 0.0
    %5878 = vmatpush1.msra.mxu0 0.0
    %5879 = vmatprep.subr.mxu0 0.0
    %5880 = vmatpush1.msra.mxu0 0.0
    %5881 = vmatprep.subr.mxu0 0.0
    %5882 = vmatpush1.msra.mxu0 0.0
    %5883 = vmatprep.subr.mxu0 0.0
    %5884 = vmatpush1.msra.mxu0 0.0
    %5885 = vmatprep.subr.mxu0 0.0
    %5886 = vmatpush1.msra.mxu0 0.0
    %5887 = vmatprep.subr.mxu0 0.0
    %5888 = vmatpush1.msra.mxu0 0.0
    %5889 = vmatprep.subr.mxu0 0.0
    %5890 = vmatpush1.msra.mxu0 0.0
    %5891 = vmatprep.subr.mxu0 0.0
    %5892 = vmatpush1.msra.mxu0 0.0
    %5893 = vmatprep.subr.mxu0 0.0
    %5894 = vmatpush1.msra.mxu0 0.0
    %5895 = vmatprep.subr.mxu0 0.0
    %5896 = vmatpush1.msra.mxu0 0.0
    %5897 = vmatprep.mubr.f32.mxu0 0.0
    %5898 = vmatmul.mubr.f32.gmra.mrb[0].mxu0 %v5544
    %v5899 = vpop.f32.mrb[0].mxu0
    %v5900 = vadd.f32 0.0, %v5899
    %v5901 = vpop.f32.mrb[0].mxu0
    %v5902 = vadd.f32 0.0, %v5901
    %5903 = vdwg.mxu0
    %5904 = vmatprep.subr.mxu0 %v3879
    %5905 = vmatpush1.msra.mxu0 %v3878
    %5906 = vmatprep.subr.mxu0 %v3883
    %5907 = vmatpush1.msra.mxu0 %v3882
    %5908 = vmatprep.subr.mxu0 %v3887
    %5909 = vmatpush1.msra.mxu0 %v3886
    %5910 = vmatprep.subr.mxu0 %v3891
    %5911 = vmatpush1.msra.mxu0 %v3890
    %5912 = vmatprep.subr.mxu0 %v3895
    %5913 = vmatpush1.msra.mxu0 %v3894
    %5914 = vmatprep.subr.mxu0 %v3899
    %5915 = vmatpush1.msra.mxu0 %v3898
    %5916 = vmatprep.subr.mxu0 %v3903
    %5917 = vmatpush1.msra.mxu0 %v3902
    %5918 = vmatprep.subr.mxu0 %v3907
    %5919 = vmatpush1.msra.mxu0 %v3906
    %5920 = vmatprep.subr.mxu0 %v3911
    %5921 = vmatpush1.msra.mxu0 %v3910
    %5922 = vmatprep.subr.mxu0 %v3915
    %5923 = vmatpush1.msra.mxu0 %v3914
    %5924 = vmatprep.subr.mxu0 %v3919
    %5925 = vmatpush1.msra.mxu0 %v3918
    %5926 = vmatprep.subr.mxu0 %v3923
    %5927 = vmatpush1.msra.mxu0 %v3922
    %5928 = vmatprep.subr.mxu0 %v3927
    %5929 = vmatpush1.msra.mxu0 %v3926
    %5930 = vmatprep.subr.mxu0 %v3931
    %5931 = vmatpush1.msra.mxu0 %v3930
    %5932 = vmatprep.subr.mxu0 %v3935
    %5933 = vmatpush1.msra.mxu0 %v3934
    %5934 = vmatprep.subr.mxu0 %v3939
    %5935 = vmatpush1.msra.mxu0 %v3938
    %5936 = vmatprep.subr.mxu0 0.0
    %5937 = vmatpush1.msra.mxu0 0.0
    %5938 = vmatprep.subr.mxu0 0.0
    %5939 = vmatpush1.msra.mxu0 0.0
    %5940 = vmatprep.subr.mxu0 0.0
    %5941 = vmatpush1.msra.mxu0 0.0
    %5942 = vmatprep.subr.mxu0 0.0
    %5943 = vmatpush1.msra.mxu0 0.0
    %5944 = vmatprep.subr.mxu0 0.0
    %5945 = vmatpush1.msra.mxu0 0.0
    %5946 = vmatprep.subr.mxu0 0.0
    %5947 = vmatpush1.msra.mxu0 0.0
    %5948 = vmatprep.subr.mxu0 0.0
    %5949 = vmatpush1.msra.mxu0 0.0
    %5950 = vmatprep.subr.mxu0 0.0
    %5951 = vmatpush1.msra.mxu0 0.0
    %5952 = vmatprep.subr.mxu0 0.0
    %5953 = vmatpush1.msra.mxu0 0.0
    %5954 = vmatprep.subr.mxu0 0.0
    %5955 = vmatpush1.msra.mxu0 0.0
    %5956 = vmatprep.subr.mxu0 0.0
    %5957 = vmatpush1.msra.mxu0 0.0
    %5958 = vmatprep.subr.mxu0 0.0
    %5959 = vmatpush1.msra.mxu0 0.0
    %5960 = vmatprep.subr.mxu0 0.0
    %5961 = vmatpush1.msra.mxu0 0.0
    %5962 = vmatprep.subr.mxu0 0.0
    %5963 = vmatpush1.msra.mxu0 0.0
    %5964 = vmatprep.subr.mxu0 0.0
    %5965 = vmatpush1.msra.mxu0 0.0
    %5966 = vmatprep.subr.mxu0 0.0
    %5967 = vmatpush1.msra.mxu0 0.0
    %5968 = vmatprep.mubr.f32.mxu0 0.0
    %5969 = vmatmul.mubr.f32.gmra.mrb[0].mxu0 %v5544
    %v5970 = vpop.f32.mrb[0].mxu0
    %v5971 = vadd.f32 0.0, %v5970
    %v5972 = vpop.f32.mrb[0].mxu0
    %v5973 = vadd.f32 0.0, %v5972
    %5974 = vdwg.mxu0
    %5975 = vmatprep.subr.mxu0 %v3749
    %5976 = vmatpush1.msra.mxu0 %v3748
    %5977 = vmatprep.subr.mxu0 %v3753
    %5978 = vmatpush1.msra.mxu0 %v3752
    %5979 = vmatprep.subr.mxu0 %v3757
    %5980 = vmatpush1.msra.mxu0 %v3756
    %5981 = vmatprep.subr.mxu0 %v3761
    %5982 = vmatpush1.msra.mxu0 %v3760
    %5983 = vmatprep.subr.mxu0 %v3765
    %5984 = vmatpush1.msra.mxu0 %v3764
    %5985 = vmatprep.subr.mxu0 %v3769
    %5986 = vmatpush1.msra.mxu0 %v3768
    %5987 = vmatprep.subr.mxu0 %v3773
    %5988 = vmatpush1.msra.mxu0 %v3772
    %5989 = vmatprep.subr.mxu0 %v3777
    %5990 = vmatpush1.msra.mxu0 %v3776
    %5991 = vmatprep.subr.mxu0 %v3781
    %5992 = vmatpush1.msra.mxu0 %v3780
    %5993 = vmatprep.subr.mxu0 %v3785
    %5994 = vmatpush1.msra.mxu0 %v3784
    %5995 = vmatprep.subr.mxu0 %v3789
    %5996 = vmatpush1.msra.mxu0 %v3788
    %5997 = vmatprep.subr.mxu0 %v3793
    %5998 = vmatpush1.msra.mxu0 %v3792
    %5999 = vmatprep.subr.mxu0 %v3797
    %6000 = vmatpush1.msra.mxu0 %v3796
    %6001 = vmatprep.subr.mxu0 %v3801
    %6002 = vmatpush1.msra.mxu0 %v3800
    %6003 = vmatprep.subr.mxu0 %v3805
    %6004 = vmatpush1.msra.mxu0 %v3804
    %6005 = vmatprep.subr.mxu0 %v3809
    %6006 = vmatpush1.msra.mxu0 %v3808
    %6007 = vmatprep.subr.mxu0 %v3813
    %6008 = vmatpush1.msra.mxu0 %v3812
    %6009 = vmatprep.subr.mxu0 %v3817
    %6010 = vmatpush1.msra.mxu0 %v3816
    %6011 = vmatprep.subr.mxu0 %v3821
    %6012 = vmatpush1.msra.mxu0 %v3820
    %6013 = vmatprep.subr.mxu0 %v3825
    %6014 = vmatpush1.msra.mxu0 %v3824
    %6015 = vmatprep.subr.mxu0 %v3829
    %6016 = vmatpush1.msra.mxu0 %v3828
    %6017 = vmatprep.subr.mxu0 %v3833
    %6018 = vmatpush1.msra.mxu0 %v3832
    %6019 = vmatprep.subr.mxu0 %v3837
    %6020 = vmatpush1.msra.mxu0 %v3836
    %6021 = vmatprep.subr.mxu0 %v3841
    %6022 = vmatpush1.msra.mxu0 %v3840
    %6023 = vmatprep.subr.mxu0 %v3845
    %6024 = vmatpush1.msra.mxu0 %v3844
    %6025 = vmatprep.subr.mxu0 %v3849
    %6026 = vmatpush1.msra.mxu0 %v3848
    %6027 = vmatprep.subr.mxu0 %v3853
    %6028 = vmatpush1.msra.mxu0 %v3852
    %6029 = vmatprep.subr.mxu0 %v3857
    %6030 = vmatpush1.msra.mxu0 %v3856
    %6031 = vmatprep.subr.mxu0 %v3861
    %6032 = vmatpush1.msra.mxu0 %v3860
    %6033 = vmatprep.subr.mxu0 %v3865
    %6034 = vmatpush1.msra.mxu0 %v3864
    %6035 = vmatprep.subr.mxu0 %v3869
    %6036 = vmatpush1.msra.mxu0 %v3868
    %6037 = vmatprep.subr.mxu0 %v3873
    %6038 = vmatpush1.msra.mxu0 %v3872
    %6039 = vmatprep.mubr.f32.mxu0 %v1820
    %6040 = vmatmul.mubr.f32.gmra.mrb[0].mxu0 %v2152
    %v6041 = vpop.f32.mrb[0].mxu0
    %v6042 = vadd.f32 %v5900, %v6041
    %v6043 = vpop.f32.mrb[0].mxu0
    %v6044 = vadd.f32 %v5902, %v6043
    %6045 = vdwg.mxu0
    %6046 = vmatprep.subr.mxu0 %v3751
    %6047 = vmatpush1.msra.mxu0 %v3750
    %6048 = vmatprep.subr.mxu0 %v3755
    %6049 = vmatpush1.msra.mxu0 %v3754
    %6050 = vmatprep.subr.mxu0 %v3759
    %6051 = vmatpush1.msra.mxu0 %v3758
    %6052 = vmatprep.subr.mxu0 %v3763
    %6053 = vmatpush1.msra.mxu0 %v3762
    %6054 = vmatprep.subr.mxu0 %v3767
    %6055 = vmatpush1.msra.mxu0 %v3766
    %6056 = vmatprep.subr.mxu0 %v3771
    %6057 = vmatpush1.msra.mxu0 %v3770
    %6058 = vmatprep.subr.mxu0 %v3775
    %6059 = vmatpush1.msra.mxu0 %v3774
    %6060 = vmatprep.subr.mxu0 %v3779
    %6061 = vmatpush1.msra.mxu0 %v3778
    %6062 = vmatprep.subr.mxu0 %v3783
    %6063 = vmatpush1.msra.mxu0 %v3782
    %6064 = vmatprep.subr.mxu0 %v3787
    %6065 = vmatpush1.msra.mxu0 %v3786
    %6066 = vmatprep.subr.mxu0 %v3791
    %6067 = vmatpush1.msra.mxu0 %v3790
    %6068 = vmatprep.subr.mxu0 %v3795
    %6069 = vmatpush1.msra.mxu0 %v3794
    %6070 = vmatprep.subr.mxu0 %v3799
    %6071 = vmatpush1.msra.mxu0 %v3798
    %6072 = vmatprep.subr.mxu0 %v3803
    %6073 = vmatpush1.msra.mxu0 %v3802
    %6074 = vmatprep.subr.mxu0 %v3807
    %6075 = vmatpush1.msra.mxu0 %v3806
    %6076 = vmatprep.subr.mxu0 %v3811
    %6077 = vmatpush1.msra.mxu0 %v3810
    %6078 = vmatprep.subr.mxu0 %v3815
    %6079 = vmatpush1.msra.mxu0 %v3814
    %6080 = vmatprep.subr.mxu0 %v3819
    %6081 = vmatpush1.msra.mxu0 %v3818
    %6082 = vmatprep.subr.mxu0 %v3823
    %6083 = vmatpush1.msra.mxu0 %v3822
    %6084 = vmatprep.subr.mxu0 %v3827
    %6085 = vmatpush1.msra.mxu0 %v3826
    %6086 = vmatprep.subr.mxu0 %v3831
    %6087 = vmatpush1.msra.mxu0 %v3830
    %6088 = vmatprep.subr.mxu0 %v3835
    %6089 = vmatpush1.msra.mxu0 %v3834
    %6090 = vmatprep.subr.mxu0 %v3839
    %6091 = vmatpush1.msra.mxu0 %v3838
    %6092 = vmatprep.subr.mxu0 %v3843
    %6093 = vmatpush1.msra.mxu0 %v3842
    %6094 = vmatprep.subr.mxu0 %v3847
    %6095 = vmatpush1.msra.mxu0 %v3846
    %6096 = vmatprep.subr.mxu0 %v3851
    %6097 = vmatpush1.msra.mxu0 %v3850
    %6098 = vmatprep.subr.mxu0 %v3855
    %6099 = vmatpush1.msra.mxu0 %v3854
    %6100 = vmatprep.subr.mxu0 %v3859
    %6101 = vmatpush1.msra.mxu0 %v3858
    %6102 = vmatprep.subr.mxu0 %v3863
    %6103 = vmatpush1.msra.mxu0 %v3862
    %6104 = vmatprep.subr.mxu0 %v3867
    %6105 = vmatpush1.msra.mxu0 %v3866
    %6106 = vmatprep.subr.mxu0 %v3871
    %6107 = vmatpush1.msra.mxu0 %v3870
    %6108 = vmatprep.subr.mxu0 %v3875
    %6109 = vmatpush1.msra.mxu0 %v3874
    %6110 = vmatprep.mubr.f32.mxu0 %v1820
    %6111 = vmatmul.mubr.f32.gmra.mrb[0].mxu0 %v2152
    %v6112 = vpop.f32.mrb[0].mxu0
    %v6113 = vadd.f32 %v5971, %v6112
    %v6114 = vpop.f32.mrb[0].mxu0
    %v6115 = vadd.f32 %v5973, %v6114
    %6116 = vdwg.mxu0
    %v6117 = vadd.f32 %v6042, %v4228
    %v6118 = vadd.f32 %v6044, %v4232
    %v6119 = vadd.f32 %v6113, %v4236
    %v6120 = vadd.f32 %v6115, %v4240
    %v6121 = vxor.u32 %v5829, 2147483648
    %v6122 = vmul.f32 %v6121, 1.442695
    %v6123 = vpow.pop %v6122
    %v6124 = vadd.f32 %v6123, 1.0
    %v6125 = vrcp.pop %v6124
    %v6126 = vmul.f32 1.0, %v6125
    %v6127 = vxor.u32 %v5830, 2147483648
    %v6128 = vmul.f32 %v6127, 1.442695
    %v6129 = vpow.pop %v6128
    %v6130 = vadd.f32 %v6129, 1.0
    %v6131 = vrcp.pop %v6130
    %v6132 = vmul.f32 1.0, %v6131
    %v6133 = vtanh.pop %v5831
    %v6134 = vxor.u32 %v5832, 2147483648
    %v6135 = vmul.f32 %v6134, 1.442695
    %v6136 = vpow.pop %v6135
    %v6137 = vadd.f32 %v6136, 1.0
    %v6138 = vrcp.pop %v6137
    %v6139 = vmul.f32 1.0, %v6138
    %v6140 = vmul.f32 %v6132, %v5518
    %v6141 = vmul.f32 %v6126, %v6133
    %v6142 = vadd.f32 %v6140, %v6141
    %v6143 = vtanh.pop %v6142
    %v6144 = vmul.f32 %v6139, %v6143
    %v6145 = vxor.u32 %v6117, 2147483648
    %v6146 = vmul.f32 %v6145, 1.442695
    %v6147 = vpow.pop %v6146
    %v6148 = vadd.f32 %v6147, 1.0
    %v6149 = vrcp.pop %v6148
    %v6150 = vmul.f32 1.0, %v6149
    %v6151 = vxor.u32 %v6118, 2147483648
    %v6152 = vmul.f32 %v6151, 1.442695
    %v6153 = vpow.pop %v6152
    %v6154 = vadd.f32 %v6153, 1.0
    %v6155 = vrcp.pop %v6154
    %v6156 = vmul.f32 1.0, %v6155
    %v6157 = vtanh.pop %v6119
    %v6158 = vxor.u32 %v6120, 2147483648
    %v6159 = vmul.f32 %v6158, 1.442695
    %v6160 = vpow.pop %v6159
    %v6161 = vadd.f32 %v6160, 1.0
    %v6162 = vrcp.pop %v6161
    %v6163 = vmul.f32 1.0, %v6162
    %v6164 = vmul.f32 %v6156, %v5542
    %v6165 = vmul.f32 %v6150, %v6157
    %v6166 = vadd.f32 %v6164, %v6165
    %v6167 = vtanh.pop %v6166
    %v6168 = vmul.f32 %v6163, %v6167
    %6169 = vmatprep.subr.mxu0 %v3376
    %6170 = vmatpush1.msra.mxu0 %v3375
    %6171 = vmatprep.subr.mxu0 %v3380
    %6172 = vmatpush1.msra.mxu0 %v3379
    %6173 = vmatprep.subr.mxu0 %v3384
    %6174 = vmatpush1.msra.mxu0 %v3383
    %6175 = vmatprep.subr.mxu0 %v3388
    %6176 = vmatpush1.msra.mxu0 %v3387
    %6177 = vmatprep.subr.mxu0 %v3392
    %6178 = vmatpush1.msra.mxu0 %v3391
    %6179 = vmatprep.subr.mxu0 %v3396
    %6180 = vmatpush1.msra.mxu0 %v3395
    %6181 = vmatprep.subr.mxu0 %v3400
    %6182 = vmatpush1.msra.mxu0 %v3399
    %6183 = vmatprep.subr.mxu0 %v3404
    %6184 = vmatpush1.msra.mxu0 %v3403
    %6185 = vmatprep.subr.mxu0 %v3408
    %6186 = vmatpush1.msra.mxu0 %v3407
    %6187 = vmatprep.subr.mxu0 %v3412
    %6188 = vmatpush1.msra.mxu0 %v3411
    %6189 = vmatprep.subr.mxu0 %v3416
    %6190 = vmatpush1.msra.mxu0 %v3415
    %6191 = vmatprep.subr.mxu0 %v3420
    %6192 = vmatpush1.msra.mxu0 %v3419
    %6193 = vmatprep.subr.mxu0 %v3424
    %6194 = vmatpush1.msra.mxu0 %v3423
    %6195 = vmatprep.subr.mxu0 %v3428
    %6196 = vmatpush1.msra.mxu0 %v3427
    %6197 = vmatprep.subr.mxu0 %v3432
    %6198 = vmatpush1.msra.mxu0 %v3431
    %6199 = vmatprep.subr.mxu0 %v3436
    %6200 = vmatpush1.msra.mxu0 %v3435
    %6201 = vmatprep.subr.mxu0 0.0
    %6202 = vmatpush1.msra.mxu0 0.0
    %6203 = vmatprep.subr.mxu0 0.0
    %6204 = vmatpush1.msra.mxu0 0.0
    %6205 = vmatprep.subr.mxu0 0.0
    %6206 = vmatpush1.msra.mxu0 0.0
    %6207 = vmatprep.subr.mxu0 0.0
    %6208 = vmatpush1.msra.mxu0 0.0
    %6209 = vmatprep.subr.mxu0 0.0
    %6210 = vmatpush1.msra.mxu0 0.0
    %6211 = vmatprep.subr.mxu0 0.0
    %6212 = vmatpush1.msra.mxu0 0.0
    %6213 = vmatprep.subr.mxu0 0.0
    %6214 = vmatpush1.msra.mxu0 0.0
    %6215 = vmatprep.subr.mxu0 0.0
    %6216 = vmatpush1.msra.mxu0 0.0
    %6217 = vmatprep.subr.mxu0 0.0
    %6218 = vmatpush1.msra.mxu0 0.0
    %6219 = vmatprep.subr.mxu0 0.0
    %6220 = vmatpush1.msra.mxu0 0.0
    %6221 = vmatprep.subr.mxu0 0.0
    %6222 = vmatpush1.msra.mxu0 0.0
    %6223 = vmatprep.subr.mxu0 0.0
    %6224 = vmatpush1.msra.mxu0 0.0
    %6225 = vmatprep.subr.mxu0 0.0
    %6226 = vmatpush1.msra.mxu0 0.0
    %6227 = vmatprep.subr.mxu0 0.0
    %6228 = vmatpush1.msra.mxu0 0.0
    %6229 = vmatprep.subr.mxu0 0.0
    %6230 = vmatpush1.msra.mxu0 0.0
    %6231 = vmatprep.subr.mxu0 0.0
    %6232 = vmatpush1.msra.mxu0 0.0
    %6233 = vmatprep.mubr.f32.mxu0 0.0
    %6234 = vmatmul.mubr.f32.gmra.mrb[0].mxu0 %v6144
    %v6235 = vpop.f32.mrb[0].mxu0
    %v6236 = vadd.f32 0.0, %v6235
    %v6237 = vpop.f32.mrb[0].mxu0
    %v6238 = vadd.f32 0.0, %v6237
    %6239 = vdwg.mxu0
    %6240 = vmatprep.subr.mxu0 %v3378
    %6241 = vmatpush1.msra.mxu0 %v3377
    %6242 = vmatprep.subr.mxu0 %v3382
    %6243 = vmatpush1.msra.mxu0 %v3381
    %6244 = vmatprep.subr.mxu0 %v3386
    %6245 = vmatpush1.msra.mxu0 %v3385
    %6246 = vmatprep.subr.mxu0 %v3390
    %6247 = vmatpush1.msra.mxu0 %v3389
    %6248 = vmatprep.subr.mxu0 %v3394
    %6249 = vmatpush1.msra.mxu0 %v3393
    %6250 = vmatprep.subr.mxu0 %v3398
    %6251 = vmatpush1.msra.mxu0 %v3397
    %6252 = vmatprep.subr.mxu0 %v3402
    %6253 = vmatpush1.msra.mxu0 %v3401
    %6254 = vmatprep.subr.mxu0 %v3406
    %6255 = vmatpush1.msra.mxu0 %v3405
    %6256 = vmatprep.subr.mxu0 %v3410
    %6257 = vmatpush1.msra.mxu0 %v3409
    %6258 = vmatprep.subr.mxu0 %v3414
    %6259 = vmatpush1.msra.mxu0 %v3413
    %6260 = vmatprep.subr.mxu0 %v3418
    %6261 = vmatpush1.msra.mxu0 %v3417
    %6262 = vmatprep.subr.mxu0 %v3422
    %6263 = vmatpush1.msra.mxu0 %v3421
    %6264 = vmatprep.subr.mxu0 %v3426
    %6265 = vmatpush1.msra.mxu0 %v3425
    %6266 = vmatprep.subr.mxu0 %v3430
    %6267 = vmatpush1.msra.mxu0 %v3429
    %6268 = vmatprep.subr.mxu0 %v3434
    %6269 = vmatpush1.msra.mxu0 %v3433
    %6270 = vmatprep.subr.mxu0 %v3438
    %6271 = vmatpush1.msra.mxu0 %v3437
    %6272 = vmatprep.subr.mxu0 0.0
    %6273 = vmatpush1.msra.mxu0 0.0
    %6274 = vmatprep.subr.mxu0 0.0
    %6275 = vmatpush1.msra.mxu0 0.0
    %6276 = vmatprep.subr.mxu0 0.0
    %6277 = vmatpush1.msra.mxu0 0.0
    %6278 = vmatprep.subr.mxu0 0.0
    %6279 = vmatpush1.msra.mxu0 0.0
    %6280 = vmatprep.subr.mxu0 0.0
    %6281 = vmatpush1.msra.mxu0 0.0
    %6282 = vmatprep.subr.mxu0 0.0
    %6283 = vmatpush1.msra.mxu0 0.0
    %6284 = vmatprep.subr.mxu0 0.0
    %6285 = vmatpush1.msra.mxu0 0.0
    %6286 = vmatprep.subr.mxu0 0.0
    %6287 = vmatpush1.msra.mxu0 0.0
    %6288 = vmatprep.subr.mxu0 0.0
    %6289 = vmatpush1.msra.mxu0 0.0
    %6290 = vmatprep.subr.mxu0 0.0
    %6291 = vmatpush1.msra.mxu0 0.0
    %6292 = vmatprep.subr.mxu0 0.0
    %6293 = vmatpush1.msra.mxu0 0.0
    %6294 = vmatprep.subr.mxu0 0.0
    %6295 = vmatpush1.msra.mxu0 0.0
    %6296 = vmatprep.subr.mxu0 0.0
    %6297 = vmatpush1.msra.mxu0 0.0
    %6298 = vmatprep.subr.mxu0 0.0
    %6299 = vmatpush1.msra.mxu0 0.0
    %6300 = vmatprep.subr.mxu0 0.0
    %6301 = vmatpush1.msra.mxu0 0.0
    %6302 = vmatprep.subr.mxu0 0.0
    %6303 = vmatpush1.msra.mxu0 0.0
    %6304 = vmatprep.mubr.f32.mxu0 0.0
    %6305 = vmatmul.mubr.f32.gmra.mrb[0].mxu0 %v6144
    %v6306 = vpop.f32.mrb[0].mxu0
    %v6307 = vadd.f32 0.0, %v6306
    %v6308 = vpop.f32.mrb[0].mxu0
    %v6309 = vadd.f32 0.0, %v6308
    %6310 = vdwg.mxu0
    %6311 = vmatprep.subr.mxu0 %v3248
    %6312 = vmatpush1.msra.mxu0 %v3247
    %6313 = vmatprep.subr.mxu0 %v3252
    %6314 = vmatpush1.msra.mxu0 %v3251
    %6315 = vmatprep.subr.mxu0 %v3256
    %6316 = vmatpush1.msra.mxu0 %v3255
    %6317 = vmatprep.subr.mxu0 %v3260
    %6318 = vmatpush1.msra.mxu0 %v3259
    %6319 = vmatprep.subr.mxu0 %v3264
    %6320 = vmatpush1.msra.mxu0 %v3263
    %6321 = vmatprep.subr.mxu0 %v3268
    %6322 = vmatpush1.msra.mxu0 %v3267
    %6323 = vmatprep.subr.mxu0 %v3272
    %6324 = vmatpush1.msra.mxu0 %v3271
    %6325 = vmatprep.subr.mxu0 %v3276
    %6326 = vmatpush1.msra.mxu0 %v3275
    %6327 = vmatprep.subr.mxu0 %v3280
    %6328 = vmatpush1.msra.mxu0 %v3279
    %6329 = vmatprep.subr.mxu0 %v3284
    %6330 = vmatpush1.msra.mxu0 %v3283
    %6331 = vmatprep.subr.mxu0 %v3288
    %6332 = vmatpush1.msra.mxu0 %v3287
    %6333 = vmatprep.subr.mxu0 %v3292
    %6334 = vmatpush1.msra.mxu0 %v3291
    %6335 = vmatprep.subr.mxu0 %v3296
    %6336 = vmatpush1.msra.mxu0 %v3295
    %6337 = vmatprep.subr.mxu0 %v3300
    %6338 = vmatpush1.msra.mxu0 %v3299
    %6339 = vmatprep.subr.mxu0 %v3304
    %6340 = vmatpush1.msra.mxu0 %v3303
    %6341 = vmatprep.subr.mxu0 %v3308
    %6342 = vmatpush1.msra.mxu0 %v3307
    %6343 = vmatprep.subr.mxu0 %v3312
    %6344 = vmatpush1.msra.mxu0 %v3311
    %6345 = vmatprep.subr.mxu0 %v3316
    %6346 = vmatpush1.msra.mxu0 %v3315
    %6347 = vmatprep.subr.mxu0 %v3320
    %6348 = vmatpush1.msra.mxu0 %v3319
    %6349 = vmatprep.subr.mxu0 %v3324
    %6350 = vmatpush1.msra.mxu0 %v3323
    %6351 = vmatprep.subr.mxu0 %v3328
    %6352 = vmatpush1.msra.mxu0 %v3327
    %6353 = vmatprep.subr.mxu0 %v3332
    %6354 = vmatpush1.msra.mxu0 %v3331
    %6355 = vmatprep.subr.mxu0 %v3336
    %6356 = vmatpush1.msra.mxu0 %v3335
    %6357 = vmatprep.subr.mxu0 %v3340
    %6358 = vmatpush1.msra.mxu0 %v3339
    %6359 = vmatprep.subr.mxu0 %v3344
    %6360 = vmatpush1.msra.mxu0 %v3343
    %6361 = vmatprep.subr.mxu0 %v3348
    %6362 = vmatpush1.msra.mxu0 %v3347
    %6363 = vmatprep.subr.mxu0 %v3352
    %6364 = vmatpush1.msra.mxu0 %v3351
    %6365 = vmatprep.subr.mxu0 %v3356
    %6366 = vmatpush1.msra.mxu0 %v3355
    %6367 = vmatprep.subr.mxu0 %v3360
    %6368 = vmatpush1.msra.mxu0 %v3359
    %6369 = vmatprep.subr.mxu0 %v3364
    %6370 = vmatpush1.msra.mxu0 %v3363
    %6371 = vmatprep.subr.mxu0 %v3368
    %6372 = vmatpush1.msra.mxu0 %v3367
    %6373 = vmatprep.subr.mxu0 %v3372
    %6374 = vmatpush1.msra.mxu0 %v3371
    %6375 = vmatprep.mubr.f32.mxu0 %v1820
    %6376 = vmatmul.mubr.f32.gmra.mrb[0].mxu0 %v2152
    %v6377 = vpop.f32.mrb[0].mxu0
    %v6378 = vadd.f32 %v6236, %v6377
    %v6379 = vpop.f32.mrb[0].mxu0
    %v6380 = vadd.f32 %v6238, %v6379
    %6381 = vdwg.mxu0
    %6382 = vmatprep.subr.mxu0 %v3250
    %6383 = vmatpush1.msra.mxu0 %v3249
    %6384 = vmatprep.subr.mxu0 %v3254
    %6385 = vmatpush1.msra.mxu0 %v3253
    %6386 = vmatprep.subr.mxu0 %v3258
    %6387 = vmatpush1.msra.mxu0 %v3257
    %6388 = vmatprep.subr.mxu0 %v3262
    %6389 = vmatpush1.msra.mxu0 %v3261
    %6390 = vmatprep.subr.mxu0 %v3266
    %6391 = vmatpush1.msra.mxu0 %v3265
    %6392 = vmatprep.subr.mxu0 %v3270
    %6393 = vmatpush1.msra.mxu0 %v3269
    %6394 = vmatprep.subr.mxu0 %v3274
    %6395 = vmatpush1.msra.mxu0 %v3273
    %6396 = vmatprep.subr.mxu0 %v3278
    %6397 = vmatpush1.msra.mxu0 %v3277
    %6398 = vmatprep.subr.mxu0 %v3282
    %6399 = vmatpush1.msra.mxu0 %v3281
    %6400 = vmatprep.subr.mxu0 %v3286
    %6401 = vmatpush1.msra.mxu0 %v3285
    %6402 = vmatprep.subr.mxu0 %v3290
    %6403 = vmatpush1.msra.mxu0 %v3289
    %6404 = vmatprep.subr.mxu0 %v3294
    %6405 = vmatpush1.msra.mxu0 %v3293
    %6406 = vmatprep.subr.mxu0 %v3298
    %6407 = vmatpush1.msra.mxu0 %v3297
    %6408 = vmatprep.subr.mxu0 %v3302
    %6409 = vmatpush1.msra.mxu0 %v3301
    %6410 = vmatprep.subr.mxu0 %v3306
    %6411 = vmatpush1.msra.mxu0 %v3305
    %6412 = vmatprep.subr.mxu0 %v3310
    %6413 = vmatpush1.msra.mxu0 %v3309
    %6414 = vmatprep.subr.mxu0 %v3314
    %6415 = vmatpush1.msra.mxu0 %v3313
    %6416 = vmatprep.subr.mxu0 %v3318
    %6417 = vmatpush1.msra.mxu0 %v3317
    %6418 = vmatprep.subr.mxu0 %v3322
    %6419 = vmatpush1.msra.mxu0 %v3321
    %6420 = vmatprep.subr.mxu0 %v3326
    %6421 = vmatpush1.msra.mxu0 %v3325
    %6422 = vmatprep.subr.mxu0 %v3330
    %6423 = vmatpush1.msra.mxu0 %v3329
    %6424 = vmatprep.subr.mxu0 %v3334
    %6425 = vmatpush1.msra.mxu0 %v3333
    %6426 = vmatprep.subr.mxu0 %v3338
    %6427 = vmatpush1.msra.mxu0 %v3337
    %6428 = vmatprep.subr.mxu0 %v3342
    %6429 = vmatpush1.msra.mxu0 %v3341
    %6430 = vmatprep.subr.mxu0 %v3346
    %6431 = vmatpush1.msra.mxu0 %v3345
    %6432 = vmatprep.subr.mxu0 %v3350
    %6433 = vmatpush1.msra.mxu0 %v3349
    %6434 = vmatprep.subr.mxu0 %v3354
    %6435 = vmatpush1.msra.mxu0 %v3353
    %6436 = vmatprep.subr.mxu0 %v3358
    %6437 = vmatpush1.msra.mxu0 %v3357
    %6438 = vmatprep.subr.mxu0 %v3362
    %6439 = vmatpush1.msra.mxu0 %v3361
    %6440 = vmatprep.subr.mxu0 %v3366
    %6441 = vmatpush1.msra.mxu0 %v3365
    %6442 = vmatprep.subr.mxu0 %v3370
    %6443 = vmatpush1.msra.mxu0 %v3369
    %6444 = vmatprep.subr.mxu0 %v3374
    %6445 = vmatpush1.msra.mxu0 %v3373
    %6446 = vmatprep.mubr.f32.mxu0 %v1820
    %6447 = vmatmul.mubr.f32.gmra.mrb[0].mxu0 %v2152
    %v6448 = vpop.f32.mrb[0].mxu0
    %v6449 = vadd.f32 %v6307, %v6448
    %v6450 = vpop.f32.mrb[0].mxu0
    %v6451 = vadd.f32 %v6309, %v6450
    %6452 = vdwg.mxu0
    %v6453 = vadd.f32 %v6378, %v3727
    %v6454 = vadd.f32 %v6380, %v3731
    %v6455 = vadd.f32 %v6449, %v3735
    %v6456 = vadd.f32 %v6451, %v3739
    %6457 = vmatprep.subr.mxu0 %v3877
    %6458 = vmatpush1.msra.mxu0 %v3876
    %6459 = vmatprep.subr.mxu0 %v3881
    %6460 = vmatpush1.msra.mxu0 %v3880
    %6461 = vmatprep.subr.mxu0 %v3885
    %6462 = vmatpush1.msra.mxu0 %v3884
    %6463 = vmatprep.subr.mxu0 %v3889
    %6464 = vmatpush1.msra.mxu0 %v3888
    %6465 = vmatprep.subr.mxu0 %v3893
    %6466 = vmatpush1.msra.mxu0 %v3892
    %6467 = vmatprep.subr.mxu0 %v3897
    %6468 = vmatpush1.msra.mxu0 %v3896
    %6469 = vmatprep.subr.mxu0 %v3901
    %6470 = vmatpush1.msra.mxu0 %v3900
    %6471 = vmatprep.subr.mxu0 %v3905
    %6472 = vmatpush1.msra.mxu0 %v3904
    %6473 = vmatprep.subr.mxu0 %v3909
    %6474 = vmatpush1.msra.mxu0 %v3908
    %6475 = vmatprep.subr.mxu0 %v3913
    %6476 = vmatpush1.msra.mxu0 %v3912
    %6477 = vmatprep.subr.mxu0 %v3917
    %6478 = vmatpush1.msra.mxu0 %v3916
    %6479 = vmatprep.subr.mxu0 %v3921
    %6480 = vmatpush1.msra.mxu0 %v3920
    %6481 = vmatprep.subr.mxu0 %v3925
    %6482 = vmatpush1.msra.mxu0 %v3924
    %6483 = vmatprep.subr.mxu0 %v3929
    %6484 = vmatpush1.msra.mxu0 %v3928
    %6485 = vmatprep.subr.mxu0 %v3933
    %6486 = vmatpush1.msra.mxu0 %v3932
    %6487 = vmatprep.subr.mxu0 %v3937
    %6488 = vmatpush1.msra.mxu0 %v3936
    %6489 = vmatprep.subr.mxu0 0.0
    %6490 = vmatpush1.msra.mxu0 0.0
    %6491 = vmatprep.subr.mxu0 0.0
    %6492 = vmatpush1.msra.mxu0 0.0
    %6493 = vmatprep.subr.mxu0 0.0
    %6494 = vmatpush1.msra.mxu0 0.0
    %6495 = vmatprep.subr.mxu0 0.0
    %6496 = vmatpush1.msra.mxu0 0.0
    %6497 = vmatprep.subr.mxu0 0.0
    %6498 = vmatpush1.msra.mxu0 0.0
    %6499 = vmatprep.subr.mxu0 0.0
    %6500 = vmatpush1.msra.mxu0 0.0
    %6501 = vmatprep.subr.mxu0 0.0
    %6502 = vmatpush1.msra.mxu0 0.0
    %6503 = vmatprep.subr.mxu0 0.0
    %6504 = vmatpush1.msra.mxu0 0.0
    %6505 = vmatprep.subr.mxu0 0.0
    %6506 = vmatpush1.msra.mxu0 0.0
    %6507 = vmatprep.subr.mxu0 0.0
    %6508 = vmatpush1.msra.mxu0 0.0
    %6509 = vmatprep.subr.mxu0 0.0
    %6510 = vmatpush1.msra.mxu0 0.0
    %6511 = vmatprep.subr.mxu0 0.0
    %6512 = vmatpush1.msra.mxu0 0.0
    %6513 = vmatprep.subr.mxu0 0.0
    %6514 = vmatpush1.msra.mxu0 0.0
    %6515 = vmatprep.subr.mxu0 0.0
    %6516 = vmatpush1.msra.mxu0 0.0
    %6517 = vmatprep.subr.mxu0 0.0
    %6518 = vmatpush1.msra.mxu0 0.0
    %6519 = vmatprep.subr.mxu0 0.0
    %6520 = vmatpush1.msra.mxu0 0.0
    %6521 = vmatprep.mubr.f32.mxu0 0.0
    %6522 = vmatmul.mubr.f32.gmra.mrb[0].mxu0 %v6168
    %v6523 = vpop.f32.mrb[0].mxu0
    %v6524 = vadd.f32 0.0, %v6523
    %v6525 = vpop.f32.mrb[0].mxu0
    %v6526 = vadd.f32 0.0, %v6525
    %6527 = vdwg.mxu0
    %6528 = vmatprep.subr.mxu0 %v3879
    %6529 = vmatpush1.msra.mxu0 %v3878
    %6530 = vmatprep.subr.mxu0 %v3883
    %6531 = vmatpush1.msra.mxu0 %v3882
    %6532 = vmatprep.subr.mxu0 %v3887
    %6533 = vmatpush1.msra.mxu0 %v3886
    %6534 = vmatprep.subr.mxu0 %v3891
    %6535 = vmatpush1.msra.mxu0 %v3890
    %6536 = vmatprep.subr.mxu0 %v3895
    %6537 = vmatpush1.msra.mxu0 %v3894
    %6538 = vmatprep.subr.mxu0 %v3899
    %6539 = vmatpush1.msra.mxu0 %v3898
    %6540 = vmatprep.subr.mxu0 %v3903
    %6541 = vmatpush1.msra.mxu0 %v3902
    %6542 = vmatprep.subr.mxu0 %v3907
    %6543 = vmatpush1.msra.mxu0 %v3906
    %6544 = vmatprep.subr.mxu0 %v3911
    %6545 = vmatpush1.msra.mxu0 %v3910
    %6546 = vmatprep.subr.mxu0 %v3915
    %6547 = vmatpush1.msra.mxu0 %v3914
    %6548 = vmatprep.subr.mxu0 %v3919
    %6549 = vmatpush1.msra.mxu0 %v3918
    %6550 = vmatprep.subr.mxu0 %v3923
    %6551 = vmatpush1.msra.mxu0 %v3922
    %6552 = vmatprep.subr.mxu0 %v3927
    %6553 = vmatpush1.msra.mxu0 %v3926
    %6554 = vmatprep.subr.mxu0 %v3931
    %6555 = vmatpush1.msra.mxu0 %v3930
    %6556 = vmatprep.subr.mxu0 %v3935
    %6557 = vmatpush1.msra.mxu0 %v3934
    %6558 = vmatprep.subr.mxu0 %v3939
    %6559 = vmatpush1.msra.mxu0 %v3938
    %6560 = vmatprep.subr.mxu0 0.0
    %6561 = vmatpush1.msra.mxu0 0.0
    %6562 = vmatprep.subr.mxu0 0.0
    %6563 = vmatpush1.msra.mxu0 0.0
    %6564 = vmatprep.subr.mxu0 0.0
    %6565 = vmatpush1.msra.mxu0 0.0
    %6566 = vmatprep.subr.mxu0 0.0
    %6567 = vmatpush1.msra.mxu0 0.0
    %6568 = vmatprep.subr.mxu0 0.0
    %6569 = vmatpush1.msra.mxu0 0.0
    %6570 = vmatprep.subr.mxu0 0.0
    %6571 = vmatpush1.msra.mxu0 0.0
    %6572 = vmatprep.subr.mxu0 0.0
    %6573 = vmatpush1.msra.mxu0 0.0
    %6574 = vmatprep.subr.mxu0 0.0
    %6575 = vmatpush1.msra.mxu0 0.0
    %6576 = vmatprep.subr.mxu0 0.0
    %6577 = vmatpush1.msra.mxu0 0.0
    %6578 = vmatprep.subr.mxu0 0.0
    %6579 = vmatpush1.msra.mxu0 0.0
    %6580 = vmatprep.subr.mxu0 0.0
    %6581 = vmatpush1.msra.mxu0 0.0
    %6582 = vmatprep.subr.mxu0 0.0
    %6583 = vmatpush1.msra.mxu0 0.0
    %6584 = vmatprep.subr.mxu0 0.0
    %6585 = vmatpush1.msra.mxu0 0.0
    %6586 = vmatprep.subr.mxu0 0.0
    %6587 = vmatpush1.msra.mxu0 0.0
    %6588 = vmatprep.subr.mxu0 0.0
    %6589 = vmatpush1.msra.mxu0 0.0
    %6590 = vmatprep.subr.mxu0 0.0
    %6591 = vmatpush1.msra.mxu0 0.0
    %6592 = vmatprep.mubr.f32.mxu0 0.0
    %6593 = vmatmul.mubr.f32.gmra.mrb[0].mxu0 %v6168
    %v6594 = vpop.f32.mrb[0].mxu0
    %v6595 = vadd.f32 0.0, %v6594
    %v6596 = vpop.f32.mrb[0].mxu0
    %v6597 = vadd.f32 0.0, %v6596
    %6598 = vdwg.mxu0
    %6599 = vmatprep.subr.mxu0 %v3749
    %6600 = vmatpush1.msra.mxu0 %v3748
    %6601 = vmatprep.subr.mxu0 %v3753
    %6602 = vmatpush1.msra.mxu0 %v3752
    %6603 = vmatprep.subr.mxu0 %v3757
    %6604 = vmatpush1.msra.mxu0 %v3756
    %6605 = vmatprep.subr.mxu0 %v3761
    %6606 = vmatpush1.msra.mxu0 %v3760
    %6607 = vmatprep.subr.mxu0 %v3765
    %6608 = vmatpush1.msra.mxu0 %v3764
    %6609 = vmatprep.subr.mxu0 %v3769
    %6610 = vmatpush1.msra.mxu0 %v3768
    %6611 = vmatprep.subr.mxu0 %v3773
    %6612 = vmatpush1.msra.mxu0 %v3772
    %6613 = vmatprep.subr.mxu0 %v3777
    %6614 = vmatpush1.msra.mxu0 %v3776
    %6615 = vmatprep.subr.mxu0 %v3781
    %6616 = vmatpush1.msra.mxu0 %v3780
    %6617 = vmatprep.subr.mxu0 %v3785
    %6618 = vmatpush1.msra.mxu0 %v3784
    %6619 = vmatprep.subr.mxu0 %v3789
    %6620 = vmatpush1.msra.mxu0 %v3788
    %6621 = vmatprep.subr.mxu0 %v3793
    %6622 = vmatpush1.msra.mxu0 %v3792
    %6623 = vmatprep.subr.mxu0 %v3797
    %6624 = vmatpush1.msra.mxu0 %v3796
    %6625 = vmatprep.subr.mxu0 %v3801
    %6626 = vmatpush1.msra.mxu0 %v3800
    %6627 = vmatprep.subr.mxu0 %v3805
    %6628 = vmatpush1.msra.mxu0 %v3804
    %6629 = vmatprep.subr.mxu0 %v3809
    %6630 = vmatpush1.msra.mxu0 %v3808
    %6631 = vmatprep.subr.mxu0 %v3813
    %6632 = vmatpush1.msra.mxu0 %v3812
    %6633 = vmatprep.subr.mxu0 %v3817
    %6634 = vmatpush1.msra.mxu0 %v3816
    %6635 = vmatprep.subr.mxu0 %v3821
    %6636 = vmatpush1.msra.mxu0 %v3820
    %6637 = vmatprep.subr.mxu0 %v3825
    %6638 = vmatpush1.msra.mxu0 %v3824
    %6639 = vmatprep.subr.mxu0 %v3829
    %6640 = vmatpush1.msra.mxu0 %v3828
    %6641 = vmatprep.subr.mxu0 %v3833
    %6642 = vmatpush1.msra.mxu0 %v3832
    %6643 = vmatprep.subr.mxu0 %v3837
    %6644 = vmatpush1.msra.mxu0 %v3836
    %6645 = vmatprep.subr.mxu0 %v3841
    %6646 = vmatpush1.msra.mxu0 %v3840
    %6647 = vmatprep.subr.mxu0 %v3845
    %6648 = vmatpush1.msra.mxu0 %v3844
    %6649 = vmatprep.subr.mxu0 %v3849
    %6650 = vmatpush1.msra.mxu0 %v3848
    %6651 = vmatprep.subr.mxu0 %v3853
    %6652 = vmatpush1.msra.mxu0 %v3852
    %6653 = vmatprep.subr.mxu0 %v3857
    %6654 = vmatpush1.msra.mxu0 %v3856
    %6655 = vmatprep.subr.mxu0 %v3861
    %6656 = vmatpush1.msra.mxu0 %v3860
    %6657 = vmatprep.subr.mxu0 %v3865
    %6658 = vmatpush1.msra.mxu0 %v3864
    %6659 = vmatprep.subr.mxu0 %v3869
    %6660 = vmatpush1.msra.mxu0 %v3868
    %6661 = vmatprep.subr.mxu0 %v3873
    %6662 = vmatpush1.msra.mxu0 %v3872
    %6663 = vmatprep.mubr.f32.mxu0 %v2176
    %6664 = vmatmul.mubr.f32.gmra.mrb[0].mxu0 %v1796
    %v6665 = vpop.f32.mrb[0].mxu0
    %v6666 = vadd.f32 %v6524, %v6665
    %v6667 = vpop.f32.mrb[0].mxu0
    %v6668 = vadd.f32 %v6526, %v6667
    %6669 = vdwg.mxu0
    %6670 = vmatprep.subr.mxu0 %v3751
    %6671 = vmatpush1.msra.mxu0 %v3750
    %6672 = vmatprep.subr.mxu0 %v3755
    %6673 = vmatpush1.msra.mxu0 %v3754
    %6674 = vmatprep.subr.mxu0 %v3759
    %6675 = vmatpush1.msra.mxu0 %v3758
    %6676 = vmatprep.subr.mxu0 %v3763
    %6677 = vmatpush1.msra.mxu0 %v3762
    %6678 = vmatprep.subr.mxu0 %v3767
    %6679 = vmatpush1.msra.mxu0 %v3766
    %6680 = vmatprep.subr.mxu0 %v3771
    %6681 = vmatpush1.msra.mxu0 %v3770
    %6682 = vmatprep.subr.mxu0 %v3775
    %6683 = vmatpush1.msra.mxu0 %v3774
    %6684 = vmatprep.subr.mxu0 %v3779
    %6685 = vmatpush1.msra.mxu0 %v3778
    %6686 = vmatprep.subr.mxu0 %v3783
    %6687 = vmatpush1.msra.mxu0 %v3782
    %6688 = vmatprep.subr.mxu0 %v3787
    %6689 = vmatpush1.msra.mxu0 %v3786
    %6690 = vmatprep.subr.mxu0 %v3791
    %6691 = vmatpush1.msra.mxu0 %v3790
    %6692 = vmatprep.subr.mxu0 %v3795
    %6693 = vmatpush1.msra.mxu0 %v3794
    %6694 = vmatprep.subr.mxu0 %v3799
    %6695 = vmatpush1.msra.mxu0 %v3798
    %6696 = vmatprep.subr.mxu0 %v3803
    %6697 = vmatpush1.msra.mxu0 %v3802
    %6698 = vmatprep.subr.mxu0 %v3807
    %6699 = vmatpush1.msra.mxu0 %v3806
    %6700 = vmatprep.subr.mxu0 %v3811
    %6701 = vmatpush1.msra.mxu0 %v3810
    %6702 = vmatprep.subr.mxu0 %v3815
    %6703 = vmatpush1.msra.mxu0 %v3814
    %6704 = vmatprep.subr.mxu0 %v3819
    %6705 = vmatpush1.msra.mxu0 %v3818
    %6706 = vmatprep.subr.mxu0 %v3823
    %6707 = vmatpush1.msra.mxu0 %v3822
    %6708 = vmatprep.subr.mxu0 %v3827
    %6709 = vmatpush1.msra.mxu0 %v3826
    %6710 = vmatprep.subr.mxu0 %v3831
    %6711 = vmatpush1.msra.mxu0 %v3830
    %6712 = vmatprep.subr.mxu0 %v3835
    %6713 = vmatpush1.msra.mxu0 %v3834
    %6714 = vmatprep.subr.mxu0 %v3839
    %6715 = vmatpush1.msra.mxu0 %v3838
    %6716 = vmatprep.subr.mxu0 %v3843
    %6717 = vmatpush1.msra.mxu0 %v3842
    %6718 = vmatprep.subr.mxu0 %v3847
    %6719 = vmatpush1.msra.mxu0 %v3846
    %6720 = vmatprep.subr.mxu0 %v3851
    %6721 = vmatpush1.msra.mxu0 %v3850
    %6722 = vmatprep.subr.mxu0 %v3855
    %6723 = vmatpush1.msra.mxu0 %v3854
    %6724 = vmatprep.subr.mxu0 %v3859
    %6725 = vmatpush1.msra.mxu0 %v3858
    %6726 = vmatprep.subr.mxu0 %v3863
    %6727 = vmatpush1.msra.mxu0 %v3862
    %6728 = vmatprep.subr.mxu0 %v3867
    %6729 = vmatpush1.msra.mxu0 %v3866
    %6730 = vmatprep.subr.mxu0 %v3871
    %6731 = vmatpush1.msra.mxu0 %v3870
    %6732 = vmatprep.subr.mxu0 %v3875
    %6733 = vmatpush1.msra.mxu0 %v3874
    %6734 = vmatprep.mubr.f32.mxu0 %v2176
    %6735 = vmatmul.mubr.f32.gmra.mrb[0].mxu0 %v1796
    %v6736 = vpop.f32.mrb[0].mxu0
    %v6737 = vadd.f32 %v6595, %v6736
    %v6738 = vpop.f32.mrb[0].mxu0
    %v6739 = vadd.f32 %v6597, %v6738
    %6740 = vdwg.mxu0
    %v6741 = vadd.f32 %v6666, %v4228
    %v6742 = vadd.f32 %v6668, %v4232
    %v6743 = vadd.f32 %v6737, %v4236
    %v6744 = vadd.f32 %v6739, %v4240
    %v6745 = vxor.u32 %v6453, 2147483648
    %v6746 = vmul.f32 %v6745, 1.442695
    %v6747 = vpow.pop %v6746
    %v6748 = vadd.f32 %v6747, 1.0
    %v6749 = vrcp.pop %v6748
    %v6750 = vmul.f32 1.0, %v6749
    %v6751 = vxor.u32 %v6454, 2147483648
    %v6752 = vmul.f32 %v6751, 1.442695
    %v6753 = vpow.pop %v6752
    %v6754 = vadd.f32 %v6753, 1.0
    %v6755 = vrcp.pop %v6754
    %v6756 = vmul.f32 1.0, %v6755
    %v6757 = vtanh.pop %v6455
    %v6758 = vxor.u32 %v6456, 2147483648
    %v6759 = vmul.f32 %v6758, 1.442695
    %v6760 = vpow.pop %v6759
    %v6761 = vadd.f32 %v6760, 1.0
    %v6762 = vrcp.pop %v6761
    %v6763 = vmul.f32 1.0, %v6762
    %v6764 = vmul.f32 %v6756, %v6142
    %v6765 = vmul.f32 %v6750, %v6757
    %v6766 = vadd.f32 %v6764, %v6765
    %v6767 = vtanh.pop %v6766
    %v6768 = vmul.f32 %v6763, %v6767
    %v6769 = vxor.u32 %v6741, 2147483648
    %v6770 = vmul.f32 %v6769, 1.442695
    %v6771 = vpow.pop %v6770
    %v6772 = vadd.f32 %v6771, 1.0
    %v6773 = vrcp.pop %v6772
    %v6774 = vmul.f32 1.0, %v6773
    %v6775 = vxor.u32 %v6742, 2147483648
    %v6776 = vmul.f32 %v6775, 1.442695
    %v6777 = vpow.pop %v6776
    %v6778 = vadd.f32 %v6777, 1.0
    %v6779 = vrcp.pop %v6778
    %v6780 = vmul.f32 1.0, %v6779
    %v6781 = vtanh.pop %v6743
    %v6782 = vxor.u32 %v6744, 2147483648
    %v6783 = vmul.f32 %v6782, 1.442695
    %v6784 = vpow.pop %v6783
    %v6785 = vadd.f32 %v6784, 1.0
    %v6786 = vrcp.pop %v6785
    %v6787 = vmul.f32 1.0, %v6786
    %v6788 = vmul.f32 %v6780, %v6166
    %v6789 = vmul.f32 %v6774, %v6781
    %v6790 = vadd.f32 %v6788, %v6789
    %v6791 = vtanh.pop %v6790
    %v6792 = vmul.f32 %v6787, %v6791
    %6793 = vmatprep.subr.mxu0 %v3376
    %6794 = vmatpush1.msra.mxu0 %v3375
    %6795 = vmatprep.subr.mxu0 %v3380
    %6796 = vmatpush1.msra.mxu0 %v3379
    %6797 = vmatprep.subr.mxu0 %v3384
    %6798 = vmatpush1.msra.mxu0 %v3383
    %6799 = vmatprep.subr.mxu0 %v3388
    %6800 = vmatpush1.msra.mxu0 %v3387
    %6801 = vmatprep.subr.mxu0 %v3392
    %6802 = vmatpush1.msra.mxu0 %v3391
    %6803 = vmatprep.subr.mxu0 %v3396
    %6804 = vmatpush1.msra.mxu0 %v3395
    %6805 = vmatprep.subr.mxu0 %v3400
    %6806 = vmatpush1.msra.mxu0 %v3399
    %6807 = vmatprep.subr.mxu0 %v3404
    %6808 = vmatpush1.msra.mxu0 %v3403
    %6809 = vmatprep.subr.mxu0 %v3408
    %6810 = vmatpush1.msra.mxu0 %v3407
    %6811 = vmatprep.subr.mxu0 %v3412
    %6812 = vmatpush1.msra.mxu0 %v3411
    %6813 = vmatprep.subr.mxu0 %v3416
    %6814 = vmatpush1.msra.mxu0 %v3415
    %6815 = vmatprep.subr.mxu0 %v3420
    %6816 = vmatpush1.msra.mxu0 %v3419
    %6817 = vmatprep.subr.mxu0 %v3424
    %6818 = vmatpush1.msra.mxu0 %v3423
    %6819 = vmatprep.subr.mxu0 %v3428
    %6820 = vmatpush1.msra.mxu0 %v3427
    %6821 = vmatprep.subr.mxu0 %v3432
    %6822 = vmatpush1.msra.mxu0 %v3431
    %6823 = vmatprep.subr.mxu0 %v3436
    %6824 = vmatpush1.msra.mxu0 %v3435
    %6825 = vmatprep.subr.mxu0 0.0
    %6826 = vmatpush1.msra.mxu0 0.0
    %6827 = vmatprep.subr.mxu0 0.0
    %6828 = vmatpush1.msra.mxu0 0.0
    %6829 = vmatprep.subr.mxu0 0.0
    %6830 = vmatpush1.msra.mxu0 0.0
    %6831 = vmatprep.subr.mxu0 0.0
    %6832 = vmatpush1.msra.mxu0 0.0
    %6833 = vmatprep.subr.mxu0 0.0
    %6834 = vmatpush1.msra.mxu0 0.0
    %6835 = vmatprep.subr.mxu0 0.0
    %6836 = vmatpush1.msra.mxu0 0.0
    %6837 = vmatprep.subr.mxu0 0.0
    %6838 = vmatpush1.msra.mxu0 0.0
    %6839 = vmatprep.subr.mxu0 0.0
    %6840 = vmatpush1.msra.mxu0 0.0
    %6841 = vmatprep.subr.mxu0 0.0
    %6842 = vmatpush1.msra.mxu0 0.0
    %6843 = vmatprep.subr.mxu0 0.0
    %6844 = vmatpush1.msra.mxu0 0.0
    %6845 = vmatprep.subr.mxu0 0.0
    %6846 = vmatpush1.msra.mxu0 0.0
    %6847 = vmatprep.subr.mxu0 0.0
    %6848 = vmatpush1.msra.mxu0 0.0
    %6849 = vmatprep.subr.mxu0 0.0
    %6850 = vmatpush1.msra.mxu0 0.0
    %6851 = vmatprep.subr.mxu0 0.0
    %6852 = vmatpush1.msra.mxu0 0.0
    %6853 = vmatprep.subr.mxu0 0.0
    %6854 = vmatpush1.msra.mxu0 0.0
    %6855 = vmatprep.subr.mxu0 0.0
    %6856 = vmatpush1.msra.mxu0 0.0
    %6857 = vmatprep.mubr.f32.mxu0 0.0
    %6858 = vmatmul.mubr.f32.gmra.mrb[0].mxu0 %v6768
    %v6859 = vpop.f32.mrb[0].mxu0
    %v6860 = vadd.f32 0.0, %v6859
    %v6861 = vpop.f32.mrb[0].mxu0
    %v6862 = vadd.f32 0.0, %v6861
    %6863 = vdwg.mxu0
    %6864 = vmatprep.subr.mxu0 %v3378
    %6865 = vmatpush1.msra.mxu0 %v3377
    %6866 = vmatprep.subr.mxu0 %v3382
    %6867 = vmatpush1.msra.mxu0 %v3381
    %6868 = vmatprep.subr.mxu0 %v3386
    %6869 = vmatpush1.msra.mxu0 %v3385
    %6870 = vmatprep.subr.mxu0 %v3390
    %6871 = vmatpush1.msra.mxu0 %v3389
    %6872 = vmatprep.subr.mxu0 %v3394
    %6873 = vmatpush1.msra.mxu0 %v3393
    %6874 = vmatprep.subr.mxu0 %v3398
    %6875 = vmatpush1.msra.mxu0 %v3397
    %6876 = vmatprep.subr.mxu0 %v3402
    %6877 = vmatpush1.msra.mxu0 %v3401
    %6878 = vmatprep.subr.mxu0 %v3406
    %6879 = vmatpush1.msra.mxu0 %v3405
    %6880 = vmatprep.subr.mxu0 %v3410
    %6881 = vmatpush1.msra.mxu0 %v3409
    %6882 = vmatprep.subr.mxu0 %v3414
    %6883 = vmatpush1.msra.mxu0 %v3413
    %6884 = vmatprep.subr.mxu0 %v3418
    %6885 = vmatpush1.msra.mxu0 %v3417
    %6886 = vmatprep.subr.mxu0 %v3422
    %6887 = vmatpush1.msra.mxu0 %v3421
    %6888 = vmatprep.subr.mxu0 %v3426
    %6889 = vmatpush1.msra.mxu0 %v3425
    %6890 = vmatprep.subr.mxu0 %v3430
    %6891 = vmatpush1.msra.mxu0 %v3429
    %6892 = vmatprep.subr.mxu0 %v3434
    %6893 = vmatpush1.msra.mxu0 %v3433
    %6894 = vmatprep.subr.mxu0 %v3438
    %6895 = vmatpush1.msra.mxu0 %v3437
    %6896 = vmatprep.subr.mxu0 0.0
    %6897 = vmatpush1.msra.mxu0 0.0
    %6898 = vmatprep.subr.mxu0 0.0
    %6899 = vmatpush1.msra.mxu0 0.0
    %6900 = vmatprep.subr.mxu0 0.0
    %6901 = vmatpush1.msra.mxu0 0.0
    %6902 = vmatprep.subr.mxu0 0.0
    %6903 = vmatpush1.msra.mxu0 0.0
    %6904 = vmatprep.subr.mxu0 0.0
    %6905 = vmatpush1.msra.mxu0 0.0
    %6906 = vmatprep.subr.mxu0 0.0
    %6907 = vmatpush1.msra.mxu0 0.0
    %6908 = vmatprep.subr.mxu0 0.0
    %6909 = vmatpush1.msra.mxu0 0.0
    %6910 = vmatprep.subr.mxu0 0.0
    %6911 = vmatpush1.msra.mxu0 0.0
    %6912 = vmatprep.subr.mxu0 0.0
    %6913 = vmatpush1.msra.mxu0 0.0
    %6914 = vmatprep.subr.mxu0 0.0
    %6915 = vmatpush1.msra.mxu0 0.0
    %6916 = vmatprep.subr.mxu0 0.0
    %6917 = vmatpush1.msra.mxu0 0.0
    %6918 = vmatprep.subr.mxu0 0.0
    %6919 = vmatpush1.msra.mxu0 0.0
    %6920 = vmatprep.subr.mxu0 0.0
    %6921 = vmatpush1.msra.mxu0 0.0
    %6922 = vmatprep.subr.mxu0 0.0
    %6923 = vmatpush1.msra.mxu0 0.0
    %6924 = vmatprep.subr.mxu0 0.0
    %6925 = vmatpush1.msra.mxu0 0.0
    %6926 = vmatprep.subr.mxu0 0.0
    %6927 = vmatpush1.msra.mxu0 0.0
    %6928 = vmatprep.mubr.f32.mxu0 0.0
    %6929 = vmatmul.mubr.f32.gmra.mrb[0].mxu0 %v6768
    %v6930 = vpop.f32.mrb[0].mxu0
    %v6931 = vadd.f32 0.0, %v6930
    %v6932 = vpop.f32.mrb[0].mxu0
    %v6933 = vadd.f32 0.0, %v6932
    %6934 = vdwg.mxu0
    %6935 = vmatprep.subr.mxu0 %v3248
    %6936 = vmatpush1.msra.mxu0 %v3247
    %6937 = vmatprep.subr.mxu0 %v3252
    %6938 = vmatpush1.msra.mxu0 %v3251
    %6939 = vmatprep.subr.mxu0 %v3256
    %6940 = vmatpush1.msra.mxu0 %v3255
    %6941 = vmatprep.subr.mxu0 %v3260
    %6942 = vmatpush1.msra.mxu0 %v3259
    %6943 = vmatprep.subr.mxu0 %v3264
    %6944 = vmatpush1.msra.mxu0 %v3263
    %6945 = vmatprep.subr.mxu0 %v3268
    %6946 = vmatpush1.msra.mxu0 %v3267
    %6947 = vmatprep.subr.mxu0 %v3272
    %6948 = vmatpush1.msra.mxu0 %v3271
    %6949 = vmatprep.subr.mxu0 %v3276
    %6950 = vmatpush1.msra.mxu0 %v3275
    %6951 = vmatprep.subr.mxu0 %v3280
    %6952 = vmatpush1.msra.mxu0 %v3279
    %6953 = vmatprep.subr.mxu0 %v3284
    %6954 = vmatpush1.msra.mxu0 %v3283
    %6955 = vmatprep.subr.mxu0 %v3288
    %6956 = vmatpush1.msra.mxu0 %v3287
    %6957 = vmatprep.subr.mxu0 %v3292
    %6958 = vmatpush1.msra.mxu0 %v3291
    %6959 = vmatprep.subr.mxu0 %v3296
    %6960 = vmatpush1.msra.mxu0 %v3295
    %6961 = vmatprep.subr.mxu0 %v3300
    %6962 = vmatpush1.msra.mxu0 %v3299
    %6963 = vmatprep.subr.mxu0 %v3304
    %6964 = vmatpush1.msra.mxu0 %v3303
    %6965 = vmatprep.subr.mxu0 %v3308
    %6966 = vmatpush1.msra.mxu0 %v3307
    %6967 = vmatprep.subr.mxu0 %v3312
    %6968 = vmatpush1.msra.mxu0 %v3311
    %6969 = vmatprep.subr.mxu0 %v3316
    %6970 = vmatpush1.msra.mxu0 %v3315
    %6971 = vmatprep.subr.mxu0 %v3320
    %6972 = vmatpush1.msra.mxu0 %v3319
    %6973 = vmatprep.subr.mxu0 %v3324
    %6974 = vmatpush1.msra.mxu0 %v3323
    %6975 = vmatprep.subr.mxu0 %v3328
    %6976 = vmatpush1.msra.mxu0 %v3327
    %6977 = vmatprep.subr.mxu0 %v3332
    %6978 = vmatpush1.msra.mxu0 %v3331
    %6979 = vmatprep.subr.mxu0 %v3336
    %6980 = vmatpush1.msra.mxu0 %v3335
    %6981 = vmatprep.subr.mxu0 %v3340
    %6982 = vmatpush1.msra.mxu0 %v3339
    %6983 = vmatprep.subr.mxu0 %v3344
    %6984 = vmatpush1.msra.mxu0 %v3343
    %6985 = vmatprep.subr.mxu0 %v3348
    %6986 = vmatpush1.msra.mxu0 %v3347
    %6987 = vmatprep.subr.mxu0 %v3352
    %6988 = vmatpush1.msra.mxu0 %v3351
    %6989 = vmatprep.subr.mxu0 %v3356
    %6990 = vmatpush1.msra.mxu0 %v3355
    %6991 = vmatprep.subr.mxu0 %v3360
    %6992 = vmatpush1.msra.mxu0 %v3359
    %6993 = vmatprep.subr.mxu0 %v3364
    %6994 = vmatpush1.msra.mxu0 %v3363
    %6995 = vmatprep.subr.mxu0 %v3368
    %6996 = vmatpush1.msra.mxu0 %v3367
    %6997 = vmatprep.subr.mxu0 %v3372
    %6998 = vmatpush1.msra.mxu0 %v3371
    %6999 = vmatprep.mubr.f32.mxu0 %v1450
    %7000 = vmatmul.mubr.f32.gmra.mrb[0].mxu0 %v2508
    %v7001 = vpop.f32.mrb[0].mxu0
    %v7002 = vadd.f32 %v6860, %v7001
    %v7003 = vpop.f32.mrb[0].mxu0
    %v7004 = vadd.f32 %v6862, %v7003
    %7005 = vdwg.mxu0
    %7006 = vmatprep.subr.mxu0 %v3250
    %7007 = vmatpush1.msra.mxu0 %v3249
    %7008 = vmatprep.subr.mxu0 %v3254
    %7009 = vmatpush1.msra.mxu0 %v3253
    %7010 = vmatprep.subr.mxu0 %v3258
    %7011 = vmatpush1.msra.mxu0 %v3257
    %7012 = vmatprep.subr.mxu0 %v3262
    %7013 = vmatpush1.msra.mxu0 %v3261
    %7014 = vmatprep.subr.mxu0 %v3266
    %7015 = vmatpush1.msra.mxu0 %v3265
    %7016 = vmatprep.subr.mxu0 %v3270
    %7017 = vmatpush1.msra.mxu0 %v3269
    %7018 = vmatprep.subr.mxu0 %v3274
    %7019 = vmatpush1.msra.mxu0 %v3273
    %7020 = vmatprep.subr.mxu0 %v3278
    %7021 = vmatpush1.msra.mxu0 %v3277
    %7022 = vmatprep.subr.mxu0 %v3282
    %7023 = vmatpush1.msra.mxu0 %v3281
    %7024 = vmatprep.subr.mxu0 %v3286
    %7025 = vmatpush1.msra.mxu0 %v3285
    %7026 = vmatprep.subr.mxu0 %v3290
    %7027 = vmatpush1.msra.mxu0 %v3289
    %7028 = vmatprep.subr.mxu0 %v3294
    %7029 = vmatpush1.msra.mxu0 %v3293
    %7030 = vmatprep.subr.mxu0 %v3298
    %7031 = vmatpush1.msra.mxu0 %v3297
    %7032 = vmatprep.subr.mxu0 %v3302
    %7033 = vmatpush1.msra.mxu0 %v3301
    %7034 = vmatprep.subr.mxu0 %v3306
    %7035 = vmatpush1.msra.mxu0 %v3305
    %7036 = vmatprep.subr.mxu0 %v3310
    %7037 = vmatpush1.msra.mxu0 %v3309
    %7038 = vmatprep.subr.mxu0 %v3314
    %7039 = vmatpush1.msra.mxu0 %v3313
    %7040 = vmatprep.subr.mxu0 %v3318
    %7041 = vmatpush1.msra.mxu0 %v3317
    %7042 = vmatprep.subr.mxu0 %v3322
    %7043 = vmatpush1.msra.mxu0 %v3321
    %7044 = vmatprep.subr.mxu0 %v3326
    %7045 = vmatpush1.msra.mxu0 %v3325
    %7046 = vmatprep.subr.mxu0 %v3330
    %7047 = vmatpush1.msra.mxu0 %v3329
    %7048 = vmatprep.subr.mxu0 %v3334
    %7049 = vmatpush1.msra.mxu0 %v3333
    %7050 = vmatprep.subr.mxu0 %v3338
    %7051 = vmatpush1.msra.mxu0 %v3337
    %7052 = vmatprep.subr.mxu0 %v3342
    %7053 = vmatpush1.msra.mxu0 %v3341
    %7054 = vmatprep.subr.mxu0 %v3346
    %7055 = vmatpush1.msra.mxu0 %v3345
    %7056 = vmatprep.subr.mxu0 %v3350
    %7057 = vmatpush1.msra.mxu0 %v3349
    %7058 = vmatprep.subr.mxu0 %v3354
    %7059 = vmatpush1.msra.mxu0 %v3353
    %7060 = vmatprep.subr.mxu0 %v3358
    %7061 = vmatpush1.msra.mxu0 %v3357
    %7062 = vmatprep.subr.mxu0 %v3362
    %7063 = vmatpush1.msra.mxu0 %v3361
    %7064 = vmatprep.subr.mxu0 %v3366
    %7065 = vmatpush1.msra.mxu0 %v3365
    %7066 = vmatprep.subr.mxu0 %v3370
    %7067 = vmatpush1.msra.mxu0 %v3369
    %7068 = vmatprep.subr.mxu0 %v3374
    %7069 = vmatpush1.msra.mxu0 %v3373
    %7070 = vmatprep.mubr.f32.mxu0 %v1450
    %7071 = vmatmul.mubr.f32.gmra.mrb[0].mxu0 %v2508
    %v7072 = vpop.f32.mrb[0].mxu0
    %v7073 = vadd.f32 %v6931, %v7072
    %v7074 = vpop.f32.mrb[0].mxu0
    %v7075 = vadd.f32 %v6933, %v7074
    %7076 = vdwg.mxu0
    %v7077 = vadd.f32 %v7002, %v3727
    %v7078 = vadd.f32 %v7004, %v3731
    %v7079 = vadd.f32 %v7073, %v3735
    %v7080 = vadd.f32 %v7075, %v3739
    %7081 = vmatprep.subr.mxu0 %v3877
    %7082 = vmatpush1.msra.mxu0 %v3876
    %7083 = vmatprep.subr.mxu0 %v3881
    %7084 = vmatpush1.msra.mxu0 %v3880
    %7085 = vmatprep.subr.mxu0 %v3885
    %7086 = vmatpush1.msra.mxu0 %v3884
    %7087 = vmatprep.subr.mxu0 %v3889
    %7088 = vmatpush1.msra.mxu0 %v3888
    %7089 = vmatprep.subr.mxu0 %v3893
    %7090 = vmatpush1.msra.mxu0 %v3892
    %7091 = vmatprep.subr.mxu0 %v3897
    %7092 = vmatpush1.msra.mxu0 %v3896
    %7093 = vmatprep.subr.mxu0 %v3901
    %7094 = vmatpush1.msra.mxu0 %v3900
    %7095 = vmatprep.subr.mxu0 %v3905
    %7096 = vmatpush1.msra.mxu0 %v3904
    %7097 = vmatprep.subr.mxu0 %v3909
    %7098 = vmatpush1.msra.mxu0 %v3908
    %7099 = vmatprep.subr.mxu0 %v3913
    %7100 = vmatpush1.msra.mxu0 %v3912
    %7101 = vmatprep.subr.mxu0 %v3917
    %7102 = vmatpush1.msra.mxu0 %v3916
    %7103 = vmatprep.subr.mxu0 %v3921
    %7104 = vmatpush1.msra.mxu0 %v3920
    %7105 = vmatprep.subr.mxu0 %v3925
    %7106 = vmatpush1.msra.mxu0 %v3924
    %7107 = vmatprep.subr.mxu0 %v3929
    %7108 = vmatpush1.msra.mxu0 %v3928
    %7109 = vmatprep.subr.mxu0 %v3933
    %7110 = vmatpush1.msra.mxu0 %v3932
    %7111 = vmatprep.subr.mxu0 %v3937
    %7112 = vmatpush1.msra.mxu0 %v3936
    %7113 = vmatprep.subr.mxu0 0.0
    %7114 = vmatpush1.msra.mxu0 0.0
    %7115 = vmatprep.subr.mxu0 0.0
    %7116 = vmatpush1.msra.mxu0 0.0
    %7117 = vmatprep.subr.mxu0 0.0
    %7118 = vmatpush1.msra.mxu0 0.0
    %7119 = vmatprep.subr.mxu0 0.0
    %7120 = vmatpush1.msra.mxu0 0.0
    %7121 = vmatprep.subr.mxu0 0.0
    %7122 = vmatpush1.msra.mxu0 0.0
    %7123 = vmatprep.subr.mxu0 0.0
    %7124 = vmatpush1.msra.mxu0 0.0
    %7125 = vmatprep.subr.mxu0 0.0
    %7126 = vmatpush1.msra.mxu0 0.0
    %7127 = vmatprep.subr.mxu0 0.0
    %7128 = vmatpush1.msra.mxu0 0.0
    %7129 = vmatprep.subr.mxu0 0.0
    %7130 = vmatpush1.msra.mxu0 0.0
    %7131 = vmatprep.subr.mxu0 0.0
    %7132 = vmatpush1.msra.mxu0 0.0
    %7133 = vmatprep.subr.mxu0 0.0
    %7134 = vmatpush1.msra.mxu0 0.0
    %7135 = vmatprep.subr.mxu0 0.0
    %7136 = vmatpush1.msra.mxu0 0.0
    %7137 = vmatprep.subr.mxu0 0.0
    %7138 = vmatpush1.msra.mxu0 0.0
    %7139 = vmatprep.subr.mxu0 0.0
    %7140 = vmatpush1.msra.mxu0 0.0
    %7141 = vmatprep.subr.mxu0 0.0
    %7142 = vmatpush1.msra.mxu0 0.0
    %7143 = vmatprep.subr.mxu0 0.0
    %7144 = vmatpush1.msra.mxu0 0.0
    %7145 = vmatprep.mubr.f32.mxu0 0.0
    %7146 = vmatmul.mubr.f32.gmra.mrb[0].mxu0 %v6792
    %v7147 = vpop.f32.mrb[0].mxu0
    %v7148 = vadd.f32 0.0, %v7147
    %v7149 = vpop.f32.mrb[0].mxu0
    %v7150 = vadd.f32 0.0, %v7149
    %7151 = vdwg.mxu0
    %7152 = vmatprep.subr.mxu0 %v3879
    %7153 = vmatpush1.msra.mxu0 %v3878
    %7154 = vmatprep.subr.mxu0 %v3883
    %7155 = vmatpush1.msra.mxu0 %v3882
    %7156 = vmatprep.subr.mxu0 %v3887
    %7157 = vmatpush1.msra.mxu0 %v3886
    %7158 = vmatprep.subr.mxu0 %v3891
    %7159 = vmatpush1.msra.mxu0 %v3890
    %7160 = vmatprep.subr.mxu0 %v3895
    %7161 = vmatpush1.msra.mxu0 %v3894
    %7162 = vmatprep.subr.mxu0 %v3899
    %7163 = vmatpush1.msra.mxu0 %v3898
    %7164 = vmatprep.subr.mxu0 %v3903
    %7165 = vmatpush1.msra.mxu0 %v3902
    %7166 = vmatprep.subr.mxu0 %v3907
    %7167 = vmatpush1.msra.mxu0 %v3906
    %7168 = vmatprep.subr.mxu0 %v3911
    %7169 = vmatpush1.msra.mxu0 %v3910
    %7170 = vmatprep.subr.mxu0 %v3915
    %7171 = vmatpush1.msra.mxu0 %v3914
    %7172 = vmatprep.subr.mxu0 %v3919
    %7173 = vmatpush1.msra.mxu0 %v3918
    %7174 = vmatprep.subr.mxu0 %v3923
    %7175 = vmatpush1.msra.mxu0 %v3922
    %7176 = vmatprep.subr.mxu0 %v3927
    %7177 = vmatpush1.msra.mxu0 %v3926
    %7178 = vmatprep.subr.mxu0 %v3931
    %7179 = vmatpush1.msra.mxu0 %v3930
    %7180 = vmatprep.subr.mxu0 %v3935
    %7181 = vmatpush1.msra.mxu0 %v3934
    %7182 = vmatprep.subr.mxu0 %v3939
    %7183 = vmatpush1.msra.mxu0 %v3938
    %7184 = vmatprep.subr.mxu0 0.0
    %7185 = vmatpush1.msra.mxu0 0.0
    %7186 = vmatprep.subr.mxu0 0.0
    %7187 = vmatpush1.msra.mxu0 0.0
    %7188 = vmatprep.subr.mxu0 0.0
    %7189 = vmatpush1.msra.mxu0 0.0
    %7190 = vmatprep.subr.mxu0 0.0
    %7191 = vmatpush1.msra.mxu0 0.0
    %7192 = vmatprep.subr.mxu0 0.0
    %7193 = vmatpush1.msra.mxu0 0.0
    %7194 = vmatprep.subr.mxu0 0.0
    %7195 = vmatpush1.msra.mxu0 0.0
    %7196 = vmatprep.subr.mxu0 0.0
    %7197 = vmatpush1.msra.mxu0 0.0
    %7198 = vmatprep.subr.mxu0 0.0
    %7199 = vmatpush1.msra.mxu0 0.0
    %7200 = vmatprep.subr.mxu0 0.0
    %7201 = vmatpush1.msra.mxu0 0.0
    %7202 = vmatprep.subr.mxu0 0.0
    %7203 = vmatpush1.msra.mxu0 0.0
    %7204 = vmatprep.subr.mxu0 0.0
    %7205 = vmatpush1.msra.mxu0 0.0
    %7206 = vmatprep.subr.mxu0 0.0
    %7207 = vmatpush1.msra.mxu0 0.0
    %7208 = vmatprep.subr.mxu0 0.0
    %7209 = vmatpush1.msra.mxu0 0.0
    %7210 = vmatprep.subr.mxu0 0.0
    %7211 = vmatpush1.msra.mxu0 0.0
    %7212 = vmatprep.subr.mxu0 0.0
    %7213 = vmatpush1.msra.mxu0 0.0
    %7214 = vmatprep.subr.mxu0 0.0
    %7215 = vmatpush1.msra.mxu0 0.0
    %7216 = vmatprep.mubr.f32.mxu0 0.0
    %7217 = vmatmul.mubr.f32.gmra.mrb[0].mxu0 %v6792
    %v7218 = vpop.f32.mrb[0].mxu0
    %v7219 = vadd.f32 0.0, %v7218
    %v7220 = vpop.f32.mrb[0].mxu0
    %v7221 = vadd.f32 0.0, %v7220
    %7222 = vdwg.mxu0
    %7223 = vmatprep.subr.mxu0 %v3749
    %7224 = vmatpush1.msra.mxu0 %v3748
    %7225 = vmatprep.subr.mxu0 %v3753
    %7226 = vmatpush1.msra.mxu0 %v3752
    %7227 = vmatprep.subr.mxu0 %v3757
    %7228 = vmatpush1.msra.mxu0 %v3756
    %7229 = vmatprep.subr.mxu0 %v3761
    %7230 = vmatpush1.msra.mxu0 %v3760
    %7231 = vmatprep.subr.mxu0 %v3765
    %7232 = vmatpush1.msra.mxu0 %v3764
    %7233 = vmatprep.subr.mxu0 %v3769
    %7234 = vmatpush1.msra.mxu0 %v3768
    %7235 = vmatprep.subr.mxu0 %v3773
    %7236 = vmatpush1.msra.mxu0 %v3772
    %7237 = vmatprep.subr.mxu0 %v3777
    %7238 = vmatpush1.msra.mxu0 %v3776
    %7239 = vmatprep.subr.mxu0 %v3781
    %7240 = vmatpush1.msra.mxu0 %v3780
    %7241 = vmatprep.subr.mxu0 %v3785
    %7242 = vmatpush1.msra.mxu0 %v3784
    %7243 = vmatprep.subr.mxu0 %v3789
    %7244 = vmatpush1.msra.mxu0 %v3788
    %7245 = vmatprep.subr.mxu0 %v3793
    %7246 = vmatpush1.msra.mxu0 %v3792
    %7247 = vmatprep.subr.mxu0 %v3797
    %7248 = vmatpush1.msra.mxu0 %v3796
    %7249 = vmatprep.subr.mxu0 %v3801
    %7250 = vmatpush1.msra.mxu0 %v3800
    %7251 = vmatprep.subr.mxu0 %v3805
    %7252 = vmatpush1.msra.mxu0 %v3804
    %7253 = vmatprep.subr.mxu0 %v3809
    %7254 = vmatpush1.msra.mxu0 %v3808
    %7255 = vmatprep.subr.mxu0 %v3813
    %7256 = vmatpush1.msra.mxu0 %v3812
    %7257 = vmatprep.subr.mxu0 %v3817
    %7258 = vmatpush1.msra.mxu0 %v3816
    %7259 = vmatprep.subr.mxu0 %v3821
    %7260 = vmatpush1.msra.mxu0 %v3820
    %7261 = vmatprep.subr.mxu0 %v3825
    %7262 = vmatpush1.msra.mxu0 %v3824
    %7263 = vmatprep.subr.mxu0 %v3829
    %7264 = vmatpush1.msra.mxu0 %v3828
    %7265 = vmatprep.subr.mxu0 %v3833
    %7266 = vmatpush1.msra.mxu0 %v3832
    %7267 = vmatprep.subr.mxu0 %v3837
    %7268 = vmatpush1.msra.mxu0 %v3836
    %7269 = vmatprep.subr.mxu0 %v3841
    %7270 = vmatpush1.msra.mxu0 %v3840
    %7271 = vmatprep.subr.mxu0 %v3845
    %7272 = vmatpush1.msra.mxu0 %v3844
    %7273 = vmatprep.subr.mxu0 %v3849
    %7274 = vmatpush1.msra.mxu0 %v3848
    %7275 = vmatprep.subr.mxu0 %v3853
    %7276 = vmatpush1.msra.mxu0 %v3852
    %7277 = vmatprep.subr.mxu0 %v3857
    %7278 = vmatpush1.msra.mxu0 %v3856
    %7279 = vmatprep.subr.mxu0 %v3861
    %7280 = vmatpush1.msra.mxu0 %v3860
    %7281 = vmatprep.subr.mxu0 %v3865
    %7282 = vmatpush1.msra.mxu0 %v3864
    %7283 = vmatprep.subr.mxu0 %v3869
    %7284 = vmatpush1.msra.mxu0 %v3868
    %7285 = vmatprep.subr.mxu0 %v3873
    %7286 = vmatpush1.msra.mxu0 %v3872
    %7287 = vmatprep.mubr.f32.mxu0 %v2532
    %7288 = vmatmul.mubr.f32.gmra.mrb[0].mxu0 %v1426
    %v7289 = vpop.f32.mrb[0].mxu0
    %v7290 = vadd.f32 %v7148, %v7289
    %v7291 = vpop.f32.mrb[0].mxu0
    %v7292 = vadd.f32 %v7150, %v7291
    %7293 = vdwg.mxu0
    %7294 = vmatprep.subr.mxu0 %v3751
    %7295 = vmatpush1.msra.mxu0 %v3750
    %7296 = vmatprep.subr.mxu0 %v3755
    %7297 = vmatpush1.msra.mxu0 %v3754
    %7298 = vmatprep.subr.mxu0 %v3759
    %7299 = vmatpush1.msra.mxu0 %v3758
    %7300 = vmatprep.subr.mxu0 %v3763
    %7301 = vmatpush1.msra.mxu0 %v3762
    %7302 = vmatprep.subr.mxu0 %v3767
    %7303 = vmatpush1.msra.mxu0 %v3766
    %7304 = vmatprep.subr.mxu0 %v3771
    %7305 = vmatpush1.msra.mxu0 %v3770
    %7306 = vmatprep.subr.mxu0 %v3775
    %7307 = vmatpush1.msra.mxu0 %v3774
    %7308 = vmatprep.subr.mxu0 %v3779
    %7309 = vmatpush1.msra.mxu0 %v3778
    %7310 = vmatprep.subr.mxu0 %v3783
    %7311 = vmatpush1.msra.mxu0 %v3782
    %7312 = vmatprep.subr.mxu0 %v3787
    %7313 = vmatpush1.msra.mxu0 %v3786
    %7314 = vmatprep.subr.mxu0 %v3791
    %7315 = vmatpush1.msra.mxu0 %v3790
    %7316 = vmatprep.subr.mxu0 %v3795
    %7317 = vmatpush1.msra.mxu0 %v3794
    %7318 = vmatprep.subr.mxu0 %v3799
    %7319 = vmatpush1.msra.mxu0 %v3798
    %7320 = vmatprep.subr.mxu0 %v3803
    %7321 = vmatpush1.msra.mxu0 %v3802
    %7322 = vmatprep.subr.mxu0 %v3807
    %7323 = vmatpush1.msra.mxu0 %v3806
    %7324 = vmatprep.subr.mxu0 %v3811
    %7325 = vmatpush1.msra.mxu0 %v3810
    %7326 = vmatprep.subr.mxu0 %v3815
    %7327 = vmatpush1.msra.mxu0 %v3814
    %7328 = vmatprep.subr.mxu0 %v3819
    %7329 = vmatpush1.msra.mxu0 %v3818
    %7330 = vmatprep.subr.mxu0 %v3823
    %7331 = vmatpush1.msra.mxu0 %v3822
    %7332 = vmatprep.subr.mxu0 %v3827
    %7333 = vmatpush1.msra.mxu0 %v3826
    %7334 = vmatprep.subr.mxu0 %v3831
    %7335 = vmatpush1.msra.mxu0 %v3830
    %7336 = vmatprep.subr.mxu0 %v3835
    %7337 = vmatpush1.msra.mxu0 %v3834
    %7338 = vmatprep.subr.mxu0 %v3839
    %7339 = vmatpush1.msra.mxu0 %v3838
    %7340 = vmatprep.subr.mxu0 %v3843
    %7341 = vmatpush1.msra.mxu0 %v3842
    %7342 = vmatprep.subr.mxu0 %v3847
    %7343 = vmatpush1.msra.mxu0 %v3846
    %7344 = vmatprep.subr.mxu0 %v3851
    %7345 = vmatpush1.msra.mxu0 %v3850
    %7346 = vmatprep.subr.mxu0 %v3855
    %7347 = vmatpush1.msra.mxu0 %v3854
    %7348 = vmatprep.subr.mxu0 %v3859
    %7349 = vmatpush1.msra.mxu0 %v3858
    %7350 = vmatprep.subr.mxu0 %v3863
    %7351 = vmatpush1.msra.mxu0 %v3862
    %7352 = vmatprep.subr.mxu0 %v3867
    %7353 = vmatpush1.msra.mxu0 %v3866
    %7354 = vmatprep.subr.mxu0 %v3871
    %7355 = vmatpush1.msra.mxu0 %v3870
    %7356 = vmatprep.subr.mxu0 %v3875
    %7357 = vmatpush1.msra.mxu0 %v3874
    %7358 = vmatprep.mubr.f32.mxu0 %v2532
    %7359 = vmatmul.mubr.f32.gmra.mrb[0].mxu0 %v1426
    %v7360 = vpop.f32.mrb[0].mxu0
    %v7361 = vadd.f32 %v7219, %v7360
    %v7362 = vpop.f32.mrb[0].mxu0
    %v7363 = vadd.f32 %v7221, %v7362
    %7364 = vdwg.mxu0
    %v7365 = vadd.f32 %v7290, %v4228
    %v7366 = vadd.f32 %v7292, %v4232
    %v7367 = vadd.f32 %v7361, %v4236
    %v7368 = vadd.f32 %v7363, %v4240
    %v7369 = vxor.u32 %v7077, 2147483648
    %v7370 = vmul.f32 %v7369, 1.442695
    %v7371 = vpow.pop %v7370
    %v7372 = vadd.f32 %v7371, 1.0
    %v7373 = vrcp.pop %v7372
    %v7374 = vmul.f32 1.0, %v7373
    %v7375 = vxor.u32 %v7078, 2147483648
    %v7376 = vmul.f32 %v7375, 1.442695
    %v7377 = vpow.pop %v7376
    %v7378 = vadd.f32 %v7377, 1.0
    %v7379 = vrcp.pop %v7378
    %v7380 = vmul.f32 1.0, %v7379
    %v7381 = vtanh.pop %v7079
    %v7382 = vxor.u32 %v7080, 2147483648
    %v7383 = vmul.f32 %v7382, 1.442695
    %v7384 = vpow.pop %v7383
    %v7385 = vadd.f32 %v7384, 1.0
    %v7386 = vrcp.pop %v7385
    %v7387 = vmul.f32 1.0, %v7386
    %v7388 = vmul.f32 %v7380, %v6766
    %v7389 = vmul.f32 %v7374, %v7381
    %v7390 = vadd.f32 %v7388, %v7389
    %v7391 = vtanh.pop %v7390
    %v7392 = vmul.f32 %v7387, %v7391
    %v7393 = vxor.u32 %v7365, 2147483648
    %v7394 = vmul.f32 %v7393, 1.442695
    %v7395 = vpow.pop %v7394
    %v7396 = vadd.f32 %v7395, 1.0
    %v7397 = vrcp.pop %v7396
    %v7398 = vmul.f32 1.0, %v7397
    %v7399 = vxor.u32 %v7366, 2147483648
    %v7400 = vmul.f32 %v7399, 1.442695
    %v7401 = vpow.pop %v7400
    %v7402 = vadd.f32 %v7401, 1.0
    %v7403 = vrcp.pop %v7402
    %v7404 = vmul.f32 1.0, %v7403
    %v7405 = vtanh.pop %v7367
    %v7406 = vxor.u32 %v7368, 2147483648
    %v7407 = vmul.f32 %v7406, 1.442695
    %v7408 = vpow.pop %v7407
    %v7409 = vadd.f32 %v7408, 1.0
    %v7410 = vrcp.pop %v7409
    %v7411 = vmul.f32 1.0, %v7410
    %v7412 = vmul.f32 %v7404, %v6790
    %v7413 = vmul.f32 %v7398, %v7405
    %v7414 = vadd.f32 %v7412, %v7413
    %v7415 = vtanh.pop %v7414
    %v7416 = vmul.f32 %v7411, %v7415
    %7417 = vmatprep.subr.mxu0 %v3376
    %7418 = vmatpush1.msra.mxu0 %v3375
    %7419 = vmatprep.subr.mxu0 %v3380
    %7420 = vmatpush1.msra.mxu0 %v3379
    %7421 = vmatprep.subr.mxu0 %v3384
    %7422 = vmatpush1.msra.mxu0 %v3383
    %7423 = vmatprep.subr.mxu0 %v3388
    %7424 = vmatpush1.msra.mxu0 %v3387
    %7425 = vmatprep.subr.mxu0 %v3392
    %7426 = vmatpush1.msra.mxu0 %v3391
    %7427 = vmatprep.subr.mxu0 %v3396
    %7428 = vmatpush1.msra.mxu0 %v3395
    %7429 = vmatprep.subr.mxu0 %v3400
    %7430 = vmatpush1.msra.mxu0 %v3399
    %7431 = vmatprep.subr.mxu0 %v3404
    %7432 = vmatpush1.msra.mxu0 %v3403
    %7433 = vmatprep.subr.mxu0 %v3408
    %7434 = vmatpush1.msra.mxu0 %v3407
    %7435 = vmatprep.subr.mxu0 %v3412
    %7436 = vmatpush1.msra.mxu0 %v3411
    %7437 = vmatprep.subr.mxu0 %v3416
    %7438 = vmatpush1.msra.mxu0 %v3415
    %7439 = vmatprep.subr.mxu0 %v3420
    %7440 = vmatpush1.msra.mxu0 %v3419
    %7441 = vmatprep.subr.mxu0 %v3424
    %7442 = vmatpush1.msra.mxu0 %v3423
    %7443 = vmatprep.subr.mxu0 %v3428
    %7444 = vmatpush1.msra.mxu0 %v3427
    %7445 = vmatprep.subr.mxu0 %v3432
    %7446 = vmatpush1.msra.mxu0 %v3431
    %7447 = vmatprep.subr.mxu0 %v3436
    %7448 = vmatpush1.msra.mxu0 %v3435
    %7449 = vmatprep.subr.mxu0 0.0
    %7450 = vmatpush1.msra.mxu0 0.0
    %7451 = vmatprep.subr.mxu0 0.0
    %7452 = vmatpush1.msra.mxu0 0.0
    %7453 = vmatprep.subr.mxu0 0.0
    %7454 = vmatpush1.msra.mxu0 0.0
    %7455 = vmatprep.subr.mxu0 0.0
    %7456 = vmatpush1.msra.mxu0 0.0
    %7457 = vmatprep.subr.mxu0 0.0
    %7458 = vmatpush1.msra.mxu0 0.0
    %7459 = vmatprep.subr.mxu0 0.0
    %7460 = vmatpush1.msra.mxu0 0.0
    %7461 = vmatprep.subr.mxu0 0.0
    %7462 = vmatpush1.msra.mxu0 0.0
    %7463 = vmatprep.subr.mxu0 0.0
    %7464 = vmatpush1.msra.mxu0 0.0
    %7465 = vmatprep.subr.mxu0 0.0
    %7466 = vmatpush1.msra.mxu0 0.0
    %7467 = vmatprep.subr.mxu0 0.0
    %7468 = vmatpush1.msra.mxu0 0.0
    %7469 = vmatprep.subr.mxu0 0.0
    %7470 = vmatpush1.msra.mxu0 0.0
    %7471 = vmatprep.subr.mxu0 0.0
    %7472 = vmatpush1.msra.mxu0 0.0
    %7473 = vmatprep.subr.mxu0 0.0
    %7474 = vmatpush1.msra.mxu0 0.0
    %7475 = vmatprep.subr.mxu0 0.0
    %7476 = vmatpush1.msra.mxu0 0.0
    %7477 = vmatprep.subr.mxu0 0.0
    %7478 = vmatpush1.msra.mxu0 0.0
    %7479 = vmatprep.subr.mxu0 0.0
    %7480 = vmatpush1.msra.mxu0 0.0
    %7481 = vmatprep.mubr.f32.mxu0 0.0
    %7482 = vmatmul.mubr.f32.gmra.mrb[0].mxu0 %v7392
    %v7483 = vpop.f32.mrb[0].mxu0
    %v7484 = vadd.f32 0.0, %v7483
    %v7485 = vpop.f32.mrb[0].mxu0
    %v7486 = vadd.f32 0.0, %v7485
    %7487 = vdwg.mxu0
    %7488 = vmatprep.subr.mxu0 %v3378
    %7489 = vmatpush1.msra.mxu0 %v3377
    %7490 = vmatprep.subr.mxu0 %v3382
    %7491 = vmatpush1.msra.mxu0 %v3381
    %7492 = vmatprep.subr.mxu0 %v3386
    %7493 = vmatpush1.msra.mxu0 %v3385
    %7494 = vmatprep.subr.mxu0 %v3390
    %7495 = vmatpush1.msra.mxu0 %v3389
    %7496 = vmatprep.subr.mxu0 %v3394
    %7497 = vmatpush1.msra.mxu0 %v3393
    %7498 = vmatprep.subr.mxu0 %v3398
    %7499 = vmatpush1.msra.mxu0 %v3397
    %7500 = vmatprep.subr.mxu0 %v3402
    %7501 = vmatpush1.msra.mxu0 %v3401
    %7502 = vmatprep.subr.mxu0 %v3406
    %7503 = vmatpush1.msra.mxu0 %v3405
    %7504 = vmatprep.subr.mxu0 %v3410
    %7505 = vmatpush1.msra.mxu0 %v3409
    %7506 = vmatprep.subr.mxu0 %v3414
    %7507 = vmatpush1.msra.mxu0 %v3413
    %7508 = vmatprep.subr.mxu0 %v3418
    %7509 = vmatpush1.msra.mxu0 %v3417
    %7510 = vmatprep.subr.mxu0 %v3422
    %7511 = vmatpush1.msra.mxu0 %v3421
    %7512 = vmatprep.subr.mxu0 %v3426
    %7513 = vmatpush1.msra.mxu0 %v3425
    %7514 = vmatprep.subr.mxu0 %v3430
    %7515 = vmatpush1.msra.mxu0 %v3429
    %7516 = vmatprep.subr.mxu0 %v3434
    %7517 = vmatpush1.msra.mxu0 %v3433
    %7518 = vmatprep.subr.mxu0 %v3438
    %7519 = vmatpush1.msra.mxu0 %v3437
    %7520 = vmatprep.subr.mxu0 0.0
    %7521 = vmatpush1.msra.mxu0 0.0
    %7522 = vmatprep.subr.mxu0 0.0
    %7523 = vmatpush1.msra.mxu0 0.0
    %7524 = vmatprep.subr.mxu0 0.0
    %7525 = vmatpush1.msra.mxu0 0.0
    %7526 = vmatprep.subr.mxu0 0.0
    %7527 = vmatpush1.msra.mxu0 0.0
    %7528 = vmatprep.subr.mxu0 0.0
    %7529 = vmatpush1.msra.mxu0 0.0
    %7530 = vmatprep.subr.mxu0 0.0
    %7531 = vmatpush1.msra.mxu0 0.0
    %7532 = vmatprep.subr.mxu0 0.0
    %7533 = vmatpush1.msra.mxu0 0.0
    %7534 = vmatprep.subr.mxu0 0.0
    %7535 = vmatpush1.msra.mxu0 0.0
    %7536 = vmatprep.subr.mxu0 0.0
    %7537 = vmatpush1.msra.mxu0 0.0
    %7538 = vmatprep.subr.mxu0 0.0
    %7539 = vmatpush1.msra.mxu0 0.0
    %7540 = vmatprep.subr.mxu0 0.0
    %7541 = vmatpush1.msra.mxu0 0.0
    %7542 = vmatprep.subr.mxu0 0.0
    %7543 = vmatpush1.msra.mxu0 0.0
    %7544 = vmatprep.subr.mxu0 0.0
    %7545 = vmatpush1.msra.mxu0 0.0
    %7546 = vmatprep.subr.mxu0 0.0
    %7547 = vmatpush1.msra.mxu0 0.0
    %7548 = vmatprep.subr.mxu0 0.0
    %7549 = vmatpush1.msra.mxu0 0.0
    %7550 = vmatprep.subr.mxu0 0.0
    %7551 = vmatpush1.msra.mxu0 0.0
    %7552 = vmatprep.mubr.f32.mxu0 0.0
    %7553 = vmatmul.mubr.f32.gmra.mrb[0].mxu0 %v7392
    %v7554 = vpop.f32.mrb[0].mxu0
    %v7555 = vadd.f32 0.0, %v7554
    %v7556 = vpop.f32.mrb[0].mxu0
    %v7557 = vadd.f32 0.0, %v7556
    %7558 = vdwg.mxu0
    %7559 = vmatprep.subr.mxu0 %v3248
    %7560 = vmatpush1.msra.mxu0 %v3247
    %7561 = vmatprep.subr.mxu0 %v3252
    %7562 = vmatpush1.msra.mxu0 %v3251
    %7563 = vmatprep.subr.mxu0 %v3256
    %7564 = vmatpush1.msra.mxu0 %v3255
    %7565 = vmatprep.subr.mxu0 %v3260
    %7566 = vmatpush1.msra.mxu0 %v3259
    %7567 = vmatprep.subr.mxu0 %v3264
    %7568 = vmatpush1.msra.mxu0 %v3263
    %7569 = vmatprep.subr.mxu0 %v3268
    %7570 = vmatpush1.msra.mxu0 %v3267
    %7571 = vmatprep.subr.mxu0 %v3272
    %7572 = vmatpush1.msra.mxu0 %v3271
    %7573 = vmatprep.subr.mxu0 %v3276
    %7574 = vmatpush1.msra.mxu0 %v3275
    %7575 = vmatprep.subr.mxu0 %v3280
    %7576 = vmatpush1.msra.mxu0 %v3279
    %7577 = vmatprep.subr.mxu0 %v3284
    %7578 = vmatpush1.msra.mxu0 %v3283
    %7579 = vmatprep.subr.mxu0 %v3288
    %7580 = vmatpush1.msra.mxu0 %v3287
    %7581 = vmatprep.subr.mxu0 %v3292
    %7582 = vmatpush1.msra.mxu0 %v3291
    %7583 = vmatprep.subr.mxu0 %v3296
    %7584 = vmatpush1.msra.mxu0 %v3295
    %7585 = vmatprep.subr.mxu0 %v3300
    %7586 = vmatpush1.msra.mxu0 %v3299
    %7587 = vmatprep.subr.mxu0 %v3304
    %7588 = vmatpush1.msra.mxu0 %v3303
    %7589 = vmatprep.subr.mxu0 %v3308
    %7590 = vmatpush1.msra.mxu0 %v3307
    %7591 = vmatprep.subr.mxu0 %v3312
    %7592 = vmatpush1.msra.mxu0 %v3311
    %7593 = vmatprep.subr.mxu0 %v3316
    %7594 = vmatpush1.msra.mxu0 %v3315
    %7595 = vmatprep.subr.mxu0 %v3320
    %7596 = vmatpush1.msra.mxu0 %v3319
    %7597 = vmatprep.subr.mxu0 %v3324
    %7598 = vmatpush1.msra.mxu0 %v3323
    %7599 = vmatprep.subr.mxu0 %v3328
    %7600 = vmatpush1.msra.mxu0 %v3327
    %7601 = vmatprep.subr.mxu0 %v3332
    %7602 = vmatpush1.msra.mxu0 %v3331
    %7603 = vmatprep.subr.mxu0 %v3336
    %7604 = vmatpush1.msra.mxu0 %v3335
    %7605 = vmatprep.subr.mxu0 %v3340
    %7606 = vmatpush1.msra.mxu0 %v3339
    %7607 = vmatprep.subr.mxu0 %v3344
    %7608 = vmatpush1.msra.mxu0 %v3343
    %7609 = vmatprep.subr.mxu0 %v3348
    %7610 = vmatpush1.msra.mxu0 %v3347
    %7611 = vmatprep.subr.mxu0 %v3352
    %7612 = vmatpush1.msra.mxu0 %v3351
    %7613 = vmatprep.subr.mxu0 %v3356
    %7614 = vmatpush1.msra.mxu0 %v3355
    %7615 = vmatprep.subr.mxu0 %v3360
    %7616 = vmatpush1.msra.mxu0 %v3359
    %7617 = vmatprep.subr.mxu0 %v3364
    %7618 = vmatpush1.msra.mxu0 %v3363
    %7619 = vmatprep.subr.mxu0 %v3368
    %7620 = vmatpush1.msra.mxu0 %v3367
    %7621 = vmatprep.subr.mxu0 %v3372
    %7622 = vmatpush1.msra.mxu0 %v3371
    %7623 = vmatprep.mubr.f32.mxu0 %v1080
    %7624 = vmatmul.mubr.f32.gmra.mrb[0].mxu0 %v2864
    %v7625 = vpop.f32.mrb[0].mxu0
    %v7626 = vadd.f32 %v7484, %v7625
    %v7627 = vpop.f32.mrb[0].mxu0
    %v7628 = vadd.f32 %v7486, %v7627
    %7629 = vdwg.mxu0
    %7630 = vmatprep.subr.mxu0 %v3250
    %7631 = vmatpush1.msra.mxu0 %v3249
    %7632 = vmatprep.subr.mxu0 %v3254
    %7633 = vmatpush1.msra.mxu0 %v3253
    %7634 = vmatprep.subr.mxu0 %v3258
    %7635 = vmatpush1.msra.mxu0 %v3257
    %7636 = vmatprep.subr.mxu0 %v3262
    %7637 = vmatpush1.msra.mxu0 %v3261
    %7638 = vmatprep.subr.mxu0 %v3266
    %7639 = vmatpush1.msra.mxu0 %v3265
    %7640 = vmatprep.subr.mxu0 %v3270
    %7641 = vmatpush1.msra.mxu0 %v3269
    %7642 = vmatprep.subr.mxu0 %v3274
    %7643 = vmatpush1.msra.mxu0 %v3273
    %7644 = vmatprep.subr.mxu0 %v3278
    %7645 = vmatpush1.msra.mxu0 %v3277
    %7646 = vmatprep.subr.mxu0 %v3282
    %7647 = vmatpush1.msra.mxu0 %v3281
    %7648 = vmatprep.subr.mxu0 %v3286
    %7649 = vmatpush1.msra.mxu0 %v3285
    %7650 = vmatprep.subr.mxu0 %v3290
    %7651 = vmatpush1.msra.mxu0 %v3289
    %7652 = vmatprep.subr.mxu0 %v3294
    %7653 = vmatpush1.msra.mxu0 %v3293
    %7654 = vmatprep.subr.mxu0 %v3298
    %7655 = vmatpush1.msra.mxu0 %v3297
    %7656 = vmatprep.subr.mxu0 %v3302
    %7657 = vmatpush1.msra.mxu0 %v3301
    %7658 = vmatprep.subr.mxu0 %v3306
    %7659 = vmatpush1.msra.mxu0 %v3305
    %7660 = vmatprep.subr.mxu0 %v3310
    %7661 = vmatpush1.msra.mxu0 %v3309
    %7662 = vmatprep.subr.mxu0 %v3314
    %7663 = vmatpush1.msra.mxu0 %v3313
    %7664 = vmatprep.subr.mxu0 %v3318
    %7665 = vmatpush1.msra.mxu0 %v3317
    %7666 = vmatprep.subr.mxu0 %v3322
    %7667 = vmatpush1.msra.mxu0 %v3321
    %7668 = vmatprep.subr.mxu0 %v3326
    %7669 = vmatpush1.msra.mxu0 %v3325
    %7670 = vmatprep.subr.mxu0 %v3330
    %7671 = vmatpush1.msra.mxu0 %v3329
    %7672 = vmatprep.subr.mxu0 %v3334
    %7673 = vmatpush1.msra.mxu0 %v3333
    %7674 = vmatprep.subr.mxu0 %v3338
    %7675 = vmatpush1.msra.mxu0 %v3337
    %7676 = vmatprep.subr.mxu0 %v3342
    %7677 = vmatpush1.msra.mxu0 %v3341
    %7678 = vmatprep.subr.mxu0 %v3346
    %7679 = vmatpush1.msra.mxu0 %v3345
    %7680 = vmatprep.subr.mxu0 %v3350
    %7681 = vmatpush1.msra.mxu0 %v3349
    %7682 = vmatprep.subr.mxu0 %v3354
    %7683 = vmatpush1.msra.mxu0 %v3353
    %7684 = vmatprep.subr.mxu0 %v3358
    %7685 = vmatpush1.msra.mxu0 %v3357
    %7686 = vmatprep.subr.mxu0 %v3362
    %7687 = vmatpush1.msra.mxu0 %v3361
    %7688 = vmatprep.subr.mxu0 %v3366
    %7689 = vmatpush1.msra.mxu0 %v3365
    %7690 = vmatprep.subr.mxu0 %v3370
    %7691 = vmatpush1.msra.mxu0 %v3369
    %7692 = vmatprep.subr.mxu0 %v3374
    %7693 = vmatpush1.msra.mxu0 %v3373
    %7694 = vmatprep.mubr.f32.mxu0 %v1080
    %7695 = vmatmul.mubr.f32.gmra.mrb[0].mxu0 %v2864
    %v7696 = vpop.f32.mrb[0].mxu0
    %v7697 = vadd.f32 %v7555, %v7696
    %v7698 = vpop.f32.mrb[0].mxu0
    %v7699 = vadd.f32 %v7557, %v7698
    %7700 = vdwg.mxu0
    %v7701 = vadd.f32 %v7626, %v3727
    %v7702 = vadd.f32 %v7628, %v3731
    %v7703 = vadd.f32 %v7697, %v3735
    %v7704 = vadd.f32 %v7699, %v3739
    %7705 = vmatprep.subr.mxu0 %v3877
    %7706 = vmatpush1.msra.mxu0 %v3876
    %7707 = vmatprep.subr.mxu0 %v3881
    %7708 = vmatpush1.msra.mxu0 %v3880
    %7709 = vmatprep.subr.mxu0 %v3885
    %7710 = vmatpush1.msra.mxu0 %v3884
    %7711 = vmatprep.subr.mxu0 %v3889
    %7712 = vmatpush1.msra.mxu0 %v3888
    %7713 = vmatprep.subr.mxu0 %v3893
    %7714 = vmatpush1.msra.mxu0 %v3892
    %7715 = vmatprep.subr.mxu0 %v3897
    %7716 = vmatpush1.msra.mxu0 %v3896
    %7717 = vmatprep.subr.mxu0 %v3901
    %7718 = vmatpush1.msra.mxu0 %v3900
    %7719 = vmatprep.subr.mxu0 %v3905
    %7720 = vmatpush1.msra.mxu0 %v3904
    %7721 = vmatprep.subr.mxu0 %v3909
    %7722 = vmatpush1.msra.mxu0 %v3908
    %7723 = vmatprep.subr.mxu0 %v3913
    %7724 = vmatpush1.msra.mxu0 %v3912
    %7725 = vmatprep.subr.mxu0 %v3917
    %7726 = vmatpush1.msra.mxu0 %v3916
    %7727 = vmatprep.subr.mxu0 %v3921
    %7728 = vmatpush1.msra.mxu0 %v3920
    %7729 = vmatprep.subr.mxu0 %v3925
    %7730 = vmatpush1.msra.mxu0 %v3924
    %7731 = vmatprep.subr.mxu0 %v3929
    %7732 = vmatpush1.msra.mxu0 %v3928
    %7733 = vmatprep.subr.mxu0 %v3933
    %7734 = vmatpush1.msra.mxu0 %v3932
    %7735 = vmatprep.subr.mxu0 %v3937
    %7736 = vmatpush1.msra.mxu0 %v3936
    %7737 = vmatprep.subr.mxu0 0.0
    %7738 = vmatpush1.msra.mxu0 0.0
    %7739 = vmatprep.subr.mxu0 0.0
    %7740 = vmatpush1.msra.mxu0 0.0
    %7741 = vmatprep.subr.mxu0 0.0
    %7742 = vmatpush1.msra.mxu0 0.0
    %7743 = vmatprep.subr.mxu0 0.0
    %7744 = vmatpush1.msra.mxu0 0.0
    %7745 = vmatprep.subr.mxu0 0.0
    %7746 = vmatpush1.msra.mxu0 0.0
    %7747 = vmatprep.subr.mxu0 0.0
    %7748 = vmatpush1.msra.mxu0 0.0
    %7749 = vmatprep.subr.mxu0 0.0
    %7750 = vmatpush1.msra.mxu0 0.0
    %7751 = vmatprep.subr.mxu0 0.0
    %7752 = vmatpush1.msra.mxu0 0.0
    %7753 = vmatprep.subr.mxu0 0.0
    %7754 = vmatpush1.msra.mxu0 0.0
    %7755 = vmatprep.subr.mxu0 0.0
    %7756 = vmatpush1.msra.mxu0 0.0
    %7757 = vmatprep.subr.mxu0 0.0
    %7758 = vmatpush1.msra.mxu0 0.0
    %7759 = vmatprep.subr.mxu0 0.0
    %7760 = vmatpush1.msra.mxu0 0.0
    %7761 = vmatprep.subr.mxu0 0.0
    %7762 = vmatpush1.msra.mxu0 0.0
    %7763 = vmatprep.subr.mxu0 0.0
    %7764 = vmatpush1.msra.mxu0 0.0
    %7765 = vmatprep.subr.mxu0 0.0
    %7766 = vmatpush1.msra.mxu0 0.0
    %7767 = vmatprep.subr.mxu0 0.0
    %7768 = vmatpush1.msra.mxu0 0.0
    %7769 = vmatprep.mubr.f32.mxu0 0.0
    %7770 = vmatmul.mubr.f32.gmra.mrb[0].mxu0 %v7416
    %v7771 = vpop.f32.mrb[0].mxu0
    %v7772 = vadd.f32 0.0, %v7771
    %v7773 = vpop.f32.mrb[0].mxu0
    %v7774 = vadd.f32 0.0, %v7773
    %7775 = vdwg.mxu0
    %7776 = vmatprep.subr.mxu0 %v3879
    %7777 = vmatpush1.msra.mxu0 %v3878
    %7778 = vmatprep.subr.mxu0 %v3883
    %7779 = vmatpush1.msra.mxu0 %v3882
    %7780 = vmatprep.subr.mxu0 %v3887
    %7781 = vmatpush1.msra.mxu0 %v3886
    %7782 = vmatprep.subr.mxu0 %v3891
    %7783 = vmatpush1.msra.mxu0 %v3890
    %7784 = vmatprep.subr.mxu0 %v3895
    %7785 = vmatpush1.msra.mxu0 %v3894
    %7786 = vmatprep.subr.mxu0 %v3899
    %7787 = vmatpush1.msra.mxu0 %v3898
    %7788 = vmatprep.subr.mxu0 %v3903
    %7789 = vmatpush1.msra.mxu0 %v3902
    %7790 = vmatprep.subr.mxu0 %v3907
    %7791 = vmatpush1.msra.mxu0 %v3906
    %7792 = vmatprep.subr.mxu0 %v3911
    %7793 = vmatpush1.msra.mxu0 %v3910
    %7794 = vmatprep.subr.mxu0 %v3915
    %7795 = vmatpush1.msra.mxu0 %v3914
    %7796 = vmatprep.subr.mxu0 %v3919
    %7797 = vmatpush1.msra.mxu0 %v3918
    %7798 = vmatprep.subr.mxu0 %v3923
    %7799 = vmatpush1.msra.mxu0 %v3922
    %7800 = vmatprep.subr.mxu0 %v3927
    %7801 = vmatpush1.msra.mxu0 %v3926
    %7802 = vmatprep.subr.mxu0 %v3931
    %7803 = vmatpush1.msra.mxu0 %v3930
    %7804 = vmatprep.subr.mxu0 %v3935
    %7805 = vmatpush1.msra.mxu0 %v3934
    %7806 = vmatprep.subr.mxu0 %v3939
    %7807 = vmatpush1.msra.mxu0 %v3938
    %7808 = vmatprep.subr.mxu0 0.0
    %7809 = vmatpush1.msra.mxu0 0.0
    %7810 = vmatprep.subr.mxu0 0.0
    %7811 = vmatpush1.msra.mxu0 0.0
    %7812 = vmatprep.subr.mxu0 0.0
    %7813 = vmatpush1.msra.mxu0 0.0
    %7814 = vmatprep.subr.mxu0 0.0
    %7815 = vmatpush1.msra.mxu0 0.0
    %7816 = vmatprep.subr.mxu0 0.0
    %7817 = vmatpush1.msra.mxu0 0.0
    %7818 = vmatprep.subr.mxu0 0.0
    %7819 = vmatpush1.msra.mxu0 0.0
    %7820 = vmatprep.subr.mxu0 0.0
    %7821 = vmatpush1.msra.mxu0 0.0
    %7822 = vmatprep.subr.mxu0 0.0
    %7823 = vmatpush1.msra.mxu0 0.0
    %7824 = vmatprep.subr.mxu0 0.0
    %7825 = vmatpush1.msra.mxu0 0.0
    %7826 = vmatprep.subr.mxu0 0.0
    %7827 = vmatpush1.msra.mxu0 0.0
    %7828 = vmatprep.subr.mxu0 0.0
    %7829 = vmatpush1.msra.mxu0 0.0
    %7830 = vmatprep.subr.mxu0 0.0
    %7831 = vmatpush1.msra.mxu0 0.0
    %7832 = vmatprep.subr.mxu0 0.0
    %7833 = vmatpush1.msra.mxu0 0.0
    %7834 = vmatprep.subr.mxu0 0.0
    %7835 = vmatpush1.msra.mxu0 0.0
    %7836 = vmatprep.subr.mxu0 0.0
    %7837 = vmatpush1.msra.mxu0 0.0
    %7838 = vmatprep.subr.mxu0 0.0
    %7839 = vmatpush1.msra.mxu0 0.0
    %7840 = vmatprep.mubr.f32.mxu0 0.0
    %7841 = vmatmul.mubr.f32.gmra.mrb[0].mxu0 %v7416
    %v7842 = vpop.f32.mrb[0].mxu0
    %v7843 = vadd.f32 0.0, %v7842
    %v7844 = vpop.f32.mrb[0].mxu0
    %v7845 = vadd.f32 0.0, %v7844
    %7846 = vdwg.mxu0
    %7847 = vmatprep.subr.mxu0 %v3749
    %7848 = vmatpush1.msra.mxu0 %v3748
    %7849 = vmatprep.subr.mxu0 %v3753
    %7850 = vmatpush1.msra.mxu0 %v3752
    %7851 = vmatprep.subr.mxu0 %v3757
    %7852 = vmatpush1.msra.mxu0 %v3756
    %7853 = vmatprep.subr.mxu0 %v3761
    %7854 = vmatpush1.msra.mxu0 %v3760
    %7855 = vmatprep.subr.mxu0 %v3765
    %7856 = vmatpush1.msra.mxu0 %v3764
    %7857 = vmatprep.subr.mxu0 %v3769
    %7858 = vmatpush1.msra.mxu0 %v3768
    %7859 = vmatprep.subr.mxu0 %v3773
    %7860 = vmatpush1.msra.mxu0 %v3772
    %7861 = vmatprep.subr.mxu0 %v3777
    %7862 = vmatpush1.msra.mxu0 %v3776
    %7863 = vmatprep.subr.mxu0 %v3781
    %7864 = vmatpush1.msra.mxu0 %v3780
    %7865 = vmatprep.subr.mxu0 %v3785
    %7866 = vmatpush1.msra.mxu0 %v3784
    %7867 = vmatprep.subr.mxu0 %v3789
    %7868 = vmatpush1.msra.mxu0 %v3788
    %7869 = vmatprep.subr.mxu0 %v3793
    %7870 = vmatpush1.msra.mxu0 %v3792
    %7871 = vmatprep.subr.mxu0 %v3797
    %7872 = vmatpush1.msra.mxu0 %v3796
    %7873 = vmatprep.subr.mxu0 %v3801
    %7874 = vmatpush1.msra.mxu0 %v3800
    %7875 = vmatprep.subr.mxu0 %v3805
    %7876 = vmatpush1.msra.mxu0 %v3804
    %7877 = vmatprep.subr.mxu0 %v3809
    %7878 = vmatpush1.msra.mxu0 %v3808
    %7879 = vmatprep.subr.mxu0 %v3813
    %7880 = vmatpush1.msra.mxu0 %v3812
    %7881 = vmatprep.subr.mxu0 %v3817
    %7882 = vmatpush1.msra.mxu0 %v3816
    %7883 = vmatprep.subr.mxu0 %v3821
    %7884 = vmatpush1.msra.mxu0 %v3820
    %7885 = vmatprep.subr.mxu0 %v3825
    %7886 = vmatpush1.msra.mxu0 %v3824
    %7887 = vmatprep.subr.mxu0 %v3829
    %7888 = vmatpush1.msra.mxu0 %v3828
    %7889 = vmatprep.subr.mxu0 %v3833
    %7890 = vmatpush1.msra.mxu0 %v3832
    %7891 = vmatprep.subr.mxu0 %v3837
    %7892 = vmatpush1.msra.mxu0 %v3836
    %7893 = vmatprep.subr.mxu0 %v3841
    %7894 = vmatpush1.msra.mxu0 %v3840
    %7895 = vmatprep.subr.mxu0 %v3845
    %7896 = vmatpush1.msra.mxu0 %v3844
    %7897 = vmatprep.subr.mxu0 %v3849
    %7898 = vmatpush1.msra.mxu0 %v3848
    %7899 = vmatprep.subr.mxu0 %v3853
    %7900 = vmatpush1.msra.mxu0 %v3852
    %7901 = vmatprep.subr.mxu0 %v3857
    %7902 = vmatpush1.msra.mxu0 %v3856
    %7903 = vmatprep.subr.mxu0 %v3861
    %7904 = vmatpush1.msra.mxu0 %v3860
    %7905 = vmatprep.subr.mxu0 %v3865
    %7906 = vmatpush1.msra.mxu0 %v3864
    %7907 = vmatprep.subr.mxu0 %v3869
    %7908 = vmatpush1.msra.mxu0 %v3868
    %7909 = vmatprep.subr.mxu0 %v3873
    %7910 = vmatpush1.msra.mxu0 %v3872
    %7911 = vmatprep.mubr.f32.mxu0 %v2888
    %7912 = vmatmul.mubr.f32.gmra.mrb[0].mxu0 %v1056
    %v7913 = vpop.f32.mrb[0].mxu0
    %v7914 = vadd.f32 %v7772, %v7913
    %v7915 = vpop.f32.mrb[0].mxu0
    %v7916 = vadd.f32 %v7774, %v7915
    %7917 = vdwg.mxu0
    %7918 = vmatprep.subr.mxu0 %v3751
    %7919 = vmatpush1.msra.mxu0 %v3750
    %7920 = vmatprep.subr.mxu0 %v3755
    %7921 = vmatpush1.msra.mxu0 %v3754
    %7922 = vmatprep.subr.mxu0 %v3759
    %7923 = vmatpush1.msra.mxu0 %v3758
    %7924 = vmatprep.subr.mxu0 %v3763
    %7925 = vmatpush1.msra.mxu0 %v3762
    %7926 = vmatprep.subr.mxu0 %v3767
    %7927 = vmatpush1.msra.mxu0 %v3766
    %7928 = vmatprep.subr.mxu0 %v3771
    %7929 = vmatpush1.msra.mxu0 %v3770
    %7930 = vmatprep.subr.mxu0 %v3775
    %7931 = vmatpush1.msra.mxu0 %v3774
    %7932 = vmatprep.subr.mxu0 %v3779
    %7933 = vmatpush1.msra.mxu0 %v3778
    %7934 = vmatprep.subr.mxu0 %v3783
    %7935 = vmatpush1.msra.mxu0 %v3782
    %7936 = vmatprep.subr.mxu0 %v3787
    %7937 = vmatpush1.msra.mxu0 %v3786
    %7938 = vmatprep.subr.mxu0 %v3791
    %7939 = vmatpush1.msra.mxu0 %v3790
    %7940 = vmatprep.subr.mxu0 %v3795
    %7941 = vmatpush1.msra.mxu0 %v3794
    %7942 = vmatprep.subr.mxu0 %v3799
    %7943 = vmatpush1.msra.mxu0 %v3798
    %7944 = vmatprep.subr.mxu0 %v3803
    %7945 = vmatpush1.msra.mxu0 %v3802
    %7946 = vmatprep.subr.mxu0 %v3807
    %7947 = vmatpush1.msra.mxu0 %v3806
    %7948 = vmatprep.subr.mxu0 %v3811
    %7949 = vmatpush1.msra.mxu0 %v3810
    %7950 = vmatprep.subr.mxu0 %v3815
    %7951 = vmatpush1.msra.mxu0 %v3814
    %7952 = vmatprep.subr.mxu0 %v3819
    %7953 = vmatpush1.msra.mxu0 %v3818
    %7954 = vmatprep.subr.mxu0 %v3823
    %7955 = vmatpush1.msra.mxu0 %v3822
    %7956 = vmatprep.subr.mxu0 %v3827
    %7957 = vmatpush1.msra.mxu0 %v3826
    %7958 = vmatprep.subr.mxu0 %v3831
    %7959 = vmatpush1.msra.mxu0 %v3830
    %7960 = vmatprep.subr.mxu0 %v3835
    %7961 = vmatpush1.msra.mxu0 %v3834
    %7962 = vmatprep.subr.mxu0 %v3839
    %7963 = vmatpush1.msra.mxu0 %v3838
    %7964 = vmatprep.subr.mxu0 %v3843
    %7965 = vmatpush1.msra.mxu0 %v3842
    %7966 = vmatprep.subr.mxu0 %v3847
    %7967 = vmatpush1.msra.mxu0 %v3846
    %7968 = vmatprep.subr.mxu0 %v3851
    %7969 = vmatpush1.msra.mxu0 %v3850
    %7970 = vmatprep.subr.mxu0 %v3855
    %7971 = vmatpush1.msra.mxu0 %v3854
    %7972 = vmatprep.subr.mxu0 %v3859
    %7973 = vmatpush1.msra.mxu0 %v3858
    %7974 = vmatprep.subr.mxu0 %v3863
    %7975 = vmatpush1.msra.mxu0 %v3862
    %7976 = vmatprep.subr.mxu0 %v3867
    %7977 = vmatpush1.msra.mxu0 %v3866
    %7978 = vmatprep.subr.mxu0 %v3871
    %7979 = vmatpush1.msra.mxu0 %v3870
    %7980 = vmatprep.subr.mxu0 %v3875
    %7981 = vmatpush1.msra.mxu0 %v3874
    %7982 = vmatprep.mubr.f32.mxu0 %v2888
    %7983 = vmatmul.mubr.f32.gmra.mrb[0].mxu0 %v1056
    %v7984 = vpop.f32.mrb[0].mxu0
    %v7985 = vadd.f32 %v7843, %v7984
    %v7986 = vpop.f32.mrb[0].mxu0
    %v7987 = vadd.f32 %v7845, %v7986
    %7988 = vdwg.mxu0
    %v7989 = vadd.f32 %v7914, %v4228
    %v7990 = vadd.f32 %v7916, %v4232
    %v7991 = vadd.f32 %v7985, %v4236
    %v7992 = vadd.f32 %v7987, %v4240
    %v7993 = vxor.u32 %v7701, 2147483648
    %v7994 = vmul.f32 %v7993, 1.442695
    %v7995 = vpow.pop %v7994
    %v7996 = vadd.f32 %v7995, 1.0
    %v7997 = vrcp.pop %v7996
    %v7998 = vmul.f32 1.0, %v7997
    %v7999 = vxor.u32 %v7702, 2147483648
    %v8000 = vmul.f32 %v7999, 1.442695
    %v8001 = vpow.pop %v8000
    %v8002 = vadd.f32 %v8001, 1.0
    %v8003 = vrcp.pop %v8002
    %v8004 = vmul.f32 1.0, %v8003
    %v8005 = vtanh.pop %v7703
    %v8006 = vxor.u32 %v7704, 2147483648
    %v8007 = vmul.f32 %v8006, 1.442695
    %v8008 = vpow.pop %v8007
    %v8009 = vadd.f32 %v8008, 1.0
    %v8010 = vrcp.pop %v8009
    %v8011 = vmul.f32 1.0, %v8010
    %v8012 = vmul.f32 %v8004, %v7390
    %v8013 = vmul.f32 %v7998, %v8005
    %v8014 = vadd.f32 %v8012, %v8013
    %v8015 = vtanh.pop %v8014
    %v8016 = vmul.f32 %v8011, %v8015
    %v8017 = vxor.u32 %v7989, 2147483648
    %v8018 = vmul.f32 %v8017, 1.442695
    %v8019 = vpow.pop %v8018
    %v8020 = vadd.f32 %v8019, 1.0
    %v8021 = vrcp.pop %v8020
    %v8022 = vmul.f32 1.0, %v8021
    %v8023 = vxor.u32 %v7990, 2147483648
    %v8024 = vmul.f32 %v8023, 1.442695
    %v8025 = vpow.pop %v8024
    %v8026 = vadd.f32 %v8025, 1.0
    %v8027 = vrcp.pop %v8026
    %v8028 = vmul.f32 1.0, %v8027
    %v8029 = vtanh.pop %v7991
    %v8030 = vxor.u32 %v7992, 2147483648
    %v8031 = vmul.f32 %v8030, 1.442695
    %v8032 = vpow.pop %v8031
    %v8033 = vadd.f32 %v8032, 1.0
    %v8034 = vrcp.pop %v8033
    %v8035 = vmul.f32 1.0, %v8034
    %v8036 = vmul.f32 %v8028, %v7414
    %v8037 = vmul.f32 %v8022, %v8029
    %v8038 = vadd.f32 %v8036, %v8037
    %v8039 = vtanh.pop %v8038
    %v8040 = vmul.f32 %v8035, %v8039
    %8041 = vmatprep.subr.mxu0 %v3376
    %8042 = vmatpush1.msra.mxu0 %v3375
    %8043 = vmatprep.subr.mxu0 %v3380
    %8044 = vmatpush1.msra.mxu0 %v3379
    %8045 = vmatprep.subr.mxu0 %v3384
    %8046 = vmatpush1.msra.mxu0 %v3383
    %8047 = vmatprep.subr.mxu0 %v3388
    %8048 = vmatpush1.msra.mxu0 %v3387
    %8049 = vmatprep.subr.mxu0 %v3392
    %8050 = vmatpush1.msra.mxu0 %v3391
    %8051 = vmatprep.subr.mxu0 %v3396
    %8052 = vmatpush1.msra.mxu0 %v3395
    %8053 = vmatprep.subr.mxu0 %v3400
    %8054 = vmatpush1.msra.mxu0 %v3399
    %8055 = vmatprep.subr.mxu0 %v3404
    %8056 = vmatpush1.msra.mxu0 %v3403
    %8057 = vmatprep.subr.mxu0 %v3408
    %8058 = vmatpush1.msra.mxu0 %v3407
    %8059 = vmatprep.subr.mxu0 %v3412
    %8060 = vmatpush1.msra.mxu0 %v3411
    %8061 = vmatprep.subr.mxu0 %v3416
    %8062 = vmatpush1.msra.mxu0 %v3415
    %8063 = vmatprep.subr.mxu0 %v3420
    %8064 = vmatpush1.msra.mxu0 %v3419
    %8065 = vmatprep.subr.mxu0 %v3424
    %8066 = vmatpush1.msra.mxu0 %v3423
    %8067 = vmatprep.subr.mxu0 %v3428
    %8068 = vmatpush1.msra.mxu0 %v3427
    %8069 = vmatprep.subr.mxu0 %v3432
    %8070 = vmatpush1.msra.mxu0 %v3431
    %8071 = vmatprep.subr.mxu0 %v3436
    %8072 = vmatpush1.msra.mxu0 %v3435
    %8073 = vmatprep.subr.mxu0 0.0
    %8074 = vmatpush1.msra.mxu0 0.0
    %8075 = vmatprep.subr.mxu0 0.0
    %8076 = vmatpush1.msra.mxu0 0.0
    %8077 = vmatprep.subr.mxu0 0.0
    %8078 = vmatpush1.msra.mxu0 0.0
    %8079 = vmatprep.subr.mxu0 0.0
    %8080 = vmatpush1.msra.mxu0 0.0
    %8081 = vmatprep.subr.mxu0 0.0
    %8082 = vmatpush1.msra.mxu0 0.0
    %8083 = vmatprep.subr.mxu0 0.0
    %8084 = vmatpush1.msra.mxu0 0.0
    %8085 = vmatprep.subr.mxu0 0.0
    %8086 = vmatpush1.msra.mxu0 0.0
    %8087 = vmatprep.subr.mxu0 0.0
    %8088 = vmatpush1.msra.mxu0 0.0
    %8089 = vmatprep.subr.mxu0 0.0
    %8090 = vmatpush1.msra.mxu0 0.0
    %8091 = vmatprep.subr.mxu0 0.0
    %8092 = vmatpush1.msra.mxu0 0.0
    %8093 = vmatprep.subr.mxu0 0.0
    %8094 = vmatpush1.msra.mxu0 0.0
    %8095 = vmatprep.subr.mxu0 0.0
    %8096 = vmatpush1.msra.mxu0 0.0
    %8097 = vmatprep.subr.mxu0 0.0
    %8098 = vmatpush1.msra.mxu0 0.0
    %8099 = vmatprep.subr.mxu0 0.0
    %8100 = vmatpush1.msra.mxu0 0.0
    %8101 = vmatprep.subr.mxu0 0.0
    %8102 = vmatpush1.msra.mxu0 0.0
    %8103 = vmatprep.subr.mxu0 0.0
    %8104 = vmatpush1.msra.mxu0 0.0
    %8105 = vmatprep.mubr.f32.mxu0 0.0
    %8106 = vmatmul.mubr.f32.gmra.mrb[0].mxu0 %v8016
    %v8107 = vpop.f32.mrb[0].mxu0
    %v8108 = vadd.f32 0.0, %v8107
    %v8109 = vpop.f32.mrb[0].mxu0
    %v8110 = vadd.f32 0.0, %v8109
    %8111 = vdwg.mxu0
    %8112 = vmatprep.subr.mxu0 %v3378
    %8113 = vmatpush1.msra.mxu0 %v3377
    %8114 = vmatprep.subr.mxu0 %v3382
    %8115 = vmatpush1.msra.mxu0 %v3381
    %8116 = vmatprep.subr.mxu0 %v3386
    %8117 = vmatpush1.msra.mxu0 %v3385
    %8118 = vmatprep.subr.mxu0 %v3390
    %8119 = vmatpush1.msra.mxu0 %v3389
    %8120 = vmatprep.subr.mxu0 %v3394
    %8121 = vmatpush1.msra.mxu0 %v3393
    %8122 = vmatprep.subr.mxu0 %v3398
    %8123 = vmatpush1.msra.mxu0 %v3397
    %8124 = vmatprep.subr.mxu0 %v3402
    %8125 = vmatpush1.msra.mxu0 %v3401
    %8126 = vmatprep.subr.mxu0 %v3406
    %8127 = vmatpush1.msra.mxu0 %v3405
    %8128 = vmatprep.subr.mxu0 %v3410
    %8129 = vmatpush1.msra.mxu0 %v3409
    %8130 = vmatprep.subr.mxu0 %v3414
    %8131 = vmatpush1.msra.mxu0 %v3413
    %8132 = vmatprep.subr.mxu0 %v3418
    %8133 = vmatpush1.msra.mxu0 %v3417
    %8134 = vmatprep.subr.mxu0 %v3422
    %8135 = vmatpush1.msra.mxu0 %v3421
    %8136 = vmatprep.subr.mxu0 %v3426
    %8137 = vmatpush1.msra.mxu0 %v3425
    %8138 = vmatprep.subr.mxu0 %v3430
    %8139 = vmatpush1.msra.mxu0 %v3429
    %8140 = vmatprep.subr.mxu0 %v3434
    %8141 = vmatpush1.msra.mxu0 %v3433
    %8142 = vmatprep.subr.mxu0 %v3438
    %8143 = vmatpush1.msra.mxu0 %v3437
    %8144 = vmatprep.subr.mxu0 0.0
    %8145 = vmatpush1.msra.mxu0 0.0
    %8146 = vmatprep.subr.mxu0 0.0
    %8147 = vmatpush1.msra.mxu0 0.0
    %8148 = vmatprep.subr.mxu0 0.0
    %8149 = vmatpush1.msra.mxu0 0.0
    %8150 = vmatprep.subr.mxu0 0.0
    %8151 = vmatpush1.msra.mxu0 0.0
    %8152 = vmatprep.subr.mxu0 0.0
    %8153 = vmatpush1.msra.mxu0 0.0
    %8154 = vmatprep.subr.mxu0 0.0
    %8155 = vmatpush1.msra.mxu0 0.0
    %8156 = vmatprep.subr.mxu0 0.0
    %8157 = vmatpush1.msra.mxu0 0.0
    %8158 = vmatprep.subr.mxu0 0.0
    %8159 = vmatpush1.msra.mxu0 0.0
    %8160 = vmatprep.subr.mxu0 0.0
    %8161 = vmatpush1.msra.mxu0 0.0
    %8162 = vmatprep.subr.mxu0 0.0
    %8163 = vmatpush1.msra.mxu0 0.0
    %8164 = vmatprep.subr.mxu0 0.0
    %8165 = vmatpush1.msra.mxu0 0.0
    %8166 = vmatprep.subr.mxu0 0.0
    %8167 = vmatpush1.msra.mxu0 0.0
    %8168 = vmatprep.subr.mxu0 0.0
    %8169 = vmatpush1.msra.mxu0 0.0
    %8170 = vmatprep.subr.mxu0 0.0
    %8171 = vmatpush1.msra.mxu0 0.0
    %8172 = vmatprep.subr.mxu0 0.0
    %8173 = vmatpush1.msra.mxu0 0.0
    %8174 = vmatprep.subr.mxu0 0.0
    %8175 = vmatpush1.msra.mxu0 0.0
    %8176 = vmatprep.mubr.f32.mxu0 0.0
    %8177 = vmatmul.mubr.f32.gmra.mrb[0].mxu0 %v8016
    %v8178 = vpop.f32.mrb[0].mxu0
    %v8179 = vadd.f32 0.0, %v8178
    %v8180 = vpop.f32.mrb[0].mxu0
    %v8181 = vadd.f32 0.0, %v8180
    %8182 = vdwg.mxu0
    %8183 = vmatprep.subr.mxu0 %v3248
    %8184 = vmatpush1.msra.mxu0 %v3247
    %8185 = vmatprep.subr.mxu0 %v3252
    %8186 = vmatpush1.msra.mxu0 %v3251
    %8187 = vmatprep.subr.mxu0 %v3256
    %8188 = vmatpush1.msra.mxu0 %v3255
    %8189 = vmatprep.subr.mxu0 %v3260
    %8190 = vmatpush1.msra.mxu0 %v3259
    %8191 = vmatprep.subr.mxu0 %v3264
    %8192 = vmatpush1.msra.mxu0 %v3263
    %8193 = vmatprep.subr.mxu0 %v3268
    %8194 = vmatpush1.msra.mxu0 %v3267
    %8195 = vmatprep.subr.mxu0 %v3272
    %8196 = vmatpush1.msra.mxu0 %v3271
    %8197 = vmatprep.subr.mxu0 %v3276
    %8198 = vmatpush1.msra.mxu0 %v3275
    %8199 = vmatprep.subr.mxu0 %v3280
    %8200 = vmatpush1.msra.mxu0 %v3279
    %8201 = vmatprep.subr.mxu0 %v3284
    %8202 = vmatpush1.msra.mxu0 %v3283
    %8203 = vmatprep.subr.mxu0 %v3288
    %8204 = vmatpush1.msra.mxu0 %v3287
    %8205 = vmatprep.subr.mxu0 %v3292
    %8206 = vmatpush1.msra.mxu0 %v3291
    %8207 = vmatprep.subr.mxu0 %v3296
    %8208 = vmatpush1.msra.mxu0 %v3295
    %8209 = vmatprep.subr.mxu0 %v3300
    %8210 = vmatpush1.msra.mxu0 %v3299
    %8211 = vmatprep.subr.mxu0 %v3304
    %8212 = vmatpush1.msra.mxu0 %v3303
    %8213 = vmatprep.subr.mxu0 %v3308
    %8214 = vmatpush1.msra.mxu0 %v3307
    %8215 = vmatprep.subr.mxu0 %v3312
    %8216 = vmatpush1.msra.mxu0 %v3311
    %8217 = vmatprep.subr.mxu0 %v3316
    %8218 = vmatpush1.msra.mxu0 %v3315
    %8219 = vmatprep.subr.mxu0 %v3320
    %8220 = vmatpush1.msra.mxu0 %v3319
    %8221 = vmatprep.subr.mxu0 %v3324
    %8222 = vmatpush1.msra.mxu0 %v3323
    %8223 = vmatprep.subr.mxu0 %v3328
    %8224 = vmatpush1.msra.mxu0 %v3327
    %8225 = vmatprep.subr.mxu0 %v3332
    %8226 = vmatpush1.msra.mxu0 %v3331
    %8227 = vmatprep.subr.mxu0 %v3336
    %8228 = vmatpush1.msra.mxu0 %v3335
    %8229 = vmatprep.subr.mxu0 %v3340
    %8230 = vmatpush1.msra.mxu0 %v3339
    %8231 = vmatprep.subr.mxu0 %v3344
    %8232 = vmatpush1.msra.mxu0 %v3343
    %8233 = vmatprep.subr.mxu0 %v3348
    %8234 = vmatpush1.msra.mxu0 %v3347
    %8235 = vmatprep.subr.mxu0 %v3352
    %8236 = vmatpush1.msra.mxu0 %v3351
    %8237 = vmatprep.subr.mxu0 %v3356
    %8238 = vmatpush1.msra.mxu0 %v3355
    %8239 = vmatprep.subr.mxu0 %v3360
    %8240 = vmatpush1.msra.mxu0 %v3359
    %8241 = vmatprep.subr.mxu0 %v3364
    %8242 = vmatpush1.msra.mxu0 %v3363
    %8243 = vmatprep.subr.mxu0 %v3368
    %8244 = vmatpush1.msra.mxu0 %v3367
    %8245 = vmatprep.subr.mxu0 %v3372
    %8246 = vmatpush1.msra.mxu0 %v3371
    %8247 = vmatprep.mubr.f32.mxu0 %v710
    %8248 = vmatmul.mubr.f32.gmra.mrb[0].mxu0 %v3220
    %v8249 = vpop.f32.mrb[0].mxu0
    %v8250 = vadd.f32 %v8108, %v8249
    %v8251 = vpop.f32.mrb[0].mxu0
    %v8252 = vadd.f32 %v8110, %v8251
    %8253 = vdwg.mxu0
    %8254 = vmatprep.subr.mxu0 %v3250
    %8255 = vmatpush1.msra.mxu0 %v3249
    %8256 = vmatprep.subr.mxu0 %v3254
    %8257 = vmatpush1.msra.mxu0 %v3253
    %8258 = vmatprep.subr.mxu0 %v3258
    %8259 = vmatpush1.msra.mxu0 %v3257
    %8260 = vmatprep.subr.mxu0 %v3262
    %8261 = vmatpush1.msra.mxu0 %v3261
    %8262 = vmatprep.subr.mxu0 %v3266
    %8263 = vmatpush1.msra.mxu0 %v3265
    %8264 = vmatprep.subr.mxu0 %v3270
    %8265 = vmatpush1.msra.mxu0 %v3269
    %8266 = vmatprep.subr.mxu0 %v3274
    %8267 = vmatpush1.msra.mxu0 %v3273
    %8268 = vmatprep.subr.mxu0 %v3278
    %8269 = vmatpush1.msra.mxu0 %v3277
    %8270 = vmatprep.subr.mxu0 %v3282
    %8271 = vmatpush1.msra.mxu0 %v3281
    %8272 = vmatprep.subr.mxu0 %v3286
    %8273 = vmatpush1.msra.mxu0 %v3285
    %8274 = vmatprep.subr.mxu0 %v3290
    %8275 = vmatpush1.msra.mxu0 %v3289
    %8276 = vmatprep.subr.mxu0 %v3294
    %8277 = vmatpush1.msra.mxu0 %v3293
    %8278 = vmatprep.subr.mxu0 %v3298
    %8279 = vmatpush1.msra.mxu0 %v3297
    %8280 = vmatprep.subr.mxu0 %v3302
    %8281 = vmatpush1.msra.mxu0 %v3301
    %8282 = vmatprep.subr.mxu0 %v3306
    %8283 = vmatpush1.msra.mxu0 %v3305
    %8284 = vmatprep.subr.mxu0 %v3310
    %8285 = vmatpush1.msra.mxu0 %v3309
    %8286 = vmatprep.subr.mxu0 %v3314
    %8287 = vmatpush1.msra.mxu0 %v3313
    %8288 = vmatprep.subr.mxu0 %v3318
    %8289 = vmatpush1.msra.mxu0 %v3317
    %8290 = vmatprep.subr.mxu0 %v3322
    %8291 = vmatpush1.msra.mxu0 %v3321
    %8292 = vmatprep.subr.mxu0 %v3326
    %8293 = vmatpush1.msra.mxu0 %v3325
    %8294 = vmatprep.subr.mxu0 %v3330
    %8295 = vmatpush1.msra.mxu0 %v3329
    %8296 = vmatprep.subr.mxu0 %v3334
    %8297 = vmatpush1.msra.mxu0 %v3333
    %8298 = vmatprep.subr.mxu0 %v3338
    %8299 = vmatpush1.msra.mxu0 %v3337
    %8300 = vmatprep.subr.mxu0 %v3342
    %8301 = vmatpush1.msra.mxu0 %v3341
    %8302 = vmatprep.subr.mxu0 %v3346
    %8303 = vmatpush1.msra.mxu0 %v3345
    %8304 = vmatprep.subr.mxu0 %v3350
    %8305 = vmatpush1.msra.mxu0 %v3349
    %8306 = vmatprep.subr.mxu0 %v3354
    %8307 = vmatpush1.msra.mxu0 %v3353
    %8308 = vmatprep.subr.mxu0 %v3358
    %8309 = vmatpush1.msra.mxu0 %v3357
    %8310 = vmatprep.subr.mxu0 %v3362
    %8311 = vmatpush1.msra.mxu0 %v3361
    %8312 = vmatprep.subr.mxu0 %v3366
    %8313 = vmatpush1.msra.mxu0 %v3365
    %8314 = vmatprep.subr.mxu0 %v3370
    %8315 = vmatpush1.msra.mxu0 %v3369
    %8316 = vmatprep.subr.mxu0 %v3374
    %8317 = vmatpush1.msra.mxu0 %v3373
    %8318 = vmatprep.mubr.f32.mxu0 %v710
    %8319 = vmatmul.mubr.f32.gmra.mrb[0].mxu0 %v3220
    %v8320 = vpop.f32.mrb[0].mxu0
    %v8321 = vadd.f32 %v8179, %v8320
    %v8322 = vpop.f32.mrb[0].mxu0
    %v8323 = vadd.f32 %v8181, %v8322
    %8324 = vdwg.mxu0
    %v8325 = vadd.f32 %v8250, %v3727
    %v8326 = vadd.f32 %v8252, %v3731
    %v8327 = vadd.f32 %v8321, %v3735
    %v8328 = vadd.f32 %v8323, %v3739
    %8329 = vmatprep.subr.mxu0 %v3877
    %8330 = vmatpush1.msra.mxu0 %v3876
    %8331 = vmatprep.subr.mxu0 %v3881
    %8332 = vmatpush1.msra.mxu0 %v3880
    %8333 = vmatprep.subr.mxu0 %v3885
    %8334 = vmatpush1.msra.mxu0 %v3884
    %8335 = vmatprep.subr.mxu0 %v3889
    %8336 = vmatpush1.msra.mxu0 %v3888
    %8337 = vmatprep.subr.mxu0 %v3893
    %8338 = vmatpush1.msra.mxu0 %v3892
    %8339 = vmatprep.subr.mxu0 %v3897
    %8340 = vmatpush1.msra.mxu0 %v3896
    %8341 = vmatprep.subr.mxu0 %v3901
    %8342 = vmatpush1.msra.mxu0 %v3900
    %8343 = vmatprep.subr.mxu0 %v3905
    %8344 = vmatpush1.msra.mxu0 %v3904
    %8345 = vmatprep.subr.mxu0 %v3909
    %8346 = vmatpush1.msra.mxu0 %v3908
    %8347 = vmatprep.subr.mxu0 %v3913
    %8348 = vmatpush1.msra.mxu0 %v3912
    %8349 = vmatprep.subr.mxu0 %v3917
    %8350 = vmatpush1.msra.mxu0 %v3916
    %8351 = vmatprep.subr.mxu0 %v3921
    %8352 = vmatpush1.msra.mxu0 %v3920
    %8353 = vmatprep.subr.mxu0 %v3925
    %8354 = vmatpush1.msra.mxu0 %v3924
    %8355 = vmatprep.subr.mxu0 %v3929
    %8356 = vmatpush1.msra.mxu0 %v3928
    %8357 = vmatprep.subr.mxu0 %v3933
    %8358 = vmatpush1.msra.mxu0 %v3932
    %8359 = vmatprep.subr.mxu0 %v3937
    %8360 = vmatpush1.msra.mxu0 %v3936
    %8361 = vmatprep.subr.mxu0 0.0
    %8362 = vmatpush1.msra.mxu0 0.0
    %8363 = vmatprep.subr.mxu0 0.0
    %8364 = vmatpush1.msra.mxu0 0.0
    %8365 = vmatprep.subr.mxu0 0.0
    %8366 = vmatpush1.msra.mxu0 0.0
    %8367 = vmatprep.subr.mxu0 0.0
    %8368 = vmatpush1.msra.mxu0 0.0
    %8369 = vmatprep.subr.mxu0 0.0
    %8370 = vmatpush1.msra.mxu0 0.0
    %8371 = vmatprep.subr.mxu0 0.0
    %8372 = vmatpush1.msra.mxu0 0.0
    %8373 = vmatprep.subr.mxu0 0.0
    %8374 = vmatpush1.msra.mxu0 0.0
    %8375 = vmatprep.subr.mxu0 0.0
    %8376 = vmatpush1.msra.mxu0 0.0
    %8377 = vmatprep.subr.mxu0 0.0
    %8378 = vmatpush1.msra.mxu0 0.0
    %8379 = vmatprep.subr.mxu0 0.0
    %8380 = vmatpush1.msra.mxu0 0.0
    %8381 = vmatprep.subr.mxu0 0.0
    %8382 = vmatpush1.msra.mxu0 0.0
    %8383 = vmatprep.subr.mxu0 0.0
    %8384 = vmatpush1.msra.mxu0 0.0
    %8385 = vmatprep.subr.mxu0 0.0
    %8386 = vmatpush1.msra.mxu0 0.0
    %8387 = vmatprep.subr.mxu0 0.0
    %8388 = vmatpush1.msra.mxu0 0.0
    %8389 = vmatprep.subr.mxu0 0.0
    %8390 = vmatpush1.msra.mxu0 0.0
    %8391 = vmatprep.subr.mxu0 0.0
    %8392 = vmatpush1.msra.mxu0 0.0
    %8393 = vmatprep.mubr.f32.mxu0 0.0
    %8394 = vmatmul.mubr.f32.gmra.mrb[0].mxu0 %v8040
    %v8395 = vpop.f32.mrb[0].mxu0
    %v8396 = vadd.f32 0.0, %v8395
    %v8397 = vpop.f32.mrb[0].mxu0
    %v8398 = vadd.f32 0.0, %v8397
    %8399 = vdwg.mxu0
    %8400 = vmatprep.subr.mxu0 %v3879
    %8401 = vmatpush1.msra.mxu0 %v3878
    %8402 = vmatprep.subr.mxu0 %v3883
    %8403 = vmatpush1.msra.mxu0 %v3882
    %8404 = vmatprep.subr.mxu0 %v3887
    %8405 = vmatpush1.msra.mxu0 %v3886
    %8406 = vmatprep.subr.mxu0 %v3891
    %8407 = vmatpush1.msra.mxu0 %v3890
    %8408 = vmatprep.subr.mxu0 %v3895
    %8409 = vmatpush1.msra.mxu0 %v3894
    %8410 = vmatprep.subr.mxu0 %v3899
    %8411 = vmatpush1.msra.mxu0 %v3898
    %8412 = vmatprep.subr.mxu0 %v3903
    %8413 = vmatpush1.msra.mxu0 %v3902
    %8414 = vmatprep.subr.mxu0 %v3907
    %8415 = vmatpush1.msra.mxu0 %v3906
    %8416 = vmatprep.subr.mxu0 %v3911
    %8417 = vmatpush1.msra.mxu0 %v3910
    %8418 = vmatprep.subr.mxu0 %v3915
    %8419 = vmatpush1.msra.mxu0 %v3914
    %8420 = vmatprep.subr.mxu0 %v3919
    %8421 = vmatpush1.msra.mxu0 %v3918
    %8422 = vmatprep.subr.mxu0 %v3923
    %8423 = vmatpush1.msra.mxu0 %v3922
    %8424 = vmatprep.subr.mxu0 %v3927
    %8425 = vmatpush1.msra.mxu0 %v3926
    %8426 = vmatprep.subr.mxu0 %v3931
    %8427 = vmatpush1.msra.mxu0 %v3930
    %8428 = vmatprep.subr.mxu0 %v3935
    %8429 = vmatpush1.msra.mxu0 %v3934
    %8430 = vmatprep.subr.mxu0 %v3939
    %8431 = vmatpush1.msra.mxu0 %v3938
    %8432 = vmatprep.subr.mxu0 0.0
    %8433 = vmatpush1.msra.mxu0 0.0
    %8434 = vmatprep.subr.mxu0 0.0
    %8435 = vmatpush1.msra.mxu0 0.0
    %8436 = vmatprep.subr.mxu0 0.0
    %8437 = vmatpush1.msra.mxu0 0.0
    %8438 = vmatprep.subr.mxu0 0.0
    %8439 = vmatpush1.msra.mxu0 0.0
    %8440 = vmatprep.subr.mxu0 0.0
    %8441 = vmatpush1.msra.mxu0 0.0
    %8442 = vmatprep.subr.mxu0 0.0
    %8443 = vmatpush1.msra.mxu0 0.0
    %8444 = vmatprep.subr.mxu0 0.0
    %8445 = vmatpush1.msra.mxu0 0.0
    %8446 = vmatprep.subr.mxu0 0.0
    %8447 = vmatpush1.msra.mxu0 0.0
    %8448 = vmatprep.subr.mxu0 0.0
    %8449 = vmatpush1.msra.mxu0 0.0
    %8450 = vmatprep.subr.mxu0 0.0
    %8451 = vmatpush1.msra.mxu0 0.0
    %8452 = vmatprep.subr.mxu0 0.0
    %8453 = vmatpush1.msra.mxu0 0.0
    %8454 = vmatprep.subr.mxu0 0.0
    %8455 = vmatpush1.msra.mxu0 0.0
    %8456 = vmatprep.subr.mxu0 0.0
    %8457 = vmatpush1.msra.mxu0 0.0
    %8458 = vmatprep.subr.mxu0 0.0
    %8459 = vmatpush1.msra.mxu0 0.0
    %8460 = vmatprep.subr.mxu0 0.0
    %8461 = vmatpush1.msra.mxu0 0.0
    %8462 = vmatprep.subr.mxu0 0.0
    %8463 = vmatpush1.msra.mxu0 0.0
    %8464 = vmatprep.mubr.f32.mxu0 0.0
    %8465 = vmatmul.mubr.f32.gmra.mrb[0].mxu0 %v8040
    %v8466 = vpop.f32.mrb[0].mxu0
    %v8467 = vadd.f32 0.0, %v8466
    %v8468 = vpop.f32.mrb[0].mxu0
    %v8469 = vadd.f32 0.0, %v8468
    %8470 = vdwg.mxu0
    %8471 = vmatprep.subr.mxu0 %v3749
    %8472 = vmatpush1.msra.mxu0 %v3748
    %8473 = vmatprep.subr.mxu0 %v3753
    %8474 = vmatpush1.msra.mxu0 %v3752
    %8475 = vmatprep.subr.mxu0 %v3757
    %8476 = vmatpush1.msra.mxu0 %v3756
    %8477 = vmatprep.subr.mxu0 %v3761
    %8478 = vmatpush1.msra.mxu0 %v3760
    %8479 = vmatprep.subr.mxu0 %v3765
    %8480 = vmatpush1.msra.mxu0 %v3764
    %8481 = vmatprep.subr.mxu0 %v3769
    %8482 = vmatpush1.msra.mxu0 %v3768
    %8483 = vmatprep.subr.mxu0 %v3773
    %8484 = vmatpush1.msra.mxu0 %v3772
    %8485 = vmatprep.subr.mxu0 %v3777
    %8486 = vmatpush1.msra.mxu0 %v3776
    %8487 = vmatprep.subr.mxu0 %v3781
    %8488 = vmatpush1.msra.mxu0 %v3780
    %8489 = vmatprep.subr.mxu0 %v3785
    %8490 = vmatpush1.msra.mxu0 %v3784
    %8491 = vmatprep.subr.mxu0 %v3789
    %8492 = vmatpush1.msra.mxu0 %v3788
    %8493 = vmatprep.subr.mxu0 %v3793
    %8494 = vmatpush1.msra.mxu0 %v3792
    %8495 = vmatprep.subr.mxu0 %v3797
    %8496 = vmatpush1.msra.mxu0 %v3796
    %8497 = vmatprep.subr.mxu0 %v3801
    %8498 = vmatpush1.msra.mxu0 %v3800
    %8499 = vmatprep.subr.mxu0 %v3805
    %8500 = vmatpush1.msra.mxu0 %v3804
    %8501 = vmatprep.subr.mxu0 %v3809
    %8502 = vmatpush1.msra.mxu0 %v3808
    %8503 = vmatprep.subr.mxu0 %v3813
    %8504 = vmatpush1.msra.mxu0 %v3812
    %8505 = vmatprep.subr.mxu0 %v3817
    %8506 = vmatpush1.msra.mxu0 %v3816
    %8507 = vmatprep.subr.mxu0 %v3821
    %8508 = vmatpush1.msra.mxu0 %v3820
    %8509 = vmatprep.subr.mxu0 %v3825
    %8510 = vmatpush1.msra.mxu0 %v3824
    %8511 = vmatprep.subr.mxu0 %v3829
    %8512 = vmatpush1.msra.mxu0 %v3828
    %8513 = vmatprep.subr.mxu0 %v3833
    %8514 = vmatpush1.msra.mxu0 %v3832
    %8515 = vmatprep.subr.mxu0 %v3837
    %8516 = vmatpush1.msra.mxu0 %v3836
    %8517 = vmatprep.subr.mxu0 %v3841
    %8518 = vmatpush1.msra.mxu0 %v3840
    %8519 = vmatprep.subr.mxu0 %v3845
    %8520 = vmatpush1.msra.mxu0 %v3844
    %8521 = vmatprep.subr.mxu0 %v3849
    %8522 = vmatpush1.msra.mxu0 %v3848
    %8523 = vmatprep.subr.mxu0 %v3853
    %8524 = vmatpush1.msra.mxu0 %v3852
    %8525 = vmatprep.subr.mxu0 %v3857
    %8526 = vmatpush1.msra.mxu0 %v3856
    %8527 = vmatprep.subr.mxu0 %v3861
    %8528 = vmatpush1.msra.mxu0 %v3860
    %8529 = vmatprep.subr.mxu0 %v3865
    %8530 = vmatpush1.msra.mxu0 %v3864
    %8531 = vmatprep.subr.mxu0 %v3869
    %8532 = vmatpush1.msra.mxu0 %v3868
    %8533 = vmatprep.subr.mxu0 %v3873
    %8534 = vmatpush1.msra.mxu0 %v3872
    %8535 = vmatprep.mubr.f32.mxu0 %v3244
    %8536 = vmatmul.mubr.f32.gmra.mrb[0].mxu0 %v686
    %v8537 = vpop.f32.mrb[0].mxu0
    %v8538 = vadd.f32 %v8396, %v8537
    %v8539 = vpop.f32.mrb[0].mxu0
    %v8540 = vadd.f32 %v8398, %v8539
    %8541 = vdwg.mxu0
    %8542 = vmatprep.subr.mxu0 %v3751
    %8543 = vmatpush1.msra.mxu0 %v3750
    %8544 = vmatprep.subr.mxu0 %v3755
    %8545 = vmatpush1.msra.mxu0 %v3754
    %8546 = vmatprep.subr.mxu0 %v3759
    %8547 = vmatpush1.msra.mxu0 %v3758
    %8548 = vmatprep.subr.mxu0 %v3763
    %8549 = vmatpush1.msra.mxu0 %v3762
    %8550 = vmatprep.subr.mxu0 %v3767
    %8551 = vmatpush1.msra.mxu0 %v3766
    %8552 = vmatprep.subr.mxu0 %v3771
    %8553 = vmatpush1.msra.mxu0 %v3770
    %8554 = vmatprep.subr.mxu0 %v3775
    %8555 = vmatpush1.msra.mxu0 %v3774
    %8556 = vmatprep.subr.mxu0 %v3779
    %8557 = vmatpush1.msra.mxu0 %v3778
    %8558 = vmatprep.subr.mxu0 %v3783
    %8559 = vmatpush1.msra.mxu0 %v3782
    %8560 = vmatprep.subr.mxu0 %v3787
    %8561 = vmatpush1.msra.mxu0 %v3786
    %8562 = vmatprep.subr.mxu0 %v3791
    %8563 = vmatpush1.msra.mxu0 %v3790
    %8564 = vmatprep.subr.mxu0 %v3795
    %8565 = vmatpush1.msra.mxu0 %v3794
    %8566 = vmatprep.subr.mxu0 %v3799
    %8567 = vmatpush1.msra.mxu0 %v3798
    %8568 = vmatprep.subr.mxu0 %v3803
    %8569 = vmatpush1.msra.mxu0 %v3802
    %8570 = vmatprep.subr.mxu0 %v3807
    %8571 = vmatpush1.msra.mxu0 %v3806
    %8572 = vmatprep.subr.mxu0 %v3811
    %8573 = vmatpush1.msra.mxu0 %v3810
    %8574 = vmatprep.subr.mxu0 %v3815
    %8575 = vmatpush1.msra.mxu0 %v3814
    %8576 = vmatprep.subr.mxu0 %v3819
    %8577 = vmatpush1.msra.mxu0 %v3818
    %8578 = vmatprep.subr.mxu0 %v3823
    %8579 = vmatpush1.msra.mxu0 %v3822
    %8580 = vmatprep.subr.mxu0 %v3827
    %8581 = vmatpush1.msra.mxu0 %v3826
    %8582 = vmatprep.subr.mxu0 %v3831
    %8583 = vmatpush1.msra.mxu0 %v3830
    %8584 = vmatprep.subr.mxu0 %v3835
    %8585 = vmatpush1.msra.mxu0 %v3834
    %8586 = vmatprep.subr.mxu0 %v3839
    %8587 = vmatpush1.msra.mxu0 %v3838
    %8588 = vmatprep.subr.mxu0 %v3843
    %8589 = vmatpush1.msra.mxu0 %v3842
    %8590 = vmatprep.subr.mxu0 %v3847
    %8591 = vmatpush1.msra.mxu0 %v3846
    %8592 = vmatprep.subr.mxu0 %v3851
    %8593 = vmatpush1.msra.mxu0 %v3850
    %8594 = vmatprep.subr.mxu0 %v3855
    %8595 = vmatpush1.msra.mxu0 %v3854
    %8596 = vmatprep.subr.mxu0 %v3859
    %8597 = vmatpush1.msra.mxu0 %v3858
    %8598 = vmatprep.subr.mxu0 %v3863
    %8599 = vmatpush1.msra.mxu0 %v3862
    %8600 = vmatprep.subr.mxu0 %v3867
    %8601 = vmatpush1.msra.mxu0 %v3866
    %8602 = vmatprep.subr.mxu0 %v3871
    %8603 = vmatpush1.msra.mxu0 %v3870
    %8604 = vmatprep.subr.mxu0 %v3875
    %8605 = vmatpush1.msra.mxu0 %v3874
    %8606 = vmatprep.mubr.f32.mxu0 %v3244
    %8607 = vmatmul.mubr.f32.gmra.mrb[0].mxu0 %v686
    %v8608 = vpop.f32.mrb[0].mxu0
    %v8609 = vadd.f32 %v8467, %v8608
    %v8610 = vpop.f32.mrb[0].mxu0
    %v8611 = vadd.f32 %v8469, %v8610
    %8612 = vdwg.mxu0
    %v8613 = vadd.f32 %v8538, %v4228
    %v8614 = vadd.f32 %v8540, %v4232
    %v8615 = vadd.f32 %v8609, %v4236
    %v8616 = vadd.f32 %v8611, %v4240
    %v8617 = vxor.u32 %v8325, 2147483648
    %v8618 = vmul.f32 %v8617, 1.442695
    %v8619 = vpow.pop %v8618
    %v8620 = vadd.f32 %v8619, 1.0
    %v8621 = vrcp.pop %v8620
    %v8622 = vmul.f32 1.0, %v8621
    %v8623 = vxor.u32 %v8326, 2147483648
    %v8624 = vmul.f32 %v8623, 1.442695
    %v8625 = vpow.pop %v8624
    %v8626 = vadd.f32 %v8625, 1.0
    %v8627 = vrcp.pop %v8626
    %v8628 = vmul.f32 1.0, %v8627
    %v8629 = vtanh.pop %v8327
    %v8630 = vxor.u32 %v8328, 2147483648
    %v8631 = vmul.f32 %v8630, 1.442695
    %v8632 = vpow.pop %v8631
    %v8633 = vadd.f32 %v8632, 1.0
    %v8634 = vrcp.pop %v8633
    %v8635 = vmul.f32 1.0, %v8634
    %v8636 = vmul.f32 %v8628, %v8014
    %v8637 = vmul.f32 %v8622, %v8629
    %v8638 = vadd.f32 %v8636, %v8637
    %v8639 = vtanh.pop %v8638
    %v8640 = vmul.f32 %v8635, %v8639
    %v8641 = vxor.u32 %v8613, 2147483648
    %v8642 = vmul.f32 %v8641, 1.442695
    %v8643 = vpow.pop %v8642
    %v8644 = vadd.f32 %v8643, 1.0
    %v8645 = vrcp.pop %v8644
    %v8646 = vmul.f32 1.0, %v8645
    %v8647 = vxor.u32 %v8614, 2147483648
    %v8648 = vmul.f32 %v8647, 1.442695
    %v8649 = vpow.pop %v8648
    %v8650 = vadd.f32 %v8649, 1.0
    %v8651 = vrcp.pop %v8650
    %v8652 = vmul.f32 1.0, %v8651
    %v8653 = vtanh.pop %v8615
    %v8654 = vxor.u32 %v8616, 2147483648
    %v8655 = vmul.f32 %v8654, 1.442695
    %v8656 = vpow.pop %v8655
    %v8657 = vadd.f32 %v8656, 1.0
    %v8658 = vrcp.pop %v8657
    %v8659 = vmul.f32 1.0, %v8658
    %v8660 = vmul.f32 %v8652, %v8038
    %v8661 = vmul.f32 %v8646, %v8653
    %v8662 = vadd.f32 %v8660, %v8661
    %v8663 = vtanh.pop %v8662
    %v8664 = vmul.f32 %v8659, %v8663
    %v8667 = vcombine.low %v8640, %v8664
    %v8669 = vunpack.c.l.s4 1983009808
    %v8670 = vunpack.c.0.s8 %v8669
    %v8671 = vlaneseq
    %v8672 = vshrl.u32 %v8671, 7
    %v8673 = vsub.s32 %v8670, %v8672
    %v8674 = vrot.slane %v8667, %v8673
    %8676 = vst [vmem:[%s13] sm:$0xf] %v8674
    // Predicated region
    $region78: #{lstm_encoder.1} parent=1 // pred_check
      _
    $region79: #{lstm_encoder.1} parent=1 // pred_check_branch
      %8678 = sbr.rel (0) target = $region81
    $region80: #{lstm_encoder.1} parent=1 // pred_region
      _
    $region81: #{lstm_encoder.1} parent=1 // pred_fallthru
      _
    // Predicated region
    $region82: #{lstm_encoder.1} parent=1 // pred_check
      _
    $region83: #{lstm_encoder.1} parent=1 // pred_check_branch
      %8680 = sbr.rel (0) target = $region85
    $region84: #{lstm_encoder.1} parent=1 // pred_region
      _
    $region85: #{lstm_encoder.1} parent=1 // pred_fallthru
      _
    %8681 = vsyncpa [#allocation3], 1
    %8682 = vsyncpa [#allocation5], 1
    %8683 = vsyncpa [#allocation8], 1
    %8684 = vsyncpa [#allocation11], 1

</llo_original>
